<compile_context>
chip_gen: v5e
topology: v5e:2x2
jax: 0.10.0
libtpu: 0.0.40
codegen_flags: <defaults>
</compile_context>

<pallas_src>
import jax
import jax.numpy as jnp
from jax.experimental import pallas as pl
from jax.experimental.pallas import tpu as pltpu


def _crf_kernel(em_ref, tag_ref, mask_ref, tr_ref, diag_ref, all_ref, seq_ref):
    s = pl.program_id(1)

    # Output blocks keep the same block index across the S axis, so they stay
    # VMEM-resident and serve as the accumulators; HBM writeback only happens
    # when the batch tile changes.  Zero them on the first sequence tile.
    @pl.when(s == 0)
    def _():
        all_ref[...] = jnp.zeros_like(all_ref)
        seq_ref[...] = jnp.zeros_like(seq_ref)

    em = em_ref[...].astype(jnp.float32)        # (bB, bS, T)
    tags = tag_ref[...]                          # (bB, bS) int32
    mk = mask_ref[...].astype(jnp.float32)       # (bB, bS)

    bB, bS, T = em.shape

    # Masked one-hot of tags (this *is* the gather matrix).  Out-of-range /
    # padded tag values compare false everywhere -> all-zero row, matching
    # jax.nn.one_hot and the reference.  Linear in mask, so non-binary masks
    # keep exactly the torch `* mask.float()` semantics.
    iota = jax.lax.broadcasted_iota(jnp.int32, (bB, bS, T), 2)
    moh = jnp.where(iota == tags[:, :, None], mk[:, :, None], 0.0)   # (bB,bS,T)

    # Masked tag histogram: counts[b,k] = sum_s mask * (tags == k)
    counts = jnp.sum(moh, axis=1)                                    # (bB, T)

    # Emission terms.
    masked_em = em * mk[:, :, None]                                  # (bB,bS,T)
    em_sum = jnp.sum(masked_em, axis=1)                              # (bB, T)
    seq_em = jnp.sum(jnp.sum(moh * em, axis=2), axis=1)              # (bB,)

    # Transition terms, factored through the histogram:
    #   sum_s mask * W[tags[b,s], :]        == counts @ W
    #   sum_s mask * W[tags[b,s], tags[b,s]] == counts . diag(W)
    trans_all = jnp.dot(counts, tr_ref[...].astype(jnp.float32),
                        preferred_element_type=jnp.float32)          # (bB, T)
    trans_seq = jnp.sum(counts * diag_ref[...].astype(jnp.float32), axis=1)

    all_ref[...] += em_sum + trans_all
    seq_ref[...] += (seq_em + trans_seq)[:, None]


def _round_up(x, m):
    return ((x + m - 1) // m) * m


def _pick_block_b(B):
    """Largest multiple-of-8 divisor of B (<= min(B//2, 64)) so the 'parallel'
    batch axis gets >= 2 blocks (keeps both v7x TensorCores busy) without
    padding the batch; otherwise the whole batch in one block."""
    if B < 16:
        return B
    best = B
    cap = min(B // 2, 64)
    for cand in range(8, cap + 1, 8):
        if B % cand == 0:
            best = cand
    return best


def crf_forward(emissions, tags, mask, transition_matrix, *,
                block_b=None, block_s=None):
    B, S, T = emissions.shape

    tags = tags.astype(jnp.int32)
    if mask.dtype == jnp.bool_:
        mask = mask.astype(jnp.int32)

    tr = transition_matrix.astype(jnp.float32)
    tr_diag = jnp.diagonal(tr).reshape(1, T)

    # Lane-padded width of the tagset axis inside VMEM (last dim pads to 128).
    lane_t = max(128, _round_up(T, 128))

    # ---- tile selection ----------------------------------------------------
    if block_b is None:
        block_b = _pick_block_b(B)
    block_b = min(block_b, B)
    if block_b < B and block_b % 8 != 0:
        block_b = max(8, (block_b // 8) * 8)
        if block_b >= B:
            block_b = B
    B_pad = _round_up(B, block_b)

    # block_s: take the whole sequence when the *lane-padded*, double-buffered
    # emissions tile fits the budget (single S step -> minimal grid overhead);
    # otherwise the largest multiple of 128 that fits.
    em_bytes_per_s = 2 * block_b * lane_t * emissions.dtype.itemsize
    budget = 8 << 20
    if block_s is None:
        max_s = max(128, budget // max(1, em_bytes_per_s))
        block_s = S if max_s >= S else (max_s // 128) * 128
    block_s = min(block_s, S)
    if block_s < S:
        block_s = max(128, (block_s // 128) * 128)
        if block_s >= S:
            block_s = S
    S_pad = _round_up(S, block_s)

    # ---- padding (padded rows / steps carry mask == 0 -> contribute 0) ------
    if B_pad != B or S_pad != S:
        emissions = jnp.pad(emissions, ((0, B_pad - B), (0, S_pad - S), (0, 0)))
        tags = jnp.pad(tags, ((0, B_pad - B), (0, S_pad - S)))
        mask = jnp.pad(mask, ((0, B_pad - B), (0, S_pad - S)))

    grid = (B_pad // block_b, S_pad // block_s)

    # Scoped-VMEM budget against lane-padded tile bytes, capped at 40 MiB so it
    # leaves headroom in v7x's 64 MiB physical VMEM (plenty on v5e/v6e).
    sub_s = _round_up(block_s, 8)
    lane_s = _round_up(block_s, 128)
    sub_b = _round_up(block_b, 8)
    est = (2 * block_b * sub_s * lane_t * emissions.dtype.itemsize   # emissions
           + 2 * 2 * sub_b * lane_s * 4                              # tags + mask
           + 2 * (_round_up(T, 8) + 8) * lane_t * 4                  # tr + diag
           + sub_b * (lane_t + 128) * 4                              # outputs
           + 3 * block_b * sub_s * lane_t * 4)                       # temporaries
    vmem_limit = int(min(40 << 20, max(16 << 20, est + (4 << 20))))

    grid_spec = pltpu.PrefetchScalarGridSpec(
        num_scalar_prefetch=0,
        grid=grid,
        in_specs=[
            pl.BlockSpec((block_b, block_s, T), lambda b, s: (b, s, 0)),
            pl.BlockSpec((block_b, block_s), lambda b, s: (b, s)),
            pl.BlockSpec((block_b, block_s), lambda b, s: (b, s)),
            pl.BlockSpec((T, T), lambda b, s: (0, 0)),
            pl.BlockSpec((1, T), lambda b, s: (0, 0)),
        ],
        out_specs=[
            # same block index across the S axis -> VMEM-resident accumulators
            pl.BlockSpec((block_b, T), lambda b, s: (b, 0)),
            pl.BlockSpec((block_b, 1), lambda b, s: (b, 0)),
        ],
    )

    all_path, tag_seq = pl.pallas_call(
        _crf_kernel,
        grid_spec=grid_spec,
        out_shape=(
            jax.ShapeDtypeStruct((B_pad, T), jnp.float32),
            jax.ShapeDtypeStruct((B_pad, 1), jnp.float32),
        ),
        compiler_params=pltpu.CompilerParams(
            dimension_semantics=("parallel", "arbitrary"),
            vmem_limit_bytes=vmem_limit,
        ),
    )(emissions, tags, mask, tr, tr_diag)

    return all_path[:B], tag_seq[:B, 0]


def _crf_reference(emissions, tags, mask, transition_matrix):
    one_hot = jax.nn.one_hot(tags, emissions.shape[-1], dtype=jnp.float32)
    trans_score = jnp.einsum("bst,tu->bsu", one_hot,
                             transition_matrix.astype(jnp.float32))
    path = (emissions.astype(jnp.float32) + trans_score) \
        * mask.astype(jnp.float32)[..., None]
    all_path = jnp.sum(path, axis=1)
    tag_seq = jnp.sum(jnp.sum(path * one_hot, axis=2), axis=1)
    return all_path, tag_seq


if __name__ == "__main__":
    key = jax.random.PRNGKey(0)
    k_em, k_tag, k_tr, k_len = jax.random.split(key, 4)

    B, S, T = 16, 256, 16  # batch, seq_len, tagset_size

    emissions = jax.random.normal(k_em, (B, S, T), dtype=jnp.float32)
    tags = jax.random.randint(k_tag, (B, S), 0, T, dtype=jnp.int32)
    lengths = jax.random.randint(k_len, (B,), S // 2, S + 1)
    mask = (jnp.arange(S)[None, :] < lengths[:, None]).astype(jnp.int32)
    transition_matrix = jax.random.normal(k_tr, (T, T), dtype=jnp.float32)

    ref_all, ref_seq = _crf_reference(emissions, tags, mask, transition_matrix)

    # 1) default tiling: 2 "parallel" batch blocks (megacore-friendly), whole
    #    sequence resident per step -> grid (2, 1)
    all_path, tag_seq = crf_forward(emissions, tags, mask, transition_matrix)
    jax.block_until_ready((all_path, tag_seq))
    assert all_path.shape == (B, T) and tag_seq.shape == (B,)
    assert jnp.allclose(all_path, ref_all, atol=1e-3, rtol=1e-4), \
        float(jnp.max(jnp.abs(all_path - ref_all)))
    assert jnp.allclose(tag_seq, ref_seq, atol=1e-3, rtol=1e-4), \
        float(jnp.max(jnp.abs(tag_seq - ref_seq)))

    # 2) explicit small blocks so the S-accumulating path is exercised:
    #    grid = (2, 2), output blocks accumulate across sequence tiles
    all_path2, tag_seq2 = crf_forward(emissions, tags, mask, transition_matrix,
                                      block_b=8, block_s=128)
    jax.block_until_ready((all_path2, tag_seq2))
    assert jnp.allclose(all_path2, ref_all, atol=1e-3, rtol=1e-4), \
        float(jnp.max(jnp.abs(all_path2 - ref_all)))
    assert jnp.allclose(tag_seq2, ref_seq, atol=1e-3, rtol=1e-4), \
        float(jnp.max(jnp.abs(tag_seq2 - ref_seq)))

    print("KERNEL_OK")
</pallas_src>

<mosaic_0001>
module attributes {stable_mosaic.version = 11 : i64} {
  func.func @_crf_kernel(%arg0: i32, %arg1: i32, %arg2: memref<8x256x16xf32, #tpu.memory_space<vmem>>, %arg3: memref<8x256xi32, #tpu.memory_space<vmem>>, %arg4: memref<8x256xi32, #tpu.memory_space<vmem>>, %arg5: memref<16x16xf32, #tpu.memory_space<vmem>>, %arg6: memref<1x16xf32, #tpu.memory_space<vmem>>, %arg7: memref<8x16xf32, #tpu.memory_space<vmem>>, %arg8: memref<8x1xf32, #tpu.memory_space<vmem>>) attributes {dimension_semantics = [#tpu.dimension_semantics<parallel>, #tpu.dimension_semantics<arbitrary>], iteration_bounds = array<i64: 2, 1>, scalar_prefetch = 0 : i64, scratch_operands = 0 : i64, tpu.core_type = #tpu.core_type<tc>, window_params = [{transform_indices = @transform_0, window_bounds = array<i64: 8, 256, 16>}, {transform_indices = @transform_1, window_bounds = array<i64: 8, 256>}, {transform_indices = @transform_2, window_bounds = array<i64: 8, 256>}, {pipeline_mode = #tpu.pipeline_mode<synchronous>, transform_indices = @transform_3, window_bounds = array<i64: 16, 16>}, {pipeline_mode = #tpu.pipeline_mode<synchronous>, transform_indices = @transform_4, window_bounds = array<i64: 1, 16>}, {transform_indices = @transform_5, window_bounds = array<i64: 8, 16>}, {transform_indices = @transform_6, window_bounds = array<i64: 8, 1>}]} {
    %c0_i32 = arith.constant 0 : i32
    %0 = arith.cmpi eq, %arg1, %c0_i32 : i32
    %1 = arith.extui %0 : i1 to i32
    %c0_i32_0 = arith.constant 0 : i32
    %2 = arith.cmpi ne, %1, %c0_i32_0 : i32
    scf.if %2 {
      %cst_25 = arith.constant 0.000000e+00 : f32
      %39 = vector.broadcast %cst_25 : f32 to vector<8x16xf32>
      %c0_26 = arith.constant 0 : index
      %c0_27 = arith.constant 0 : index
      %40 = vector.load %arg7[%c0_26, %c0_27] : memref<8x16xf32, #tpu.memory_space<vmem>>, vector<8x16xf32>
      tpu.vector_store %arg7[%c0_26, %c0_27], %39 {strides = array<i32>} : memref<8x16xf32, #tpu.memory_space<vmem>>, vector<8x16xf32>,
      %cst_28 = arith.constant 0.000000e+00 : f32
      %41 = vector.broadcast %cst_28 : f32 to vector<8x1xf32>
      %c0_29 = arith.constant 0 : index
      %c0_30 = arith.constant 0 : index
      %42 = vector.load %arg8[%c0_29, %c0_30] : memref<8x1xf32, #tpu.memory_space<vmem>>, vector<8x1xf32>
      tpu.vector_store %arg8[%c0_29, %c0_30], %41 {strides = array<i32>} : memref<8x1xf32, #tpu.memory_space<vmem>>, vector<8x1xf32>,
    } else {
    }
    %c0 = arith.constant 0 : index
    %c0_1 = arith.constant 0 : index
    %c0_2 = arith.constant 0 : index
    %3 = vector.load %arg2[%c0, %c0_1, %c0_2] : memref<8x256x16xf32, #tpu.memory_space<vmem>>, vector<8x256x16xf32>
    %c0_3 = arith.constant 0 : index
    %c0_4 = arith.constant 0 : index
    %4 = vector.load %arg3[%c0_3, %c0_4] : memref<8x256xi32, #tpu.memory_space<vmem>>, vector<8x256xi32>
    %c0_5 = arith.constant 0 : index
    %c0_6 = arith.constant 0 : index
    %5 = vector.load %arg4[%c0_5, %c0_6] : memref<8x256xi32, #tpu.memory_space<vmem>>, vector<8x256xi32>
    %6 = arith.sitofp %5 : vector<8x256xi32> to vector<8x256xf32>
    %7 = tpu.iota {dimensions = array<i32: 2>} : vector<8x256x16xi32>
    %8 = vector.shape_cast %4 : vector<8x256xi32> to vector<8x256x1xi32>
    %9 = vector.broadcast %8 : vector<8x256x1xi32> to vector<8x256x16xi32>
    %10 = arith.cmpi eq, %7, %9 : vector<8x256x16xi32>
    %11 = vector.shape_cast %6 : vector<8x256xf32> to vector<8x256x1xf32>
    %cst = arith.constant 0.000000e+00 : f32
    %12 = vector.shape_cast %11 : vector<8x256x1xf32> to vector<8x256x1xf32>
    %13 = vector.broadcast %12 : vector<8x256x1xf32> to vector<8x256x16xf32>
    %14 = vector.broadcast %cst : f32 to vector<8x256x16xf32>
    %15 = arith.select %10, %13, %14 : vector<8x256x16xi1>, vector<8x256x16xf32>
    %cst_7 = arith.constant dense<0.000000e+00> : vector<8x16xf32>
    %16 = vector.multi_reduction <add>, %15, %cst_7 [1] : vector<8x256x16xf32> to vector<8x16xf32>
    %17 = vector.shape_cast %6 : vector<8x256xf32> to vector<8x256x1xf32>
    %18 = vector.broadcast %17 : vector<8x256x1xf32> to vector<8x256x16xf32>
    %19 = arith.mulf %3, %18 : vector<8x256x16xf32>
    %cst_8 = arith.constant dense<0.000000e+00> : vector<8x16xf32>
    %20 = vector.multi_reduction <add>, %19, %cst_8 [1] : vector<8x256x16xf32> to vector<8x16xf32>
    %21 = arith.mulf %15, %3 : vector<8x256x16xf32>
    %cst_9 = arith.constant dense<0.000000e+00> : vector<8x256xf32>
    %22 = vector.multi_reduction <add>, %21, %cst_9 [2] : vector<8x256x16xf32> to vector<8x256xf32>
    %cst_10 = arith.constant dense<0.000000e+00> : vector<8xf32>
    %23 = vector.multi_reduction <add>, %22, %cst_10 [1] : vector<8x256xf32> to vector<8xf32>
    %c0_11 = arith.constant 0 : index
    %c0_12 = arith.constant 0 : index
    %24 = vector.load %arg5[%c0_11, %c0_12] : memref<16x16xf32, #tpu.memory_space<vmem>>, vector<16x16xf32>
    %cst_13 = arith.constant dense<0.000000e+00> : vector<8x16xf32>
    %25 = tpu.matmul %16, %24, %cst_13 {dimension_numbers = #tpu.dot_dimension_numbers<[1], [0], [0], [1], [0, 0, 1, 1], [], []>} : vector<8x16xf32>, vector<16x16xf32>, vector<8x16xf32> -> vector<8x16xf32>
    %c0_14 = arith.constant 0 : index
    %c0_15 = arith.constant 0 : index
    %26 = vector.load %arg6[%c0_14, %c0_15] : memref<1x16xf32, #tpu.memory_space<vmem>>, vector<1x16xf32>
    %27 = vector.broadcast %26 : vector<1x16xf32> to vector<8x16xf32>
    %28 = arith.mulf %16, %27 : vector<8x16xf32>
    %cst_16 = arith.constant dense<0.000000e+00> : vector<8xf32>
    %29 = vector.multi_reduction <add>, %28, %cst_16 [1] : vector<8x16xf32> to vector<8xf32>
    %c0_17 = arith.constant 0 : index
    %c0_18 = arith.constant 0 : index
    %30 = vector.load %arg7[%c0_17, %c0_18] : memref<8x16xf32, #tpu.memory_space<vmem>>, vector<8x16xf32>
    %31 = arith.addf %20, %25 : vector<8x16xf32>
    %32 = arith.addf %30, %31 : vector<8x16xf32>
    %c0_19 = arith.constant 0 : index
    %c0_20 = arith.constant 0 : index
    %33 = vector.load %arg7[%c0_19, %c0_20] : memref<8x16xf32, #tpu.memory_space<vmem>>, vector<8x16xf32>
    tpu.vector_store %arg7[%c0_19, %c0_20], %32 {strides = array<i32>} : memref<8x16xf32, #tpu.memory_space<vmem>>, vector<8x16xf32>,
    %c0_21 = arith.constant 0 : index
    %c0_22 = arith.constant 0 : index
    %34 = vector.load %arg8[%c0_21, %c0_22] : memref<8x1xf32, #tpu.memory_space<vmem>>, vector<8x1xf32>
    %35 = arith.addf %23, %29 : vector<8xf32>
    %36 = vector.shape_cast %35 : vector<8xf32> to vector<8x1xf32>
    %37 = arith.addf %34, %36 : vector<8x1xf32>
    %c0_23 = arith.constant 0 : index
    %c0_24 = arith.constant 0 : index
    %38 = vector.load %arg8[%c0_23, %c0_24] : memref<8x1xf32, #tpu.memory_space<vmem>>, vector<8x1xf32>
    tpu.vector_store %arg8[%c0_23, %c0_24], %37 {strides = array<i32>} : memref<8x1xf32, #tpu.memory_space<vmem>>, vector<8x1xf32>,
    return
  }
  func.func @transform_0(%arg0: i32, %arg1: i32) -> (i32, i32, i32) {
    %c0_i32 = arith.constant 0 : i32
    %c0_i32_0 = arith.constant 0 : i32
    return %arg0, %arg1, %c0_i32 : i32, i32, i32
  }
  func.func @transform_1(%arg0: i32, %arg1: i32) -> (i32, i32) {
    %c0_i32 = arith.constant 0 : i32
    return %arg0, %arg1 : i32, i32
  }
  func.func @transform_2(%arg0: i32, %arg1: i32) -> (i32, i32) {
    %c0_i32 = arith.constant 0 : i32
    return %arg0, %arg1 : i32, i32
  }
  func.func @transform_3(%arg0: i32, %arg1: i32) -> (i32, i32) {
    %c0_i32 = arith.constant 0 : i32
    %c0_i32_0 = arith.constant 0 : i32
    %c0_i32_1 = arith.constant 0 : i32
    return %c0_i32, %c0_i32_0 : i32, i32
  }
  func.func @transform_4(%arg0: i32, %arg1: i32) -> (i32, i32) {
    %c0_i32 = arith.constant 0 : i32
    %c0_i32_0 = arith.constant 0 : i32
    %c0_i32_1 = arith.constant 0 : i32
    return %c0_i32, %c0_i32_0 : i32, i32
  }
  func.func @transform_5(%arg0: i32, %arg1: i32) -> (i32, i32) {
    %c0_i32 = arith.constant 0 : i32
    %c0_i32_0 = arith.constant 0 : i32
    return %arg0, %c0_i32 : i32, i32
  }
  func.func @transform_6(%arg0: i32, %arg1: i32) -> (i32, i32) {
    %c0_i32 = arith.constant 0 : i32
    %c0_i32_0 = arith.constant 0 : i32
    return %arg0, %c0_i32 : i32, i32
  }
}

</mosaic_0001>

<llo_original>
// kernel: tpu_custom_call.1
$region0: #{tpu_custom_call.1}
  #allocation0 [shape = 'u32[]', space=smem, size = 0x4, offset = 0x4, fixed_abs, tag = 'smem constant byte address 0x4 - core index']
  #allocation1 [shape = 'u32[72,128]{1,0:T(1,128)}', space=vmem, size = 0x9000, scoped, tag = 'internal scratch']
  %s0 = inlined_call_operand.vmem [shape: f32[16,256,16], index: 0, kind: input, shape index: {}]
  %s1 = inlined_call_operand.vmem [shape: s32[16,256], index: 1, kind: input, shape index: {}]
  %s2 = inlined_call_operand.vmem [shape: s32[16,256], index: 2, kind: input, shape index: {}]
  %s3 = inlined_call_operand.vmem [shape: f32[16,16], index: 3, kind: input, shape index: {}]
  %s4 = inlined_call_operand.vmem [shape: f32[1,16], index: 4, kind: input, shape index: {}]
  %s5 = inlined_call_operand.hbm [shape: f32[16,16], index: 5, kind: output, shape index: {0}]
  %s6 = inlined_call_operand.vmem [shape: f32[16,1], index: 6, kind: output, shape index: {1}]
  %7 = xla_tuple %s5, %s6
  %s8 = sld [smem:[#allocation0]]
  $region65: #{tpu_custom_call.1} parent=0
    _
  %s10 = ssub.s32 1, %s8
  %s11 = scalar_select 0, %s10, %s8
  $region1: #{tpu_custom_call.1} parent=0
    #allocation2 [shape = 'u8[8192]{0}', space=vmem, size = 0x2000, scoped, tag = 'output window, operand 0']
    #allocation3 [shape = 's32[2]{0}', space=sflag, size = 0x8, scoped, tag = 'scoped memory for tpu_custom_call.1']
    %12 = vsyncpa [#allocation3], 0
    %s13 = scalar_lea.sflag [#allocation3], 1
    %14 = vsyncpa %s13, 0
    loop: start=0, step=1, limit=4
    $region2: #{tpu_custom_call.1} parent=1 // loop_pre_header
      _
    $region3: #{tpu_custom_call.1} parent=1 // loop_header
      %s16 = sphi 0, %s20
      %p17 = scmp.ge.s32.totalorder %s16, 4
      %s23 = sphi 0, %s35
      %s24 = sphi 0, %s31
      %s25 = sphi 0, %s23
      %s26 = sphi 0, %s24
      %s27 = sphi 0, %s25
      %s28 = sphi 0, %s26
      %s40 = sphi 0, %s42
      %s43 = sphi 0, %s40
      %s44 = sphi 0, %s43
      %s60 = sphi 0, %s44
      %s68 = sphi 0, %s70
      %s71 = sphi 0, %s68
      %s72 = sphi 0, %s71
      %s88 = sphi 0, %s72
      %s96 = sphi 0, %s98
      %s99 = sphi 0, %s96
      %s100 = sphi 0, %s99
      %s116 = sphi 0, %s100
      %s120 = sphi 0, %s120
      %s122 = sphi 0, %s120
      %s123 = sphi 0, %s122
      %s137 = sphi 0, %s123
      %s141 = sphi 0, %s141
      %s143 = sphi 0, %s141
      %s144 = sphi 0, %s143
      %s158 = sphi 0, %s144
      %s164 = sphi 0, %s166
      %s167 = sphi 0, %s164
      %s168 = sphi 0, %s167
      %s184 = sphi 0, %s168
      %s190 = sphi 0, %s192
      %s193 = sphi 0, %s190
      %s194 = sphi 0, %s193
      %s210 = sphi 0, %s194
    $region4: #{tpu_custom_call.1} parent=1 // loop_header_branch
      %19 = sbr.rel (%p17) target = $region8
    $region5: #{tpu_custom_call.1} parent=1 // loop_body
      %s21 = ssub.s32 %s16, 1
      %s22 = ssub.s32 %s16, 2
      %s29 = sadd.s32 1, %s24
      %p30 = scmp.ge.s32.totalorder %s29, 1
      %s31 = scalar_select %p30, 0, %s29
      %s32 = sadd.s32 1, %s23
      %s33 = scalar_select %p30, %s32, %s23
      %p34 = scmp.ge.s32.totalorder %s33, 2
      %s35 = scalar_select %p34, 0, %s33
      %s36 = ssub.s32 %s23, %s35
      %s37 = ssub.s32 %s24, %s31
      %s38 = sor.u32 %s36, %s37
      %p39 = scmp.eq.s32.totalorder %s38, 0
      %s41 = sadd.s32 %s40, 1
      %s42 = scalar_select %p39, %s40, %s41
      %p45 = pneg %p39
      %p46 = scmp.eq.s32.totalorder %s16, 1
      %p47 = por %p45, %p46
      %p48 = scmp.ne.s32.totalorder %s40, %s43
      %p49 = scmp.eq.s32.totalorder %s16, 0
      %p50 = por %p48, %p49
      %p51 = scmp.ne.s32.totalorder %s40, %s43
      %p52 = scmp.eq.s32.totalorder %s21, 1
      %p53 = por %p51, %p52
      %p54 = scmp.ne.s32.totalorder %s43, %s44
      %p55 = scmp.eq.s32.totalorder %s21, 0
      %p56 = por %p54, %p55
      %p57 = scmp.ne.s32.totalorder %s43, %s44
      %p58 = scmp.eq.s32.totalorder %s22, 1
      %p59 = por %p57, %p58
      %p61 = scmp.ne.s32.totalorder %s44, %s60
      %p62 = scmp.eq.s32.totalorder %s22, 0
      %p63 = por %p61, %p62
      %s64 = ssub.s32 %s23, %s35
      %s65 = ssub.s32 %s24, %s31
      %s66 = sor.u32 %s64, %s65
      %p67 = scmp.eq.s32.totalorder %s66, 0
      %s69 = sadd.s32 %s68, 1
      %s70 = scalar_select %p67, %s68, %s69
      %p73 = pneg %p67
      %p74 = scmp.eq.s32.totalorder %s16, 1
      %p75 = por %p73, %p74
      %p76 = scmp.ne.s32.totalorder %s68, %s71
      %p77 = scmp.eq.s32.totalorder %s16, 0
      %p78 = por %p76, %p77
      %p79 = scmp.ne.s32.totalorder %s68, %s71
      %p80 = scmp.eq.s32.totalorder %s21, 1
      %p81 = por %p79, %p80
      %p82 = scmp.ne.s32.totalorder %s71, %s72
      %p83 = scmp.eq.s32.totalorder %s21, 0
      %p84 = por %p82, %p83
      %p85 = scmp.ne.s32.totalorder %s71, %s72
      %p86 = scmp.eq.s32.totalorder %s22, 1
      %p87 = por %p85, %p86
      %p89 = scmp.ne.s32.totalorder %s72, %s88
      %p90 = scmp.eq.s32.totalorder %s22, 0
      %p91 = por %p89, %p90
      %s92 = ssub.s32 %s23, %s35
      %s93 = ssub.s32 %s24, %s31
      %s94 = sor.u32 %s92, %s93
      %p95 = scmp.eq.s32.totalorder %s94, 0
      %s97 = sadd.s32 %s96, 1
      %s98 = scalar_select %p95, %s96, %s97
      %p101 = pneg %p95
      %p102 = scmp.eq.s32.totalorder %s16, 1
      %p103 = por %p101, %p102
      %p104 = scmp.ne.s32.totalorder %s96, %s99
      %p105 = scmp.eq.s32.totalorder %s16, 0
      %p106 = por %p104, %p105
      %p107 = scmp.ne.s32.totalorder %s96, %s99
      %p108 = scmp.eq.s32.totalorder %s21, 1
      %p109 = por %p107, %p108
      %p110 = scmp.ne.s32.totalorder %s99, %s100
      %p111 = scmp.eq.s32.totalorder %s21, 0
      %p112 = por %p110, %p111
      %p113 = scmp.ne.s32.totalorder %s99, %s100
      %p114 = scmp.eq.s32.totalorder %s22, 1
      %p115 = por %p113, %p114
      %p117 = scmp.ne.s32.totalorder %s100, %s116
      %p118 = scmp.eq.s32.totalorder %s22, 0
      %p119 = por %p117, %p118
      %s121 = sadd.s32 %s120, 1
      %p124 = scmp.eq.s32.totalorder %s16, 1
      %p125 = scmp.ne.s32.totalorder %s120, %s122
      %p126 = scmp.eq.s32.totalorder %s16, 0
      %p127 = por %p125, %p126
      %p128 = scmp.ne.s32.totalorder %s120, %s122
      %p129 = scmp.eq.s32.totalorder %s21, 1
      %p130 = por %p128, %p129
      %p131 = scmp.ne.s32.totalorder %s122, %s123
      %p132 = scmp.eq.s32.totalorder %s21, 0
      %p133 = por %p131, %p132
      %p134 = scmp.ne.s32.totalorder %s122, %s123
      %p135 = scmp.eq.s32.totalorder %s22, 1
      %p136 = por %p134, %p135
      %p138 = scmp.ne.s32.totalorder %s123, %s137
      %p139 = scmp.eq.s32.totalorder %s22, 0
      %p140 = por %p138, %p139
      %s142 = sadd.s32 %s141, 1
      %p145 = scmp.eq.s32.totalorder %s16, 1
      %p146 = scmp.ne.s32.totalorder %s141, %s143
      %p147 = scmp.eq.s32.totalorder %s16, 0
      %p148 = por %p146, %p147
      %p149 = scmp.ne.s32.totalorder %s141, %s143
      %p150 = scmp.eq.s32.totalorder %s21, 1
      %p151 = por %p149, %p150
      %p152 = scmp.ne.s32.totalorder %s143, %s144
      %p153 = scmp.eq.s32.totalorder %s21, 0
      %p154 = por %p152, %p153
      %p155 = scmp.ne.s32.totalorder %s143, %s144
      %p156 = scmp.eq.s32.totalorder %s22, 1
      %p157 = por %p155, %p156
      %p159 = scmp.ne.s32.totalorder %s144, %s158
      %p160 = scmp.eq.s32.totalorder %s22, 0
      %p161 = por %p159, %p160
      %s162 = ssub.s32 %s23, %s35
      %p163 = scmp.eq.s32.totalorder %s162, 0
      %s165 = sadd.s32 %s164, 1
      %s166 = scalar_select %p163, %s164, %s165
      %p169 = pneg %p163
      %p170 = scmp.eq.s32.totalorder %s16, 1
      %p171 = por %p169, %p170
      %p172 = scmp.ne.s32.totalorder %s164, %s167
      %p173 = scmp.eq.s32.totalorder %s16, 0
      %p174 = por %p172, %p173
      %p175 = scmp.ne.s32.totalorder %s164, %s167
      %p176 = scmp.eq.s32.totalorder %s21, 1
      %p177 = por %p175, %p176
      %p178 = scmp.ne.s32.totalorder %s167, %s168
      %p179 = scmp.eq.s32.totalorder %s21, 0
      %p180 = por %p178, %p179
      %p181 = scmp.ne.s32.totalorder %s167, %s168
      %p182 = scmp.eq.s32.totalorder %s22, 1
      %p183 = por %p181, %p182
      %p185 = scmp.ne.s32.totalorder %s168, %s184
      %p186 = scmp.eq.s32.totalorder %s22, 0
      %p187 = por %p185, %p186
      %s188 = ssub.s32 %s23, %s35
      %p189 = scmp.eq.s32.totalorder %s188, 0
      %s191 = sadd.s32 %s190, 1
      %s192 = scalar_select %p189, %s190, %s191
      %p195 = pneg %p189
      %p196 = scmp.eq.s32.totalorder %s16, 1
      %p197 = por %p195, %p196
      %p198 = scmp.ne.s32.totalorder %s190, %s193
      %p199 = scmp.eq.s32.totalorder %s16, 0
      %p200 = por %p198, %p199
      %p201 = scmp.ne.s32.totalorder %s190, %s193
      %p202 = scmp.eq.s32.totalorder %s21, 1
      %p203 = por %p201, %p202
      %p204 = scmp.ne.s32.totalorder %s193, %s194
      %p205 = scmp.eq.s32.totalorder %s21, 0
      %p206 = por %p204, %p205
      %p207 = scmp.ne.s32.totalorder %s193, %s194
      %p208 = scmp.eq.s32.totalorder %s22, 1
      %p209 = por %p207, %p208
      %p211 = scmp.ne.s32.totalorder %s194, %s210
      %p212 = scmp.eq.s32.totalorder %s22, 0
      %p213 = por %p211, %p212
      %p214 = scmp.le.s32.totalorder 1, %s16
      %p215 = scmp.lt.s32.totalorder %s16, 3
      %p216 = pnand %p214, %p215
      %p217 = pneg %p216
      // Predicated region
      $region9: #{tpu_custom_call.1} parent=5 // pred_check
        _
      $region10: #{tpu_custom_call.1} parent=5 // pred_check_branch
        %219 = sbr.rel (%p216) target = $region12
      $region11: #{tpu_custom_call.1} parent=5 // pred_region
        %s220 = ssub.s32 %s16, 1
        // Predicated region
        $region13: #{tpu_custom_call.1} parent=11 // pred_check
          %p221 = pneg %p133
        $region14: #{tpu_custom_call.1} parent=11 // pred_check_branch
          %223 = sbr.rel (%p221) target = $region16
        $region15: #{tpu_custom_call.1} parent=11 // pred_region
          _
        $region16: #{tpu_custom_call.1} parent=11 // pred_fallthru
          _
        // Predicated region
        $region17: #{tpu_custom_call.1} parent=11 // pred_check
          %p224 = pneg %p154
        $region18: #{tpu_custom_call.1} parent=11 // pred_check_branch
          %226 = sbr.rel (%p224) target = $region20
        $region19: #{tpu_custom_call.1} parent=11 // pred_region
          _
        $region20: #{tpu_custom_call.1} parent=11 // pred_fallthru
          _
      $region12: #{tpu_custom_call.1} parent=5 // pred_fallthru
        _
      %p227 = scmp.lt.s32.totalorder %s16, 2
      // Predicated region
      $region21: #{tpu_custom_call.1} parent=5 // pred_check
        %p228 = pneg %p227
      $region22: #{tpu_custom_call.1} parent=5 // pred_check_branch
        %230 = sbr.rel (%p228) target = $region24
      $region23: #{tpu_custom_call.1} parent=5 // pred_region
        // Predicated region
        $region25: #{tpu_custom_call.1} parent=23 // pred_check
          %p231 = pneg %p50
        $region26: #{tpu_custom_call.1} parent=23 // pred_check_branch
          %233 = sbr.rel (%p231) target = $region28
        $region27: #{tpu_custom_call.1} parent=23 // pred_region
          %s234 = smul.u32 8, %s23
          %s235 = smul.u32 32, %s24
          %p236 = scmp.lt.s32.totalorder %s234, 15
          %s237 = scalar_select %p236, %s234, 15
          %p238 = scmp.lt.s32.totalorder %s235, 31
          %s239 = scalar_select %p238, %s235, 31
          %s240 = smul.addr %s237, 32
          %s241 = sadd.s32 %s239, %s240
          %s242 = smul.addr %s241, 8
          %s243 = scalar_lea.vmem %s0, %s242
          %s244 = smul.u32 8, %s23
          %s245 = smul.u32 32, %s24
        $region28: #{tpu_custom_call.1} parent=23 // pred_fallthru
          _
        // Predicated region
        $region29: #{tpu_custom_call.1} parent=23 // pred_check
          %p246 = pneg %p78
        $region30: #{tpu_custom_call.1} parent=23 // pred_check_branch
          %248 = sbr.rel (%p246) target = $region32
        $region31: #{tpu_custom_call.1} parent=23 // pred_region
          %s249 = smul.u32 2, %s24
          %p250 = scmp.lt.s32.totalorder %s23, 1
          %s251 = scalar_select %p250, %s23, 1
          %p252 = scmp.lt.s32.totalorder %s249, 1
          %s253 = scalar_select %p252, %s249, 1
          %s254 = smul.addr %s251, 2
          %s255 = sadd.s32 %s253, %s254
          %s256 = smul.addr %s255, 8
          %s257 = scalar_lea.vmem %s1, %s256
          %s258 = smul.u32 2, %s24
        $region32: #{tpu_custom_call.1} parent=23 // pred_fallthru
          _
        // Predicated region
        $region33: #{tpu_custom_call.1} parent=23 // pred_check
          %p259 = pneg %p106
        $region34: #{tpu_custom_call.1} parent=23 // pred_check_branch
          %261 = sbr.rel (%p259) target = $region36
        $region35: #{tpu_custom_call.1} parent=23 // pred_region
          %s262 = smul.u32 2, %s24
          %p263 = scmp.lt.s32.totalorder %s23, 1
          %s264 = scalar_select %p263, %s23, 1
          %p265 = scmp.lt.s32.totalorder %s262, 1
          %s266 = scalar_select %p265, %s262, 1
          %s267 = smul.addr %s264, 2
          %s268 = sadd.s32 %s266, %s267
          %s269 = smul.addr %s268, 8
          %s270 = scalar_lea.vmem %s2, %s269
          %s271 = smul.u32 2, %s24
        $region36: #{tpu_custom_call.1} parent=23 // pred_fallthru
          _
      $region24: #{tpu_custom_call.1} parent=5 // pred_fallthru
        _
      %p272 = scmp.le.s32.totalorder 1, %s16
      %p273 = scmp.lt.s32.totalorder %s16, 3
      %p274 = pnand %p272, %p273
      %p275 = pneg %p274
      // Predicated region
      $region37: #{tpu_custom_call.1} parent=5 // pred_check
        _
      $region38: #{tpu_custom_call.1} parent=5 // pred_check_branch
        %277 = sbr.rel (%p274) target = $region40
      $region39: #{tpu_custom_call.1} parent=5 // pred_region
        %s278 = ssub.s32 %s16, 1
        %s279 = smul.u32 8, %s25
        %s280 = smul.u32 32, %s26
        %p281 = scmp.lt.s32.totalorder %s279, 15
        %s282 = scalar_select %p281, %s279, 15
        %p283 = scmp.lt.s32.totalorder %s280, 31
        %s284 = scalar_select %p283, %s280, 31
        %s285 = smul.addr %s282, 32
        %s286 = sadd.s32 %s284, %s285
        %s287 = smul.addr %s286, 8
        %s288 = scalar_lea.vmem %s0, %s287
        %p289 = pneg %p56
        %p290 = pneg %p53
        %s291 = smul.u32 2, %s26
        %p292 = scmp.lt.s32.totalorder %s25, 1
        %s293 = scalar_select %p292, %s25, 1
        %p294 = scmp.lt.s32.totalorder %s291, 1
        %s295 = scalar_select %p294, %s291, 1
        %s296 = smul.addr %s293, 2
        %s297 = sadd.s32 %s295, %s296
        %s298 = smul.addr %s297, 8
        %s299 = scalar_lea.vmem %s1, %s298
        %p300 = pneg %p84
        %p301 = pneg %p81
        %s302 = smul.u32 2, %s26
        %p303 = scmp.lt.s32.totalorder %s25, 1
        %s304 = scalar_select %p303, %s25, 1
        %p305 = scmp.lt.s32.totalorder %s302, 1
        %s306 = scalar_select %p305, %s302, 1
        %s307 = smul.addr %s304, 2
        %s308 = sadd.s32 %s306, %s307
        %s309 = smul.addr %s308, 8
        %s310 = scalar_lea.vmem %s2, %s309
        %p311 = pneg %p112
        %p312 = pneg %p109
        %p313 = pneg %p133
        %p314 = pneg %p130
        %p315 = pneg %p154
        %p316 = pneg %p151
        %p317 = pneg %p180
        %p318 = pneg %p177
        %s319 = sand.u32 %s167, 1
        %s320 = scalar_lea.sflag [#allocation3], %s319
        %s321 = sand.u32 %s167, 1
        %s322 = smul.addr %s321, 8
        %s323 = scalar_lea.vmem [#allocation2], %s322
        %p324 = pneg %p206
        %p325 = pneg %p203
        %p326 = scmp.lt.s32.totalorder %s25, 1
        %s327 = scalar_select %p326, %s25, 1
        %s328 = smul.addr %s327, 8
        %s329 = scalar_lea.vmem %s6, %s328
        %s330 = smul.u32 8, %s25
        %s331 = smul.u32 32, %s26
        %p332 = scmp.lt.s32.totalorder %s330, 15
        %s333 = scalar_select %p332, %s330, 15
        %p334 = scmp.lt.s32.totalorder %s331, 31
        %s335 = scalar_select %p334, %s331, 31
        %s336 = smul.addr %s333, 32
        %s337 = sadd.s32 %s335, %s336
        %s338 = smul.addr %s337, 8
        %s339 = scalar_lea.vmem %s0, %s338
        %s340 = smul.u32 8, %s25
        %s341 = smul.u32 32, %s26
        %s342 = smul.u32 2, %s26
        %p343 = scmp.lt.s32.totalorder %s25, 1
        %s344 = scalar_select %p343, %s25, 1
        %p345 = scmp.lt.s32.totalorder %s342, 1
        %s346 = scalar_select %p345, %s342, 1
        %s347 = smul.addr %s344, 2
        %s348 = sadd.s32 %s346, %s347
        %s349 = smul.addr %s348, 8
        %s350 = scalar_lea.vmem %s1, %s349
        %s351 = smul.u32 2, %s26
        %s352 = smul.u32 2, %s26
        %p353 = scmp.lt.s32.totalorder %s25, 1
        %s354 = scalar_select %p353, %s25, 1
        %p355 = scmp.lt.s32.totalorder %s352, 1
        %s356 = scalar_select %p355, %s352, 1
        %s357 = smul.addr %s354, 2
        %s358 = sadd.s32 %s356, %s357
        %s359 = smul.addr %s358, 8
        %s360 = scalar_lea.vmem %s2, %s359
        %s361 = smul.u32 2, %s26
        %p362 = scmp.lt.s32.totalorder %s25, 1
        %s363 = scalar_select %p362, %s25, 1
        %s364 = smul.addr %s363, 8
        %s365 = scalar_lea.vmem %s6, %s364
        %p366 = scmp.eq.s32.totalorder %s26, 0
        // Predicated region
        $region41: #{tpu_custom_call.1} parent=39 // pred_check
          %p367 = pneg %p366
        $region42: #{tpu_custom_call.1} parent=39 // pred_check_branch
          %369 = sbr.rel (%p367) target = $region44
        $region43: #{tpu_custom_call.1} parent=39 // pred_region
          %vm370 = vcmask 130048
          %371 = vst.msk [vmem:[%s323] sm:$0xff] %vm370, 0.0
          %vm372 = vcmask 7168
          %373 = vst.msk [vmem:[%s365] sm:$0xff] %vm372, 0.0
        $region44: #{tpu_custom_call.1} parent=39 // pred_fallthru
          _
        %v374 = vld [vmem:[%s339] sm:$0xff]
        %v375 = vld [vmem:[%s339 + $0x8] sm:$0xff]
        %v376 = vld [vmem:[%s339 + $0x10] sm:$0xff]
        %v377 = vld [vmem:[%s339 + $0x18] sm:$0xff]
        %v378 = vld [vmem:[%s339 + $0x20] sm:$0xff]
        %v379 = vld [vmem:[%s339 + $0x28] sm:$0xff]
        %v380 = vld [vmem:[%s339 + $0x30] sm:$0xff]
        %v381 = vld [vmem:[%s339 + $0x38] sm:$0xff]
        %v382 = vld [vmem:[%s339 + $0x40] sm:$0xff]
        %v383 = vld [vmem:[%s339 + $0x48] sm:$0xff]
        %v384 = vld [vmem:[%s339 + $0x50] sm:$0xff]
        %v385 = vld [vmem:[%s339 + $0x58] sm:$0xff]
        %v386 = vld [vmem:[%s339 + $0x60] sm:$0xff]
        %v387 = vld [vmem:[%s339 + $0x68] sm:$0xff]
        %v388 = vld [vmem:[%s339 + $0x70] sm:$0xff]
        %v389 = vld [vmem:[%s339 + $0x78] sm:$0xff]
        %v390 = vld [vmem:[%s339 + $0x80] sm:$0xff]
        %v391 = vld [vmem:[%s339 + $0x88] sm:$0xff]
        %v392 = vld [vmem:[%s339 + $0x90] sm:$0xff]
        %v393 = vld [vmem:[%s339 + $0x98] sm:$0xff]
        %v394 = vld [vmem:[%s339 + $0xa0] sm:$0xff]
        %v395 = vld [vmem:[%s339 + $0xa8] sm:$0xff]
        %v396 = vld [vmem:[%s339 + $0xb0] sm:$0xff]
        %v397 = vld [vmem:[%s339 + $0xb8] sm:$0xff]
        %v398 = vld [vmem:[%s339 + $0xc0] sm:$0xff]
        %v399 = vld [vmem:[%s339 + $0xc8] sm:$0xff]
        %v400 = vld [vmem:[%s339 + $0xd0] sm:$0xff]
        %v401 = vld [vmem:[%s339 + $0xd8] sm:$0xff]
        %v402 = vld [vmem:[%s339 + $0xe0] sm:$0xff]
        %v403 = vld [vmem:[%s339 + $0xe8] sm:$0xff]
        %v404 = vld [vmem:[%s339 + $0xf0] sm:$0xff]
        %v405 = vld [vmem:[%s339 + $0xf8] sm:$0xff]
        %v406 = vld [vmem:[%s339 + $0x100] sm:$0xff]
        %v407 = vld [vmem:[%s339 + $0x108] sm:$0xff]
        %v408 = vld [vmem:[%s339 + $0x110] sm:$0xff]
        %v409 = vld [vmem:[%s339 + $0x118] sm:$0xff]
        %v410 = vld [vmem:[%s339 + $0x120] sm:$0xff]
        %v411 = vld [vmem:[%s339 + $0x128] sm:$0xff]
        %v412 = vld [vmem:[%s339 + $0x130] sm:$0xff]
        %v413 = vld [vmem:[%s339 + $0x138] sm:$0xff]
        %v414 = vld [vmem:[%s339 + $0x140] sm:$0xff]
        %v415 = vld [vmem:[%s339 + $0x148] sm:$0xff]
        %v416 = vld [vmem:[%s339 + $0x150] sm:$0xff]
        %v417 = vld [vmem:[%s339 + $0x158] sm:$0xff]
        %v418 = vld [vmem:[%s339 + $0x160] sm:$0xff]
        %v419 = vld [vmem:[%s339 + $0x168] sm:$0xff]
        %v420 = vld [vmem:[%s339 + $0x170] sm:$0xff]
        %v421 = vld [vmem:[%s339 + $0x178] sm:$0xff]
        %v422 = vld [vmem:[%s339 + $0x180] sm:$0xff]
        %v423 = vld [vmem:[%s339 + $0x188] sm:$0xff]
        %v424 = vld [vmem:[%s339 + $0x190] sm:$0xff]
        %v425 = vld [vmem:[%s339 + $0x198] sm:$0xff]
        %v426 = vld [vmem:[%s339 + $0x1a0] sm:$0xff]
        %v427 = vld [vmem:[%s339 + $0x1a8] sm:$0xff]
        %v428 = vld [vmem:[%s339 + $0x1b0] sm:$0xff]
        %v429 = vld [vmem:[%s339 + $0x1b8] sm:$0xff]
        %v430 = vld [vmem:[%s339 + $0x1c0] sm:$0xff]
        %v431 = vld [vmem:[%s339 + $0x1c8] sm:$0xff]
        %v432 = vld [vmem:[%s339 + $0x1d0] sm:$0xff]
        %v433 = vld [vmem:[%s339 + $0x1d8] sm:$0xff]
        %v434 = vld [vmem:[%s339 + $0x1e0] sm:$0xff]
        %v435 = vld [vmem:[%s339 + $0x1e8] sm:$0xff]
        %v436 = vld [vmem:[%s339 + $0x1f0] sm:$0xff]
        %v437 = vld [vmem:[%s339 + $0x1f8] sm:$0xff]
        %v438 = vld [vmem:[%s339 + $0x200] sm:$0xff]
        %v439 = vld [vmem:[%s339 + $0x208] sm:$0xff]
        %v440 = vld [vmem:[%s339 + $0x210] sm:$0xff]
        %v441 = vld [vmem:[%s339 + $0x218] sm:$0xff]
        %v442 = vld [vmem:[%s339 + $0x220] sm:$0xff]
        %v443 = vld [vmem:[%s339 + $0x228] sm:$0xff]
        %v444 = vld [vmem:[%s339 + $0x230] sm:$0xff]
        %v445 = vld [vmem:[%s339 + $0x238] sm:$0xff]
        %v446 = vld [vmem:[%s339 + $0x240] sm:$0xff]
        %v447 = vld [vmem:[%s339 + $0x248] sm:$0xff]
        %v448 = vld [vmem:[%s339 + $0x250] sm:$0xff]
        %v449 = vld [vmem:[%s339 + $0x258] sm:$0xff]
        %v450 = vld [vmem:[%s339 + $0x260] sm:$0xff]
        %v451 = vld [vmem:[%s339 + $0x268] sm:$0xff]
        %v452 = vld [vmem:[%s339 + $0x270] sm:$0xff]
        %v453 = vld [vmem:[%s339 + $0x278] sm:$0xff]
        %v454 = vld [vmem:[%s339 + $0x280] sm:$0xff]
        %v455 = vld [vmem:[%s339 + $0x288] sm:$0xff]
        %v456 = vld [vmem:[%s339 + $0x290] sm:$0xff]
        %v457 = vld [vmem:[%s339 + $0x298] sm:$0xff]
        %v458 = vld [vmem:[%s339 + $0x2a0] sm:$0xff]
        %v459 = vld [vmem:[%s339 + $0x2a8] sm:$0xff]
        %v460 = vld [vmem:[%s339 + $0x2b0] sm:$0xff]
        %v461 = vld [vmem:[%s339 + $0x2b8] sm:$0xff]
        %v462 = vld [vmem:[%s339 + $0x2c0] sm:$0xff]
        %v463 = vld [vmem:[%s339 + $0x2c8] sm:$0xff]
        %v464 = vld [vmem:[%s339 + $0x2d0] sm:$0xff]
        %v465 = vld [vmem:[%s339 + $0x2d8] sm:$0xff]
        %v466 = vld [vmem:[%s339 + $0x2e0] sm:$0xff]
        %v467 = vld [vmem:[%s339 + $0x2e8] sm:$0xff]
        %v468 = vld [vmem:[%s339 + $0x2f0] sm:$0xff]
        %v469 = vld [vmem:[%s339 + $0x2f8] sm:$0xff]
        %v470 = vld [vmem:[%s339 + $0x300] sm:$0xff]
        %v471 = vld [vmem:[%s339 + $0x308] sm:$0xff]
        %v472 = vld [vmem:[%s339 + $0x310] sm:$0xff]
        %v473 = vld [vmem:[%s339 + $0x318] sm:$0xff]
        %v474 = vld [vmem:[%s339 + $0x320] sm:$0xff]
        %v475 = vld [vmem:[%s339 + $0x328] sm:$0xff]
        %v476 = vld [vmem:[%s339 + $0x330] sm:$0xff]
        %v477 = vld [vmem:[%s339 + $0x338] sm:$0xff]
        %v478 = vld [vmem:[%s339 + $0x340] sm:$0xff]
        %v479 = vld [vmem:[%s339 + $0x348] sm:$0xff]
        %v480 = vld [vmem:[%s339 + $0x350] sm:$0xff]
        %v481 = vld [vmem:[%s339 + $0x358] sm:$0xff]
        %v482 = vld [vmem:[%s339 + $0x360] sm:$0xff]
        %v483 = vld [vmem:[%s339 + $0x368] sm:$0xff]
        %v484 = vld [vmem:[%s339 + $0x370] sm:$0xff]
        %v485 = vld [vmem:[%s339 + $0x378] sm:$0xff]
        %v486 = vld [vmem:[%s339 + $0x380] sm:$0xff]
        %v487 = vld [vmem:[%s339 + $0x388] sm:$0xff]
        %v488 = vld [vmem:[%s339 + $0x390] sm:$0xff]
        %v489 = vld [vmem:[%s339 + $0x398] sm:$0xff]
        %v490 = vld [vmem:[%s339 + $0x3a0] sm:$0xff]
        %v491 = vld [vmem:[%s339 + $0x3a8] sm:$0xff]
        %v492 = vld [vmem:[%s339 + $0x3b0] sm:$0xff]
        %v493 = vld [vmem:[%s339 + $0x3b8] sm:$0xff]
        %v494 = vld [vmem:[%s339 + $0x3c0] sm:$0xff]
        %v495 = vld [vmem:[%s339 + $0x3c8] sm:$0xff]
        %v496 = vld [vmem:[%s339 + $0x3d0] sm:$0xff]
        %v497 = vld [vmem:[%s339 + $0x3d8] sm:$0xff]
        %v498 = vld [vmem:[%s339 + $0x3e0] sm:$0xff]
        %v499 = vld [vmem:[%s339 + $0x3e8] sm:$0xff]
        %v500 = vld [vmem:[%s339 + $0x3f0] sm:$0xff]
        %v501 = vld [vmem:[%s339 + $0x3f8] sm:$0xff]
        %v502 = vld [vmem:[%s339 + $0x400] sm:$0xff]
        %v503 = vld [vmem:[%s339 + $0x408] sm:$0xff]
        %v504 = vld [vmem:[%s339 + $0x410] sm:$0xff]
        %v505 = vld [vmem:[%s339 + $0x418] sm:$0xff]
        %v506 = vld [vmem:[%s339 + $0x420] sm:$0xff]
        %v507 = vld [vmem:[%s339 + $0x428] sm:$0xff]
        %v508 = vld [vmem:[%s339 + $0x430] sm:$0xff]
        %v509 = vld [vmem:[%s339 + $0x438] sm:$0xff]
        %v510 = vld [vmem:[%s339 + $0x440] sm:$0xff]
        %v511 = vld [vmem:[%s339 + $0x448] sm:$0xff]
        %v512 = vld [vmem:[%s339 + $0x450] sm:$0xff]
        %v513 = vld [vmem:[%s339 + $0x458] sm:$0xff]
        %v514 = vld [vmem:[%s339 + $0x460] sm:$0xff]
        %v515 = vld [vmem:[%s339 + $0x468] sm:$0xff]
        %v516 = vld [vmem:[%s339 + $0x470] sm:$0xff]
        %v517 = vld [vmem:[%s339 + $0x478] sm:$0xff]
        %v518 = vld [vmem:[%s339 + $0x480] sm:$0xff]
        %v519 = vld [vmem:[%s339 + $0x488] sm:$0xff]
        %v520 = vld [vmem:[%s339 + $0x490] sm:$0xff]
        %v521 = vld [vmem:[%s339 + $0x498] sm:$0xff]
        %v522 = vld [vmem:[%s339 + $0x4a0] sm:$0xff]
        %v523 = vld [vmem:[%s339 + $0x4a8] sm:$0xff]
        %v524 = vld [vmem:[%s339 + $0x4b0] sm:$0xff]
        %v525 = vld [vmem:[%s339 + $0x4b8] sm:$0xff]
        %v526 = vld [vmem:[%s339 + $0x4c0] sm:$0xff]
        %v527 = vld [vmem:[%s339 + $0x4c8] sm:$0xff]
        %v528 = vld [vmem:[%s339 + $0x4d0] sm:$0xff]
        %v529 = vld [vmem:[%s339 + $0x4d8] sm:$0xff]
        %v530 = vld [vmem:[%s339 + $0x4e0] sm:$0xff]
        %v531 = vld [vmem:[%s339 + $0x4e8] sm:$0xff]
        %v532 = vld [vmem:[%s339 + $0x4f0] sm:$0xff]
        %v533 = vld [vmem:[%s339 + $0x4f8] sm:$0xff]
        %v534 = vld [vmem:[%s339 + $0x500] sm:$0xff]
        %v535 = vld [vmem:[%s339 + $0x508] sm:$0xff]
        %v536 = vld [vmem:[%s339 + $0x510] sm:$0xff]
        %v537 = vld [vmem:[%s339 + $0x518] sm:$0xff]
        %v538 = vld [vmem:[%s339 + $0x520] sm:$0xff]
        %v539 = vld [vmem:[%s339 + $0x528] sm:$0xff]
        %v540 = vld [vmem:[%s339 + $0x530] sm:$0xff]
        %v541 = vld [vmem:[%s339 + $0x538] sm:$0xff]
        %v542 = vld [vmem:[%s339 + $0x540] sm:$0xff]
        %v543 = vld [vmem:[%s339 + $0x548] sm:$0xff]
        %v544 = vld [vmem:[%s339 + $0x550] sm:$0xff]
        %v545 = vld [vmem:[%s339 + $0x558] sm:$0xff]
        %v546 = vld [vmem:[%s339 + $0x560] sm:$0xff]
        %v547 = vld [vmem:[%s339 + $0x568] sm:$0xff]
        %v548 = vld [vmem:[%s339 + $0x570] sm:$0xff]
        %v549 = vld [vmem:[%s339 + $0x578] sm:$0xff]
        %v550 = vld [vmem:[%s339 + $0x580] sm:$0xff]
        %v551 = vld [vmem:[%s339 + $0x588] sm:$0xff]
        %v552 = vld [vmem:[%s339 + $0x590] sm:$0xff]
        %v553 = vld [vmem:[%s339 + $0x598] sm:$0xff]
        %v554 = vld [vmem:[%s339 + $0x5a0] sm:$0xff]
        %v555 = vld [vmem:[%s339 + $0x5a8] sm:$0xff]
        %v556 = vld [vmem:[%s339 + $0x5b0] sm:$0xff]
        %v557 = vld [vmem:[%s339 + $0x5b8] sm:$0xff]
        %v558 = vld [vmem:[%s339 + $0x5c0] sm:$0xff]
        %v559 = vld [vmem:[%s339 + $0x5c8] sm:$0xff]
        %v560 = vld [vmem:[%s339 + $0x5d0] sm:$0xff]
        %v561 = vld [vmem:[%s339 + $0x5d8] sm:$0xff]
        %v562 = vld [vmem:[%s339 + $0x5e0] sm:$0xff]
        %v563 = vld [vmem:[%s339 + $0x5e8] sm:$0xff]
        %v564 = vld [vmem:[%s339 + $0x5f0] sm:$0xff]
        %v565 = vld [vmem:[%s339 + $0x5f8] sm:$0xff]
        %v566 = vld [vmem:[%s339 + $0x600] sm:$0xff]
        %v567 = vld [vmem:[%s339 + $0x608] sm:$0xff]
        %v568 = vld [vmem:[%s339 + $0x610] sm:$0xff]
        %v569 = vld [vmem:[%s339 + $0x618] sm:$0xff]
        %v570 = vld [vmem:[%s339 + $0x620] sm:$0xff]
        %v571 = vld [vmem:[%s339 + $0x628] sm:$0xff]
        %v572 = vld [vmem:[%s339 + $0x630] sm:$0xff]
        %v573 = vld [vmem:[%s339 + $0x638] sm:$0xff]
        %v574 = vld [vmem:[%s339 + $0x640] sm:$0xff]
        %v575 = vld [vmem:[%s339 + $0x648] sm:$0xff]
        %v576 = vld [vmem:[%s339 + $0x650] sm:$0xff]
        %v577 = vld [vmem:[%s339 + $0x658] sm:$0xff]
        %v578 = vld [vmem:[%s339 + $0x660] sm:$0xff]
        %v579 = vld [vmem:[%s339 + $0x668] sm:$0xff]
        %v580 = vld [vmem:[%s339 + $0x670] sm:$0xff]
        %v581 = vld [vmem:[%s339 + $0x678] sm:$0xff]
        %v582 = vld [vmem:[%s339 + $0x680] sm:$0xff]
        %v583 = vld [vmem:[%s339 + $0x688] sm:$0xff]
        %v584 = vld [vmem:[%s339 + $0x690] sm:$0xff]
        %v585 = vld [vmem:[%s339 + $0x698] sm:$0xff]
        %v586 = vld [vmem:[%s339 + $0x6a0] sm:$0xff]
        %v587 = vld [vmem:[%s339 + $0x6a8] sm:$0xff]
        %v588 = vld [vmem:[%s339 + $0x6b0] sm:$0xff]
        %v589 = vld [vmem:[%s339 + $0x6b8] sm:$0xff]
        %v590 = vld [vmem:[%s339 + $0x6c0] sm:$0xff]
        %v591 = vld [vmem:[%s339 + $0x6c8] sm:$0xff]
        %v592 = vld [vmem:[%s339 + $0x6d0] sm:$0xff]
        %v593 = vld [vmem:[%s339 + $0x6d8] sm:$0xff]
        %v594 = vld [vmem:[%s339 + $0x6e0] sm:$0xff]
        %v595 = vld [vmem:[%s339 + $0x6e8] sm:$0xff]
        %v596 = vld [vmem:[%s339 + $0x6f0] sm:$0xff]
        %v597 = vld [vmem:[%s339 + $0x6f8] sm:$0xff]
        %v598 = vld [vmem:[%s339 + $0x700] sm:$0xff]
        %v599 = vld [vmem:[%s339 + $0x708] sm:$0xff]
        %v600 = vld [vmem:[%s339 + $0x710] sm:$0xff]
        %v601 = vld [vmem:[%s339 + $0x718] sm:$0xff]
        %v602 = vld [vmem:[%s339 + $0x720] sm:$0xff]
        %v603 = vld [vmem:[%s339 + $0x728] sm:$0xff]
        %v604 = vld [vmem:[%s339 + $0x730] sm:$0xff]
        %v605 = vld [vmem:[%s339 + $0x738] sm:$0xff]
        %v606 = vld [vmem:[%s339 + $0x740] sm:$0xff]
        %v607 = vld [vmem:[%s339 + $0x748] sm:$0xff]
        %v608 = vld [vmem:[%s339 + $0x750] sm:$0xff]
        %v609 = vld [vmem:[%s339 + $0x758] sm:$0xff]
        %v610 = vld [vmem:[%s339 + $0x760] sm:$0xff]
        %v611 = vld [vmem:[%s339 + $0x768] sm:$0xff]
        %v612 = vld [vmem:[%s339 + $0x770] sm:$0xff]
        %v613 = vld [vmem:[%s339 + $0x778] sm:$0xff]
        %v614 = vld [vmem:[%s339 + $0x780] sm:$0xff]
        %v615 = vld [vmem:[%s339 + $0x788] sm:$0xff]
        %v616 = vld [vmem:[%s339 + $0x790] sm:$0xff]
        %v617 = vld [vmem:[%s339 + $0x798] sm:$0xff]
        %v618 = vld [vmem:[%s339 + $0x7a0] sm:$0xff]
        %v619 = vld [vmem:[%s339 + $0x7a8] sm:$0xff]
        %v620 = vld [vmem:[%s339 + $0x7b0] sm:$0xff]
        %v621 = vld [vmem:[%s339 + $0x7b8] sm:$0xff]
        %v622 = vld [vmem:[%s339 + $0x7c0] sm:$0xff]
        %v623 = vld [vmem:[%s339 + $0x7c8] sm:$0xff]
        %v624 = vld [vmem:[%s339 + $0x7d0] sm:$0xff]
        %v625 = vld [vmem:[%s339 + $0x7d8] sm:$0xff]
        %v626 = vld [vmem:[%s339 + $0x7e0] sm:$0xff]
        %v627 = vld [vmem:[%s339 + $0x7e8] sm:$0xff]
        %v628 = vld [vmem:[%s339 + $0x7f0] sm:$0xff]
        %v629 = vld [vmem:[%s339 + $0x7f8] sm:$0xff]
        %v630 = vld [vmem:[%s350] sm:$0xff]
        %v631 = vld [vmem:[%s350 + $0x8] sm:$0xff]
        %v632 = vld [vmem:[%s360] sm:$0xff]
        %v633 = vld [vmem:[%s360 + $0x8] sm:$0xff]
        %v634 = vcvt.s32.f32 %v632
        %v635 = vcvt.s32.f32 %v633
        %v636 = vlaneseq
        %v637 = vand.u32 %v636, 127
        %v638 = vperm.slane %v630, 0
        %v639 = vlaneseq
        %v640 = vshrl.u32 %v639, 7
        %642 = vset.pattern.permute.xlu0 %v640
        %643 = vperm.xlu0 %642, %v638
        %v644 = vpop.permute.xlu0 %643
        %v645 = vlaneseq
        %v646 = vshrl.u32 %v645, 7
        %v647 = vadd.s32 %v646, 8
        %648 = vset.pattern.permute.xlu0 %v647
        %649 = vperm.xlu0 %648, %v638
        %v650 = vpop.permute.xlu0 %649
        %v651 = vlaneseq
        %v652 = vshrl.u32 %v651, 7
        %v653 = vadd.s32 %v652, 16
        %654 = vset.pattern.permute.xlu0 %v653
        %655 = vperm.xlu0 %654, %v638
        %v656 = vpop.permute.xlu0 %655
        %v657 = vlaneseq
        %v658 = vshrl.u32 %v657, 7
        %v659 = vadd.s32 %v658, 24
        %660 = vset.pattern.permute.xlu0 %v659
        %661 = vperm.xlu0 %660, %v638
        %v662 = vpop.permute.xlu0 %661
        %v663 = vlaneseq
        %v664 = vshrl.u32 %v663, 7
        %v665 = vadd.s32 %v664, 32
        %666 = vset.pattern.permute.xlu0 %v665
        %667 = vperm.xlu0 %666, %v638
        %v668 = vpop.permute.xlu0 %667
        %v669 = vlaneseq
        %v670 = vshrl.u32 %v669, 7
        %v671 = vadd.s32 %v670, 40
        %672 = vset.pattern.permute.xlu0 %v671
        %673 = vperm.xlu0 %672, %v638
        %v674 = vpop.permute.xlu0 %673
        %v675 = vlaneseq
        %v676 = vshrl.u32 %v675, 7
        %v677 = vadd.s32 %v676, 48
        %678 = vset.pattern.permute.xlu0 %v677
        %679 = vperm.xlu0 %678, %v638
        %v680 = vpop.permute.xlu0 %679
        %v681 = vlaneseq
        %v682 = vshrl.u32 %v681, 7
        %v683 = vadd.s32 %v682, 56
        %684 = vset.pattern.permute.xlu0 %v683
        %685 = vperm.xlu0 %684, %v638
        %v686 = vpop.permute.xlu0 %685
        %v687 = vlaneseq
        %v688 = vshrl.u32 %v687, 7
        %v689 = vadd.s32 %v688, 64
        %690 = vset.pattern.permute.xlu0 %v689
        %691 = vperm.xlu0 %690, %v638
        %v692 = vpop.permute.xlu0 %691
        %v693 = vlaneseq
        %v694 = vshrl.u32 %v693, 7
        %v695 = vadd.s32 %v694, 72
        %696 = vset.pattern.permute.xlu0 %v695
        %697 = vperm.xlu0 %696, %v638
        %v698 = vpop.permute.xlu0 %697
        %v699 = vlaneseq
        %v700 = vshrl.u32 %v699, 7
        %v701 = vadd.s32 %v700, 80
        %702 = vset.pattern.permute.xlu0 %v701
        %703 = vperm.xlu0 %702, %v638
        %v704 = vpop.permute.xlu0 %703
        %v705 = vlaneseq
        %v706 = vshrl.u32 %v705, 7
        %v707 = vadd.s32 %v706, 88
        %708 = vset.pattern.permute.xlu0 %v707
        %709 = vperm.xlu0 %708, %v638
        %v710 = vpop.permute.xlu0 %709
        %v711 = vlaneseq
        %v712 = vshrl.u32 %v711, 7
        %v713 = vadd.s32 %v712, 96
        %714 = vset.pattern.permute.xlu0 %v713
        %715 = vperm.xlu0 %714, %v638
        %v716 = vpop.permute.xlu0 %715
        %v717 = vlaneseq
        %v718 = vshrl.u32 %v717, 7
        %v719 = vadd.s32 %v718, 104
        %720 = vset.pattern.permute.xlu0 %v719
        %721 = vperm.xlu0 %720, %v638
        %v722 = vpop.permute.xlu0 %721
        %v723 = vlaneseq
        %v724 = vshrl.u32 %v723, 7
        %v725 = vadd.s32 %v724, 112
        %726 = vset.pattern.permute.xlu0 %v725
        %727 = vperm.xlu0 %726, %v638
        %v728 = vpop.permute.xlu0 %727
        %v729 = vlaneseq
        %v730 = vshrl.u32 %v729, 7
        %v731 = vadd.s32 %v730, 120
        %732 = vset.pattern.permute.xlu0 %v731
        %733 = vperm.xlu0 %732, %v638
        %v734 = vpop.permute.xlu0 %733
        %v735 = vperm.slane %v631, 0
        %v736 = vlaneseq
        %v737 = vshrl.u32 %v736, 7
        %739 = vset.pattern.permute.xlu0 %v737
        %740 = vperm.xlu0 %739, %v735
        %v741 = vpop.permute.xlu0 %740
        %v742 = vlaneseq
        %v743 = vshrl.u32 %v742, 7
        %v744 = vadd.s32 %v743, 8
        %745 = vset.pattern.permute.xlu0 %v744
        %746 = vperm.xlu0 %745, %v735
        %v747 = vpop.permute.xlu0 %746
        %v748 = vlaneseq
        %v749 = vshrl.u32 %v748, 7
        %v750 = vadd.s32 %v749, 16
        %751 = vset.pattern.permute.xlu0 %v750
        %752 = vperm.xlu0 %751, %v735
        %v753 = vpop.permute.xlu0 %752
        %v754 = vlaneseq
        %v755 = vshrl.u32 %v754, 7
        %v756 = vadd.s32 %v755, 24
        %757 = vset.pattern.permute.xlu0 %v756
        %758 = vperm.xlu0 %757, %v735
        %v759 = vpop.permute.xlu0 %758
        %v760 = vlaneseq
        %v761 = vshrl.u32 %v760, 7
        %v762 = vadd.s32 %v761, 32
        %763 = vset.pattern.permute.xlu0 %v762
        %764 = vperm.xlu0 %763, %v735
        %v765 = vpop.permute.xlu0 %764
        %v766 = vlaneseq
        %v767 = vshrl.u32 %v766, 7
        %v768 = vadd.s32 %v767, 40
        %769 = vset.pattern.permute.xlu0 %v768
        %770 = vperm.xlu0 %769, %v735
        %v771 = vpop.permute.xlu0 %770
        %v772 = vlaneseq
        %v773 = vshrl.u32 %v772, 7
        %v774 = vadd.s32 %v773, 48
        %775 = vset.pattern.permute.xlu0 %v774
        %776 = vperm.xlu0 %775, %v735
        %v777 = vpop.permute.xlu0 %776
        %v778 = vlaneseq
        %v779 = vshrl.u32 %v778, 7
        %v780 = vadd.s32 %v779, 56
        %781 = vset.pattern.permute.xlu0 %v780
        %782 = vperm.xlu0 %781, %v735
        %v783 = vpop.permute.xlu0 %782
        %v784 = vlaneseq
        %v785 = vshrl.u32 %v784, 7
        %v786 = vadd.s32 %v785, 64
        %787 = vset.pattern.permute.xlu0 %v786
        %788 = vperm.xlu0 %787, %v735
        %v789 = vpop.permute.xlu0 %788
        %v790 = vlaneseq
        %v791 = vshrl.u32 %v790, 7
        %v792 = vadd.s32 %v791, 72
        %793 = vset.pattern.permute.xlu0 %v792
        %794 = vperm.xlu0 %793, %v735
        %v795 = vpop.permute.xlu0 %794
        %v796 = vlaneseq
        %v797 = vshrl.u32 %v796, 7
        %v798 = vadd.s32 %v797, 80
        %799 = vset.pattern.permute.xlu0 %v798
        %800 = vperm.xlu0 %799, %v735
        %v801 = vpop.permute.xlu0 %800
        %v802 = vlaneseq
        %v803 = vshrl.u32 %v802, 7
        %v804 = vadd.s32 %v803, 88
        %805 = vset.pattern.permute.xlu0 %v804
        %806 = vperm.xlu0 %805, %v735
        %v807 = vpop.permute.xlu0 %806
        %v808 = vlaneseq
        %v809 = vshrl.u32 %v808, 7
        %v810 = vadd.s32 %v809, 96
        %811 = vset.pattern.permute.xlu0 %v810
        %812 = vperm.xlu0 %811, %v735
        %v813 = vpop.permute.xlu0 %812
        %v814 = vlaneseq
        %v815 = vshrl.u32 %v814, 7
        %v816 = vadd.s32 %v815, 104
        %817 = vset.pattern.permute.xlu0 %v816
        %818 = vperm.xlu0 %817, %v735
        %v819 = vpop.permute.xlu0 %818
        %v820 = vlaneseq
        %v821 = vshrl.u32 %v820, 7
        %v822 = vadd.s32 %v821, 112
        %823 = vset.pattern.permute.xlu0 %v822
        %824 = vperm.xlu0 %823, %v735
        %v825 = vpop.permute.xlu0 %824
        %v826 = vlaneseq
        %v827 = vshrl.u32 %v826, 7
        %v828 = vadd.s32 %v827, 120
        %829 = vset.pattern.permute.xlu0 %v828
        %830 = vperm.xlu0 %829, %v735
        %v831 = vpop.permute.xlu0 %830
        %v832 = vperm.slane %v630, 1
        %v833 = vlaneseq
        %v834 = vshrl.u32 %v833, 7
        %836 = vset.pattern.permute.xlu0 %v834
        %837 = vperm.xlu0 %836, %v832
        %v838 = vpop.permute.xlu0 %837
        %v839 = vlaneseq
        %v840 = vshrl.u32 %v839, 7
        %v841 = vadd.s32 %v840, 8
        %842 = vset.pattern.permute.xlu0 %v841
        %843 = vperm.xlu0 %842, %v832
        %v844 = vpop.permute.xlu0 %843
        %v845 = vlaneseq
        %v846 = vshrl.u32 %v845, 7
        %v847 = vadd.s32 %v846, 16
        %848 = vset.pattern.permute.xlu0 %v847
        %849 = vperm.xlu0 %848, %v832
        %v850 = vpop.permute.xlu0 %849
        %v851 = vlaneseq
        %v852 = vshrl.u32 %v851, 7
        %v853 = vadd.s32 %v852, 24
        %854 = vset.pattern.permute.xlu0 %v853
        %855 = vperm.xlu0 %854, %v832
        %v856 = vpop.permute.xlu0 %855
        %v857 = vlaneseq
        %v858 = vshrl.u32 %v857, 7
        %v859 = vadd.s32 %v858, 32
        %860 = vset.pattern.permute.xlu0 %v859
        %861 = vperm.xlu0 %860, %v832
        %v862 = vpop.permute.xlu0 %861
        %v863 = vlaneseq
        %v864 = vshrl.u32 %v863, 7
        %v865 = vadd.s32 %v864, 40
        %866 = vset.pattern.permute.xlu0 %v865
        %867 = vperm.xlu0 %866, %v832
        %v868 = vpop.permute.xlu0 %867
        %v869 = vlaneseq
        %v870 = vshrl.u32 %v869, 7
        %v871 = vadd.s32 %v870, 48
        %872 = vset.pattern.permute.xlu0 %v871
        %873 = vperm.xlu0 %872, %v832
        %v874 = vpop.permute.xlu0 %873
        %v875 = vlaneseq
        %v876 = vshrl.u32 %v875, 7
        %v877 = vadd.s32 %v876, 56
        %878 = vset.pattern.permute.xlu0 %v877
        %879 = vperm.xlu0 %878, %v832
        %v880 = vpop.permute.xlu0 %879
        %v881 = vlaneseq
        %v882 = vshrl.u32 %v881, 7
        %v883 = vadd.s32 %v882, 64
        %884 = vset.pattern.permute.xlu0 %v883
        %885 = vperm.xlu0 %884, %v832
        %v886 = vpop.permute.xlu0 %885
        %v887 = vlaneseq
        %v888 = vshrl.u32 %v887, 7
        %v889 = vadd.s32 %v888, 72
        %890 = vset.pattern.permute.xlu0 %v889
        %891 = vperm.xlu0 %890, %v832
        %v892 = vpop.permute.xlu0 %891
        %v893 = vlaneseq
        %v894 = vshrl.u32 %v893, 7
        %v895 = vadd.s32 %v894, 80
        %896 = vset.pattern.permute.xlu0 %v895
        %897 = vperm.xlu0 %896, %v832
        %v898 = vpop.permute.xlu0 %897
        %v899 = vlaneseq
        %v900 = vshrl.u32 %v899, 7
        %v901 = vadd.s32 %v900, 88
        %902 = vset.pattern.permute.xlu0 %v901
        %903 = vperm.xlu0 %902, %v832
        %v904 = vpop.permute.xlu0 %903
        %v905 = vlaneseq
        %v906 = vshrl.u32 %v905, 7
        %v907 = vadd.s32 %v906, 96
        %908 = vset.pattern.permute.xlu0 %v907
        %909 = vperm.xlu0 %908, %v832
        %v910 = vpop.permute.xlu0 %909
        %v911 = vlaneseq
        %v912 = vshrl.u32 %v911, 7
        %v913 = vadd.s32 %v912, 104
        %914 = vset.pattern.permute.xlu0 %v913
        %915 = vperm.xlu0 %914, %v832
        %v916 = vpop.permute.xlu0 %915
        %v917 = vlaneseq
        %v918 = vshrl.u32 %v917, 7
        %v919 = vadd.s32 %v918, 112
        %920 = vset.pattern.permute.xlu0 %v919
        %921 = vperm.xlu0 %920, %v832
        %v922 = vpop.permute.xlu0 %921
        %v923 = vlaneseq
        %v924 = vshrl.u32 %v923, 7
        %v925 = vadd.s32 %v924, 120
        %926 = vset.pattern.permute.xlu0 %v925
        %927 = vperm.xlu0 %926, %v832
        %v928 = vpop.permute.xlu0 %927
        %v929 = vperm.slane %v631, 1
        %v930 = vlaneseq
        %v931 = vshrl.u32 %v930, 7
        %933 = vset.pattern.permute.xlu0 %v931
        %934 = vperm.xlu0 %933, %v929
        %v935 = vpop.permute.xlu0 %934
        %v936 = vlaneseq
        %v937 = vshrl.u32 %v936, 7
        %v938 = vadd.s32 %v937, 8
        %939 = vset.pattern.permute.xlu0 %v938
        %940 = vperm.xlu0 %939, %v929
        %v941 = vpop.permute.xlu0 %940
        %v942 = vlaneseq
        %v943 = vshrl.u32 %v942, 7
        %v944 = vadd.s32 %v943, 16
        %945 = vset.pattern.permute.xlu0 %v944
        %946 = vperm.xlu0 %945, %v929
        %v947 = vpop.permute.xlu0 %946
        %v948 = vlaneseq
        %v949 = vshrl.u32 %v948, 7
        %v950 = vadd.s32 %v949, 24
        %951 = vset.pattern.permute.xlu0 %v950
        %952 = vperm.xlu0 %951, %v929
        %v953 = vpop.permute.xlu0 %952
        %v954 = vlaneseq
        %v955 = vshrl.u32 %v954, 7
        %v956 = vadd.s32 %v955, 32
        %957 = vset.pattern.permute.xlu0 %v956
        %958 = vperm.xlu0 %957, %v929
        %v959 = vpop.permute.xlu0 %958
        %v960 = vlaneseq
        %v961 = vshrl.u32 %v960, 7
        %v962 = vadd.s32 %v961, 40
        %963 = vset.pattern.permute.xlu0 %v962
        %964 = vperm.xlu0 %963, %v929
        %v965 = vpop.permute.xlu0 %964
        %v966 = vlaneseq
        %v967 = vshrl.u32 %v966, 7
        %v968 = vadd.s32 %v967, 48
        %969 = vset.pattern.permute.xlu0 %v968
        %970 = vperm.xlu0 %969, %v929
        %v971 = vpop.permute.xlu0 %970
        %v972 = vlaneseq
        %v973 = vshrl.u32 %v972, 7
        %v974 = vadd.s32 %v973, 56
        %975 = vset.pattern.permute.xlu0 %v974
        %976 = vperm.xlu0 %975, %v929
        %v977 = vpop.permute.xlu0 %976
        %v978 = vlaneseq
        %v979 = vshrl.u32 %v978, 7
        %v980 = vadd.s32 %v979, 64
        %981 = vset.pattern.permute.xlu0 %v980
        %982 = vperm.xlu0 %981, %v929
        %v983 = vpop.permute.xlu0 %982
        %v984 = vlaneseq
        %v985 = vshrl.u32 %v984, 7
        %v986 = vadd.s32 %v985, 72
        %987 = vset.pattern.permute.xlu0 %v986
        %988 = vperm.xlu0 %987, %v929
        %v989 = vpop.permute.xlu0 %988
        %v990 = vlaneseq
        %v991 = vshrl.u32 %v990, 7
        %v992 = vadd.s32 %v991, 80
        %993 = vset.pattern.permute.xlu0 %v992
        %994 = vperm.xlu0 %993, %v929
        %v995 = vpop.permute.xlu0 %994
        %v996 = vlaneseq
        %v997 = vshrl.u32 %v996, 7
        %v998 = vadd.s32 %v997, 88
        %999 = vset.pattern.permute.xlu0 %v998
        %1000 = vperm.xlu0 %999, %v929
        %v1001 = vpop.permute.xlu0 %1000
        %v1002 = vlaneseq
        %v1003 = vshrl.u32 %v1002, 7
        %v1004 = vadd.s32 %v1003, 96
        %1005 = vset.pattern.permute.xlu0 %v1004
        %1006 = vperm.xlu0 %1005, %v929
        %v1007 = vpop.permute.xlu0 %1006
        %v1008 = vlaneseq
        %v1009 = vshrl.u32 %v1008, 7
        %v1010 = vadd.s32 %v1009, 104
        %1011 = vset.pattern.permute.xlu0 %v1010
        %1012 = vperm.xlu0 %1011, %v929
        %v1013 = vpop.permute.xlu0 %1012
        %v1014 = vlaneseq
        %v1015 = vshrl.u32 %v1014, 7
        %v1016 = vadd.s32 %v1015, 112
        %1017 = vset.pattern.permute.xlu0 %v1016
        %1018 = vperm.xlu0 %1017, %v929
        %v1019 = vpop.permute.xlu0 %1018
        %v1020 = vlaneseq
        %v1021 = vshrl.u32 %v1020, 7
        %v1022 = vadd.s32 %v1021, 120
        %1023 = vset.pattern.permute.xlu0 %v1022
        %1024 = vperm.xlu0 %1023, %v929
        %v1025 = vpop.permute.xlu0 %1024
        %v1026 = vperm.slane %v630, 2
        %v1027 = vlaneseq
        %v1028 = vshrl.u32 %v1027, 7
        %1030 = vset.pattern.permute.xlu0 %v1028
        %1031 = vperm.xlu0 %1030, %v1026
        %v1032 = vpop.permute.xlu0 %1031
        %v1033 = vlaneseq
        %v1034 = vshrl.u32 %v1033, 7
        %v1035 = vadd.s32 %v1034, 8
        %1036 = vset.pattern.permute.xlu0 %v1035
        %1037 = vperm.xlu0 %1036, %v1026
        %v1038 = vpop.permute.xlu0 %1037
        %v1039 = vlaneseq
        %v1040 = vshrl.u32 %v1039, 7
        %v1041 = vadd.s32 %v1040, 16
        %1042 = vset.pattern.permute.xlu0 %v1041
        %1043 = vperm.xlu0 %1042, %v1026
        %v1044 = vpop.permute.xlu0 %1043
        %v1045 = vlaneseq
        %v1046 = vshrl.u32 %v1045, 7
        %v1047 = vadd.s32 %v1046, 24
        %1048 = vset.pattern.permute.xlu0 %v1047
        %1049 = vperm.xlu0 %1048, %v1026
        %v1050 = vpop.permute.xlu0 %1049
        %v1051 = vlaneseq
        %v1052 = vshrl.u32 %v1051, 7
        %v1053 = vadd.s32 %v1052, 32
        %1054 = vset.pattern.permute.xlu0 %v1053
        %1055 = vperm.xlu0 %1054, %v1026
        %v1056 = vpop.permute.xlu0 %1055
        %v1057 = vlaneseq
        %v1058 = vshrl.u32 %v1057, 7
        %v1059 = vadd.s32 %v1058, 40
        %1060 = vset.pattern.permute.xlu0 %v1059
        %1061 = vperm.xlu0 %1060, %v1026
        %v1062 = vpop.permute.xlu0 %1061
        %v1063 = vlaneseq
        %v1064 = vshrl.u32 %v1063, 7
        %v1065 = vadd.s32 %v1064, 48
        %1066 = vset.pattern.permute.xlu0 %v1065
        %1067 = vperm.xlu0 %1066, %v1026
        %v1068 = vpop.permute.xlu0 %1067
        %v1069 = vlaneseq
        %v1070 = vshrl.u32 %v1069, 7
        %v1071 = vadd.s32 %v1070, 56
        %1072 = vset.pattern.permute.xlu0 %v1071
        %1073 = vperm.xlu0 %1072, %v1026
        %v1074 = vpop.permute.xlu0 %1073
        %v1075 = vlaneseq
        %v1076 = vshrl.u32 %v1075, 7
        %v1077 = vadd.s32 %v1076, 64
        %1078 = vset.pattern.permute.xlu0 %v1077
        %1079 = vperm.xlu0 %1078, %v1026
        %v1080 = vpop.permute.xlu0 %1079
        %v1081 = vlaneseq
        %v1082 = vshrl.u32 %v1081, 7
        %v1083 = vadd.s32 %v1082, 72
        %1084 = vset.pattern.permute.xlu0 %v1083
        %1085 = vperm.xlu0 %1084, %v1026
        %v1086 = vpop.permute.xlu0 %1085
        %v1087 = vlaneseq
        %v1088 = vshrl.u32 %v1087, 7
        %v1089 = vadd.s32 %v1088, 80
        %1090 = vset.pattern.permute.xlu0 %v1089
        %1091 = vperm.xlu0 %1090, %v1026
        %v1092 = vpop.permute.xlu0 %1091
        %v1093 = vlaneseq
        %v1094 = vshrl.u32 %v1093, 7
        %v1095 = vadd.s32 %v1094, 88
        %1096 = vset.pattern.permute.xlu0 %v1095
        %1097 = vperm.xlu0 %1096, %v1026
        %v1098 = vpop.permute.xlu0 %1097
        %v1099 = vlaneseq
        %v1100 = vshrl.u32 %v1099, 7
        %v1101 = vadd.s32 %v1100, 96
        %1102 = vset.pattern.permute.xlu0 %v1101
        %1103 = vperm.xlu0 %1102, %v1026
        %v1104 = vpop.permute.xlu0 %1103
        %v1105 = vlaneseq
        %v1106 = vshrl.u32 %v1105, 7
        %v1107 = vadd.s32 %v1106, 104
        %1108 = vset.pattern.permute.xlu0 %v1107
        %1109 = vperm.xlu0 %1108, %v1026
        %v1110 = vpop.permute.xlu0 %1109
        %v1111 = vlaneseq
        %v1112 = vshrl.u32 %v1111, 7
        %v1113 = vadd.s32 %v1112, 112
        %1114 = vset.pattern.permute.xlu0 %v1113
        %1115 = vperm.xlu0 %1114, %v1026
        %v1116 = vpop.permute.xlu0 %1115
        %v1117 = vlaneseq
        %v1118 = vshrl.u32 %v1117, 7
        %v1119 = vadd.s32 %v1118, 120
        %1120 = vset.pattern.permute.xlu0 %v1119
        %1121 = vperm.xlu0 %1120, %v1026
        %v1122 = vpop.permute.xlu0 %1121
        %v1123 = vperm.slane %v631, 2
        %v1124 = vlaneseq
        %v1125 = vshrl.u32 %v1124, 7
        %1127 = vset.pattern.permute.xlu0 %v1125
        %1128 = vperm.xlu0 %1127, %v1123
        %v1129 = vpop.permute.xlu0 %1128
        %v1130 = vlaneseq
        %v1131 = vshrl.u32 %v1130, 7
        %v1132 = vadd.s32 %v1131, 8
        %1133 = vset.pattern.permute.xlu0 %v1132
        %1134 = vperm.xlu0 %1133, %v1123
        %v1135 = vpop.permute.xlu0 %1134
        %v1136 = vlaneseq
        %v1137 = vshrl.u32 %v1136, 7
        %v1138 = vadd.s32 %v1137, 16
        %1139 = vset.pattern.permute.xlu0 %v1138
        %1140 = vperm.xlu0 %1139, %v1123
        %v1141 = vpop.permute.xlu0 %1140
        %v1142 = vlaneseq
        %v1143 = vshrl.u32 %v1142, 7
        %v1144 = vadd.s32 %v1143, 24
        %1145 = vset.pattern.permute.xlu0 %v1144
        %1146 = vperm.xlu0 %1145, %v1123
        %v1147 = vpop.permute.xlu0 %1146
        %v1148 = vlaneseq
        %v1149 = vshrl.u32 %v1148, 7
        %v1150 = vadd.s32 %v1149, 32
        %1151 = vset.pattern.permute.xlu0 %v1150
        %1152 = vperm.xlu0 %1151, %v1123
        %v1153 = vpop.permute.xlu0 %1152
        %v1154 = vlaneseq
        %v1155 = vshrl.u32 %v1154, 7
        %v1156 = vadd.s32 %v1155, 40
        %1157 = vset.pattern.permute.xlu0 %v1156
        %1158 = vperm.xlu0 %1157, %v1123
        %v1159 = vpop.permute.xlu0 %1158
        %v1160 = vlaneseq
        %v1161 = vshrl.u32 %v1160, 7
        %v1162 = vadd.s32 %v1161, 48
        %1163 = vset.pattern.permute.xlu0 %v1162
        %1164 = vperm.xlu0 %1163, %v1123
        %v1165 = vpop.permute.xlu0 %1164
        %v1166 = vlaneseq
        %v1167 = vshrl.u32 %v1166, 7
        %v1168 = vadd.s32 %v1167, 56
        %1169 = vset.pattern.permute.xlu0 %v1168
        %1170 = vperm.xlu0 %1169, %v1123
        %v1171 = vpop.permute.xlu0 %1170
        %v1172 = vlaneseq
        %v1173 = vshrl.u32 %v1172, 7
        %v1174 = vadd.s32 %v1173, 64
        %1175 = vset.pattern.permute.xlu0 %v1174
        %1176 = vperm.xlu0 %1175, %v1123
        %v1177 = vpop.permute.xlu0 %1176
        %v1178 = vlaneseq
        %v1179 = vshrl.u32 %v1178, 7
        %v1180 = vadd.s32 %v1179, 72
        %1181 = vset.pattern.permute.xlu0 %v1180
        %1182 = vperm.xlu0 %1181, %v1123
        %v1183 = vpop.permute.xlu0 %1182
        %v1184 = vlaneseq
        %v1185 = vshrl.u32 %v1184, 7
        %v1186 = vadd.s32 %v1185, 80
        %1187 = vset.pattern.permute.xlu0 %v1186
        %1188 = vperm.xlu0 %1187, %v1123
        %v1189 = vpop.permute.xlu0 %1188
        %v1190 = vlaneseq
        %v1191 = vshrl.u32 %v1190, 7
        %v1192 = vadd.s32 %v1191, 88
        %1193 = vset.pattern.permute.xlu0 %v1192
        %1194 = vperm.xlu0 %1193, %v1123
        %v1195 = vpop.permute.xlu0 %1194
        %v1196 = vlaneseq
        %v1197 = vshrl.u32 %v1196, 7
        %v1198 = vadd.s32 %v1197, 96
        %1199 = vset.pattern.permute.xlu0 %v1198
        %1200 = vperm.xlu0 %1199, %v1123
        %v1201 = vpop.permute.xlu0 %1200
        %v1202 = vlaneseq
        %v1203 = vshrl.u32 %v1202, 7
        %v1204 = vadd.s32 %v1203, 104
        %1205 = vset.pattern.permute.xlu0 %v1204
        %1206 = vperm.xlu0 %1205, %v1123
        %v1207 = vpop.permute.xlu0 %1206
        %v1208 = vlaneseq
        %v1209 = vshrl.u32 %v1208, 7
        %v1210 = vadd.s32 %v1209, 112
        %1211 = vset.pattern.permute.xlu0 %v1210
        %1212 = vperm.xlu0 %1211, %v1123
        %v1213 = vpop.permute.xlu0 %1212
        %v1214 = vlaneseq
        %v1215 = vshrl.u32 %v1214, 7
        %v1216 = vadd.s32 %v1215, 120
        %1217 = vset.pattern.permute.xlu0 %v1216
        %1218 = vperm.xlu0 %1217, %v1123
        %v1219 = vpop.permute.xlu0 %1218
        %v1220 = vperm.slane %v630, 3
        %v1221 = vlaneseq
        %v1222 = vshrl.u32 %v1221, 7
        %1224 = vset.pattern.permute.xlu0 %v1222
        %1225 = vperm.xlu0 %1224, %v1220
        %v1226 = vpop.permute.xlu0 %1225
        %v1227 = vlaneseq
        %v1228 = vshrl.u32 %v1227, 7
        %v1229 = vadd.s32 %v1228, 8
        %1230 = vset.pattern.permute.xlu0 %v1229
        %1231 = vperm.xlu0 %1230, %v1220
        %v1232 = vpop.permute.xlu0 %1231
        %v1233 = vlaneseq
        %v1234 = vshrl.u32 %v1233, 7
        %v1235 = vadd.s32 %v1234, 16
        %1236 = vset.pattern.permute.xlu0 %v1235
        %1237 = vperm.xlu0 %1236, %v1220
        %v1238 = vpop.permute.xlu0 %1237
        %v1239 = vlaneseq
        %v1240 = vshrl.u32 %v1239, 7
        %v1241 = vadd.s32 %v1240, 24
        %1242 = vset.pattern.permute.xlu0 %v1241
        %1243 = vperm.xlu0 %1242, %v1220
        %v1244 = vpop.permute.xlu0 %1243
        %v1245 = vlaneseq
        %v1246 = vshrl.u32 %v1245, 7
        %v1247 = vadd.s32 %v1246, 32
        %1248 = vset.pattern.permute.xlu0 %v1247
        %1249 = vperm.xlu0 %1248, %v1220
        %v1250 = vpop.permute.xlu0 %1249
        %v1251 = vlaneseq
        %v1252 = vshrl.u32 %v1251, 7
        %v1253 = vadd.s32 %v1252, 40
        %1254 = vset.pattern.permute.xlu0 %v1253
        %1255 = vperm.xlu0 %1254, %v1220
        %v1256 = vpop.permute.xlu0 %1255
        %v1257 = vlaneseq
        %v1258 = vshrl.u32 %v1257, 7
        %v1259 = vadd.s32 %v1258, 48
        %1260 = vset.pattern.permute.xlu0 %v1259
        %1261 = vperm.xlu0 %1260, %v1220
        %v1262 = vpop.permute.xlu0 %1261
        %v1263 = vlaneseq
        %v1264 = vshrl.u32 %v1263, 7
        %v1265 = vadd.s32 %v1264, 56
        %1266 = vset.pattern.permute.xlu0 %v1265
        %1267 = vperm.xlu0 %1266, %v1220
        %v1268 = vpop.permute.xlu0 %1267
        %v1269 = vlaneseq
        %v1270 = vshrl.u32 %v1269, 7
        %v1271 = vadd.s32 %v1270, 64
        %1272 = vset.pattern.permute.xlu0 %v1271
        %1273 = vperm.xlu0 %1272, %v1220
        %v1274 = vpop.permute.xlu0 %1273
        %v1275 = vlaneseq
        %v1276 = vshrl.u32 %v1275, 7
        %v1277 = vadd.s32 %v1276, 72
        %1278 = vset.pattern.permute.xlu0 %v1277
        %1279 = vperm.xlu0 %1278, %v1220
        %v1280 = vpop.permute.xlu0 %1279
        %v1281 = vlaneseq
        %v1282 = vshrl.u32 %v1281, 7
        %v1283 = vadd.s32 %v1282, 80
        %1284 = vset.pattern.permute.xlu0 %v1283
        %1285 = vperm.xlu0 %1284, %v1220
        %v1286 = vpop.permute.xlu0 %1285
        %v1287 = vlaneseq
        %v1288 = vshrl.u32 %v1287, 7
        %v1289 = vadd.s32 %v1288, 88
        %1290 = vset.pattern.permute.xlu0 %v1289
        %1291 = vperm.xlu0 %1290, %v1220
        %v1292 = vpop.permute.xlu0 %1291
        %v1293 = vlaneseq
        %v1294 = vshrl.u32 %v1293, 7
        %v1295 = vadd.s32 %v1294, 96
        %1296 = vset.pattern.permute.xlu0 %v1295
        %1297 = vperm.xlu0 %1296, %v1220
        %v1298 = vpop.permute.xlu0 %1297
        %v1299 = vlaneseq
        %v1300 = vshrl.u32 %v1299, 7
        %v1301 = vadd.s32 %v1300, 104
        %1302 = vset.pattern.permute.xlu0 %v1301
        %1303 = vperm.xlu0 %1302, %v1220
        %v1304 = vpop.permute.xlu0 %1303
        %v1305 = vlaneseq
        %v1306 = vshrl.u32 %v1305, 7
        %v1307 = vadd.s32 %v1306, 112
        %1308 = vset.pattern.permute.xlu0 %v1307
        %1309 = vperm.xlu0 %1308, %v1220
        %v1310 = vpop.permute.xlu0 %1309
        %v1311 = vlaneseq
        %v1312 = vshrl.u32 %v1311, 7
        %v1313 = vadd.s32 %v1312, 120
        %1314 = vset.pattern.permute.xlu0 %v1313
        %1315 = vperm.xlu0 %1314, %v1220
        %v1316 = vpop.permute.xlu0 %1315
        %v1317 = vperm.slane %v631, 3
        %v1318 = vlaneseq
        %v1319 = vshrl.u32 %v1318, 7
        %1321 = vset.pattern.permute.xlu0 %v1319
        %1322 = vperm.xlu0 %1321, %v1317
        %v1323 = vpop.permute.xlu0 %1322
        %v1324 = vlaneseq
        %v1325 = vshrl.u32 %v1324, 7
        %v1326 = vadd.s32 %v1325, 8
        %1327 = vset.pattern.permute.xlu0 %v1326
        %1328 = vperm.xlu0 %1327, %v1317
        %v1329 = vpop.permute.xlu0 %1328
        %v1330 = vlaneseq
        %v1331 = vshrl.u32 %v1330, 7
        %v1332 = vadd.s32 %v1331, 16
        %1333 = vset.pattern.permute.xlu0 %v1332
        %1334 = vperm.xlu0 %1333, %v1317
        %v1335 = vpop.permute.xlu0 %1334
        %v1336 = vlaneseq
        %v1337 = vshrl.u32 %v1336, 7
        %v1338 = vadd.s32 %v1337, 24
        %1339 = vset.pattern.permute.xlu0 %v1338
        %1340 = vperm.xlu0 %1339, %v1317
        %v1341 = vpop.permute.xlu0 %1340
        %v1342 = vlaneseq
        %v1343 = vshrl.u32 %v1342, 7
        %v1344 = vadd.s32 %v1343, 32
        %1345 = vset.pattern.permute.xlu0 %v1344
        %1346 = vperm.xlu0 %1345, %v1317
        %v1347 = vpop.permute.xlu0 %1346
        %v1348 = vlaneseq
        %v1349 = vshrl.u32 %v1348, 7
        %v1350 = vadd.s32 %v1349, 40
        %1351 = vset.pattern.permute.xlu0 %v1350
        %1352 = vperm.xlu0 %1351, %v1317
        %v1353 = vpop.permute.xlu0 %1352
        %v1354 = vlaneseq
        %v1355 = vshrl.u32 %v1354, 7
        %v1356 = vadd.s32 %v1355, 48
        %1357 = vset.pattern.permute.xlu0 %v1356
        %1358 = vperm.xlu0 %1357, %v1317
        %v1359 = vpop.permute.xlu0 %1358
        %v1360 = vlaneseq
        %v1361 = vshrl.u32 %v1360, 7
        %v1362 = vadd.s32 %v1361, 56
        %1363 = vset.pattern.permute.xlu0 %v1362
        %1364 = vperm.xlu0 %1363, %v1317
        %v1365 = vpop.permute.xlu0 %1364
        %v1366 = vlaneseq
        %v1367 = vshrl.u32 %v1366, 7
        %v1368 = vadd.s32 %v1367, 64
        %1369 = vset.pattern.permute.xlu0 %v1368
        %1370 = vperm.xlu0 %1369, %v1317
        %v1371 = vpop.permute.xlu0 %1370
        %v1372 = vlaneseq
        %v1373 = vshrl.u32 %v1372, 7
        %v1374 = vadd.s32 %v1373, 72
        %1375 = vset.pattern.permute.xlu0 %v1374
        %1376 = vperm.xlu0 %1375, %v1317
        %v1377 = vpop.permute.xlu0 %1376
        %v1378 = vlaneseq
        %v1379 = vshrl.u32 %v1378, 7
        %v1380 = vadd.s32 %v1379, 80
        %1381 = vset.pattern.permute.xlu0 %v1380
        %1382 = vperm.xlu0 %1381, %v1317
        %v1383 = vpop.permute.xlu0 %1382
        %v1384 = vlaneseq
        %v1385 = vshrl.u32 %v1384, 7
        %v1386 = vadd.s32 %v1385, 88
        %1387 = vset.pattern.permute.xlu0 %v1386
        %1388 = vperm.xlu0 %1387, %v1317
        %v1389 = vpop.permute.xlu0 %1388
        %v1390 = vlaneseq
        %v1391 = vshrl.u32 %v1390, 7
        %v1392 = vadd.s32 %v1391, 96
        %1393 = vset.pattern.permute.xlu0 %v1392
        %1394 = vperm.xlu0 %1393, %v1317
        %v1395 = vpop.permute.xlu0 %1394
        %v1396 = vlaneseq
        %v1397 = vshrl.u32 %v1396, 7
        %v1398 = vadd.s32 %v1397, 104
        %1399 = vset.pattern.permute.xlu0 %v1398
        %1400 = vperm.xlu0 %1399, %v1317
        %v1401 = vpop.permute.xlu0 %1400
        %v1402 = vlaneseq
        %v1403 = vshrl.u32 %v1402, 7
        %v1404 = vadd.s32 %v1403, 112
        %1405 = vset.pattern.permute.xlu0 %v1404
        %1406 = vperm.xlu0 %1405, %v1317
        %v1407 = vpop.permute.xlu0 %1406
        %v1408 = vlaneseq
        %v1409 = vshrl.u32 %v1408, 7
        %v1410 = vadd.s32 %v1409, 120
        %1411 = vset.pattern.permute.xlu0 %v1410
        %1412 = vperm.xlu0 %1411, %v1317
        %v1413 = vpop.permute.xlu0 %1412
        %v1414 = vperm.slane %v630, 4
        %v1415 = vlaneseq
        %v1416 = vshrl.u32 %v1415, 7
        %1418 = vset.pattern.permute.xlu0 %v1416
        %1419 = vperm.xlu0 %1418, %v1414
        %v1420 = vpop.permute.xlu0 %1419
        %v1421 = vlaneseq
        %v1422 = vshrl.u32 %v1421, 7
        %v1423 = vadd.s32 %v1422, 8
        %1424 = vset.pattern.permute.xlu0 %v1423
        %1425 = vperm.xlu0 %1424, %v1414
        %v1426 = vpop.permute.xlu0 %1425
        %v1427 = vlaneseq
        %v1428 = vshrl.u32 %v1427, 7
        %v1429 = vadd.s32 %v1428, 16
        %1430 = vset.pattern.permute.xlu0 %v1429
        %1431 = vperm.xlu0 %1430, %v1414
        %v1432 = vpop.permute.xlu0 %1431
        %v1433 = vlaneseq
        %v1434 = vshrl.u32 %v1433, 7
        %v1435 = vadd.s32 %v1434, 24
        %1436 = vset.pattern.permute.xlu0 %v1435
        %1437 = vperm.xlu0 %1436, %v1414
        %v1438 = vpop.permute.xlu0 %1437
        %v1439 = vlaneseq
        %v1440 = vshrl.u32 %v1439, 7
        %v1441 = vadd.s32 %v1440, 32
        %1442 = vset.pattern.permute.xlu0 %v1441
        %1443 = vperm.xlu0 %1442, %v1414
        %v1444 = vpop.permute.xlu0 %1443
        %v1445 = vlaneseq
        %v1446 = vshrl.u32 %v1445, 7
        %v1447 = vadd.s32 %v1446, 40
        %1448 = vset.pattern.permute.xlu0 %v1447
        %1449 = vperm.xlu0 %1448, %v1414
        %v1450 = vpop.permute.xlu0 %1449
        %v1451 = vlaneseq
        %v1452 = vshrl.u32 %v1451, 7
        %v1453 = vadd.s32 %v1452, 48
        %1454 = vset.pattern.permute.xlu0 %v1453
        %1455 = vperm.xlu0 %1454, %v1414
        %v1456 = vpop.permute.xlu0 %1455
        %v1457 = vlaneseq
        %v1458 = vshrl.u32 %v1457, 7
        %v1459 = vadd.s32 %v1458, 56
        %1460 = vset.pattern.permute.xlu0 %v1459
        %1461 = vperm.xlu0 %1460, %v1414
        %v1462 = vpop.permute.xlu0 %1461
        %v1463 = vlaneseq
        %v1464 = vshrl.u32 %v1463, 7
        %v1465 = vadd.s32 %v1464, 64
        %1466 = vset.pattern.permute.xlu0 %v1465
        %1467 = vperm.xlu0 %1466, %v1414
        %v1468 = vpop.permute.xlu0 %1467
        %v1469 = vlaneseq
        %v1470 = vshrl.u32 %v1469, 7
        %v1471 = vadd.s32 %v1470, 72
        %1472 = vset.pattern.permute.xlu0 %v1471
        %1473 = vperm.xlu0 %1472, %v1414
        %v1474 = vpop.permute.xlu0 %1473
        %v1475 = vlaneseq
        %v1476 = vshrl.u32 %v1475, 7
        %v1477 = vadd.s32 %v1476, 80
        %1478 = vset.pattern.permute.xlu0 %v1477
        %1479 = vperm.xlu0 %1478, %v1414
        %v1480 = vpop.permute.xlu0 %1479
        %v1481 = vlaneseq
        %v1482 = vshrl.u32 %v1481, 7
        %v1483 = vadd.s32 %v1482, 88
        %1484 = vset.pattern.permute.xlu0 %v1483
        %1485 = vperm.xlu0 %1484, %v1414
        %v1486 = vpop.permute.xlu0 %1485
        %v1487 = vlaneseq
        %v1488 = vshrl.u32 %v1487, 7
        %v1489 = vadd.s32 %v1488, 96
        %1490 = vset.pattern.permute.xlu0 %v1489
        %1491 = vperm.xlu0 %1490, %v1414
        %v1492 = vpop.permute.xlu0 %1491
        %v1493 = vlaneseq
        %v1494 = vshrl.u32 %v1493, 7
        %v1495 = vadd.s32 %v1494, 104
        %1496 = vset.pattern.permute.xlu0 %v1495
        %1497 = vperm.xlu0 %1496, %v1414
        %v1498 = vpop.permute.xlu0 %1497
        %v1499 = vlaneseq
        %v1500 = vshrl.u32 %v1499, 7
        %v1501 = vadd.s32 %v1500, 112
        %1502 = vset.pattern.permute.xlu0 %v1501
        %1503 = vperm.xlu0 %1502, %v1414
        %v1504 = vpop.permute.xlu0 %1503
        %v1505 = vlaneseq
        %v1506 = vshrl.u32 %v1505, 7
        %v1507 = vadd.s32 %v1506, 120
        %1508 = vset.pattern.permute.xlu0 %v1507
        %1509 = vperm.xlu0 %1508, %v1414
        %v1510 = vpop.permute.xlu0 %1509
        %v1511 = vperm.slane %v631, 4
        %v1512 = vlaneseq
        %v1513 = vshrl.u32 %v1512, 7
        %1515 = vset.pattern.permute.xlu0 %v1513
        %1516 = vperm.xlu0 %1515, %v1511
        %v1517 = vpop.permute.xlu0 %1516
        %v1518 = vlaneseq
        %v1519 = vshrl.u32 %v1518, 7
        %v1520 = vadd.s32 %v1519, 8
        %1521 = vset.pattern.permute.xlu0 %v1520
        %1522 = vperm.xlu0 %1521, %v1511
        %v1523 = vpop.permute.xlu0 %1522
        %v1524 = vlaneseq
        %v1525 = vshrl.u32 %v1524, 7
        %v1526 = vadd.s32 %v1525, 16
        %1527 = vset.pattern.permute.xlu0 %v1526
        %1528 = vperm.xlu0 %1527, %v1511
        %v1529 = vpop.permute.xlu0 %1528
        %v1530 = vlaneseq
        %v1531 = vshrl.u32 %v1530, 7
        %v1532 = vadd.s32 %v1531, 24
        %1533 = vset.pattern.permute.xlu0 %v1532
        %1534 = vperm.xlu0 %1533, %v1511
        %v1535 = vpop.permute.xlu0 %1534
        %v1536 = vlaneseq
        %v1537 = vshrl.u32 %v1536, 7
        %v1538 = vadd.s32 %v1537, 32
        %1539 = vset.pattern.permute.xlu0 %v1538
        %1540 = vperm.xlu0 %1539, %v1511
        %v1541 = vpop.permute.xlu0 %1540
        %v1542 = vlaneseq
        %v1543 = vshrl.u32 %v1542, 7
        %v1544 = vadd.s32 %v1543, 40
        %1545 = vset.pattern.permute.xlu0 %v1544
        %1546 = vperm.xlu0 %1545, %v1511
        %v1547 = vpop.permute.xlu0 %1546
        %v1548 = vlaneseq
        %v1549 = vshrl.u32 %v1548, 7
        %v1550 = vadd.s32 %v1549, 48
        %1551 = vset.pattern.permute.xlu0 %v1550
        %1552 = vperm.xlu0 %1551, %v1511
        %v1553 = vpop.permute.xlu0 %1552
        %v1554 = vlaneseq
        %v1555 = vshrl.u32 %v1554, 7
        %v1556 = vadd.s32 %v1555, 56
        %1557 = vset.pattern.permute.xlu0 %v1556
        %1558 = vperm.xlu0 %1557, %v1511
        %v1559 = vpop.permute.xlu0 %1558
        %v1560 = vlaneseq
        %v1561 = vshrl.u32 %v1560, 7
        %v1562 = vadd.s32 %v1561, 64
        %1563 = vset.pattern.permute.xlu0 %v1562
        %1564 = vperm.xlu0 %1563, %v1511
        %v1565 = vpop.permute.xlu0 %1564
        %v1566 = vlaneseq
        %v1567 = vshrl.u32 %v1566, 7
        %v1568 = vadd.s32 %v1567, 72
        %1569 = vset.pattern.permute.xlu0 %v1568
        %1570 = vperm.xlu0 %1569, %v1511
        %v1571 = vpop.permute.xlu0 %1570
        %v1572 = vlaneseq
        %v1573 = vshrl.u32 %v1572, 7
        %v1574 = vadd.s32 %v1573, 80
        %1575 = vset.pattern.permute.xlu0 %v1574
        %1576 = vperm.xlu0 %1575, %v1511
        %v1577 = vpop.permute.xlu0 %1576
        %v1578 = vlaneseq
        %v1579 = vshrl.u32 %v1578, 7
        %v1580 = vadd.s32 %v1579, 88
        %1581 = vset.pattern.permute.xlu0 %v1580
        %1582 = vperm.xlu0 %1581, %v1511
        %v1583 = vpop.permute.xlu0 %1582
        %v1584 = vlaneseq
        %v1585 = vshrl.u32 %v1584, 7
        %v1586 = vadd.s32 %v1585, 96
        %1587 = vset.pattern.permute.xlu0 %v1586
        %1588 = vperm.xlu0 %1587, %v1511
        %v1589 = vpop.permute.xlu0 %1588
        %v1590 = vlaneseq
        %v1591 = vshrl.u32 %v1590, 7
        %v1592 = vadd.s32 %v1591, 104
        %1593 = vset.pattern.permute.xlu0 %v1592
        %1594 = vperm.xlu0 %1593, %v1511
        %v1595 = vpop.permute.xlu0 %1594
        %v1596 = vlaneseq
        %v1597 = vshrl.u32 %v1596, 7
        %v1598 = vadd.s32 %v1597, 112
        %1599 = vset.pattern.permute.xlu0 %v1598
        %1600 = vperm.xlu0 %1599, %v1511
        %v1601 = vpop.permute.xlu0 %1600
        %v1602 = vlaneseq
        %v1603 = vshrl.u32 %v1602, 7
        %v1604 = vadd.s32 %v1603, 120
        %1605 = vset.pattern.permute.xlu0 %v1604
        %1606 = vperm.xlu0 %1605, %v1511
        %v1607 = vpop.permute.xlu0 %1606
        %v1608 = vperm.slane %v630, 5
        %v1609 = vlaneseq
        %v1610 = vshrl.u32 %v1609, 7
        %1612 = vset.pattern.permute.xlu0 %v1610
        %1613 = vperm.xlu0 %1612, %v1608
        %v1614 = vpop.permute.xlu0 %1613
        %v1615 = vlaneseq
        %v1616 = vshrl.u32 %v1615, 7
        %v1617 = vadd.s32 %v1616, 8
        %1618 = vset.pattern.permute.xlu0 %v1617
        %1619 = vperm.xlu0 %1618, %v1608
        %v1620 = vpop.permute.xlu0 %1619
        %v1621 = vlaneseq
        %v1622 = vshrl.u32 %v1621, 7
        %v1623 = vadd.s32 %v1622, 16
        %1624 = vset.pattern.permute.xlu0 %v1623
        %1625 = vperm.xlu0 %1624, %v1608
        %v1626 = vpop.permute.xlu0 %1625
        %v1627 = vlaneseq
        %v1628 = vshrl.u32 %v1627, 7
        %v1629 = vadd.s32 %v1628, 24
        %1630 = vset.pattern.permute.xlu0 %v1629
        %1631 = vperm.xlu0 %1630, %v1608
        %v1632 = vpop.permute.xlu0 %1631
        %v1633 = vlaneseq
        %v1634 = vshrl.u32 %v1633, 7
        %v1635 = vadd.s32 %v1634, 32
        %1636 = vset.pattern.permute.xlu0 %v1635
        %1637 = vperm.xlu0 %1636, %v1608
        %v1638 = vpop.permute.xlu0 %1637
        %v1639 = vlaneseq
        %v1640 = vshrl.u32 %v1639, 7
        %v1641 = vadd.s32 %v1640, 40
        %1642 = vset.pattern.permute.xlu0 %v1641
        %1643 = vperm.xlu0 %1642, %v1608
        %v1644 = vpop.permute.xlu0 %1643
        %v1645 = vlaneseq
        %v1646 = vshrl.u32 %v1645, 7
        %v1647 = vadd.s32 %v1646, 48
        %1648 = vset.pattern.permute.xlu0 %v1647
        %1649 = vperm.xlu0 %1648, %v1608
        %v1650 = vpop.permute.xlu0 %1649
        %v1651 = vlaneseq
        %v1652 = vshrl.u32 %v1651, 7
        %v1653 = vadd.s32 %v1652, 56
        %1654 = vset.pattern.permute.xlu0 %v1653
        %1655 = vperm.xlu0 %1654, %v1608
        %v1656 = vpop.permute.xlu0 %1655
        %v1657 = vlaneseq
        %v1658 = vshrl.u32 %v1657, 7
        %v1659 = vadd.s32 %v1658, 64
        %1660 = vset.pattern.permute.xlu0 %v1659
        %1661 = vperm.xlu0 %1660, %v1608
        %v1662 = vpop.permute.xlu0 %1661
        %v1663 = vlaneseq
        %v1664 = vshrl.u32 %v1663, 7
        %v1665 = vadd.s32 %v1664, 72
        %1666 = vset.pattern.permute.xlu0 %v1665
        %1667 = vperm.xlu0 %1666, %v1608
        %v1668 = vpop.permute.xlu0 %1667
        %v1669 = vlaneseq
        %v1670 = vshrl.u32 %v1669, 7
        %v1671 = vadd.s32 %v1670, 80
        %1672 = vset.pattern.permute.xlu0 %v1671
        %1673 = vperm.xlu0 %1672, %v1608
        %v1674 = vpop.permute.xlu0 %1673
        %v1675 = vlaneseq
        %v1676 = vshrl.u32 %v1675, 7
        %v1677 = vadd.s32 %v1676, 88
        %1678 = vset.pattern.permute.xlu0 %v1677
        %1679 = vperm.xlu0 %1678, %v1608
        %v1680 = vpop.permute.xlu0 %1679
        %v1681 = vlaneseq
        %v1682 = vshrl.u32 %v1681, 7
        %v1683 = vadd.s32 %v1682, 96
        %1684 = vset.pattern.permute.xlu0 %v1683
        %1685 = vperm.xlu0 %1684, %v1608
        %v1686 = vpop.permute.xlu0 %1685
        %v1687 = vlaneseq
        %v1688 = vshrl.u32 %v1687, 7
        %v1689 = vadd.s32 %v1688, 104
        %1690 = vset.pattern.permute.xlu0 %v1689
        %1691 = vperm.xlu0 %1690, %v1608
        %v1692 = vpop.permute.xlu0 %1691
        %v1693 = vlaneseq
        %v1694 = vshrl.u32 %v1693, 7
        %v1695 = vadd.s32 %v1694, 112
        %1696 = vset.pattern.permute.xlu0 %v1695
        %1697 = vperm.xlu0 %1696, %v1608
        %v1698 = vpop.permute.xlu0 %1697
        %v1699 = vlaneseq
        %v1700 = vshrl.u32 %v1699, 7
        %v1701 = vadd.s32 %v1700, 120
        %1702 = vset.pattern.permute.xlu0 %v1701
        %1703 = vperm.xlu0 %1702, %v1608
        %v1704 = vpop.permute.xlu0 %1703
        %v1705 = vperm.slane %v631, 5
        %v1706 = vlaneseq
        %v1707 = vshrl.u32 %v1706, 7
        %1709 = vset.pattern.permute.xlu0 %v1707
        %1710 = vperm.xlu0 %1709, %v1705
        %v1711 = vpop.permute.xlu0 %1710
        %v1712 = vlaneseq
        %v1713 = vshrl.u32 %v1712, 7
        %v1714 = vadd.s32 %v1713, 8
        %1715 = vset.pattern.permute.xlu0 %v1714
        %1716 = vperm.xlu0 %1715, %v1705
        %v1717 = vpop.permute.xlu0 %1716
        %v1718 = vlaneseq
        %v1719 = vshrl.u32 %v1718, 7
        %v1720 = vadd.s32 %v1719, 16
        %1721 = vset.pattern.permute.xlu0 %v1720
        %1722 = vperm.xlu0 %1721, %v1705
        %v1723 = vpop.permute.xlu0 %1722
        %v1724 = vlaneseq
        %v1725 = vshrl.u32 %v1724, 7
        %v1726 = vadd.s32 %v1725, 24
        %1727 = vset.pattern.permute.xlu0 %v1726
        %1728 = vperm.xlu0 %1727, %v1705
        %v1729 = vpop.permute.xlu0 %1728
        %v1730 = vlaneseq
        %v1731 = vshrl.u32 %v1730, 7
        %v1732 = vadd.s32 %v1731, 32
        %1733 = vset.pattern.permute.xlu0 %v1732
        %1734 = vperm.xlu0 %1733, %v1705
        %v1735 = vpop.permute.xlu0 %1734
        %v1736 = vlaneseq
        %v1737 = vshrl.u32 %v1736, 7
        %v1738 = vadd.s32 %v1737, 40
        %1739 = vset.pattern.permute.xlu0 %v1738
        %1740 = vperm.xlu0 %1739, %v1705
        %v1741 = vpop.permute.xlu0 %1740
        %v1742 = vlaneseq
        %v1743 = vshrl.u32 %v1742, 7
        %v1744 = vadd.s32 %v1743, 48
        %1745 = vset.pattern.permute.xlu0 %v1744
        %1746 = vperm.xlu0 %1745, %v1705
        %v1747 = vpop.permute.xlu0 %1746
        %v1748 = vlaneseq
        %v1749 = vshrl.u32 %v1748, 7
        %v1750 = vadd.s32 %v1749, 56
        %1751 = vset.pattern.permute.xlu0 %v1750
        %1752 = vperm.xlu0 %1751, %v1705
        %v1753 = vpop.permute.xlu0 %1752
        %v1754 = vlaneseq
        %v1755 = vshrl.u32 %v1754, 7
        %v1756 = vadd.s32 %v1755, 64
        %1757 = vset.pattern.permute.xlu0 %v1756
        %1758 = vperm.xlu0 %1757, %v1705
        %v1759 = vpop.permute.xlu0 %1758
        %v1760 = vlaneseq
        %v1761 = vshrl.u32 %v1760, 7
        %v1762 = vadd.s32 %v1761, 72
        %1763 = vset.pattern.permute.xlu0 %v1762
        %1764 = vperm.xlu0 %1763, %v1705
        %v1765 = vpop.permute.xlu0 %1764
        %v1766 = vlaneseq
        %v1767 = vshrl.u32 %v1766, 7
        %v1768 = vadd.s32 %v1767, 80
        %1769 = vset.pattern.permute.xlu0 %v1768
        %1770 = vperm.xlu0 %1769, %v1705
        %v1771 = vpop.permute.xlu0 %1770
        %v1772 = vlaneseq
        %v1773 = vshrl.u32 %v1772, 7
        %v1774 = vadd.s32 %v1773, 88
        %1775 = vset.pattern.permute.xlu0 %v1774
        %1776 = vperm.xlu0 %1775, %v1705
        %v1777 = vpop.permute.xlu0 %1776
        %v1778 = vlaneseq
        %v1779 = vshrl.u32 %v1778, 7
        %v1780 = vadd.s32 %v1779, 96
        %1781 = vset.pattern.permute.xlu0 %v1780
        %1782 = vperm.xlu0 %1781, %v1705
        %v1783 = vpop.permute.xlu0 %1782
        %v1784 = vlaneseq
        %v1785 = vshrl.u32 %v1784, 7
        %v1786 = vadd.s32 %v1785, 104
        %1787 = vset.pattern.permute.xlu0 %v1786
        %1788 = vperm.xlu0 %1787, %v1705
        %v1789 = vpop.permute.xlu0 %1788
        %v1790 = vlaneseq
        %v1791 = vshrl.u32 %v1790, 7
        %v1792 = vadd.s32 %v1791, 112
        %1793 = vset.pattern.permute.xlu0 %v1792
        %1794 = vperm.xlu0 %1793, %v1705
        %v1795 = vpop.permute.xlu0 %1794
        %v1796 = vlaneseq
        %v1797 = vshrl.u32 %v1796, 7
        %v1798 = vadd.s32 %v1797, 120
        %1799 = vset.pattern.permute.xlu0 %v1798
        %1800 = vperm.xlu0 %1799, %v1705
        %v1801 = vpop.permute.xlu0 %1800
        %v1802 = vperm.slane %v630, 6
        %v1803 = vlaneseq
        %v1804 = vshrl.u32 %v1803, 7
        %1806 = vset.pattern.permute.xlu0 %v1804
        %1807 = vperm.xlu0 %1806, %v1802
        %v1808 = vpop.permute.xlu0 %1807
        %v1809 = vlaneseq
        %v1810 = vshrl.u32 %v1809, 7
        %v1811 = vadd.s32 %v1810, 8
        %1812 = vset.pattern.permute.xlu0 %v1811
        %1813 = vperm.xlu0 %1812, %v1802
        %v1814 = vpop.permute.xlu0 %1813
        %v1815 = vlaneseq
        %v1816 = vshrl.u32 %v1815, 7
        %v1817 = vadd.s32 %v1816, 16
        %1818 = vset.pattern.permute.xlu0 %v1817
        %1819 = vperm.xlu0 %1818, %v1802
        %v1820 = vpop.permute.xlu0 %1819
        %v1821 = vlaneseq
        %v1822 = vshrl.u32 %v1821, 7
        %v1823 = vadd.s32 %v1822, 24
        %1824 = vset.pattern.permute.xlu0 %v1823
        %1825 = vperm.xlu0 %1824, %v1802
        %v1826 = vpop.permute.xlu0 %1825
        %v1827 = vlaneseq
        %v1828 = vshrl.u32 %v1827, 7
        %v1829 = vadd.s32 %v1828, 32
        %1830 = vset.pattern.permute.xlu0 %v1829
        %1831 = vperm.xlu0 %1830, %v1802
        %v1832 = vpop.permute.xlu0 %1831
        %v1833 = vlaneseq
        %v1834 = vshrl.u32 %v1833, 7
        %v1835 = vadd.s32 %v1834, 40
        %1836 = vset.pattern.permute.xlu0 %v1835
        %1837 = vperm.xlu0 %1836, %v1802
        %v1838 = vpop.permute.xlu0 %1837
        %v1839 = vlaneseq
        %v1840 = vshrl.u32 %v1839, 7
        %v1841 = vadd.s32 %v1840, 48
        %1842 = vset.pattern.permute.xlu0 %v1841
        %1843 = vperm.xlu0 %1842, %v1802
        %v1844 = vpop.permute.xlu0 %1843
        %v1845 = vlaneseq
        %v1846 = vshrl.u32 %v1845, 7
        %v1847 = vadd.s32 %v1846, 56
        %1848 = vset.pattern.permute.xlu0 %v1847
        %1849 = vperm.xlu0 %1848, %v1802
        %v1850 = vpop.permute.xlu0 %1849
        %v1851 = vlaneseq
        %v1852 = vshrl.u32 %v1851, 7
        %v1853 = vadd.s32 %v1852, 64
        %1854 = vset.pattern.permute.xlu0 %v1853
        %1855 = vperm.xlu0 %1854, %v1802
        %v1856 = vpop.permute.xlu0 %1855
        %v1857 = vlaneseq
        %v1858 = vshrl.u32 %v1857, 7
        %v1859 = vadd.s32 %v1858, 72
        %1860 = vset.pattern.permute.xlu0 %v1859
        %1861 = vperm.xlu0 %1860, %v1802
        %v1862 = vpop.permute.xlu0 %1861
        %v1863 = vlaneseq
        %v1864 = vshrl.u32 %v1863, 7
        %v1865 = vadd.s32 %v1864, 80
        %1866 = vset.pattern.permute.xlu0 %v1865
        %1867 = vperm.xlu0 %1866, %v1802
        %v1868 = vpop.permute.xlu0 %1867
        %v1869 = vlaneseq
        %v1870 = vshrl.u32 %v1869, 7
        %v1871 = vadd.s32 %v1870, 88
        %1872 = vset.pattern.permute.xlu0 %v1871
        %1873 = vperm.xlu0 %1872, %v1802
        %v1874 = vpop.permute.xlu0 %1873
        %v1875 = vlaneseq
        %v1876 = vshrl.u32 %v1875, 7
        %v1877 = vadd.s32 %v1876, 96
        %1878 = vset.pattern.permute.xlu0 %v1877
        %1879 = vperm.xlu0 %1878, %v1802
        %v1880 = vpop.permute.xlu0 %1879
        %v1881 = vlaneseq
        %v1882 = vshrl.u32 %v1881, 7
        %v1883 = vadd.s32 %v1882, 104
        %1884 = vset.pattern.permute.xlu0 %v1883
        %1885 = vperm.xlu0 %1884, %v1802
        %v1886 = vpop.permute.xlu0 %1885
        %v1887 = vlaneseq
        %v1888 = vshrl.u32 %v1887, 7
        %v1889 = vadd.s32 %v1888, 112
        %1890 = vset.pattern.permute.xlu0 %v1889
        %1891 = vperm.xlu0 %1890, %v1802
        %v1892 = vpop.permute.xlu0 %1891
        %v1893 = vlaneseq
        %v1894 = vshrl.u32 %v1893, 7
        %v1895 = vadd.s32 %v1894, 120
        %1896 = vset.pattern.permute.xlu0 %v1895
        %1897 = vperm.xlu0 %1896, %v1802
        %v1898 = vpop.permute.xlu0 %1897
        %v1899 = vperm.slane %v631, 6
        %v1900 = vlaneseq
        %v1901 = vshrl.u32 %v1900, 7
        %1903 = vset.pattern.permute.xlu0 %v1901
        %1904 = vperm.xlu0 %1903, %v1899
        %v1905 = vpop.permute.xlu0 %1904
        %v1906 = vlaneseq
        %v1907 = vshrl.u32 %v1906, 7
        %v1908 = vadd.s32 %v1907, 8
        %1909 = vset.pattern.permute.xlu0 %v1908
        %1910 = vperm.xlu0 %1909, %v1899
        %v1911 = vpop.permute.xlu0 %1910
        %v1912 = vlaneseq
        %v1913 = vshrl.u32 %v1912, 7
        %v1914 = vadd.s32 %v1913, 16
        %1915 = vset.pattern.permute.xlu0 %v1914
        %1916 = vperm.xlu0 %1915, %v1899
        %v1917 = vpop.permute.xlu0 %1916
        %v1918 = vlaneseq
        %v1919 = vshrl.u32 %v1918, 7
        %v1920 = vadd.s32 %v1919, 24
        %1921 = vset.pattern.permute.xlu0 %v1920
        %1922 = vperm.xlu0 %1921, %v1899
        %v1923 = vpop.permute.xlu0 %1922
        %v1924 = vlaneseq
        %v1925 = vshrl.u32 %v1924, 7
        %v1926 = vadd.s32 %v1925, 32
        %1927 = vset.pattern.permute.xlu0 %v1926
        %1928 = vperm.xlu0 %1927, %v1899
        %v1929 = vpop.permute.xlu0 %1928
        %v1930 = vlaneseq
        %v1931 = vshrl.u32 %v1930, 7
        %v1932 = vadd.s32 %v1931, 40
        %1933 = vset.pattern.permute.xlu0 %v1932
        %1934 = vperm.xlu0 %1933, %v1899
        %v1935 = vpop.permute.xlu0 %1934
        %v1936 = vlaneseq
        %v1937 = vshrl.u32 %v1936, 7
        %v1938 = vadd.s32 %v1937, 48
        %1939 = vset.pattern.permute.xlu0 %v1938
        %1940 = vperm.xlu0 %1939, %v1899
        %v1941 = vpop.permute.xlu0 %1940
        %v1942 = vlaneseq
        %v1943 = vshrl.u32 %v1942, 7
        %v1944 = vadd.s32 %v1943, 56
        %1945 = vset.pattern.permute.xlu0 %v1944
        %1946 = vperm.xlu0 %1945, %v1899
        %v1947 = vpop.permute.xlu0 %1946
        %v1948 = vlaneseq
        %v1949 = vshrl.u32 %v1948, 7
        %v1950 = vadd.s32 %v1949, 64
        %1951 = vset.pattern.permute.xlu0 %v1950
        %1952 = vperm.xlu0 %1951, %v1899
        %v1953 = vpop.permute.xlu0 %1952
        %v1954 = vlaneseq
        %v1955 = vshrl.u32 %v1954, 7
        %v1956 = vadd.s32 %v1955, 72
        %1957 = vset.pattern.permute.xlu0 %v1956
        %1958 = vperm.xlu0 %1957, %v1899
        %v1959 = vpop.permute.xlu0 %1958
        %v1960 = vlaneseq
        %v1961 = vshrl.u32 %v1960, 7
        %v1962 = vadd.s32 %v1961, 80
        %1963 = vset.pattern.permute.xlu0 %v1962
        %1964 = vperm.xlu0 %1963, %v1899
        %v1965 = vpop.permute.xlu0 %1964
        %v1966 = vlaneseq
        %v1967 = vshrl.u32 %v1966, 7
        %v1968 = vadd.s32 %v1967, 88
        %1969 = vset.pattern.permute.xlu0 %v1968
        %1970 = vperm.xlu0 %1969, %v1899
        %v1971 = vpop.permute.xlu0 %1970
        %v1972 = vlaneseq
        %v1973 = vshrl.u32 %v1972, 7
        %v1974 = vadd.s32 %v1973, 96
        %1975 = vset.pattern.permute.xlu0 %v1974
        %1976 = vperm.xlu0 %1975, %v1899
        %v1977 = vpop.permute.xlu0 %1976
        %v1978 = vlaneseq
        %v1979 = vshrl.u32 %v1978, 7
        %v1980 = vadd.s32 %v1979, 104
        %1981 = vset.pattern.permute.xlu0 %v1980
        %1982 = vperm.xlu0 %1981, %v1899
        %v1983 = vpop.permute.xlu0 %1982
        %v1984 = vlaneseq
        %v1985 = vshrl.u32 %v1984, 7
        %v1986 = vadd.s32 %v1985, 112
        %1987 = vset.pattern.permute.xlu0 %v1986
        %1988 = vperm.xlu0 %1987, %v1899
        %v1989 = vpop.permute.xlu0 %1988
        %v1990 = vlaneseq
        %v1991 = vshrl.u32 %v1990, 7
        %v1992 = vadd.s32 %v1991, 120
        %1993 = vset.pattern.permute.xlu0 %v1992
        %1994 = vperm.xlu0 %1993, %v1899
        %v1995 = vpop.permute.xlu0 %1994
        %v1996 = vperm.slane %v630, 7
        %v1997 = vlaneseq
        %v1998 = vshrl.u32 %v1997, 7
        %2000 = vset.pattern.permute.xlu0 %v1998
        %2001 = vperm.xlu0 %2000, %v1996
        %v2002 = vpop.permute.xlu0 %2001
        %v2003 = vlaneseq
        %v2004 = vshrl.u32 %v2003, 7
        %v2005 = vadd.s32 %v2004, 8
        %2006 = vset.pattern.permute.xlu0 %v2005
        %2007 = vperm.xlu0 %2006, %v1996
        %v2008 = vpop.permute.xlu0 %2007
        %v2009 = vlaneseq
        %v2010 = vshrl.u32 %v2009, 7
        %v2011 = vadd.s32 %v2010, 16
        %2012 = vset.pattern.permute.xlu0 %v2011
        %2013 = vperm.xlu0 %2012, %v1996
        %v2014 = vpop.permute.xlu0 %2013
        %v2015 = vlaneseq
        %v2016 = vshrl.u32 %v2015, 7
        %v2017 = vadd.s32 %v2016, 24
        %2018 = vset.pattern.permute.xlu0 %v2017
        %2019 = vperm.xlu0 %2018, %v1996
        %v2020 = vpop.permute.xlu0 %2019
        %v2021 = vlaneseq
        %v2022 = vshrl.u32 %v2021, 7
        %v2023 = vadd.s32 %v2022, 32
        %2024 = vset.pattern.permute.xlu0 %v2023
        %2025 = vperm.xlu0 %2024, %v1996
        %v2026 = vpop.permute.xlu0 %2025
        %v2027 = vlaneseq
        %v2028 = vshrl.u32 %v2027, 7
        %v2029 = vadd.s32 %v2028, 40
        %2030 = vset.pattern.permute.xlu0 %v2029
        %2031 = vperm.xlu0 %2030, %v1996
        %v2032 = vpop.permute.xlu0 %2031
        %v2033 = vlaneseq
        %v2034 = vshrl.u32 %v2033, 7
        %v2035 = vadd.s32 %v2034, 48
        %2036 = vset.pattern.permute.xlu0 %v2035
        %2037 = vperm.xlu0 %2036, %v1996
        %v2038 = vpop.permute.xlu0 %2037
        %v2039 = vlaneseq
        %v2040 = vshrl.u32 %v2039, 7
        %v2041 = vadd.s32 %v2040, 56
        %2042 = vset.pattern.permute.xlu0 %v2041
        %2043 = vperm.xlu0 %2042, %v1996
        %v2044 = vpop.permute.xlu0 %2043
        %v2045 = vlaneseq
        %v2046 = vshrl.u32 %v2045, 7
        %v2047 = vadd.s32 %v2046, 64
        %2048 = vset.pattern.permute.xlu0 %v2047
        %2049 = vperm.xlu0 %2048, %v1996
        %v2050 = vpop.permute.xlu0 %2049
        %v2051 = vlaneseq
        %v2052 = vshrl.u32 %v2051, 7
        %v2053 = vadd.s32 %v2052, 72
        %2054 = vset.pattern.permute.xlu0 %v2053
        %2055 = vperm.xlu0 %2054, %v1996
        %v2056 = vpop.permute.xlu0 %2055
        %v2057 = vlaneseq
        %v2058 = vshrl.u32 %v2057, 7
        %v2059 = vadd.s32 %v2058, 80
        %2060 = vset.pattern.permute.xlu0 %v2059
        %2061 = vperm.xlu0 %2060, %v1996
        %v2062 = vpop.permute.xlu0 %2061
        %v2063 = vlaneseq
        %v2064 = vshrl.u32 %v2063, 7
        %v2065 = vadd.s32 %v2064, 88
        %2066 = vset.pattern.permute.xlu0 %v2065
        %2067 = vperm.xlu0 %2066, %v1996
        %v2068 = vpop.permute.xlu0 %2067
        %v2069 = vlaneseq
        %v2070 = vshrl.u32 %v2069, 7
        %v2071 = vadd.s32 %v2070, 96
        %2072 = vset.pattern.permute.xlu0 %v2071
        %2073 = vperm.xlu0 %2072, %v1996
        %v2074 = vpop.permute.xlu0 %2073
        %v2075 = vlaneseq
        %v2076 = vshrl.u32 %v2075, 7
        %v2077 = vadd.s32 %v2076, 104
        %2078 = vset.pattern.permute.xlu0 %v2077
        %2079 = vperm.xlu0 %2078, %v1996
        %v2080 = vpop.permute.xlu0 %2079
        %v2081 = vlaneseq
        %v2082 = vshrl.u32 %v2081, 7
        %v2083 = vadd.s32 %v2082, 112
        %2084 = vset.pattern.permute.xlu0 %v2083
        %2085 = vperm.xlu0 %2084, %v1996
        %v2086 = vpop.permute.xlu0 %2085
        %v2087 = vlaneseq
        %v2088 = vshrl.u32 %v2087, 7
        %v2089 = vadd.s32 %v2088, 120
        %2090 = vset.pattern.permute.xlu0 %v2089
        %2091 = vperm.xlu0 %2090, %v1996
        %v2092 = vpop.permute.xlu0 %2091
        %v2093 = vperm.slane %v631, 7
        %v2094 = vlaneseq
        %v2095 = vshrl.u32 %v2094, 7
        %2097 = vset.pattern.permute.xlu0 %v2095
        %2098 = vperm.xlu0 %2097, %v2093
        %v2099 = vpop.permute.xlu0 %2098
        %v2100 = vlaneseq
        %v2101 = vshrl.u32 %v2100, 7
        %v2102 = vadd.s32 %v2101, 8
        %2103 = vset.pattern.permute.xlu0 %v2102
        %2104 = vperm.xlu0 %2103, %v2093
        %v2105 = vpop.permute.xlu0 %2104
        %v2106 = vlaneseq
        %v2107 = vshrl.u32 %v2106, 7
        %v2108 = vadd.s32 %v2107, 16
        %2109 = vset.pattern.permute.xlu0 %v2108
        %2110 = vperm.xlu0 %2109, %v2093
        %v2111 = vpop.permute.xlu0 %2110
        %v2112 = vlaneseq
        %v2113 = vshrl.u32 %v2112, 7
        %v2114 = vadd.s32 %v2113, 24
        %2115 = vset.pattern.permute.xlu0 %v2114
        %2116 = vperm.xlu0 %2115, %v2093
        %v2117 = vpop.permute.xlu0 %2116
        %v2118 = vlaneseq
        %v2119 = vshrl.u32 %v2118, 7
        %v2120 = vadd.s32 %v2119, 32
        %2121 = vset.pattern.permute.xlu0 %v2120
        %2122 = vperm.xlu0 %2121, %v2093
        %v2123 = vpop.permute.xlu0 %2122
        %v2124 = vlaneseq
        %v2125 = vshrl.u32 %v2124, 7
        %v2126 = vadd.s32 %v2125, 40
        %2127 = vset.pattern.permute.xlu0 %v2126
        %2128 = vperm.xlu0 %2127, %v2093
        %v2129 = vpop.permute.xlu0 %2128
        %v2130 = vlaneseq
        %v2131 = vshrl.u32 %v2130, 7
        %v2132 = vadd.s32 %v2131, 48
        %2133 = vset.pattern.permute.xlu0 %v2132
        %2134 = vperm.xlu0 %2133, %v2093
        %v2135 = vpop.permute.xlu0 %2134
        %v2136 = vlaneseq
        %v2137 = vshrl.u32 %v2136, 7
        %v2138 = vadd.s32 %v2137, 56
        %2139 = vset.pattern.permute.xlu0 %v2138
        %2140 = vperm.xlu0 %2139, %v2093
        %v2141 = vpop.permute.xlu0 %2140
        %v2142 = vlaneseq
        %v2143 = vshrl.u32 %v2142, 7
        %v2144 = vadd.s32 %v2143, 64
        %2145 = vset.pattern.permute.xlu0 %v2144
        %2146 = vperm.xlu0 %2145, %v2093
        %v2147 = vpop.permute.xlu0 %2146
        %v2148 = vlaneseq
        %v2149 = vshrl.u32 %v2148, 7
        %v2150 = vadd.s32 %v2149, 72
        %2151 = vset.pattern.permute.xlu0 %v2150
        %2152 = vperm.xlu0 %2151, %v2093
        %v2153 = vpop.permute.xlu0 %2152
        %v2154 = vlaneseq
        %v2155 = vshrl.u32 %v2154, 7
        %v2156 = vadd.s32 %v2155, 80
        %2157 = vset.pattern.permute.xlu0 %v2156
        %2158 = vperm.xlu0 %2157, %v2093
        %v2159 = vpop.permute.xlu0 %2158
        %v2160 = vlaneseq
        %v2161 = vshrl.u32 %v2160, 7
        %v2162 = vadd.s32 %v2161, 88
        %2163 = vset.pattern.permute.xlu0 %v2162
        %2164 = vperm.xlu0 %2163, %v2093
        %v2165 = vpop.permute.xlu0 %2164
        %v2166 = vlaneseq
        %v2167 = vshrl.u32 %v2166, 7
        %v2168 = vadd.s32 %v2167, 96
        %2169 = vset.pattern.permute.xlu0 %v2168
        %2170 = vperm.xlu0 %2169, %v2093
        %v2171 = vpop.permute.xlu0 %2170
        %v2172 = vlaneseq
        %v2173 = vshrl.u32 %v2172, 7
        %v2174 = vadd.s32 %v2173, 104
        %2175 = vset.pattern.permute.xlu0 %v2174
        %2176 = vperm.xlu0 %2175, %v2093
        %v2177 = vpop.permute.xlu0 %2176
        %v2178 = vlaneseq
        %v2179 = vshrl.u32 %v2178, 7
        %v2180 = vadd.s32 %v2179, 112
        %2181 = vset.pattern.permute.xlu0 %v2180
        %2182 = vperm.xlu0 %2181, %v2093
        %v2183 = vpop.permute.xlu0 %2182
        %v2184 = vlaneseq
        %v2185 = vshrl.u32 %v2184, 7
        %v2186 = vadd.s32 %v2185, 120
        %2187 = vset.pattern.permute.xlu0 %v2186
        %2188 = vperm.xlu0 %2187, %v2093
        %v2189 = vpop.permute.xlu0 %2188
        %vm2190 = vcmp.eq.s32.totalorder %v637, %v644
        %vm2191 = vcmp.eq.s32.totalorder %v637, %v650
        %vm2192 = vcmp.eq.s32.totalorder %v637, %v656
        %vm2193 = vcmp.eq.s32.totalorder %v637, %v662
        %vm2194 = vcmp.eq.s32.totalorder %v637, %v668
        %vm2195 = vcmp.eq.s32.totalorder %v637, %v674
        %vm2196 = vcmp.eq.s32.totalorder %v637, %v680
        %vm2197 = vcmp.eq.s32.totalorder %v637, %v686
        %vm2198 = vcmp.eq.s32.totalorder %v637, %v692
        %vm2199 = vcmp.eq.s32.totalorder %v637, %v698
        %vm2200 = vcmp.eq.s32.totalorder %v637, %v704
        %vm2201 = vcmp.eq.s32.totalorder %v637, %v710
        %vm2202 = vcmp.eq.s32.totalorder %v637, %v716
        %vm2203 = vcmp.eq.s32.totalorder %v637, %v722
        %vm2204 = vcmp.eq.s32.totalorder %v637, %v728
        %vm2205 = vcmp.eq.s32.totalorder %v637, %v734
        %vm2206 = vcmp.eq.s32.totalorder %v637, %v741
        %vm2207 = vcmp.eq.s32.totalorder %v637, %v747
        %vm2208 = vcmp.eq.s32.totalorder %v637, %v753
        %vm2209 = vcmp.eq.s32.totalorder %v637, %v759
        %vm2210 = vcmp.eq.s32.totalorder %v637, %v765
        %vm2211 = vcmp.eq.s32.totalorder %v637, %v771
        %vm2212 = vcmp.eq.s32.totalorder %v637, %v777
        %vm2213 = vcmp.eq.s32.totalorder %v637, %v783
        %vm2214 = vcmp.eq.s32.totalorder %v637, %v789
        %vm2215 = vcmp.eq.s32.totalorder %v637, %v795
        %vm2216 = vcmp.eq.s32.totalorder %v637, %v801
        %vm2217 = vcmp.eq.s32.totalorder %v637, %v807
        %vm2218 = vcmp.eq.s32.totalorder %v637, %v813
        %vm2219 = vcmp.eq.s32.totalorder %v637, %v819
        %vm2220 = vcmp.eq.s32.totalorder %v637, %v825
        %vm2221 = vcmp.eq.s32.totalorder %v637, %v831
        %vm2222 = vcmp.eq.s32.totalorder %v637, %v838
        %vm2223 = vcmp.eq.s32.totalorder %v637, %v844
        %vm2224 = vcmp.eq.s32.totalorder %v637, %v850
        %vm2225 = vcmp.eq.s32.totalorder %v637, %v856
        %vm2226 = vcmp.eq.s32.totalorder %v637, %v862
        %vm2227 = vcmp.eq.s32.totalorder %v637, %v868
        %vm2228 = vcmp.eq.s32.totalorder %v637, %v874
        %vm2229 = vcmp.eq.s32.totalorder %v637, %v880
        %vm2230 = vcmp.eq.s32.totalorder %v637, %v886
        %vm2231 = vcmp.eq.s32.totalorder %v637, %v892
        %vm2232 = vcmp.eq.s32.totalorder %v637, %v898
        %vm2233 = vcmp.eq.s32.totalorder %v637, %v904
        %vm2234 = vcmp.eq.s32.totalorder %v637, %v910
        %vm2235 = vcmp.eq.s32.totalorder %v637, %v916
        %vm2236 = vcmp.eq.s32.totalorder %v637, %v922
        %vm2237 = vcmp.eq.s32.totalorder %v637, %v928
        %vm2238 = vcmp.eq.s32.totalorder %v637, %v935
        %vm2239 = vcmp.eq.s32.totalorder %v637, %v941
        %vm2240 = vcmp.eq.s32.totalorder %v637, %v947
        %vm2241 = vcmp.eq.s32.totalorder %v637, %v953
        %vm2242 = vcmp.eq.s32.totalorder %v637, %v959
        %vm2243 = vcmp.eq.s32.totalorder %v637, %v965
        %vm2244 = vcmp.eq.s32.totalorder %v637, %v971
        %vm2245 = vcmp.eq.s32.totalorder %v637, %v977
        %vm2246 = vcmp.eq.s32.totalorder %v637, %v983
        %vm2247 = vcmp.eq.s32.totalorder %v637, %v989
        %vm2248 = vcmp.eq.s32.totalorder %v637, %v995
        %vm2249 = vcmp.eq.s32.totalorder %v637, %v1001
        %vm2250 = vcmp.eq.s32.totalorder %v637, %v1007
        %vm2251 = vcmp.eq.s32.totalorder %v637, %v1013
        %vm2252 = vcmp.eq.s32.totalorder %v637, %v1019
        %vm2253 = vcmp.eq.s32.totalorder %v637, %v1025
        %vm2254 = vcmp.eq.s32.totalorder %v637, %v1032
        %vm2255 = vcmp.eq.s32.totalorder %v637, %v1038
        %vm2256 = vcmp.eq.s32.totalorder %v637, %v1044
        %vm2257 = vcmp.eq.s32.totalorder %v637, %v1050
        %vm2258 = vcmp.eq.s32.totalorder %v637, %v1056
        %vm2259 = vcmp.eq.s32.totalorder %v637, %v1062
        %vm2260 = vcmp.eq.s32.totalorder %v637, %v1068
        %vm2261 = vcmp.eq.s32.totalorder %v637, %v1074
        %vm2262 = vcmp.eq.s32.totalorder %v637, %v1080
        %vm2263 = vcmp.eq.s32.totalorder %v637, %v1086
        %vm2264 = vcmp.eq.s32.totalorder %v637, %v1092
        %vm2265 = vcmp.eq.s32.totalorder %v637, %v1098
        %vm2266 = vcmp.eq.s32.totalorder %v637, %v1104
        %vm2267 = vcmp.eq.s32.totalorder %v637, %v1110
        %vm2268 = vcmp.eq.s32.totalorder %v637, %v1116
        %vm2269 = vcmp.eq.s32.totalorder %v637, %v1122
        %vm2270 = vcmp.eq.s32.totalorder %v637, %v1129
        %vm2271 = vcmp.eq.s32.totalorder %v637, %v1135
        %vm2272 = vcmp.eq.s32.totalorder %v637, %v1141
        %vm2273 = vcmp.eq.s32.totalorder %v637, %v1147
        %vm2274 = vcmp.eq.s32.totalorder %v637, %v1153
        %vm2275 = vcmp.eq.s32.totalorder %v637, %v1159
        %vm2276 = vcmp.eq.s32.totalorder %v637, %v1165
        %vm2277 = vcmp.eq.s32.totalorder %v637, %v1171
        %vm2278 = vcmp.eq.s32.totalorder %v637, %v1177
        %vm2279 = vcmp.eq.s32.totalorder %v637, %v1183
        %vm2280 = vcmp.eq.s32.totalorder %v637, %v1189
        %vm2281 = vcmp.eq.s32.totalorder %v637, %v1195
        %vm2282 = vcmp.eq.s32.totalorder %v637, %v1201
        %vm2283 = vcmp.eq.s32.totalorder %v637, %v1207
        %vm2284 = vcmp.eq.s32.totalorder %v637, %v1213
        %vm2285 = vcmp.eq.s32.totalorder %v637, %v1219
        %vm2286 = vcmp.eq.s32.totalorder %v637, %v1226
        %vm2287 = vcmp.eq.s32.totalorder %v637, %v1232
        %vm2288 = vcmp.eq.s32.totalorder %v637, %v1238
        %vm2289 = vcmp.eq.s32.totalorder %v637, %v1244
        %vm2290 = vcmp.eq.s32.totalorder %v637, %v1250
        %vm2291 = vcmp.eq.s32.totalorder %v637, %v1256
        %vm2292 = vcmp.eq.s32.totalorder %v637, %v1262
        %vm2293 = vcmp.eq.s32.totalorder %v637, %v1268
        %vm2294 = vcmp.eq.s32.totalorder %v637, %v1274
        %vm2295 = vcmp.eq.s32.totalorder %v637, %v1280
        %vm2296 = vcmp.eq.s32.totalorder %v637, %v1286
        %vm2297 = vcmp.eq.s32.totalorder %v637, %v1292
        %vm2298 = vcmp.eq.s32.totalorder %v637, %v1298
        %vm2299 = vcmp.eq.s32.totalorder %v637, %v1304
        %vm2300 = vcmp.eq.s32.totalorder %v637, %v1310
        %vm2301 = vcmp.eq.s32.totalorder %v637, %v1316
        %vm2302 = vcmp.eq.s32.totalorder %v637, %v1323
        %vm2303 = vcmp.eq.s32.totalorder %v637, %v1329
        %vm2304 = vcmp.eq.s32.totalorder %v637, %v1335
        %vm2305 = vcmp.eq.s32.totalorder %v637, %v1341
        %vm2306 = vcmp.eq.s32.totalorder %v637, %v1347
        %vm2307 = vcmp.eq.s32.totalorder %v637, %v1353
        %vm2308 = vcmp.eq.s32.totalorder %v637, %v1359
        %vm2309 = vcmp.eq.s32.totalorder %v637, %v1365
        %vm2310 = vcmp.eq.s32.totalorder %v637, %v1371
        %vm2311 = vcmp.eq.s32.totalorder %v637, %v1377
        %vm2312 = vcmp.eq.s32.totalorder %v637, %v1383
        %vm2313 = vcmp.eq.s32.totalorder %v637, %v1389
        %vm2314 = vcmp.eq.s32.totalorder %v637, %v1395
        %vm2315 = vcmp.eq.s32.totalorder %v637, %v1401
        %vm2316 = vcmp.eq.s32.totalorder %v637, %v1407
        %vm2317 = vcmp.eq.s32.totalorder %v637, %v1413
        %vm2318 = vcmp.eq.s32.totalorder %v637, %v1420
        %vm2319 = vcmp.eq.s32.totalorder %v637, %v1426
        %vm2320 = vcmp.eq.s32.totalorder %v637, %v1432
        %vm2321 = vcmp.eq.s32.totalorder %v637, %v1438
        %vm2322 = vcmp.eq.s32.totalorder %v637, %v1444
        %vm2323 = vcmp.eq.s32.totalorder %v637, %v1450
        %vm2324 = vcmp.eq.s32.totalorder %v637, %v1456
        %vm2325 = vcmp.eq.s32.totalorder %v637, %v1462
        %vm2326 = vcmp.eq.s32.totalorder %v637, %v1468
        %vm2327 = vcmp.eq.s32.totalorder %v637, %v1474
        %vm2328 = vcmp.eq.s32.totalorder %v637, %v1480
        %vm2329 = vcmp.eq.s32.totalorder %v637, %v1486
        %vm2330 = vcmp.eq.s32.totalorder %v637, %v1492
        %vm2331 = vcmp.eq.s32.totalorder %v637, %v1498
        %vm2332 = vcmp.eq.s32.totalorder %v637, %v1504
        %vm2333 = vcmp.eq.s32.totalorder %v637, %v1510
        %vm2334 = vcmp.eq.s32.totalorder %v637, %v1517
        %vm2335 = vcmp.eq.s32.totalorder %v637, %v1523
        %vm2336 = vcmp.eq.s32.totalorder %v637, %v1529
        %vm2337 = vcmp.eq.s32.totalorder %v637, %v1535
        %vm2338 = vcmp.eq.s32.totalorder %v637, %v1541
        %vm2339 = vcmp.eq.s32.totalorder %v637, %v1547
        %vm2340 = vcmp.eq.s32.totalorder %v637, %v1553
        %vm2341 = vcmp.eq.s32.totalorder %v637, %v1559
        %vm2342 = vcmp.eq.s32.totalorder %v637, %v1565
        %vm2343 = vcmp.eq.s32.totalorder %v637, %v1571
        %vm2344 = vcmp.eq.s32.totalorder %v637, %v1577
        %vm2345 = vcmp.eq.s32.totalorder %v637, %v1583
        %vm2346 = vcmp.eq.s32.totalorder %v637, %v1589
        %vm2347 = vcmp.eq.s32.totalorder %v637, %v1595
        %vm2348 = vcmp.eq.s32.totalorder %v637, %v1601
        %vm2349 = vcmp.eq.s32.totalorder %v637, %v1607
        %vm2350 = vcmp.eq.s32.totalorder %v637, %v1614
        %vm2351 = vcmp.eq.s32.totalorder %v637, %v1620
        %vm2352 = vcmp.eq.s32.totalorder %v637, %v1626
        %vm2353 = vcmp.eq.s32.totalorder %v637, %v1632
        %vm2354 = vcmp.eq.s32.totalorder %v637, %v1638
        %vm2355 = vcmp.eq.s32.totalorder %v637, %v1644
        %vm2356 = vcmp.eq.s32.totalorder %v637, %v1650
        %vm2357 = vcmp.eq.s32.totalorder %v637, %v1656
        %vm2358 = vcmp.eq.s32.totalorder %v637, %v1662
        %vm2359 = vcmp.eq.s32.totalorder %v637, %v1668
        %vm2360 = vcmp.eq.s32.totalorder %v637, %v1674
        %vm2361 = vcmp.eq.s32.totalorder %v637, %v1680
        %vm2362 = vcmp.eq.s32.totalorder %v637, %v1686
        %vm2363 = vcmp.eq.s32.totalorder %v637, %v1692
        %vm2364 = vcmp.eq.s32.totalorder %v637, %v1698
        %vm2365 = vcmp.eq.s32.totalorder %v637, %v1704
        %vm2366 = vcmp.eq.s32.totalorder %v637, %v1711
        %vm2367 = vcmp.eq.s32.totalorder %v637, %v1717
        %vm2368 = vcmp.eq.s32.totalorder %v637, %v1723
        %vm2369 = vcmp.eq.s32.totalorder %v637, %v1729
        %vm2370 = vcmp.eq.s32.totalorder %v637, %v1735
        %vm2371 = vcmp.eq.s32.totalorder %v637, %v1741
        %vm2372 = vcmp.eq.s32.totalorder %v637, %v1747
        %vm2373 = vcmp.eq.s32.totalorder %v637, %v1753
        %vm2374 = vcmp.eq.s32.totalorder %v637, %v1759
        %vm2375 = vcmp.eq.s32.totalorder %v637, %v1765
        %vm2376 = vcmp.eq.s32.totalorder %v637, %v1771
        %vm2377 = vcmp.eq.s32.totalorder %v637, %v1777
        %vm2378 = vcmp.eq.s32.totalorder %v637, %v1783
        %vm2379 = vcmp.eq.s32.totalorder %v637, %v1789
        %vm2380 = vcmp.eq.s32.totalorder %v637, %v1795
        %vm2381 = vcmp.eq.s32.totalorder %v637, %v1801
        %vm2382 = vcmp.eq.s32.totalorder %v637, %v1808
        %vm2383 = vcmp.eq.s32.totalorder %v637, %v1814
        %vm2384 = vcmp.eq.s32.totalorder %v637, %v1820
        %vm2385 = vcmp.eq.s32.totalorder %v637, %v1826
        %vm2386 = vcmp.eq.s32.totalorder %v637, %v1832
        %vm2387 = vcmp.eq.s32.totalorder %v637, %v1838
        %vm2388 = vcmp.eq.s32.totalorder %v637, %v1844
        %vm2389 = vcmp.eq.s32.totalorder %v637, %v1850
        %vm2390 = vcmp.eq.s32.totalorder %v637, %v1856
        %vm2391 = vcmp.eq.s32.totalorder %v637, %v1862
        %vm2392 = vcmp.eq.s32.totalorder %v637, %v1868
        %vm2393 = vcmp.eq.s32.totalorder %v637, %v1874
        %vm2394 = vcmp.eq.s32.totalorder %v637, %v1880
        %vm2395 = vcmp.eq.s32.totalorder %v637, %v1886
        %vm2396 = vcmp.eq.s32.totalorder %v637, %v1892
        %vm2397 = vcmp.eq.s32.totalorder %v637, %v1898
        %vm2398 = vcmp.eq.s32.totalorder %v637, %v1905
        %vm2399 = vcmp.eq.s32.totalorder %v637, %v1911
        %vm2400 = vcmp.eq.s32.totalorder %v637, %v1917
        %vm2401 = vcmp.eq.s32.totalorder %v637, %v1923
        %vm2402 = vcmp.eq.s32.totalorder %v637, %v1929
        %vm2403 = vcmp.eq.s32.totalorder %v637, %v1935
        %vm2404 = vcmp.eq.s32.totalorder %v637, %v1941
        %vm2405 = vcmp.eq.s32.totalorder %v637, %v1947
        %vm2406 = vcmp.eq.s32.totalorder %v637, %v1953
        %vm2407 = vcmp.eq.s32.totalorder %v637, %v1959
        %vm2408 = vcmp.eq.s32.totalorder %v637, %v1965
        %vm2409 = vcmp.eq.s32.totalorder %v637, %v1971
        %vm2410 = vcmp.eq.s32.totalorder %v637, %v1977
        %vm2411 = vcmp.eq.s32.totalorder %v637, %v1983
        %vm2412 = vcmp.eq.s32.totalorder %v637, %v1989
        %vm2413 = vcmp.eq.s32.totalorder %v637, %v1995
        %vm2414 = vcmp.eq.s32.totalorder %v637, %v2002
        %vm2415 = vcmp.eq.s32.totalorder %v637, %v2008
        %vm2416 = vcmp.eq.s32.totalorder %v637, %v2014
        %vm2417 = vcmp.eq.s32.totalorder %v637, %v2020
        %vm2418 = vcmp.eq.s32.totalorder %v637, %v2026
        %vm2419 = vcmp.eq.s32.totalorder %v637, %v2032
        %vm2420 = vcmp.eq.s32.totalorder %v637, %v2038
        %vm2421 = vcmp.eq.s32.totalorder %v637, %v2044
        %vm2422 = vcmp.eq.s32.totalorder %v637, %v2050
        %vm2423 = vcmp.eq.s32.totalorder %v637, %v2056
        %vm2424 = vcmp.eq.s32.totalorder %v637, %v2062
        %vm2425 = vcmp.eq.s32.totalorder %v637, %v2068
        %vm2426 = vcmp.eq.s32.totalorder %v637, %v2074
        %vm2427 = vcmp.eq.s32.totalorder %v637, %v2080
        %vm2428 = vcmp.eq.s32.totalorder %v637, %v2086
        %vm2429 = vcmp.eq.s32.totalorder %v637, %v2092
        %vm2430 = vcmp.eq.s32.totalorder %v637, %v2099
        %vm2431 = vcmp.eq.s32.totalorder %v637, %v2105
        %vm2432 = vcmp.eq.s32.totalorder %v637, %v2111
        %vm2433 = vcmp.eq.s32.totalorder %v637, %v2117
        %vm2434 = vcmp.eq.s32.totalorder %v637, %v2123
        %vm2435 = vcmp.eq.s32.totalorder %v637, %v2129
        %vm2436 = vcmp.eq.s32.totalorder %v637, %v2135
        %vm2437 = vcmp.eq.s32.totalorder %v637, %v2141
        %vm2438 = vcmp.eq.s32.totalorder %v637, %v2147
        %vm2439 = vcmp.eq.s32.totalorder %v637, %v2153
        %vm2440 = vcmp.eq.s32.totalorder %v637, %v2159
        %vm2441 = vcmp.eq.s32.totalorder %v637, %v2165
        %vm2442 = vcmp.eq.s32.totalorder %v637, %v2171
        %vm2443 = vcmp.eq.s32.totalorder %v637, %v2177
        %vm2444 = vcmp.eq.s32.totalorder %v637, %v2183
        %vm2445 = vcmp.eq.s32.totalorder %v637, %v2189
        %v2446 = vperm.slane %v634, 0
        %v2447 = vlaneseq
        %v2448 = vshrl.u32 %v2447, 7
        %2450 = vset.pattern.permute.xlu0 %v2448
        %2451 = vperm.xlu0 %2450, %v2446
        %v2452 = vpop.permute.xlu0 %2451
        %v2453 = vlaneseq
        %v2454 = vshrl.u32 %v2453, 7
        %v2455 = vadd.s32 %v2454, 8
        %2456 = vset.pattern.permute.xlu0 %v2455
        %2457 = vperm.xlu0 %2456, %v2446
        %v2458 = vpop.permute.xlu0 %2457
        %v2459 = vlaneseq
        %v2460 = vshrl.u32 %v2459, 7
        %v2461 = vadd.s32 %v2460, 16
        %2462 = vset.pattern.permute.xlu0 %v2461
        %2463 = vperm.xlu0 %2462, %v2446
        %v2464 = vpop.permute.xlu0 %2463
        %v2465 = vlaneseq
        %v2466 = vshrl.u32 %v2465, 7
        %v2467 = vadd.s32 %v2466, 24
        %2468 = vset.pattern.permute.xlu0 %v2467
        %2469 = vperm.xlu0 %2468, %v2446
        %v2470 = vpop.permute.xlu0 %2469
        %v2471 = vlaneseq
        %v2472 = vshrl.u32 %v2471, 7
        %v2473 = vadd.s32 %v2472, 32
        %2474 = vset.pattern.permute.xlu0 %v2473
        %2475 = vperm.xlu0 %2474, %v2446
        %v2476 = vpop.permute.xlu0 %2475
        %v2477 = vlaneseq
        %v2478 = vshrl.u32 %v2477, 7
        %v2479 = vadd.s32 %v2478, 40
        %2480 = vset.pattern.permute.xlu0 %v2479
        %2481 = vperm.xlu0 %2480, %v2446
        %v2482 = vpop.permute.xlu0 %2481
        %v2483 = vlaneseq
        %v2484 = vshrl.u32 %v2483, 7
        %v2485 = vadd.s32 %v2484, 48
        %2486 = vset.pattern.permute.xlu0 %v2485
        %2487 = vperm.xlu0 %2486, %v2446
        %v2488 = vpop.permute.xlu0 %2487
        %v2489 = vlaneseq
        %v2490 = vshrl.u32 %v2489, 7
        %v2491 = vadd.s32 %v2490, 56
        %2492 = vset.pattern.permute.xlu0 %v2491
        %2493 = vperm.xlu0 %2492, %v2446
        %v2494 = vpop.permute.xlu0 %2493
        %v2495 = vlaneseq
        %v2496 = vshrl.u32 %v2495, 7
        %v2497 = vadd.s32 %v2496, 64
        %2498 = vset.pattern.permute.xlu0 %v2497
        %2499 = vperm.xlu0 %2498, %v2446
        %v2500 = vpop.permute.xlu0 %2499
        %v2501 = vlaneseq
        %v2502 = vshrl.u32 %v2501, 7
        %v2503 = vadd.s32 %v2502, 72
        %2504 = vset.pattern.permute.xlu0 %v2503
        %2505 = vperm.xlu0 %2504, %v2446
        %v2506 = vpop.permute.xlu0 %2505
        %v2507 = vlaneseq
        %v2508 = vshrl.u32 %v2507, 7
        %v2509 = vadd.s32 %v2508, 80
        %2510 = vset.pattern.permute.xlu0 %v2509
        %2511 = vperm.xlu0 %2510, %v2446
        %v2512 = vpop.permute.xlu0 %2511
        %v2513 = vlaneseq
        %v2514 = vshrl.u32 %v2513, 7
        %v2515 = vadd.s32 %v2514, 88
        %2516 = vset.pattern.permute.xlu0 %v2515
        %2517 = vperm.xlu0 %2516, %v2446
        %v2518 = vpop.permute.xlu0 %2517
        %v2519 = vlaneseq
        %v2520 = vshrl.u32 %v2519, 7
        %v2521 = vadd.s32 %v2520, 96
        %2522 = vset.pattern.permute.xlu0 %v2521
        %2523 = vperm.xlu0 %2522, %v2446
        %v2524 = vpop.permute.xlu0 %2523
        %v2525 = vlaneseq
        %v2526 = vshrl.u32 %v2525, 7
        %v2527 = vadd.s32 %v2526, 104
        %2528 = vset.pattern.permute.xlu0 %v2527
        %2529 = vperm.xlu0 %2528, %v2446
        %v2530 = vpop.permute.xlu0 %2529
        %v2531 = vlaneseq
        %v2532 = vshrl.u32 %v2531, 7
        %v2533 = vadd.s32 %v2532, 112
        %2534 = vset.pattern.permute.xlu0 %v2533
        %2535 = vperm.xlu0 %2534, %v2446
        %v2536 = vpop.permute.xlu0 %2535
        %v2537 = vlaneseq
        %v2538 = vshrl.u32 %v2537, 7
        %v2539 = vadd.s32 %v2538, 120
        %2540 = vset.pattern.permute.xlu0 %v2539
        %2541 = vperm.xlu0 %2540, %v2446
        %v2542 = vpop.permute.xlu0 %2541
        %v2543 = vperm.slane %v635, 0
        %v2544 = vlaneseq
        %v2545 = vshrl.u32 %v2544, 7
        %2547 = vset.pattern.permute.xlu0 %v2545
        %2548 = vperm.xlu0 %2547, %v2543
        %v2549 = vpop.permute.xlu0 %2548
        %v2550 = vlaneseq
        %v2551 = vshrl.u32 %v2550, 7
        %v2552 = vadd.s32 %v2551, 8
        %2553 = vset.pattern.permute.xlu0 %v2552
        %2554 = vperm.xlu0 %2553, %v2543
        %v2555 = vpop.permute.xlu0 %2554
        %v2556 = vlaneseq
        %v2557 = vshrl.u32 %v2556, 7
        %v2558 = vadd.s32 %v2557, 16
        %2559 = vset.pattern.permute.xlu0 %v2558
        %2560 = vperm.xlu0 %2559, %v2543
        %v2561 = vpop.permute.xlu0 %2560
        %v2562 = vlaneseq
        %v2563 = vshrl.u32 %v2562, 7
        %v2564 = vadd.s32 %v2563, 24
        %2565 = vset.pattern.permute.xlu0 %v2564
        %2566 = vperm.xlu0 %2565, %v2543
        %v2567 = vpop.permute.xlu0 %2566
        %v2568 = vlaneseq
        %v2569 = vshrl.u32 %v2568, 7
        %v2570 = vadd.s32 %v2569, 32
        %2571 = vset.pattern.permute.xlu0 %v2570
        %2572 = vperm.xlu0 %2571, %v2543
        %v2573 = vpop.permute.xlu0 %2572
        %v2574 = vlaneseq
        %v2575 = vshrl.u32 %v2574, 7
        %v2576 = vadd.s32 %v2575, 40
        %2577 = vset.pattern.permute.xlu0 %v2576
        %2578 = vperm.xlu0 %2577, %v2543
        %v2579 = vpop.permute.xlu0 %2578
        %v2580 = vlaneseq
        %v2581 = vshrl.u32 %v2580, 7
        %v2582 = vadd.s32 %v2581, 48
        %2583 = vset.pattern.permute.xlu0 %v2582
        %2584 = vperm.xlu0 %2583, %v2543
        %v2585 = vpop.permute.xlu0 %2584
        %v2586 = vlaneseq
        %v2587 = vshrl.u32 %v2586, 7
        %v2588 = vadd.s32 %v2587, 56
        %2589 = vset.pattern.permute.xlu0 %v2588
        %2590 = vperm.xlu0 %2589, %v2543
        %v2591 = vpop.permute.xlu0 %2590
        %v2592 = vlaneseq
        %v2593 = vshrl.u32 %v2592, 7
        %v2594 = vadd.s32 %v2593, 64
        %2595 = vset.pattern.permute.xlu0 %v2594
        %2596 = vperm.xlu0 %2595, %v2543
        %v2597 = vpop.permute.xlu0 %2596
        %v2598 = vlaneseq
        %v2599 = vshrl.u32 %v2598, 7
        %v2600 = vadd.s32 %v2599, 72
        %2601 = vset.pattern.permute.xlu0 %v2600
        %2602 = vperm.xlu0 %2601, %v2543
        %v2603 = vpop.permute.xlu0 %2602
        %v2604 = vlaneseq
        %v2605 = vshrl.u32 %v2604, 7
        %v2606 = vadd.s32 %v2605, 80
        %2607 = vset.pattern.permute.xlu0 %v2606
        %2608 = vperm.xlu0 %2607, %v2543
        %v2609 = vpop.permute.xlu0 %2608
        %v2610 = vlaneseq
        %v2611 = vshrl.u32 %v2610, 7
        %v2612 = vadd.s32 %v2611, 88
        %2613 = vset.pattern.permute.xlu0 %v2612
        %2614 = vperm.xlu0 %2613, %v2543
        %v2615 = vpop.permute.xlu0 %2614
        %v2616 = vlaneseq
        %v2617 = vshrl.u32 %v2616, 7
        %v2618 = vadd.s32 %v2617, 96
        %2619 = vset.pattern.permute.xlu0 %v2618
        %2620 = vperm.xlu0 %2619, %v2543
        %v2621 = vpop.permute.xlu0 %2620
        %v2622 = vlaneseq
        %v2623 = vshrl.u32 %v2622, 7
        %v2624 = vadd.s32 %v2623, 104
        %2625 = vset.pattern.permute.xlu0 %v2624
        %2626 = vperm.xlu0 %2625, %v2543
        %v2627 = vpop.permute.xlu0 %2626
        %v2628 = vlaneseq
        %v2629 = vshrl.u32 %v2628, 7
        %v2630 = vadd.s32 %v2629, 112
        %2631 = vset.pattern.permute.xlu0 %v2630
        %2632 = vperm.xlu0 %2631, %v2543
        %v2633 = vpop.permute.xlu0 %2632
        %v2634 = vlaneseq
        %v2635 = vshrl.u32 %v2634, 7
        %v2636 = vadd.s32 %v2635, 120
        %2637 = vset.pattern.permute.xlu0 %v2636
        %2638 = vperm.xlu0 %2637, %v2543
        %v2639 = vpop.permute.xlu0 %2638
        %v2640 = vperm.slane %v634, 1
        %v2641 = vlaneseq
        %v2642 = vshrl.u32 %v2641, 7
        %2644 = vset.pattern.permute.xlu0 %v2642
        %2645 = vperm.xlu0 %2644, %v2640
        %v2646 = vpop.permute.xlu0 %2645
        %v2647 = vlaneseq
        %v2648 = vshrl.u32 %v2647, 7
        %v2649 = vadd.s32 %v2648, 8
        %2650 = vset.pattern.permute.xlu0 %v2649
        %2651 = vperm.xlu0 %2650, %v2640
        %v2652 = vpop.permute.xlu0 %2651
        %v2653 = vlaneseq
        %v2654 = vshrl.u32 %v2653, 7
        %v2655 = vadd.s32 %v2654, 16
        %2656 = vset.pattern.permute.xlu0 %v2655
        %2657 = vperm.xlu0 %2656, %v2640
        %v2658 = vpop.permute.xlu0 %2657
        %v2659 = vlaneseq
        %v2660 = vshrl.u32 %v2659, 7
        %v2661 = vadd.s32 %v2660, 24
        %2662 = vset.pattern.permute.xlu0 %v2661
        %2663 = vperm.xlu0 %2662, %v2640
        %v2664 = vpop.permute.xlu0 %2663
        %v2665 = vlaneseq
        %v2666 = vshrl.u32 %v2665, 7
        %v2667 = vadd.s32 %v2666, 32
        %2668 = vset.pattern.permute.xlu0 %v2667
        %2669 = vperm.xlu0 %2668, %v2640
        %v2670 = vpop.permute.xlu0 %2669
        %v2671 = vlaneseq
        %v2672 = vshrl.u32 %v2671, 7
        %v2673 = vadd.s32 %v2672, 40
        %2674 = vset.pattern.permute.xlu0 %v2673
        %2675 = vperm.xlu0 %2674, %v2640
        %v2676 = vpop.permute.xlu0 %2675
        %v2677 = vlaneseq
        %v2678 = vshrl.u32 %v2677, 7
        %v2679 = vadd.s32 %v2678, 48
        %2680 = vset.pattern.permute.xlu0 %v2679
        %2681 = vperm.xlu0 %2680, %v2640
        %v2682 = vpop.permute.xlu0 %2681
        %v2683 = vlaneseq
        %v2684 = vshrl.u32 %v2683, 7
        %v2685 = vadd.s32 %v2684, 56
        %2686 = vset.pattern.permute.xlu0 %v2685
        %2687 = vperm.xlu0 %2686, %v2640
        %v2688 = vpop.permute.xlu0 %2687
        %v2689 = vlaneseq
        %v2690 = vshrl.u32 %v2689, 7
        %v2691 = vadd.s32 %v2690, 64
        %2692 = vset.pattern.permute.xlu0 %v2691
        %2693 = vperm.xlu0 %2692, %v2640
        %v2694 = vpop.permute.xlu0 %2693
        %v2695 = vlaneseq
        %v2696 = vshrl.u32 %v2695, 7
        %v2697 = vadd.s32 %v2696, 72
        %2698 = vset.pattern.permute.xlu0 %v2697
        %2699 = vperm.xlu0 %2698, %v2640
        %v2700 = vpop.permute.xlu0 %2699
        %v2701 = vlaneseq
        %v2702 = vshrl.u32 %v2701, 7
        %v2703 = vadd.s32 %v2702, 80
        %2704 = vset.pattern.permute.xlu0 %v2703
        %2705 = vperm.xlu0 %2704, %v2640
        %v2706 = vpop.permute.xlu0 %2705
        %v2707 = vlaneseq
        %v2708 = vshrl.u32 %v2707, 7
        %v2709 = vadd.s32 %v2708, 88
        %2710 = vset.pattern.permute.xlu0 %v2709
        %2711 = vperm.xlu0 %2710, %v2640
        %v2712 = vpop.permute.xlu0 %2711
        %v2713 = vlaneseq
        %v2714 = vshrl.u32 %v2713, 7
        %v2715 = vadd.s32 %v2714, 96
        %2716 = vset.pattern.permute.xlu0 %v2715
        %2717 = vperm.xlu0 %2716, %v2640
        %v2718 = vpop.permute.xlu0 %2717
        %v2719 = vlaneseq
        %v2720 = vshrl.u32 %v2719, 7
        %v2721 = vadd.s32 %v2720, 104
        %2722 = vset.pattern.permute.xlu0 %v2721
        %2723 = vperm.xlu0 %2722, %v2640
        %v2724 = vpop.permute.xlu0 %2723
        %v2725 = vlaneseq
        %v2726 = vshrl.u32 %v2725, 7
        %v2727 = vadd.s32 %v2726, 112
        %2728 = vset.pattern.permute.xlu0 %v2727
        %2729 = vperm.xlu0 %2728, %v2640
        %v2730 = vpop.permute.xlu0 %2729
        %v2731 = vlaneseq
        %v2732 = vshrl.u32 %v2731, 7
        %v2733 = vadd.s32 %v2732, 120
        %2734 = vset.pattern.permute.xlu0 %v2733
        %2735 = vperm.xlu0 %2734, %v2640
        %v2736 = vpop.permute.xlu0 %2735
        %v2737 = vperm.slane %v635, 1
        %v2738 = vlaneseq
        %v2739 = vshrl.u32 %v2738, 7
        %2741 = vset.pattern.permute.xlu0 %v2739
        %2742 = vperm.xlu0 %2741, %v2737
        %v2743 = vpop.permute.xlu0 %2742
        %v2744 = vlaneseq
        %v2745 = vshrl.u32 %v2744, 7
        %v2746 = vadd.s32 %v2745, 8
        %2747 = vset.pattern.permute.xlu0 %v2746
        %2748 = vperm.xlu0 %2747, %v2737
        %v2749 = vpop.permute.xlu0 %2748
        %v2750 = vlaneseq
        %v2751 = vshrl.u32 %v2750, 7
        %v2752 = vadd.s32 %v2751, 16
        %2753 = vset.pattern.permute.xlu0 %v2752
        %2754 = vperm.xlu0 %2753, %v2737
        %v2755 = vpop.permute.xlu0 %2754
        %v2756 = vlaneseq
        %v2757 = vshrl.u32 %v2756, 7
        %v2758 = vadd.s32 %v2757, 24
        %2759 = vset.pattern.permute.xlu0 %v2758
        %2760 = vperm.xlu0 %2759, %v2737
        %v2761 = vpop.permute.xlu0 %2760
        %v2762 = vlaneseq
        %v2763 = vshrl.u32 %v2762, 7
        %v2764 = vadd.s32 %v2763, 32
        %2765 = vset.pattern.permute.xlu0 %v2764
        %2766 = vperm.xlu0 %2765, %v2737
        %v2767 = vpop.permute.xlu0 %2766
        %v2768 = vlaneseq
        %v2769 = vshrl.u32 %v2768, 7
        %v2770 = vadd.s32 %v2769, 40
        %2771 = vset.pattern.permute.xlu0 %v2770
        %2772 = vperm.xlu0 %2771, %v2737
        %v2773 = vpop.permute.xlu0 %2772
        %v2774 = vlaneseq
        %v2775 = vshrl.u32 %v2774, 7
        %v2776 = vadd.s32 %v2775, 48
        %2777 = vset.pattern.permute.xlu0 %v2776
        %2778 = vperm.xlu0 %2777, %v2737
        %v2779 = vpop.permute.xlu0 %2778
        %v2780 = vlaneseq
        %v2781 = vshrl.u32 %v2780, 7
        %v2782 = vadd.s32 %v2781, 56
        %2783 = vset.pattern.permute.xlu0 %v2782
        %2784 = vperm.xlu0 %2783, %v2737
        %v2785 = vpop.permute.xlu0 %2784
        %v2786 = vlaneseq
        %v2787 = vshrl.u32 %v2786, 7
        %v2788 = vadd.s32 %v2787, 64
        %2789 = vset.pattern.permute.xlu0 %v2788
        %2790 = vperm.xlu0 %2789, %v2737
        %v2791 = vpop.permute.xlu0 %2790
        %v2792 = vlaneseq
        %v2793 = vshrl.u32 %v2792, 7
        %v2794 = vadd.s32 %v2793, 72
        %2795 = vset.pattern.permute.xlu0 %v2794
        %2796 = vperm.xlu0 %2795, %v2737
        %v2797 = vpop.permute.xlu0 %2796
        %v2798 = vlaneseq
        %v2799 = vshrl.u32 %v2798, 7
        %v2800 = vadd.s32 %v2799, 80
        %2801 = vset.pattern.permute.xlu0 %v2800
        %2802 = vperm.xlu0 %2801, %v2737
        %v2803 = vpop.permute.xlu0 %2802
        %v2804 = vlaneseq
        %v2805 = vshrl.u32 %v2804, 7
        %v2806 = vadd.s32 %v2805, 88
        %2807 = vset.pattern.permute.xlu0 %v2806
        %2808 = vperm.xlu0 %2807, %v2737
        %v2809 = vpop.permute.xlu0 %2808
        %v2810 = vlaneseq
        %v2811 = vshrl.u32 %v2810, 7
        %v2812 = vadd.s32 %v2811, 96
        %2813 = vset.pattern.permute.xlu0 %v2812
        %2814 = vperm.xlu0 %2813, %v2737
        %v2815 = vpop.permute.xlu0 %2814
        %v2816 = vlaneseq
        %v2817 = vshrl.u32 %v2816, 7
        %v2818 = vadd.s32 %v2817, 104
        %2819 = vset.pattern.permute.xlu0 %v2818
        %2820 = vperm.xlu0 %2819, %v2737
        %v2821 = vpop.permute.xlu0 %2820
        %v2822 = vlaneseq
        %v2823 = vshrl.u32 %v2822, 7
        %v2824 = vadd.s32 %v2823, 112
        %2825 = vset.pattern.permute.xlu0 %v2824
        %2826 = vperm.xlu0 %2825, %v2737
        %v2827 = vpop.permute.xlu0 %2826
        %v2828 = vlaneseq
        %v2829 = vshrl.u32 %v2828, 7
        %v2830 = vadd.s32 %v2829, 120
        %2831 = vset.pattern.permute.xlu0 %v2830
        %2832 = vperm.xlu0 %2831, %v2737
        %v2833 = vpop.permute.xlu0 %2832
        %v2834 = vperm.slane %v634, 2
        %v2835 = vlaneseq
        %v2836 = vshrl.u32 %v2835, 7
        %2838 = vset.pattern.permute.xlu0 %v2836
        %2839 = vperm.xlu0 %2838, %v2834
        %v2840 = vpop.permute.xlu0 %2839
        %v2841 = vlaneseq
        %v2842 = vshrl.u32 %v2841, 7
        %v2843 = vadd.s32 %v2842, 8
        %2844 = vset.pattern.permute.xlu0 %v2843
        %2845 = vperm.xlu0 %2844, %v2834
        %v2846 = vpop.permute.xlu0 %2845
        %v2847 = vlaneseq
        %v2848 = vshrl.u32 %v2847, 7
        %v2849 = vadd.s32 %v2848, 16
        %2850 = vset.pattern.permute.xlu0 %v2849
        %2851 = vperm.xlu0 %2850, %v2834
        %v2852 = vpop.permute.xlu0 %2851
        %v2853 = vlaneseq
        %v2854 = vshrl.u32 %v2853, 7
        %v2855 = vadd.s32 %v2854, 24
        %2856 = vset.pattern.permute.xlu0 %v2855
        %2857 = vperm.xlu0 %2856, %v2834
        %v2858 = vpop.permute.xlu0 %2857
        %v2859 = vlaneseq
        %v2860 = vshrl.u32 %v2859, 7
        %v2861 = vadd.s32 %v2860, 32
        %2862 = vset.pattern.permute.xlu0 %v2861
        %2863 = vperm.xlu0 %2862, %v2834
        %v2864 = vpop.permute.xlu0 %2863
        %v2865 = vlaneseq
        %v2866 = vshrl.u32 %v2865, 7
        %v2867 = vadd.s32 %v2866, 40
        %2868 = vset.pattern.permute.xlu0 %v2867
        %2869 = vperm.xlu0 %2868, %v2834
        %v2870 = vpop.permute.xlu0 %2869
        %v2871 = vlaneseq
        %v2872 = vshrl.u32 %v2871, 7
        %v2873 = vadd.s32 %v2872, 48
        %2874 = vset.pattern.permute.xlu0 %v2873
        %2875 = vperm.xlu0 %2874, %v2834
        %v2876 = vpop.permute.xlu0 %2875
        %v2877 = vlaneseq
        %v2878 = vshrl.u32 %v2877, 7
        %v2879 = vadd.s32 %v2878, 56
        %2880 = vset.pattern.permute.xlu0 %v2879
        %2881 = vperm.xlu0 %2880, %v2834
        %v2882 = vpop.permute.xlu0 %2881
        %v2883 = vlaneseq
        %v2884 = vshrl.u32 %v2883, 7
        %v2885 = vadd.s32 %v2884, 64
        %2886 = vset.pattern.permute.xlu0 %v2885
        %2887 = vperm.xlu0 %2886, %v2834
        %v2888 = vpop.permute.xlu0 %2887
        %v2889 = vlaneseq
        %v2890 = vshrl.u32 %v2889, 7
        %v2891 = vadd.s32 %v2890, 72
        %2892 = vset.pattern.permute.xlu0 %v2891
        %2893 = vperm.xlu0 %2892, %v2834
        %v2894 = vpop.permute.xlu0 %2893
        %v2895 = vlaneseq
        %v2896 = vshrl.u32 %v2895, 7
        %v2897 = vadd.s32 %v2896, 80
        %2898 = vset.pattern.permute.xlu0 %v2897
        %2899 = vperm.xlu0 %2898, %v2834
        %v2900 = vpop.permute.xlu0 %2899
        %v2901 = vlaneseq
        %v2902 = vshrl.u32 %v2901, 7
        %v2903 = vadd.s32 %v2902, 88
        %2904 = vset.pattern.permute.xlu0 %v2903
        %2905 = vperm.xlu0 %2904, %v2834
        %v2906 = vpop.permute.xlu0 %2905
        %v2907 = vlaneseq
        %v2908 = vshrl.u32 %v2907, 7
        %v2909 = vadd.s32 %v2908, 96
        %2910 = vset.pattern.permute.xlu0 %v2909
        %2911 = vperm.xlu0 %2910, %v2834
        %v2912 = vpop.permute.xlu0 %2911
        %v2913 = vlaneseq
        %v2914 = vshrl.u32 %v2913, 7
        %v2915 = vadd.s32 %v2914, 104
        %2916 = vset.pattern.permute.xlu0 %v2915
        %2917 = vperm.xlu0 %2916, %v2834
        %v2918 = vpop.permute.xlu0 %2917
        %v2919 = vlaneseq
        %v2920 = vshrl.u32 %v2919, 7
        %v2921 = vadd.s32 %v2920, 112
        %2922 = vset.pattern.permute.xlu0 %v2921
        %2923 = vperm.xlu0 %2922, %v2834
        %v2924 = vpop.permute.xlu0 %2923
        %v2925 = vlaneseq
        %v2926 = vshrl.u32 %v2925, 7
        %v2927 = vadd.s32 %v2926, 120
        %2928 = vset.pattern.permute.xlu0 %v2927
        %2929 = vperm.xlu0 %2928, %v2834
        %v2930 = vpop.permute.xlu0 %2929
        %v2931 = vperm.slane %v635, 2
        %v2932 = vlaneseq
        %v2933 = vshrl.u32 %v2932, 7
        %2935 = vset.pattern.permute.xlu0 %v2933
        %2936 = vperm.xlu0 %2935, %v2931
        %v2937 = vpop.permute.xlu0 %2936
        %v2938 = vlaneseq
        %v2939 = vshrl.u32 %v2938, 7
        %v2940 = vadd.s32 %v2939, 8
        %2941 = vset.pattern.permute.xlu0 %v2940
        %2942 = vperm.xlu0 %2941, %v2931
        %v2943 = vpop.permute.xlu0 %2942
        %v2944 = vlaneseq
        %v2945 = vshrl.u32 %v2944, 7
        %v2946 = vadd.s32 %v2945, 16
        %2947 = vset.pattern.permute.xlu0 %v2946
        %2948 = vperm.xlu0 %2947, %v2931
        %v2949 = vpop.permute.xlu0 %2948
        %v2950 = vlaneseq
        %v2951 = vshrl.u32 %v2950, 7
        %v2952 = vadd.s32 %v2951, 24
        %2953 = vset.pattern.permute.xlu0 %v2952
        %2954 = vperm.xlu0 %2953, %v2931
        %v2955 = vpop.permute.xlu0 %2954
        %v2956 = vlaneseq
        %v2957 = vshrl.u32 %v2956, 7
        %v2958 = vadd.s32 %v2957, 32
        %2959 = vset.pattern.permute.xlu0 %v2958
        %2960 = vperm.xlu0 %2959, %v2931
        %v2961 = vpop.permute.xlu0 %2960
        %v2962 = vlaneseq
        %v2963 = vshrl.u32 %v2962, 7
        %v2964 = vadd.s32 %v2963, 40
        %2965 = vset.pattern.permute.xlu0 %v2964
        %2966 = vperm.xlu0 %2965, %v2931
        %v2967 = vpop.permute.xlu0 %2966
        %v2968 = vlaneseq
        %v2969 = vshrl.u32 %v2968, 7
        %v2970 = vadd.s32 %v2969, 48
        %2971 = vset.pattern.permute.xlu0 %v2970
        %2972 = vperm.xlu0 %2971, %v2931
        %v2973 = vpop.permute.xlu0 %2972
        %v2974 = vlaneseq
        %v2975 = vshrl.u32 %v2974, 7
        %v2976 = vadd.s32 %v2975, 56
        %2977 = vset.pattern.permute.xlu0 %v2976
        %2978 = vperm.xlu0 %2977, %v2931
        %v2979 = vpop.permute.xlu0 %2978
        %v2980 = vlaneseq
        %v2981 = vshrl.u32 %v2980, 7
        %v2982 = vadd.s32 %v2981, 64
        %2983 = vset.pattern.permute.xlu0 %v2982
        %2984 = vperm.xlu0 %2983, %v2931
        %v2985 = vpop.permute.xlu0 %2984
        %v2986 = vlaneseq
        %v2987 = vshrl.u32 %v2986, 7
        %v2988 = vadd.s32 %v2987, 72
        %2989 = vset.pattern.permute.xlu0 %v2988
        %2990 = vperm.xlu0 %2989, %v2931
        %v2991 = vpop.permute.xlu0 %2990
        %v2992 = vlaneseq
        %v2993 = vshrl.u32 %v2992, 7
        %v2994 = vadd.s32 %v2993, 80
        %2995 = vset.pattern.permute.xlu0 %v2994
        %2996 = vperm.xlu0 %2995, %v2931
        %v2997 = vpop.permute.xlu0 %2996
        %v2998 = vlaneseq
        %v2999 = vshrl.u32 %v2998, 7
        %v3000 = vadd.s32 %v2999, 88
        %3001 = vset.pattern.permute.xlu0 %v3000
        %3002 = vperm.xlu0 %3001, %v2931
        %v3003 = vpop.permute.xlu0 %3002
        %v3004 = vlaneseq
        %v3005 = vshrl.u32 %v3004, 7
        %v3006 = vadd.s32 %v3005, 96
        %3007 = vset.pattern.permute.xlu0 %v3006
        %3008 = vperm.xlu0 %3007, %v2931
        %v3009 = vpop.permute.xlu0 %3008
        %v3010 = vlaneseq
        %v3011 = vshrl.u32 %v3010, 7
        %v3012 = vadd.s32 %v3011, 104
        %3013 = vset.pattern.permute.xlu0 %v3012
        %3014 = vperm.xlu0 %3013, %v2931
        %v3015 = vpop.permute.xlu0 %3014
        %v3016 = vlaneseq
        %v3017 = vshrl.u32 %v3016, 7
        %v3018 = vadd.s32 %v3017, 112
        %3019 = vset.pattern.permute.xlu0 %v3018
        %3020 = vperm.xlu0 %3019, %v2931
        %v3021 = vpop.permute.xlu0 %3020
        %v3022 = vlaneseq
        %v3023 = vshrl.u32 %v3022, 7
        %v3024 = vadd.s32 %v3023, 120
        %3025 = vset.pattern.permute.xlu0 %v3024
        %3026 = vperm.xlu0 %3025, %v2931
        %v3027 = vpop.permute.xlu0 %3026
        %v3028 = vperm.slane %v634, 3
        %v3029 = vlaneseq
        %v3030 = vshrl.u32 %v3029, 7
        %3032 = vset.pattern.permute.xlu0 %v3030
        %3033 = vperm.xlu0 %3032, %v3028
        %v3034 = vpop.permute.xlu0 %3033
        %v3035 = vlaneseq
        %v3036 = vshrl.u32 %v3035, 7
        %v3037 = vadd.s32 %v3036, 8
        %3038 = vset.pattern.permute.xlu0 %v3037
        %3039 = vperm.xlu0 %3038, %v3028
        %v3040 = vpop.permute.xlu0 %3039
        %v3041 = vlaneseq
        %v3042 = vshrl.u32 %v3041, 7
        %v3043 = vadd.s32 %v3042, 16
        %3044 = vset.pattern.permute.xlu0 %v3043
        %3045 = vperm.xlu0 %3044, %v3028
        %v3046 = vpop.permute.xlu0 %3045
        %v3047 = vlaneseq
        %v3048 = vshrl.u32 %v3047, 7
        %v3049 = vadd.s32 %v3048, 24
        %3050 = vset.pattern.permute.xlu0 %v3049
        %3051 = vperm.xlu0 %3050, %v3028
        %v3052 = vpop.permute.xlu0 %3051
        %v3053 = vlaneseq
        %v3054 = vshrl.u32 %v3053, 7
        %v3055 = vadd.s32 %v3054, 32
        %3056 = vset.pattern.permute.xlu0 %v3055
        %3057 = vperm.xlu0 %3056, %v3028
        %v3058 = vpop.permute.xlu0 %3057
        %v3059 = vlaneseq
        %v3060 = vshrl.u32 %v3059, 7
        %v3061 = vadd.s32 %v3060, 40
        %3062 = vset.pattern.permute.xlu0 %v3061
        %3063 = vperm.xlu0 %3062, %v3028
        %v3064 = vpop.permute.xlu0 %3063
        %v3065 = vlaneseq
        %v3066 = vshrl.u32 %v3065, 7
        %v3067 = vadd.s32 %v3066, 48
        %3068 = vset.pattern.permute.xlu0 %v3067
        %3069 = vperm.xlu0 %3068, %v3028
        %v3070 = vpop.permute.xlu0 %3069
        %v3071 = vlaneseq
        %v3072 = vshrl.u32 %v3071, 7
        %v3073 = vadd.s32 %v3072, 56
        %3074 = vset.pattern.permute.xlu0 %v3073
        %3075 = vperm.xlu0 %3074, %v3028
        %v3076 = vpop.permute.xlu0 %3075
        %v3077 = vlaneseq
        %v3078 = vshrl.u32 %v3077, 7
        %v3079 = vadd.s32 %v3078, 64
        %3080 = vset.pattern.permute.xlu0 %v3079
        %3081 = vperm.xlu0 %3080, %v3028
        %v3082 = vpop.permute.xlu0 %3081
        %v3083 = vlaneseq
        %v3084 = vshrl.u32 %v3083, 7
        %v3085 = vadd.s32 %v3084, 72
        %3086 = vset.pattern.permute.xlu0 %v3085
        %3087 = vperm.xlu0 %3086, %v3028
        %v3088 = vpop.permute.xlu0 %3087
        %v3089 = vlaneseq
        %v3090 = vshrl.u32 %v3089, 7
        %v3091 = vadd.s32 %v3090, 80
        %3092 = vset.pattern.permute.xlu0 %v3091
        %3093 = vperm.xlu0 %3092, %v3028
        %v3094 = vpop.permute.xlu0 %3093
        %v3095 = vlaneseq
        %v3096 = vshrl.u32 %v3095, 7
        %v3097 = vadd.s32 %v3096, 88
        %3098 = vset.pattern.permute.xlu0 %v3097
        %3099 = vperm.xlu0 %3098, %v3028
        %v3100 = vpop.permute.xlu0 %3099
        %v3101 = vlaneseq
        %v3102 = vshrl.u32 %v3101, 7
        %v3103 = vadd.s32 %v3102, 96
        %3104 = vset.pattern.permute.xlu0 %v3103
        %3105 = vperm.xlu0 %3104, %v3028
        %v3106 = vpop.permute.xlu0 %3105
        %v3107 = vlaneseq
        %v3108 = vshrl.u32 %v3107, 7
        %v3109 = vadd.s32 %v3108, 104
        %3110 = vset.pattern.permute.xlu0 %v3109
        %3111 = vperm.xlu0 %3110, %v3028
        %v3112 = vpop.permute.xlu0 %3111
        %v3113 = vlaneseq
        %v3114 = vshrl.u32 %v3113, 7
        %v3115 = vadd.s32 %v3114, 112
        %3116 = vset.pattern.permute.xlu0 %v3115
        %3117 = vperm.xlu0 %3116, %v3028
        %v3118 = vpop.permute.xlu0 %3117
        %v3119 = vlaneseq
        %v3120 = vshrl.u32 %v3119, 7
        %v3121 = vadd.s32 %v3120, 120
        %3122 = vset.pattern.permute.xlu0 %v3121
        %3123 = vperm.xlu0 %3122, %v3028
        %v3124 = vpop.permute.xlu0 %3123
        %v3125 = vperm.slane %v635, 3
        %v3126 = vlaneseq
        %v3127 = vshrl.u32 %v3126, 7
        %3129 = vset.pattern.permute.xlu0 %v3127
        %3130 = vperm.xlu0 %3129, %v3125
        %v3131 = vpop.permute.xlu0 %3130
        %v3132 = vlaneseq
        %v3133 = vshrl.u32 %v3132, 7
        %v3134 = vadd.s32 %v3133, 8
        %3135 = vset.pattern.permute.xlu0 %v3134
        %3136 = vperm.xlu0 %3135, %v3125
        %v3137 = vpop.permute.xlu0 %3136
        %v3138 = vlaneseq
        %v3139 = vshrl.u32 %v3138, 7
        %v3140 = vadd.s32 %v3139, 16
        %3141 = vset.pattern.permute.xlu0 %v3140
        %3142 = vperm.xlu0 %3141, %v3125
        %v3143 = vpop.permute.xlu0 %3142
        %v3144 = vlaneseq
        %v3145 = vshrl.u32 %v3144, 7
        %v3146 = vadd.s32 %v3145, 24
        %3147 = vset.pattern.permute.xlu0 %v3146
        %3148 = vperm.xlu0 %3147, %v3125
        %v3149 = vpop.permute.xlu0 %3148
        %v3150 = vlaneseq
        %v3151 = vshrl.u32 %v3150, 7
        %v3152 = vadd.s32 %v3151, 32
        %3153 = vset.pattern.permute.xlu0 %v3152
        %3154 = vperm.xlu0 %3153, %v3125
        %v3155 = vpop.permute.xlu0 %3154
        %v3156 = vlaneseq
        %v3157 = vshrl.u32 %v3156, 7
        %v3158 = vadd.s32 %v3157, 40
        %3159 = vset.pattern.permute.xlu0 %v3158
        %3160 = vperm.xlu0 %3159, %v3125
        %v3161 = vpop.permute.xlu0 %3160
        %v3162 = vlaneseq
        %v3163 = vshrl.u32 %v3162, 7
        %v3164 = vadd.s32 %v3163, 48
        %3165 = vset.pattern.permute.xlu0 %v3164
        %3166 = vperm.xlu0 %3165, %v3125
        %v3167 = vpop.permute.xlu0 %3166
        %v3168 = vlaneseq
        %v3169 = vshrl.u32 %v3168, 7
        %v3170 = vadd.s32 %v3169, 56
        %3171 = vset.pattern.permute.xlu0 %v3170
        %3172 = vperm.xlu0 %3171, %v3125
        %v3173 = vpop.permute.xlu0 %3172
        %v3174 = vlaneseq
        %v3175 = vshrl.u32 %v3174, 7
        %v3176 = vadd.s32 %v3175, 64
        %3177 = vset.pattern.permute.xlu0 %v3176
        %3178 = vperm.xlu0 %3177, %v3125
        %v3179 = vpop.permute.xlu0 %3178
        %v3180 = vlaneseq
        %v3181 = vshrl.u32 %v3180, 7
        %v3182 = vadd.s32 %v3181, 72
        %3183 = vset.pattern.permute.xlu0 %v3182
        %3184 = vperm.xlu0 %3183, %v3125
        %v3185 = vpop.permute.xlu0 %3184
        %v3186 = vlaneseq
        %v3187 = vshrl.u32 %v3186, 7
        %v3188 = vadd.s32 %v3187, 80
        %3189 = vset.pattern.permute.xlu0 %v3188
        %3190 = vperm.xlu0 %3189, %v3125
        %v3191 = vpop.permute.xlu0 %3190
        %v3192 = vlaneseq
        %v3193 = vshrl.u32 %v3192, 7
        %v3194 = vadd.s32 %v3193, 88
        %3195 = vset.pattern.permute.xlu0 %v3194
        %3196 = vperm.xlu0 %3195, %v3125
        %v3197 = vpop.permute.xlu0 %3196
        %v3198 = vlaneseq
        %v3199 = vshrl.u32 %v3198, 7
        %v3200 = vadd.s32 %v3199, 96
        %3201 = vset.pattern.permute.xlu0 %v3200
        %3202 = vperm.xlu0 %3201, %v3125
        %v3203 = vpop.permute.xlu0 %3202
        %v3204 = vlaneseq
        %v3205 = vshrl.u32 %v3204, 7
        %v3206 = vadd.s32 %v3205, 104
        %3207 = vset.pattern.permute.xlu0 %v3206
        %3208 = vperm.xlu0 %3207, %v3125
        %v3209 = vpop.permute.xlu0 %3208
        %v3210 = vlaneseq
        %v3211 = vshrl.u32 %v3210, 7
        %v3212 = vadd.s32 %v3211, 112
        %3213 = vset.pattern.permute.xlu0 %v3212
        %3214 = vperm.xlu0 %3213, %v3125
        %v3215 = vpop.permute.xlu0 %3214
        %v3216 = vlaneseq
        %v3217 = vshrl.u32 %v3216, 7
        %v3218 = vadd.s32 %v3217, 120
        %3219 = vset.pattern.permute.xlu0 %v3218
        %3220 = vperm.xlu0 %3219, %v3125
        %v3221 = vpop.permute.xlu0 %3220
        %v3222 = vperm.slane %v634, 4
        %v3223 = vlaneseq
        %v3224 = vshrl.u32 %v3223, 7
        %3226 = vset.pattern.permute.xlu0 %v3224
        %3227 = vperm.xlu0 %3226, %v3222
        %v3228 = vpop.permute.xlu0 %3227
        %v3229 = vlaneseq
        %v3230 = vshrl.u32 %v3229, 7
        %v3231 = vadd.s32 %v3230, 8
        %3232 = vset.pattern.permute.xlu0 %v3231
        %3233 = vperm.xlu0 %3232, %v3222
        %v3234 = vpop.permute.xlu0 %3233
        %v3235 = vlaneseq
        %v3236 = vshrl.u32 %v3235, 7
        %v3237 = vadd.s32 %v3236, 16
        %3238 = vset.pattern.permute.xlu0 %v3237
        %3239 = vperm.xlu0 %3238, %v3222
        %v3240 = vpop.permute.xlu0 %3239
        %v3241 = vlaneseq
        %v3242 = vshrl.u32 %v3241, 7
        %v3243 = vadd.s32 %v3242, 24
        %3244 = vset.pattern.permute.xlu0 %v3243
        %3245 = vperm.xlu0 %3244, %v3222
        %v3246 = vpop.permute.xlu0 %3245
        %v3247 = vlaneseq
        %v3248 = vshrl.u32 %v3247, 7
        %v3249 = vadd.s32 %v3248, 32
        %3250 = vset.pattern.permute.xlu0 %v3249
        %3251 = vperm.xlu0 %3250, %v3222
        %v3252 = vpop.permute.xlu0 %3251
        %v3253 = vlaneseq
        %v3254 = vshrl.u32 %v3253, 7
        %v3255 = vadd.s32 %v3254, 40
        %3256 = vset.pattern.permute.xlu0 %v3255
        %3257 = vperm.xlu0 %3256, %v3222
        %v3258 = vpop.permute.xlu0 %3257
        %v3259 = vlaneseq
        %v3260 = vshrl.u32 %v3259, 7
        %v3261 = vadd.s32 %v3260, 48
        %3262 = vset.pattern.permute.xlu0 %v3261
        %3263 = vperm.xlu0 %3262, %v3222
        %v3264 = vpop.permute.xlu0 %3263
        %v3265 = vlaneseq
        %v3266 = vshrl.u32 %v3265, 7
        %v3267 = vadd.s32 %v3266, 56
        %3268 = vset.pattern.permute.xlu0 %v3267
        %3269 = vperm.xlu0 %3268, %v3222
        %v3270 = vpop.permute.xlu0 %3269
        %v3271 = vlaneseq
        %v3272 = vshrl.u32 %v3271, 7
        %v3273 = vadd.s32 %v3272, 64
        %3274 = vset.pattern.permute.xlu0 %v3273
        %3275 = vperm.xlu0 %3274, %v3222
        %v3276 = vpop.permute.xlu0 %3275
        %v3277 = vlaneseq
        %v3278 = vshrl.u32 %v3277, 7
        %v3279 = vadd.s32 %v3278, 72
        %3280 = vset.pattern.permute.xlu0 %v3279
        %3281 = vperm.xlu0 %3280, %v3222
        %v3282 = vpop.permute.xlu0 %3281
        %v3283 = vlaneseq
        %v3284 = vshrl.u32 %v3283, 7
        %v3285 = vadd.s32 %v3284, 80
        %3286 = vset.pattern.permute.xlu0 %v3285
        %3287 = vperm.xlu0 %3286, %v3222
        %v3288 = vpop.permute.xlu0 %3287
        %v3289 = vlaneseq
        %v3290 = vshrl.u32 %v3289, 7
        %v3291 = vadd.s32 %v3290, 88
        %3292 = vset.pattern.permute.xlu0 %v3291
        %3293 = vperm.xlu0 %3292, %v3222
        %v3294 = vpop.permute.xlu0 %3293
        %v3295 = vlaneseq
        %v3296 = vshrl.u32 %v3295, 7
        %v3297 = vadd.s32 %v3296, 96
        %3298 = vset.pattern.permute.xlu0 %v3297
        %3299 = vperm.xlu0 %3298, %v3222
        %v3300 = vpop.permute.xlu0 %3299
        %v3301 = vlaneseq
        %v3302 = vshrl.u32 %v3301, 7
        %v3303 = vadd.s32 %v3302, 104
        %3304 = vset.pattern.permute.xlu0 %v3303
        %3305 = vperm.xlu0 %3304, %v3222
        %v3306 = vpop.permute.xlu0 %3305
        %v3307 = vlaneseq
        %v3308 = vshrl.u32 %v3307, 7
        %v3309 = vadd.s32 %v3308, 112
        %3310 = vset.pattern.permute.xlu0 %v3309
        %3311 = vperm.xlu0 %3310, %v3222
        %v3312 = vpop.permute.xlu0 %3311
        %v3313 = vlaneseq
        %v3314 = vshrl.u32 %v3313, 7
        %v3315 = vadd.s32 %v3314, 120
        %3316 = vset.pattern.permute.xlu0 %v3315
        %3317 = vperm.xlu0 %3316, %v3222
        %v3318 = vpop.permute.xlu0 %3317
        %v3319 = vperm.slane %v635, 4
        %v3320 = vlaneseq
        %v3321 = vshrl.u32 %v3320, 7
        %3323 = vset.pattern.permute.xlu0 %v3321
        %3324 = vperm.xlu0 %3323, %v3319
        %v3325 = vpop.permute.xlu0 %3324
        %v3326 = vlaneseq
        %v3327 = vshrl.u32 %v3326, 7
        %v3328 = vadd.s32 %v3327, 8
        %3329 = vset.pattern.permute.xlu0 %v3328
        %3330 = vperm.xlu0 %3329, %v3319
        %v3331 = vpop.permute.xlu0 %3330
        %v3332 = vlaneseq
        %v3333 = vshrl.u32 %v3332, 7
        %v3334 = vadd.s32 %v3333, 16
        %3335 = vset.pattern.permute.xlu0 %v3334
        %3336 = vperm.xlu0 %3335, %v3319
        %v3337 = vpop.permute.xlu0 %3336
        %v3338 = vlaneseq
        %v3339 = vshrl.u32 %v3338, 7
        %v3340 = vadd.s32 %v3339, 24
        %3341 = vset.pattern.permute.xlu0 %v3340
        %3342 = vperm.xlu0 %3341, %v3319
        %v3343 = vpop.permute.xlu0 %3342
        %v3344 = vlaneseq
        %v3345 = vshrl.u32 %v3344, 7
        %v3346 = vadd.s32 %v3345, 32
        %3347 = vset.pattern.permute.xlu0 %v3346
        %3348 = vperm.xlu0 %3347, %v3319
        %v3349 = vpop.permute.xlu0 %3348
        %v3350 = vlaneseq
        %v3351 = vshrl.u32 %v3350, 7
        %v3352 = vadd.s32 %v3351, 40
        %3353 = vset.pattern.permute.xlu0 %v3352
        %3354 = vperm.xlu0 %3353, %v3319
        %v3355 = vpop.permute.xlu0 %3354
        %v3356 = vlaneseq
        %v3357 = vshrl.u32 %v3356, 7
        %v3358 = vadd.s32 %v3357, 48
        %3359 = vset.pattern.permute.xlu0 %v3358
        %3360 = vperm.xlu0 %3359, %v3319
        %v3361 = vpop.permute.xlu0 %3360
        %v3362 = vlaneseq
        %v3363 = vshrl.u32 %v3362, 7
        %v3364 = vadd.s32 %v3363, 56
        %3365 = vset.pattern.permute.xlu0 %v3364
        %3366 = vperm.xlu0 %3365, %v3319
        %v3367 = vpop.permute.xlu0 %3366
        %v3368 = vlaneseq
        %v3369 = vshrl.u32 %v3368, 7
        %v3370 = vadd.s32 %v3369, 64
        %3371 = vset.pattern.permute.xlu0 %v3370
        %3372 = vperm.xlu0 %3371, %v3319
        %v3373 = vpop.permute.xlu0 %3372
        %v3374 = vlaneseq
        %v3375 = vshrl.u32 %v3374, 7
        %v3376 = vadd.s32 %v3375, 72
        %3377 = vset.pattern.permute.xlu0 %v3376
        %3378 = vperm.xlu0 %3377, %v3319
        %v3379 = vpop.permute.xlu0 %3378
        %v3380 = vlaneseq
        %v3381 = vshrl.u32 %v3380, 7
        %v3382 = vadd.s32 %v3381, 80
        %3383 = vset.pattern.permute.xlu0 %v3382
        %3384 = vperm.xlu0 %3383, %v3319
        %v3385 = vpop.permute.xlu0 %3384
        %v3386 = vlaneseq
        %v3387 = vshrl.u32 %v3386, 7
        %v3388 = vadd.s32 %v3387, 88
        %3389 = vset.pattern.permute.xlu0 %v3388
        %3390 = vperm.xlu0 %3389, %v3319
        %v3391 = vpop.permute.xlu0 %3390
        %v3392 = vlaneseq
        %v3393 = vshrl.u32 %v3392, 7
        %v3394 = vadd.s32 %v3393, 96
        %3395 = vset.pattern.permute.xlu0 %v3394
        %3396 = vperm.xlu0 %3395, %v3319
        %v3397 = vpop.permute.xlu0 %3396
        %v3398 = vlaneseq
        %v3399 = vshrl.u32 %v3398, 7
        %v3400 = vadd.s32 %v3399, 104
        %3401 = vset.pattern.permute.xlu0 %v3400
        %3402 = vperm.xlu0 %3401, %v3319
        %v3403 = vpop.permute.xlu0 %3402
        %v3404 = vlaneseq
        %v3405 = vshrl.u32 %v3404, 7
        %v3406 = vadd.s32 %v3405, 112
        %3407 = vset.pattern.permute.xlu0 %v3406
        %3408 = vperm.xlu0 %3407, %v3319
        %v3409 = vpop.permute.xlu0 %3408
        %v3410 = vlaneseq
        %v3411 = vshrl.u32 %v3410, 7
        %v3412 = vadd.s32 %v3411, 120
        %3413 = vset.pattern.permute.xlu0 %v3412
        %3414 = vperm.xlu0 %3413, %v3319
        %v3415 = vpop.permute.xlu0 %3414
        %v3416 = vperm.slane %v634, 5
        %v3417 = vlaneseq
        %v3418 = vshrl.u32 %v3417, 7
        %3420 = vset.pattern.permute.xlu0 %v3418
        %3421 = vperm.xlu0 %3420, %v3416
        %v3422 = vpop.permute.xlu0 %3421
        %v3423 = vlaneseq
        %v3424 = vshrl.u32 %v3423, 7
        %v3425 = vadd.s32 %v3424, 8
        %3426 = vset.pattern.permute.xlu0 %v3425
        %3427 = vperm.xlu0 %3426, %v3416
        %v3428 = vpop.permute.xlu0 %3427
        %v3429 = vlaneseq
        %v3430 = vshrl.u32 %v3429, 7
        %v3431 = vadd.s32 %v3430, 16
        %3432 = vset.pattern.permute.xlu0 %v3431
        %3433 = vperm.xlu0 %3432, %v3416
        %v3434 = vpop.permute.xlu0 %3433
        %v3435 = vlaneseq
        %v3436 = vshrl.u32 %v3435, 7
        %v3437 = vadd.s32 %v3436, 24
        %3438 = vset.pattern.permute.xlu0 %v3437
        %3439 = vperm.xlu0 %3438, %v3416
        %v3440 = vpop.permute.xlu0 %3439
        %v3441 = vlaneseq
        %v3442 = vshrl.u32 %v3441, 7
        %v3443 = vadd.s32 %v3442, 32
        %3444 = vset.pattern.permute.xlu0 %v3443
        %3445 = vperm.xlu0 %3444, %v3416
        %v3446 = vpop.permute.xlu0 %3445
        %v3447 = vlaneseq
        %v3448 = vshrl.u32 %v3447, 7
        %v3449 = vadd.s32 %v3448, 40
        %3450 = vset.pattern.permute.xlu0 %v3449
        %3451 = vperm.xlu0 %3450, %v3416
        %v3452 = vpop.permute.xlu0 %3451
        %v3453 = vlaneseq
        %v3454 = vshrl.u32 %v3453, 7
        %v3455 = vadd.s32 %v3454, 48
        %3456 = vset.pattern.permute.xlu0 %v3455
        %3457 = vperm.xlu0 %3456, %v3416
        %v3458 = vpop.permute.xlu0 %3457
        %v3459 = vlaneseq
        %v3460 = vshrl.u32 %v3459, 7
        %v3461 = vadd.s32 %v3460, 56
        %3462 = vset.pattern.permute.xlu0 %v3461
        %3463 = vperm.xlu0 %3462, %v3416
        %v3464 = vpop.permute.xlu0 %3463
        %v3465 = vlaneseq
        %v3466 = vshrl.u32 %v3465, 7
        %v3467 = vadd.s32 %v3466, 64
        %3468 = vset.pattern.permute.xlu0 %v3467
        %3469 = vperm.xlu0 %3468, %v3416
        %v3470 = vpop.permute.xlu0 %3469
        %v3471 = vlaneseq
        %v3472 = vshrl.u32 %v3471, 7
        %v3473 = vadd.s32 %v3472, 72
        %3474 = vset.pattern.permute.xlu0 %v3473
        %3475 = vperm.xlu0 %3474, %v3416
        %v3476 = vpop.permute.xlu0 %3475
        %v3477 = vlaneseq
        %v3478 = vshrl.u32 %v3477, 7
        %v3479 = vadd.s32 %v3478, 80
        %3480 = vset.pattern.permute.xlu0 %v3479
        %3481 = vperm.xlu0 %3480, %v3416
        %v3482 = vpop.permute.xlu0 %3481
        %v3483 = vlaneseq
        %v3484 = vshrl.u32 %v3483, 7
        %v3485 = vadd.s32 %v3484, 88
        %3486 = vset.pattern.permute.xlu0 %v3485
        %3487 = vperm.xlu0 %3486, %v3416
        %v3488 = vpop.permute.xlu0 %3487
        %v3489 = vlaneseq
        %v3490 = vshrl.u32 %v3489, 7
        %v3491 = vadd.s32 %v3490, 96
        %3492 = vset.pattern.permute.xlu0 %v3491
        %3493 = vperm.xlu0 %3492, %v3416
        %v3494 = vpop.permute.xlu0 %3493
        %v3495 = vlaneseq
        %v3496 = vshrl.u32 %v3495, 7
        %v3497 = vadd.s32 %v3496, 104
        %3498 = vset.pattern.permute.xlu0 %v3497
        %3499 = vperm.xlu0 %3498, %v3416
        %v3500 = vpop.permute.xlu0 %3499
        %v3501 = vlaneseq
        %v3502 = vshrl.u32 %v3501, 7
        %v3503 = vadd.s32 %v3502, 112
        %3504 = vset.pattern.permute.xlu0 %v3503
        %3505 = vperm.xlu0 %3504, %v3416
        %v3506 = vpop.permute.xlu0 %3505
        %v3507 = vlaneseq
        %v3508 = vshrl.u32 %v3507, 7
        %v3509 = vadd.s32 %v3508, 120
        %3510 = vset.pattern.permute.xlu0 %v3509
        %3511 = vperm.xlu0 %3510, %v3416
        %v3512 = vpop.permute.xlu0 %3511
        %v3513 = vperm.slane %v635, 5
        %v3514 = vlaneseq
        %v3515 = vshrl.u32 %v3514, 7
        %3517 = vset.pattern.permute.xlu0 %v3515
        %3518 = vperm.xlu0 %3517, %v3513
        %v3519 = vpop.permute.xlu0 %3518
        %v3520 = vlaneseq
        %v3521 = vshrl.u32 %v3520, 7
        %v3522 = vadd.s32 %v3521, 8
        %3523 = vset.pattern.permute.xlu0 %v3522
        %3524 = vperm.xlu0 %3523, %v3513
        %v3525 = vpop.permute.xlu0 %3524
        %v3526 = vlaneseq
        %v3527 = vshrl.u32 %v3526, 7
        %v3528 = vadd.s32 %v3527, 16
        %3529 = vset.pattern.permute.xlu0 %v3528
        %3530 = vperm.xlu0 %3529, %v3513
        %v3531 = vpop.permute.xlu0 %3530
        %v3532 = vlaneseq
        %v3533 = vshrl.u32 %v3532, 7
        %v3534 = vadd.s32 %v3533, 24
        %3535 = vset.pattern.permute.xlu0 %v3534
        %3536 = vperm.xlu0 %3535, %v3513
        %v3537 = vpop.permute.xlu0 %3536
        %v3538 = vlaneseq
        %v3539 = vshrl.u32 %v3538, 7
        %v3540 = vadd.s32 %v3539, 32
        %3541 = vset.pattern.permute.xlu0 %v3540
        %3542 = vperm.xlu0 %3541, %v3513
        %v3543 = vpop.permute.xlu0 %3542
        %v3544 = vlaneseq
        %v3545 = vshrl.u32 %v3544, 7
        %v3546 = vadd.s32 %v3545, 40
        %3547 = vset.pattern.permute.xlu0 %v3546
        %3548 = vperm.xlu0 %3547, %v3513
        %v3549 = vpop.permute.xlu0 %3548
        %v3550 = vlaneseq
        %v3551 = vshrl.u32 %v3550, 7
        %v3552 = vadd.s32 %v3551, 48
        %3553 = vset.pattern.permute.xlu0 %v3552
        %3554 = vperm.xlu0 %3553, %v3513
        %v3555 = vpop.permute.xlu0 %3554
        %v3556 = vlaneseq
        %v3557 = vshrl.u32 %v3556, 7
        %v3558 = vadd.s32 %v3557, 56
        %3559 = vset.pattern.permute.xlu0 %v3558
        %3560 = vperm.xlu0 %3559, %v3513
        %v3561 = vpop.permute.xlu0 %3560
        %v3562 = vlaneseq
        %v3563 = vshrl.u32 %v3562, 7
        %v3564 = vadd.s32 %v3563, 64
        %3565 = vset.pattern.permute.xlu0 %v3564
        %3566 = vperm.xlu0 %3565, %v3513
        %v3567 = vpop.permute.xlu0 %3566
        %v3568 = vlaneseq
        %v3569 = vshrl.u32 %v3568, 7
        %v3570 = vadd.s32 %v3569, 72
        %3571 = vset.pattern.permute.xlu0 %v3570
        %3572 = vperm.xlu0 %3571, %v3513
        %v3573 = vpop.permute.xlu0 %3572
        %v3574 = vlaneseq
        %v3575 = vshrl.u32 %v3574, 7
        %v3576 = vadd.s32 %v3575, 80
        %3577 = vset.pattern.permute.xlu0 %v3576
        %3578 = vperm.xlu0 %3577, %v3513
        %v3579 = vpop.permute.xlu0 %3578
        %v3580 = vlaneseq
        %v3581 = vshrl.u32 %v3580, 7
        %v3582 = vadd.s32 %v3581, 88
        %3583 = vset.pattern.permute.xlu0 %v3582
        %3584 = vperm.xlu0 %3583, %v3513
        %v3585 = vpop.permute.xlu0 %3584
        %v3586 = vlaneseq
        %v3587 = vshrl.u32 %v3586, 7
        %v3588 = vadd.s32 %v3587, 96
        %3589 = vset.pattern.permute.xlu0 %v3588
        %3590 = vperm.xlu0 %3589, %v3513
        %v3591 = vpop.permute.xlu0 %3590
        %v3592 = vlaneseq
        %v3593 = vshrl.u32 %v3592, 7
        %v3594 = vadd.s32 %v3593, 104
        %3595 = vset.pattern.permute.xlu0 %v3594
        %3596 = vperm.xlu0 %3595, %v3513
        %v3597 = vpop.permute.xlu0 %3596
        %v3598 = vlaneseq
        %v3599 = vshrl.u32 %v3598, 7
        %v3600 = vadd.s32 %v3599, 112
        %3601 = vset.pattern.permute.xlu0 %v3600
        %3602 = vperm.xlu0 %3601, %v3513
        %v3603 = vpop.permute.xlu0 %3602
        %v3604 = vlaneseq
        %v3605 = vshrl.u32 %v3604, 7
        %v3606 = vadd.s32 %v3605, 120
        %3607 = vset.pattern.permute.xlu0 %v3606
        %3608 = vperm.xlu0 %3607, %v3513
        %v3609 = vpop.permute.xlu0 %3608
        %v3610 = vperm.slane %v634, 6
        %v3611 = vlaneseq
        %v3612 = vshrl.u32 %v3611, 7
        %3614 = vset.pattern.permute.xlu0 %v3612
        %3615 = vperm.xlu0 %3614, %v3610
        %v3616 = vpop.permute.xlu0 %3615
        %v3617 = vlaneseq
        %v3618 = vshrl.u32 %v3617, 7
        %v3619 = vadd.s32 %v3618, 8
        %3620 = vset.pattern.permute.xlu0 %v3619
        %3621 = vperm.xlu0 %3620, %v3610
        %v3622 = vpop.permute.xlu0 %3621
        %v3623 = vlaneseq
        %v3624 = vshrl.u32 %v3623, 7
        %v3625 = vadd.s32 %v3624, 16
        %3626 = vset.pattern.permute.xlu0 %v3625
        %3627 = vperm.xlu0 %3626, %v3610
        %v3628 = vpop.permute.xlu0 %3627
        %v3629 = vlaneseq
        %v3630 = vshrl.u32 %v3629, 7
        %v3631 = vadd.s32 %v3630, 24
        %3632 = vset.pattern.permute.xlu0 %v3631
        %3633 = vperm.xlu0 %3632, %v3610
        %v3634 = vpop.permute.xlu0 %3633
        %v3635 = vlaneseq
        %v3636 = vshrl.u32 %v3635, 7
        %v3637 = vadd.s32 %v3636, 32
        %3638 = vset.pattern.permute.xlu0 %v3637
        %3639 = vperm.xlu0 %3638, %v3610
        %v3640 = vpop.permute.xlu0 %3639
        %v3641 = vlaneseq
        %v3642 = vshrl.u32 %v3641, 7
        %v3643 = vadd.s32 %v3642, 40
        %3644 = vset.pattern.permute.xlu0 %v3643
        %3645 = vperm.xlu0 %3644, %v3610
        %v3646 = vpop.permute.xlu0 %3645
        %v3647 = vlaneseq
        %v3648 = vshrl.u32 %v3647, 7
        %v3649 = vadd.s32 %v3648, 48
        %3650 = vset.pattern.permute.xlu0 %v3649
        %3651 = vperm.xlu0 %3650, %v3610
        %v3652 = vpop.permute.xlu0 %3651
        %v3653 = vlaneseq
        %v3654 = vshrl.u32 %v3653, 7
        %v3655 = vadd.s32 %v3654, 56
        %3656 = vset.pattern.permute.xlu0 %v3655
        %3657 = vperm.xlu0 %3656, %v3610
        %v3658 = vpop.permute.xlu0 %3657
        %v3659 = vlaneseq
        %v3660 = vshrl.u32 %v3659, 7
        %v3661 = vadd.s32 %v3660, 64
        %3662 = vset.pattern.permute.xlu0 %v3661
        %3663 = vperm.xlu0 %3662, %v3610
        %v3664 = vpop.permute.xlu0 %3663
        %v3665 = vlaneseq
        %v3666 = vshrl.u32 %v3665, 7
        %v3667 = vadd.s32 %v3666, 72
        %3668 = vset.pattern.permute.xlu0 %v3667
        %3669 = vperm.xlu0 %3668, %v3610
        %v3670 = vpop.permute.xlu0 %3669
        %v3671 = vlaneseq
        %v3672 = vshrl.u32 %v3671, 7
        %v3673 = vadd.s32 %v3672, 80
        %3674 = vset.pattern.permute.xlu0 %v3673
        %3675 = vperm.xlu0 %3674, %v3610
        %v3676 = vpop.permute.xlu0 %3675
        %v3677 = vlaneseq
        %v3678 = vshrl.u32 %v3677, 7
        %v3679 = vadd.s32 %v3678, 88
        %3680 = vset.pattern.permute.xlu0 %v3679
        %3681 = vperm.xlu0 %3680, %v3610
        %v3682 = vpop.permute.xlu0 %3681
        %v3683 = vlaneseq
        %v3684 = vshrl.u32 %v3683, 7
        %v3685 = vadd.s32 %v3684, 96
        %3686 = vset.pattern.permute.xlu0 %v3685
        %3687 = vperm.xlu0 %3686, %v3610
        %v3688 = vpop.permute.xlu0 %3687
        %v3689 = vlaneseq
        %v3690 = vshrl.u32 %v3689, 7
        %v3691 = vadd.s32 %v3690, 104
        %3692 = vset.pattern.permute.xlu0 %v3691
        %3693 = vperm.xlu0 %3692, %v3610
        %v3694 = vpop.permute.xlu0 %3693
        %v3695 = vlaneseq
        %v3696 = vshrl.u32 %v3695, 7
        %v3697 = vadd.s32 %v3696, 112
        %3698 = vset.pattern.permute.xlu0 %v3697
        %3699 = vperm.xlu0 %3698, %v3610
        %v3700 = vpop.permute.xlu0 %3699
        %v3701 = vlaneseq
        %v3702 = vshrl.u32 %v3701, 7
        %v3703 = vadd.s32 %v3702, 120
        %3704 = vset.pattern.permute.xlu0 %v3703
        %3705 = vperm.xlu0 %3704, %v3610
        %v3706 = vpop.permute.xlu0 %3705
        %v3707 = vperm.slane %v635, 6
        %v3708 = vlaneseq
        %v3709 = vshrl.u32 %v3708, 7
        %3711 = vset.pattern.permute.xlu0 %v3709
        %3712 = vperm.xlu0 %3711, %v3707
        %v3713 = vpop.permute.xlu0 %3712
        %v3714 = vlaneseq
        %v3715 = vshrl.u32 %v3714, 7
        %v3716 = vadd.s32 %v3715, 8
        %3717 = vset.pattern.permute.xlu0 %v3716
        %3718 = vperm.xlu0 %3717, %v3707
        %v3719 = vpop.permute.xlu0 %3718
        %v3720 = vlaneseq
        %v3721 = vshrl.u32 %v3720, 7
        %v3722 = vadd.s32 %v3721, 16
        %3723 = vset.pattern.permute.xlu0 %v3722
        %3724 = vperm.xlu0 %3723, %v3707
        %v3725 = vpop.permute.xlu0 %3724
        %v3726 = vlaneseq
        %v3727 = vshrl.u32 %v3726, 7
        %v3728 = vadd.s32 %v3727, 24
        %3729 = vset.pattern.permute.xlu0 %v3728
        %3730 = vperm.xlu0 %3729, %v3707
        %v3731 = vpop.permute.xlu0 %3730
        %v3732 = vlaneseq
        %v3733 = vshrl.u32 %v3732, 7
        %v3734 = vadd.s32 %v3733, 32
        %3735 = vset.pattern.permute.xlu0 %v3734
        %3736 = vperm.xlu0 %3735, %v3707
        %v3737 = vpop.permute.xlu0 %3736
        %v3738 = vlaneseq
        %v3739 = vshrl.u32 %v3738, 7
        %v3740 = vadd.s32 %v3739, 40
        %3741 = vset.pattern.permute.xlu0 %v3740
        %3742 = vperm.xlu0 %3741, %v3707
        %v3743 = vpop.permute.xlu0 %3742
        %v3744 = vlaneseq
        %v3745 = vshrl.u32 %v3744, 7
        %v3746 = vadd.s32 %v3745, 48
        %3747 = vset.pattern.permute.xlu0 %v3746
        %3748 = vperm.xlu0 %3747, %v3707
        %v3749 = vpop.permute.xlu0 %3748
        %v3750 = vlaneseq
        %v3751 = vshrl.u32 %v3750, 7
        %v3752 = vadd.s32 %v3751, 56
        %3753 = vset.pattern.permute.xlu0 %v3752
        %3754 = vperm.xlu0 %3753, %v3707
        %v3755 = vpop.permute.xlu0 %3754
        %v3756 = vlaneseq
        %v3757 = vshrl.u32 %v3756, 7
        %v3758 = vadd.s32 %v3757, 64
        %3759 = vset.pattern.permute.xlu0 %v3758
        %3760 = vperm.xlu0 %3759, %v3707
        %v3761 = vpop.permute.xlu0 %3760
        %v3762 = vlaneseq
        %v3763 = vshrl.u32 %v3762, 7
        %v3764 = vadd.s32 %v3763, 72
        %3765 = vset.pattern.permute.xlu0 %v3764
        %3766 = vperm.xlu0 %3765, %v3707
        %v3767 = vpop.permute.xlu0 %3766
        %v3768 = vlaneseq
        %v3769 = vshrl.u32 %v3768, 7
        %v3770 = vadd.s32 %v3769, 80
        %3771 = vset.pattern.permute.xlu0 %v3770
        %3772 = vperm.xlu0 %3771, %v3707
        %v3773 = vpop.permute.xlu0 %3772
        %v3774 = vlaneseq
        %v3775 = vshrl.u32 %v3774, 7
        %v3776 = vadd.s32 %v3775, 88
        %3777 = vset.pattern.permute.xlu0 %v3776
        %3778 = vperm.xlu0 %3777, %v3707
        %v3779 = vpop.permute.xlu0 %3778
        %v3780 = vlaneseq
        %v3781 = vshrl.u32 %v3780, 7
        %v3782 = vadd.s32 %v3781, 96
        %3783 = vset.pattern.permute.xlu0 %v3782
        %3784 = vperm.xlu0 %3783, %v3707
        %v3785 = vpop.permute.xlu0 %3784
        %v3786 = vlaneseq
        %v3787 = vshrl.u32 %v3786, 7
        %v3788 = vadd.s32 %v3787, 104
        %3789 = vset.pattern.permute.xlu0 %v3788
        %3790 = vperm.xlu0 %3789, %v3707
        %v3791 = vpop.permute.xlu0 %3790
        %v3792 = vlaneseq
        %v3793 = vshrl.u32 %v3792, 7
        %v3794 = vadd.s32 %v3793, 112
        %3795 = vset.pattern.permute.xlu0 %v3794
        %3796 = vperm.xlu0 %3795, %v3707
        %v3797 = vpop.permute.xlu0 %3796
        %v3798 = vlaneseq
        %v3799 = vshrl.u32 %v3798, 7
        %v3800 = vadd.s32 %v3799, 120
        %3801 = vset.pattern.permute.xlu0 %v3800
        %3802 = vperm.xlu0 %3801, %v3707
        %v3803 = vpop.permute.xlu0 %3802
        %v3804 = vperm.slane %v634, 7
        %v3805 = vlaneseq
        %v3806 = vshrl.u32 %v3805, 7
        %3808 = vset.pattern.permute.xlu0 %v3806
        %3809 = vperm.xlu0 %3808, %v3804
        %v3810 = vpop.permute.xlu0 %3809
        %v3811 = vlaneseq
        %v3812 = vshrl.u32 %v3811, 7
        %v3813 = vadd.s32 %v3812, 8
        %3814 = vset.pattern.permute.xlu0 %v3813
        %3815 = vperm.xlu0 %3814, %v3804
        %v3816 = vpop.permute.xlu0 %3815
        %v3817 = vlaneseq
        %v3818 = vshrl.u32 %v3817, 7
        %v3819 = vadd.s32 %v3818, 16
        %3820 = vset.pattern.permute.xlu0 %v3819
        %3821 = vperm.xlu0 %3820, %v3804
        %v3822 = vpop.permute.xlu0 %3821
        %v3823 = vlaneseq
        %v3824 = vshrl.u32 %v3823, 7
        %v3825 = vadd.s32 %v3824, 24
        %3826 = vset.pattern.permute.xlu0 %v3825
        %3827 = vperm.xlu0 %3826, %v3804
        %v3828 = vpop.permute.xlu0 %3827
        %v3829 = vlaneseq
        %v3830 = vshrl.u32 %v3829, 7
        %v3831 = vadd.s32 %v3830, 32
        %3832 = vset.pattern.permute.xlu0 %v3831
        %3833 = vperm.xlu0 %3832, %v3804
        %v3834 = vpop.permute.xlu0 %3833
        %v3835 = vlaneseq
        %v3836 = vshrl.u32 %v3835, 7
        %v3837 = vadd.s32 %v3836, 40
        %3838 = vset.pattern.permute.xlu0 %v3837
        %3839 = vperm.xlu0 %3838, %v3804
        %v3840 = vpop.permute.xlu0 %3839
        %v3841 = vlaneseq
        %v3842 = vshrl.u32 %v3841, 7
        %v3843 = vadd.s32 %v3842, 48
        %3844 = vset.pattern.permute.xlu0 %v3843
        %3845 = vperm.xlu0 %3844, %v3804
        %v3846 = vpop.permute.xlu0 %3845
        %v3847 = vlaneseq
        %v3848 = vshrl.u32 %v3847, 7
        %v3849 = vadd.s32 %v3848, 56
        %3850 = vset.pattern.permute.xlu0 %v3849
        %3851 = vperm.xlu0 %3850, %v3804
        %v3852 = vpop.permute.xlu0 %3851
        %v3853 = vlaneseq
        %v3854 = vshrl.u32 %v3853, 7
        %v3855 = vadd.s32 %v3854, 64
        %3856 = vset.pattern.permute.xlu0 %v3855
        %3857 = vperm.xlu0 %3856, %v3804
        %v3858 = vpop.permute.xlu0 %3857
        %v3859 = vlaneseq
        %v3860 = vshrl.u32 %v3859, 7
        %v3861 = vadd.s32 %v3860, 72
        %3862 = vset.pattern.permute.xlu0 %v3861
        %3863 = vperm.xlu0 %3862, %v3804
        %v3864 = vpop.permute.xlu0 %3863
        %v3865 = vlaneseq
        %v3866 = vshrl.u32 %v3865, 7
        %v3867 = vadd.s32 %v3866, 80
        %3868 = vset.pattern.permute.xlu0 %v3867
        %3869 = vperm.xlu0 %3868, %v3804
        %v3870 = vpop.permute.xlu0 %3869
        %v3871 = vlaneseq
        %v3872 = vshrl.u32 %v3871, 7
        %v3873 = vadd.s32 %v3872, 88
        %3874 = vset.pattern.permute.xlu0 %v3873
        %3875 = vperm.xlu0 %3874, %v3804
        %v3876 = vpop.permute.xlu0 %3875
        %v3877 = vlaneseq
        %v3878 = vshrl.u32 %v3877, 7
        %v3879 = vadd.s32 %v3878, 96
        %3880 = vset.pattern.permute.xlu0 %v3879
        %3881 = vperm.xlu0 %3880, %v3804
        %v3882 = vpop.permute.xlu0 %3881
        %v3883 = vlaneseq
        %v3884 = vshrl.u32 %v3883, 7
        %v3885 = vadd.s32 %v3884, 104
        %3886 = vset.pattern.permute.xlu0 %v3885
        %3887 = vperm.xlu0 %3886, %v3804
        %v3888 = vpop.permute.xlu0 %3887
        %v3889 = vlaneseq
        %v3890 = vshrl.u32 %v3889, 7
        %v3891 = vadd.s32 %v3890, 112
        %3892 = vset.pattern.permute.xlu0 %v3891
        %3893 = vperm.xlu0 %3892, %v3804
        %v3894 = vpop.permute.xlu0 %3893
        %v3895 = vlaneseq
        %v3896 = vshrl.u32 %v3895, 7
        %v3897 = vadd.s32 %v3896, 120
        %3898 = vset.pattern.permute.xlu0 %v3897
        %3899 = vperm.xlu0 %3898, %v3804
        %v3900 = vpop.permute.xlu0 %3899
        %v3901 = vperm.slane %v635, 7
        %v3902 = vlaneseq
        %v3903 = vshrl.u32 %v3902, 7
        %3905 = vset.pattern.permute.xlu0 %v3903
        %3906 = vperm.xlu0 %3905, %v3901
        %v3907 = vpop.permute.xlu0 %3906
        %v3908 = vlaneseq
        %v3909 = vshrl.u32 %v3908, 7
        %v3910 = vadd.s32 %v3909, 8
        %3911 = vset.pattern.permute.xlu0 %v3910
        %3912 = vperm.xlu0 %3911, %v3901
        %v3913 = vpop.permute.xlu0 %3912
        %v3914 = vlaneseq
        %v3915 = vshrl.u32 %v3914, 7
        %v3916 = vadd.s32 %v3915, 16
        %3917 = vset.pattern.permute.xlu0 %v3916
        %3918 = vperm.xlu0 %3917, %v3901
        %v3919 = vpop.permute.xlu0 %3918
        %v3920 = vlaneseq
        %v3921 = vshrl.u32 %v3920, 7
        %v3922 = vadd.s32 %v3921, 24
        %3923 = vset.pattern.permute.xlu0 %v3922
        %3924 = vperm.xlu0 %3923, %v3901
        %v3925 = vpop.permute.xlu0 %3924
        %v3926 = vlaneseq
        %v3927 = vshrl.u32 %v3926, 7
        %v3928 = vadd.s32 %v3927, 32
        %3929 = vset.pattern.permute.xlu0 %v3928
        %3930 = vperm.xlu0 %3929, %v3901
        %v3931 = vpop.permute.xlu0 %3930
        %v3932 = vlaneseq
        %v3933 = vshrl.u32 %v3932, 7
        %v3934 = vadd.s32 %v3933, 40
        %3935 = vset.pattern.permute.xlu0 %v3934
        %3936 = vperm.xlu0 %3935, %v3901
        %v3937 = vpop.permute.xlu0 %3936
        %v3938 = vlaneseq
        %v3939 = vshrl.u32 %v3938, 7
        %v3940 = vadd.s32 %v3939, 48
        %3941 = vset.pattern.permute.xlu0 %v3940
        %3942 = vperm.xlu0 %3941, %v3901
        %v3943 = vpop.permute.xlu0 %3942
        %v3944 = vlaneseq
        %v3945 = vshrl.u32 %v3944, 7
        %v3946 = vadd.s32 %v3945, 56
        %3947 = vset.pattern.permute.xlu0 %v3946
        %3948 = vperm.xlu0 %3947, %v3901
        %v3949 = vpop.permute.xlu0 %3948
        %v3950 = vlaneseq
        %v3951 = vshrl.u32 %v3950, 7
        %v3952 = vadd.s32 %v3951, 64
        %3953 = vset.pattern.permute.xlu0 %v3952
        %3954 = vperm.xlu0 %3953, %v3901
        %v3955 = vpop.permute.xlu0 %3954
        %v3956 = vlaneseq
        %v3957 = vshrl.u32 %v3956, 7
        %v3958 = vadd.s32 %v3957, 72
        %3959 = vset.pattern.permute.xlu0 %v3958
        %3960 = vperm.xlu0 %3959, %v3901
        %v3961 = vpop.permute.xlu0 %3960
        %v3962 = vlaneseq
        %v3963 = vshrl.u32 %v3962, 7
        %v3964 = vadd.s32 %v3963, 80
        %3965 = vset.pattern.permute.xlu0 %v3964
        %3966 = vperm.xlu0 %3965, %v3901
        %v3967 = vpop.permute.xlu0 %3966
        %v3968 = vlaneseq
        %v3969 = vshrl.u32 %v3968, 7
        %v3970 = vadd.s32 %v3969, 88
        %3971 = vset.pattern.permute.xlu0 %v3970
        %3972 = vperm.xlu0 %3971, %v3901
        %v3973 = vpop.permute.xlu0 %3972
        %v3974 = vlaneseq
        %v3975 = vshrl.u32 %v3974, 7
        %v3976 = vadd.s32 %v3975, 96
        %3977 = vset.pattern.permute.xlu0 %v3976
        %3978 = vperm.xlu0 %3977, %v3901
        %v3979 = vpop.permute.xlu0 %3978
        %v3980 = vlaneseq
        %v3981 = vshrl.u32 %v3980, 7
        %v3982 = vadd.s32 %v3981, 104
        %3983 = vset.pattern.permute.xlu0 %v3982
        %3984 = vperm.xlu0 %3983, %v3901
        %v3985 = vpop.permute.xlu0 %3984
        %v3986 = vlaneseq
        %v3987 = vshrl.u32 %v3986, 7
        %v3988 = vadd.s32 %v3987, 112
        %3989 = vset.pattern.permute.xlu0 %v3988
        %3990 = vperm.xlu0 %3989, %v3901
        %v3991 = vpop.permute.xlu0 %3990
        %v3992 = vlaneseq
        %v3993 = vshrl.u32 %v3992, 7
        %v3994 = vadd.s32 %v3993, 120
        %3995 = vset.pattern.permute.xlu0 %v3994
        %3996 = vperm.xlu0 %3995, %v3901
        %v3997 = vpop.permute.xlu0 %3996
        %v3998 = vsel %vm2190, %v2452, 0.0
        %v3999 = vsel %vm2191, %v2458, 0.0
        %v4000 = vsel %vm2192, %v2464, 0.0
        %v4001 = vsel %vm2193, %v2470, 0.0
        %v4002 = vsel %vm2194, %v2476, 0.0
        %v4003 = vsel %vm2195, %v2482, 0.0
        %v4004 = vsel %vm2196, %v2488, 0.0
        %v4005 = vsel %vm2197, %v2494, 0.0
        %v4006 = vsel %vm2198, %v2500, 0.0
        %v4007 = vsel %vm2199, %v2506, 0.0
        %v4008 = vsel %vm2200, %v2512, 0.0
        %v4009 = vsel %vm2201, %v2518, 0.0
        %v4010 = vsel %vm2202, %v2524, 0.0
        %v4011 = vsel %vm2203, %v2530, 0.0
        %v4012 = vsel %vm2204, %v2536, 0.0
        %v4013 = vsel %vm2205, %v2542, 0.0
        %v4014 = vsel %vm2206, %v2549, 0.0
        %v4015 = vsel %vm2207, %v2555, 0.0
        %v4016 = vsel %vm2208, %v2561, 0.0
        %v4017 = vsel %vm2209, %v2567, 0.0
        %v4018 = vsel %vm2210, %v2573, 0.0
        %v4019 = vsel %vm2211, %v2579, 0.0
        %v4020 = vsel %vm2212, %v2585, 0.0
        %v4021 = vsel %vm2213, %v2591, 0.0
        %v4022 = vsel %vm2214, %v2597, 0.0
        %v4023 = vsel %vm2215, %v2603, 0.0
        %v4024 = vsel %vm2216, %v2609, 0.0
        %v4025 = vsel %vm2217, %v2615, 0.0
        %v4026 = vsel %vm2218, %v2621, 0.0
        %v4027 = vsel %vm2219, %v2627, 0.0
        %v4028 = vsel %vm2220, %v2633, 0.0
        %v4029 = vsel %vm2221, %v2639, 0.0
        %v4030 = vsel %vm2222, %v2646, 0.0
        %v4031 = vsel %vm2223, %v2652, 0.0
        %v4032 = vsel %vm2224, %v2658, 0.0
        %v4033 = vsel %vm2225, %v2664, 0.0
        %v4034 = vsel %vm2226, %v2670, 0.0
        %v4035 = vsel %vm2227, %v2676, 0.0
        %v4036 = vsel %vm2228, %v2682, 0.0
        %v4037 = vsel %vm2229, %v2688, 0.0
        %v4038 = vsel %vm2230, %v2694, 0.0
        %v4039 = vsel %vm2231, %v2700, 0.0
        %v4040 = vsel %vm2232, %v2706, 0.0
        %v4041 = vsel %vm2233, %v2712, 0.0
        %v4042 = vsel %vm2234, %v2718, 0.0
        %v4043 = vsel %vm2235, %v2724, 0.0
        %v4044 = vsel %vm2236, %v2730, 0.0
        %v4045 = vsel %vm2237, %v2736, 0.0
        %v4046 = vsel %vm2238, %v2743, 0.0
        %v4047 = vsel %vm2239, %v2749, 0.0
        %v4048 = vsel %vm2240, %v2755, 0.0
        %v4049 = vsel %vm2241, %v2761, 0.0
        %v4050 = vsel %vm2242, %v2767, 0.0
        %v4051 = vsel %vm2243, %v2773, 0.0
        %v4052 = vsel %vm2244, %v2779, 0.0
        %v4053 = vsel %vm2245, %v2785, 0.0
        %v4054 = vsel %vm2246, %v2791, 0.0
        %v4055 = vsel %vm2247, %v2797, 0.0
        %v4056 = vsel %vm2248, %v2803, 0.0
        %v4057 = vsel %vm2249, %v2809, 0.0
        %v4058 = vsel %vm2250, %v2815, 0.0
        %v4059 = vsel %vm2251, %v2821, 0.0
        %v4060 = vsel %vm2252, %v2827, 0.0
        %v4061 = vsel %vm2253, %v2833, 0.0
        %v4062 = vsel %vm2254, %v2840, 0.0
        %v4063 = vsel %vm2255, %v2846, 0.0
        %v4064 = vsel %vm2256, %v2852, 0.0
        %v4065 = vsel %vm2257, %v2858, 0.0
        %v4066 = vsel %vm2258, %v2864, 0.0
        %v4067 = vsel %vm2259, %v2870, 0.0
        %v4068 = vsel %vm2260, %v2876, 0.0
        %v4069 = vsel %vm2261, %v2882, 0.0
        %v4070 = vsel %vm2262, %v2888, 0.0
        %v4071 = vsel %vm2263, %v2894, 0.0
        %v4072 = vsel %vm2264, %v2900, 0.0
        %v4073 = vsel %vm2265, %v2906, 0.0
        %v4074 = vsel %vm2266, %v2912, 0.0
        %v4075 = vsel %vm2267, %v2918, 0.0
        %v4076 = vsel %vm2268, %v2924, 0.0
        %v4077 = vsel %vm2269, %v2930, 0.0
        %v4078 = vsel %vm2270, %v2937, 0.0
        %v4079 = vsel %vm2271, %v2943, 0.0
        %v4080 = vsel %vm2272, %v2949, 0.0
        %v4081 = vsel %vm2273, %v2955, 0.0
        %v4082 = vsel %vm2274, %v2961, 0.0
        %v4083 = vsel %vm2275, %v2967, 0.0
        %v4084 = vsel %vm2276, %v2973, 0.0
        %v4085 = vsel %vm2277, %v2979, 0.0
        %v4086 = vsel %vm2278, %v2985, 0.0
        %v4087 = vsel %vm2279, %v2991, 0.0
        %v4088 = vsel %vm2280, %v2997, 0.0
        %v4089 = vsel %vm2281, %v3003, 0.0
        %v4090 = vsel %vm2282, %v3009, 0.0
        %v4091 = vsel %vm2283, %v3015, 0.0
        %v4092 = vsel %vm2284, %v3021, 0.0
        %v4093 = vsel %vm2285, %v3027, 0.0
        %v4094 = vsel %vm2286, %v3034, 0.0
        %v4095 = vsel %vm2287, %v3040, 0.0
        %v4096 = vsel %vm2288, %v3046, 0.0
        %v4097 = vsel %vm2289, %v3052, 0.0
        %v4098 = vsel %vm2290, %v3058, 0.0
        %v4099 = vsel %vm2291, %v3064, 0.0
        %v4100 = vsel %vm2292, %v3070, 0.0
        %v4101 = vsel %vm2293, %v3076, 0.0
        %v4102 = vsel %vm2294, %v3082, 0.0
        %v4103 = vsel %vm2295, %v3088, 0.0
        %v4104 = vsel %vm2296, %v3094, 0.0
        %v4105 = vsel %vm2297, %v3100, 0.0
        %v4106 = vsel %vm2298, %v3106, 0.0
        %v4107 = vsel %vm2299, %v3112, 0.0
        %v4108 = vsel %vm2300, %v3118, 0.0
        %v4109 = vsel %vm2301, %v3124, 0.0
        %v4110 = vsel %vm2302, %v3131, 0.0
        %v4111 = vsel %vm2303, %v3137, 0.0
        %v4112 = vsel %vm2304, %v3143, 0.0
        %v4113 = vsel %vm2305, %v3149, 0.0
        %v4114 = vsel %vm2306, %v3155, 0.0
        %v4115 = vsel %vm2307, %v3161, 0.0
        %v4116 = vsel %vm2308, %v3167, 0.0
        %v4117 = vsel %vm2309, %v3173, 0.0
        %v4118 = vsel %vm2310, %v3179, 0.0
        %v4119 = vsel %vm2311, %v3185, 0.0
        %v4120 = vsel %vm2312, %v3191, 0.0
        %v4121 = vsel %vm2313, %v3197, 0.0
        %v4122 = vsel %vm2314, %v3203, 0.0
        %v4123 = vsel %vm2315, %v3209, 0.0
        %v4124 = vsel %vm2316, %v3215, 0.0
        %v4125 = vsel %vm2317, %v3221, 0.0
        %v4126 = vsel %vm2318, %v3228, 0.0
        %v4127 = vsel %vm2319, %v3234, 0.0
        %v4128 = vsel %vm2320, %v3240, 0.0
        %v4129 = vsel %vm2321, %v3246, 0.0
        %v4130 = vsel %vm2322, %v3252, 0.0
        %v4131 = vsel %vm2323, %v3258, 0.0
        %v4132 = vsel %vm2324, %v3264, 0.0
        %v4133 = vsel %vm2325, %v3270, 0.0
        %v4134 = vsel %vm2326, %v3276, 0.0
        %v4135 = vsel %vm2327, %v3282, 0.0
        %v4136 = vsel %vm2328, %v3288, 0.0
        %v4137 = vsel %vm2329, %v3294, 0.0
        %v4138 = vsel %vm2330, %v3300, 0.0
        %v4139 = vsel %vm2331, %v3306, 0.0
        %v4140 = vsel %vm2332, %v3312, 0.0
        %v4141 = vsel %vm2333, %v3318, 0.0
        %v4142 = vsel %vm2334, %v3325, 0.0
        %v4143 = vsel %vm2335, %v3331, 0.0
        %v4144 = vsel %vm2336, %v3337, 0.0
        %v4145 = vsel %vm2337, %v3343, 0.0
        %v4146 = vsel %vm2338, %v3349, 0.0
        %v4147 = vsel %vm2339, %v3355, 0.0
        %v4148 = vsel %vm2340, %v3361, 0.0
        %v4149 = vsel %vm2341, %v3367, 0.0
        %v4150 = vsel %vm2342, %v3373, 0.0
        %v4151 = vsel %vm2343, %v3379, 0.0
        %v4152 = vsel %vm2344, %v3385, 0.0
        %v4153 = vsel %vm2345, %v3391, 0.0
        %v4154 = vsel %vm2346, %v3397, 0.0
        %v4155 = vsel %vm2347, %v3403, 0.0
        %v4156 = vsel %vm2348, %v3409, 0.0
        %v4157 = vsel %vm2349, %v3415, 0.0
        %v4158 = vsel %vm2350, %v3422, 0.0
        %v4159 = vsel %vm2351, %v3428, 0.0
        %v4160 = vsel %vm2352, %v3434, 0.0
        %v4161 = vsel %vm2353, %v3440, 0.0
        %v4162 = vsel %vm2354, %v3446, 0.0
        %v4163 = vsel %vm2355, %v3452, 0.0
        %v4164 = vsel %vm2356, %v3458, 0.0
        %v4165 = vsel %vm2357, %v3464, 0.0
        %v4166 = vsel %vm2358, %v3470, 0.0
        %v4167 = vsel %vm2359, %v3476, 0.0
        %v4168 = vsel %vm2360, %v3482, 0.0
        %v4169 = vsel %vm2361, %v3488, 0.0
        %v4170 = vsel %vm2362, %v3494, 0.0
        %v4171 = vsel %vm2363, %v3500, 0.0
        %v4172 = vsel %vm2364, %v3506, 0.0
        %v4173 = vsel %vm2365, %v3512, 0.0
        %v4174 = vsel %vm2366, %v3519, 0.0
        %v4175 = vsel %vm2367, %v3525, 0.0
        %v4176 = vsel %vm2368, %v3531, 0.0
        %v4177 = vsel %vm2369, %v3537, 0.0
        %v4178 = vsel %vm2370, %v3543, 0.0
        %v4179 = vsel %vm2371, %v3549, 0.0
        %v4180 = vsel %vm2372, %v3555, 0.0
        %v4181 = vsel %vm2373, %v3561, 0.0
        %v4182 = vsel %vm2374, %v3567, 0.0
        %v4183 = vsel %vm2375, %v3573, 0.0
        %v4184 = vsel %vm2376, %v3579, 0.0
        %v4185 = vsel %vm2377, %v3585, 0.0
        %v4186 = vsel %vm2378, %v3591, 0.0
        %v4187 = vsel %vm2379, %v3597, 0.0
        %v4188 = vsel %vm2380, %v3603, 0.0
        %v4189 = vsel %vm2381, %v3609, 0.0
        %v4190 = vsel %vm2382, %v3616, 0.0
        %v4191 = vsel %vm2383, %v3622, 0.0
        %v4192 = vsel %vm2384, %v3628, 0.0
        %v4193 = vsel %vm2385, %v3634, 0.0
        %v4194 = vsel %vm2386, %v3640, 0.0
        %v4195 = vsel %vm2387, %v3646, 0.0
        %v4196 = vsel %vm2388, %v3652, 0.0
        %v4197 = vsel %vm2389, %v3658, 0.0
        %v4198 = vsel %vm2390, %v3664, 0.0
        %v4199 = vsel %vm2391, %v3670, 0.0
        %v4200 = vsel %vm2392, %v3676, 0.0
        %v4201 = vsel %vm2393, %v3682, 0.0
        %v4202 = vsel %vm2394, %v3688, 0.0
        %v4203 = vsel %vm2395, %v3694, 0.0
        %v4204 = vsel %vm2396, %v3700, 0.0
        %v4205 = vsel %vm2397, %v3706, 0.0
        %v4206 = vsel %vm2398, %v3713, 0.0
        %v4207 = vsel %vm2399, %v3719, 0.0
        %v4208 = vsel %vm2400, %v3725, 0.0
        %v4209 = vsel %vm2401, %v3731, 0.0
        %v4210 = vsel %vm2402, %v3737, 0.0
        %v4211 = vsel %vm2403, %v3743, 0.0
        %v4212 = vsel %vm2404, %v3749, 0.0
        %v4213 = vsel %vm2405, %v3755, 0.0
        %v4214 = vsel %vm2406, %v3761, 0.0
        %v4215 = vsel %vm2407, %v3767, 0.0
        %v4216 = vsel %vm2408, %v3773, 0.0
        %v4217 = vsel %vm2409, %v3779, 0.0
        %v4218 = vsel %vm2410, %v3785, 0.0
        %v4219 = vsel %vm2411, %v3791, 0.0
        %v4220 = vsel %vm2412, %v3797, 0.0
        %v4221 = vsel %vm2413, %v3803, 0.0
        %v4222 = vsel %vm2414, %v3810, 0.0
        %v4223 = vsel %vm2415, %v3816, 0.0
        %v4224 = vsel %vm2416, %v3822, 0.0
        %v4225 = vsel %vm2417, %v3828, 0.0
        %v4226 = vsel %vm2418, %v3834, 0.0
        %v4227 = vsel %vm2419, %v3840, 0.0
        %v4228 = vsel %vm2420, %v3846, 0.0
        %v4229 = vsel %vm2421, %v3852, 0.0
        %v4230 = vsel %vm2422, %v3858, 0.0
        %v4231 = vsel %vm2423, %v3864, 0.0
        %v4232 = vsel %vm2424, %v3870, 0.0
        %v4233 = vsel %vm2425, %v3876, 0.0
        %v4234 = vsel %vm2426, %v3882, 0.0
        %v4235 = vsel %vm2427, %v3888, 0.0
        %v4236 = vsel %vm2428, %v3894, 0.0
        %v4237 = vsel %vm2429, %v3900, 0.0
        %v4238 = vsel %vm2430, %v3907, 0.0
        %v4239 = vsel %vm2431, %v3913, 0.0
        %v4240 = vsel %vm2432, %v3919, 0.0
        %v4241 = vsel %vm2433, %v3925, 0.0
        %v4242 = vsel %vm2434, %v3931, 0.0
        %v4243 = vsel %vm2435, %v3937, 0.0
        %v4244 = vsel %vm2436, %v3943, 0.0
        %v4245 = vsel %vm2437, %v3949, 0.0
        %v4246 = vsel %vm2438, %v3955, 0.0
        %v4247 = vsel %vm2439, %v3961, 0.0
        %v4248 = vsel %vm2440, %v3967, 0.0
        %v4249 = vsel %vm2441, %v3973, 0.0
        %v4250 = vsel %vm2442, %v3979, 0.0
        %v4251 = vsel %vm2443, %v3985, 0.0
        %v4252 = vsel %vm2444, %v3991, 0.0
        %v4253 = vsel %vm2445, %v3997, 0.0
        %vm4254 = vcmask 130048
        %v4255 = vsel %vm4254, %v3998, 0.0
        %v4256 = vsel %vm4254, %v3999, 0.0
        %v4257 = vadd.f32 %v4255, %v4256
        %v4258 = vsel %vm4254, %v4000, 0.0
        %v4259 = vadd.f32 %v4257, %v4258
        %v4260 = vsel %vm4254, %v4001, 0.0
        %v4261 = vadd.f32 %v4259, %v4260
        %v4262 = vsel %vm4254, %v4002, 0.0
        %v4263 = vadd.f32 %v4261, %v4262
        %v4264 = vsel %vm4254, %v4003, 0.0
        %v4265 = vadd.f32 %v4263, %v4264
        %v4266 = vsel %vm4254, %v4004, 0.0
        %v4267 = vadd.f32 %v4265, %v4266
        %v4268 = vsel %vm4254, %v4005, 0.0
        %v4269 = vadd.f32 %v4267, %v4268
        %v4270 = vsel %vm4254, %v4006, 0.0
        %v4271 = vadd.f32 %v4269, %v4270
        %v4272 = vsel %vm4254, %v4007, 0.0
        %v4273 = vadd.f32 %v4271, %v4272
        %v4274 = vsel %vm4254, %v4008, 0.0
        %v4275 = vadd.f32 %v4273, %v4274
        %v4276 = vsel %vm4254, %v4009, 0.0
        %v4277 = vadd.f32 %v4275, %v4276
        %v4278 = vsel %vm4254, %v4010, 0.0
        %v4279 = vadd.f32 %v4277, %v4278
        %v4280 = vsel %vm4254, %v4011, 0.0
        %v4281 = vadd.f32 %v4279, %v4280
        %v4282 = vsel %vm4254, %v4012, 0.0
        %v4283 = vadd.f32 %v4281, %v4282
        %v4284 = vsel %vm4254, %v4013, 0.0
        %v4285 = vadd.f32 %v4283, %v4284
        %v4286 = vsel %vm4254, %v4014, 0.0
        %v4287 = vadd.f32 %v4285, %v4286
        %v4288 = vsel %vm4254, %v4015, 0.0
        %v4289 = vadd.f32 %v4287, %v4288
        %v4290 = vsel %vm4254, %v4016, 0.0
        %v4291 = vadd.f32 %v4289, %v4290
        %v4292 = vsel %vm4254, %v4017, 0.0
        %v4293 = vadd.f32 %v4291, %v4292
        %v4294 = vsel %vm4254, %v4018, 0.0
        %v4295 = vadd.f32 %v4293, %v4294
        %v4296 = vsel %vm4254, %v4019, 0.0
        %v4297 = vadd.f32 %v4295, %v4296
        %v4298 = vsel %vm4254, %v4020, 0.0
        %v4299 = vadd.f32 %v4297, %v4298
        %v4300 = vsel %vm4254, %v4021, 0.0
        %v4301 = vadd.f32 %v4299, %v4300
        %v4302 = vsel %vm4254, %v4022, 0.0
        %v4303 = vadd.f32 %v4301, %v4302
        %v4304 = vsel %vm4254, %v4023, 0.0
        %v4305 = vadd.f32 %v4303, %v4304
        %v4306 = vsel %vm4254, %v4024, 0.0
        %v4307 = vadd.f32 %v4305, %v4306
        %v4308 = vsel %vm4254, %v4025, 0.0
        %v4309 = vadd.f32 %v4307, %v4308
        %v4310 = vsel %vm4254, %v4026, 0.0
        %v4311 = vadd.f32 %v4309, %v4310
        %v4312 = vsel %vm4254, %v4027, 0.0
        %v4313 = vadd.f32 %v4311, %v4312
        %v4314 = vsel %vm4254, %v4028, 0.0
        %v4315 = vadd.f32 %v4313, %v4314
        %v4316 = vsel %vm4254, %v4029, 0.0
        %v4317 = vadd.f32 %v4315, %v4316
        %v4318 = vrot.slane %v4317, 4
        %v4319 = vadd.f32 %v4317, %v4318
        %v4320 = vrot.slane %v4319, 2
        %v4321 = vadd.f32 %v4319, %v4320
        %v4322 = vrot.slane %v4321, 1
        %v4323 = vadd.f32 %v4321, %v4322
        %v4324 = vsel %vm4254, %v4030, 0.0
        %v4325 = vsel %vm4254, %v4031, 0.0
        %v4326 = vadd.f32 %v4324, %v4325
        %v4327 = vsel %vm4254, %v4032, 0.0
        %v4328 = vadd.f32 %v4326, %v4327
        %v4329 = vsel %vm4254, %v4033, 0.0
        %v4330 = vadd.f32 %v4328, %v4329
        %v4331 = vsel %vm4254, %v4034, 0.0
        %v4332 = vadd.f32 %v4330, %v4331
        %v4333 = vsel %vm4254, %v4035, 0.0
        %v4334 = vadd.f32 %v4332, %v4333
        %v4335 = vsel %vm4254, %v4036, 0.0
        %v4336 = vadd.f32 %v4334, %v4335
        %v4337 = vsel %vm4254, %v4037, 0.0
        %v4338 = vadd.f32 %v4336, %v4337
        %v4339 = vsel %vm4254, %v4038, 0.0
        %v4340 = vadd.f32 %v4338, %v4339
        %v4341 = vsel %vm4254, %v4039, 0.0
        %v4342 = vadd.f32 %v4340, %v4341
        %v4343 = vsel %vm4254, %v4040, 0.0
        %v4344 = vadd.f32 %v4342, %v4343
        %v4345 = vsel %vm4254, %v4041, 0.0
        %v4346 = vadd.f32 %v4344, %v4345
        %v4347 = vsel %vm4254, %v4042, 0.0
        %v4348 = vadd.f32 %v4346, %v4347
        %v4349 = vsel %vm4254, %v4043, 0.0
        %v4350 = vadd.f32 %v4348, %v4349
        %v4351 = vsel %vm4254, %v4044, 0.0
        %v4352 = vadd.f32 %v4350, %v4351
        %v4353 = vsel %vm4254, %v4045, 0.0
        %v4354 = vadd.f32 %v4352, %v4353
        %v4355 = vsel %vm4254, %v4046, 0.0
        %v4356 = vadd.f32 %v4354, %v4355
        %v4357 = vsel %vm4254, %v4047, 0.0
        %v4358 = vadd.f32 %v4356, %v4357
        %v4359 = vsel %vm4254, %v4048, 0.0
        %v4360 = vadd.f32 %v4358, %v4359
        %v4361 = vsel %vm4254, %v4049, 0.0
        %v4362 = vadd.f32 %v4360, %v4361
        %v4363 = vsel %vm4254, %v4050, 0.0
        %v4364 = vadd.f32 %v4362, %v4363
        %v4365 = vsel %vm4254, %v4051, 0.0
        %v4366 = vadd.f32 %v4364, %v4365
        %v4367 = vsel %vm4254, %v4052, 0.0
        %v4368 = vadd.f32 %v4366, %v4367
        %v4369 = vsel %vm4254, %v4053, 0.0
        %v4370 = vadd.f32 %v4368, %v4369
        %v4371 = vsel %vm4254, %v4054, 0.0
        %v4372 = vadd.f32 %v4370, %v4371
        %v4373 = vsel %vm4254, %v4055, 0.0
        %v4374 = vadd.f32 %v4372, %v4373
        %v4375 = vsel %vm4254, %v4056, 0.0
        %v4376 = vadd.f32 %v4374, %v4375
        %v4377 = vsel %vm4254, %v4057, 0.0
        %v4378 = vadd.f32 %v4376, %v4377
        %v4379 = vsel %vm4254, %v4058, 0.0
        %v4380 = vadd.f32 %v4378, %v4379
        %v4381 = vsel %vm4254, %v4059, 0.0
        %v4382 = vadd.f32 %v4380, %v4381
        %v4383 = vsel %vm4254, %v4060, 0.0
        %v4384 = vadd.f32 %v4382, %v4383
        %v4385 = vsel %vm4254, %v4061, 0.0
        %v4386 = vadd.f32 %v4384, %v4385
        %v4387 = vrot.slane %v4386, 4
        %v4388 = vadd.f32 %v4386, %v4387
        %v4389 = vrot.slane %v4388, 2
        %v4390 = vadd.f32 %v4388, %v4389
        %v4391 = vrot.slane %v4390, 1
        %v4392 = vadd.f32 %v4390, %v4391
        %v4393 = vsel %vm4254, %v4062, 0.0
        %v4394 = vsel %vm4254, %v4063, 0.0
        %v4395 = vadd.f32 %v4393, %v4394
        %v4396 = vsel %vm4254, %v4064, 0.0
        %v4397 = vadd.f32 %v4395, %v4396
        %v4398 = vsel %vm4254, %v4065, 0.0
        %v4399 = vadd.f32 %v4397, %v4398
        %v4400 = vsel %vm4254, %v4066, 0.0
        %v4401 = vadd.f32 %v4399, %v4400
        %v4402 = vsel %vm4254, %v4067, 0.0
        %v4403 = vadd.f32 %v4401, %v4402
        %v4404 = vsel %vm4254, %v4068, 0.0
        %v4405 = vadd.f32 %v4403, %v4404
        %v4406 = vsel %vm4254, %v4069, 0.0
        %v4407 = vadd.f32 %v4405, %v4406
        %v4408 = vsel %vm4254, %v4070, 0.0
        %v4409 = vadd.f32 %v4407, %v4408
        %v4410 = vsel %vm4254, %v4071, 0.0
        %v4411 = vadd.f32 %v4409, %v4410
        %v4412 = vsel %vm4254, %v4072, 0.0
        %v4413 = vadd.f32 %v4411, %v4412
        %v4414 = vsel %vm4254, %v4073, 0.0
        %v4415 = vadd.f32 %v4413, %v4414
        %v4416 = vsel %vm4254, %v4074, 0.0
        %v4417 = vadd.f32 %v4415, %v4416
        %v4418 = vsel %vm4254, %v4075, 0.0
        %v4419 = vadd.f32 %v4417, %v4418
        %v4420 = vsel %vm4254, %v4076, 0.0
        %v4421 = vadd.f32 %v4419, %v4420
        %v4422 = vsel %vm4254, %v4077, 0.0
        %v4423 = vadd.f32 %v4421, %v4422
        %v4424 = vsel %vm4254, %v4078, 0.0
        %v4425 = vadd.f32 %v4423, %v4424
        %v4426 = vsel %vm4254, %v4079, 0.0
        %v4427 = vadd.f32 %v4425, %v4426
        %v4428 = vsel %vm4254, %v4080, 0.0
        %v4429 = vadd.f32 %v4427, %v4428
        %v4430 = vsel %vm4254, %v4081, 0.0
        %v4431 = vadd.f32 %v4429, %v4430
        %v4432 = vsel %vm4254, %v4082, 0.0
        %v4433 = vadd.f32 %v4431, %v4432
        %v4434 = vsel %vm4254, %v4083, 0.0
        %v4435 = vadd.f32 %v4433, %v4434
        %v4436 = vsel %vm4254, %v4084, 0.0
        %v4437 = vadd.f32 %v4435, %v4436
        %v4438 = vsel %vm4254, %v4085, 0.0
        %v4439 = vadd.f32 %v4437, %v4438
        %v4440 = vsel %vm4254, %v4086, 0.0
        %v4441 = vadd.f32 %v4439, %v4440
        %v4442 = vsel %vm4254, %v4087, 0.0
        %v4443 = vadd.f32 %v4441, %v4442
        %v4444 = vsel %vm4254, %v4088, 0.0
        %v4445 = vadd.f32 %v4443, %v4444
        %v4446 = vsel %vm4254, %v4089, 0.0
        %v4447 = vadd.f32 %v4445, %v4446
        %v4448 = vsel %vm4254, %v4090, 0.0
        %v4449 = vadd.f32 %v4447, %v4448
        %v4450 = vsel %vm4254, %v4091, 0.0
        %v4451 = vadd.f32 %v4449, %v4450
        %v4452 = vsel %vm4254, %v4092, 0.0
        %v4453 = vadd.f32 %v4451, %v4452
        %v4454 = vsel %vm4254, %v4093, 0.0
        %v4455 = vadd.f32 %v4453, %v4454
        %v4456 = vrot.slane %v4455, 4
        %v4457 = vadd.f32 %v4455, %v4456
        %v4458 = vrot.slane %v4457, 2
        %v4459 = vadd.f32 %v4457, %v4458
        %v4460 = vrot.slane %v4459, 1
        %v4461 = vadd.f32 %v4459, %v4460
        %v4462 = vsel %vm4254, %v4094, 0.0
        %v4463 = vsel %vm4254, %v4095, 0.0
        %v4464 = vadd.f32 %v4462, %v4463
        %v4465 = vsel %vm4254, %v4096, 0.0
        %v4466 = vadd.f32 %v4464, %v4465
        %v4467 = vsel %vm4254, %v4097, 0.0
        %v4468 = vadd.f32 %v4466, %v4467
        %v4469 = vsel %vm4254, %v4098, 0.0
        %v4470 = vadd.f32 %v4468, %v4469
        %v4471 = vsel %vm4254, %v4099, 0.0
        %v4472 = vadd.f32 %v4470, %v4471
        %v4473 = vsel %vm4254, %v4100, 0.0
        %v4474 = vadd.f32 %v4472, %v4473
        %v4475 = vsel %vm4254, %v4101, 0.0
        %v4476 = vadd.f32 %v4474, %v4475
        %v4477 = vsel %vm4254, %v4102, 0.0
        %v4478 = vadd.f32 %v4476, %v4477
        %v4479 = vsel %vm4254, %v4103, 0.0
        %v4480 = vadd.f32 %v4478, %v4479
        %v4481 = vsel %vm4254, %v4104, 0.0
        %v4482 = vadd.f32 %v4480, %v4481
        %v4483 = vsel %vm4254, %v4105, 0.0
        %v4484 = vadd.f32 %v4482, %v4483
        %v4485 = vsel %vm4254, %v4106, 0.0
        %v4486 = vadd.f32 %v4484, %v4485
        %v4487 = vsel %vm4254, %v4107, 0.0
        %v4488 = vadd.f32 %v4486, %v4487
        %v4489 = vsel %vm4254, %v4108, 0.0
        %v4490 = vadd.f32 %v4488, %v4489
        %v4491 = vsel %vm4254, %v4109, 0.0
        %v4492 = vadd.f32 %v4490, %v4491
        %v4493 = vsel %vm4254, %v4110, 0.0
        %v4494 = vadd.f32 %v4492, %v4493
        %v4495 = vsel %vm4254, %v4111, 0.0
        %v4496 = vadd.f32 %v4494, %v4495
        %v4497 = vsel %vm4254, %v4112, 0.0
        %v4498 = vadd.f32 %v4496, %v4497
        %v4499 = vsel %vm4254, %v4113, 0.0
        %v4500 = vadd.f32 %v4498, %v4499
        %v4501 = vsel %vm4254, %v4114, 0.0
        %v4502 = vadd.f32 %v4500, %v4501
        %v4503 = vsel %vm4254, %v4115, 0.0
        %v4504 = vadd.f32 %v4502, %v4503
        %v4505 = vsel %vm4254, %v4116, 0.0
        %v4506 = vadd.f32 %v4504, %v4505
        %v4507 = vsel %vm4254, %v4117, 0.0
        %v4508 = vadd.f32 %v4506, %v4507
        %v4509 = vsel %vm4254, %v4118, 0.0
        %v4510 = vadd.f32 %v4508, %v4509
        %v4511 = vsel %vm4254, %v4119, 0.0
        %v4512 = vadd.f32 %v4510, %v4511
        %v4513 = vsel %vm4254, %v4120, 0.0
        %v4514 = vadd.f32 %v4512, %v4513
        %v4515 = vsel %vm4254, %v4121, 0.0
        %v4516 = vadd.f32 %v4514, %v4515
        %v4517 = vsel %vm4254, %v4122, 0.0
        %v4518 = vadd.f32 %v4516, %v4517
        %v4519 = vsel %vm4254, %v4123, 0.0
        %v4520 = vadd.f32 %v4518, %v4519
        %v4521 = vsel %vm4254, %v4124, 0.0
        %v4522 = vadd.f32 %v4520, %v4521
        %v4523 = vsel %vm4254, %v4125, 0.0
        %v4524 = vadd.f32 %v4522, %v4523
        %v4525 = vrot.slane %v4524, 4
        %v4526 = vadd.f32 %v4524, %v4525
        %v4527 = vrot.slane %v4526, 2
        %v4528 = vadd.f32 %v4526, %v4527
        %v4529 = vrot.slane %v4528, 1
        %v4530 = vadd.f32 %v4528, %v4529
        %v4531 = vsel %vm4254, %v4126, 0.0
        %v4532 = vsel %vm4254, %v4127, 0.0
        %v4533 = vadd.f32 %v4531, %v4532
        %v4534 = vsel %vm4254, %v4128, 0.0
        %v4535 = vadd.f32 %v4533, %v4534
        %v4536 = vsel %vm4254, %v4129, 0.0
        %v4537 = vadd.f32 %v4535, %v4536
        %v4538 = vsel %vm4254, %v4130, 0.0
        %v4539 = vadd.f32 %v4537, %v4538
        %v4540 = vsel %vm4254, %v4131, 0.0
        %v4541 = vadd.f32 %v4539, %v4540
        %v4542 = vsel %vm4254, %v4132, 0.0
        %v4543 = vadd.f32 %v4541, %v4542
        %v4544 = vsel %vm4254, %v4133, 0.0
        %v4545 = vadd.f32 %v4543, %v4544
        %v4546 = vsel %vm4254, %v4134, 0.0
        %v4547 = vadd.f32 %v4545, %v4546
        %v4548 = vsel %vm4254, %v4135, 0.0
        %v4549 = vadd.f32 %v4547, %v4548
        %v4550 = vsel %vm4254, %v4136, 0.0
        %v4551 = vadd.f32 %v4549, %v4550
        %v4552 = vsel %vm4254, %v4137, 0.0
        %v4553 = vadd.f32 %v4551, %v4552
        %v4554 = vsel %vm4254, %v4138, 0.0
        %v4555 = vadd.f32 %v4553, %v4554
        %v4556 = vsel %vm4254, %v4139, 0.0
        %v4557 = vadd.f32 %v4555, %v4556
        %v4558 = vsel %vm4254, %v4140, 0.0
        %v4559 = vadd.f32 %v4557, %v4558
        %v4560 = vsel %vm4254, %v4141, 0.0
        %v4561 = vadd.f32 %v4559, %v4560
        %v4562 = vsel %vm4254, %v4142, 0.0
        %v4563 = vadd.f32 %v4561, %v4562
        %v4564 = vsel %vm4254, %v4143, 0.0
        %v4565 = vadd.f32 %v4563, %v4564
        %v4566 = vsel %vm4254, %v4144, 0.0
        %v4567 = vadd.f32 %v4565, %v4566
        %v4568 = vsel %vm4254, %v4145, 0.0
        %v4569 = vadd.f32 %v4567, %v4568
        %v4570 = vsel %vm4254, %v4146, 0.0
        %v4571 = vadd.f32 %v4569, %v4570
        %v4572 = vsel %vm4254, %v4147, 0.0
        %v4573 = vadd.f32 %v4571, %v4572
        %v4574 = vsel %vm4254, %v4148, 0.0
        %v4575 = vadd.f32 %v4573, %v4574
        %v4576 = vsel %vm4254, %v4149, 0.0
        %v4577 = vadd.f32 %v4575, %v4576
        %v4578 = vsel %vm4254, %v4150, 0.0
        %v4579 = vadd.f32 %v4577, %v4578
        %v4580 = vsel %vm4254, %v4151, 0.0
        %v4581 = vadd.f32 %v4579, %v4580
        %v4582 = vsel %vm4254, %v4152, 0.0
        %v4583 = vadd.f32 %v4581, %v4582
        %v4584 = vsel %vm4254, %v4153, 0.0
        %v4585 = vadd.f32 %v4583, %v4584
        %v4586 = vsel %vm4254, %v4154, 0.0
        %v4587 = vadd.f32 %v4585, %v4586
        %v4588 = vsel %vm4254, %v4155, 0.0
        %v4589 = vadd.f32 %v4587, %v4588
        %v4590 = vsel %vm4254, %v4156, 0.0
        %v4591 = vadd.f32 %v4589, %v4590
        %v4592 = vsel %vm4254, %v4157, 0.0
        %v4593 = vadd.f32 %v4591, %v4592
        %v4594 = vrot.slane %v4593, 4
        %v4595 = vadd.f32 %v4593, %v4594
        %v4596 = vrot.slane %v4595, 2
        %v4597 = vadd.f32 %v4595, %v4596
        %v4598 = vrot.slane %v4597, 1
        %v4599 = vadd.f32 %v4597, %v4598
        %v4600 = vsel %vm4254, %v4158, 0.0
        %v4601 = vsel %vm4254, %v4159, 0.0
        %v4602 = vadd.f32 %v4600, %v4601
        %v4603 = vsel %vm4254, %v4160, 0.0
        %v4604 = vadd.f32 %v4602, %v4603
        %v4605 = vsel %vm4254, %v4161, 0.0
        %v4606 = vadd.f32 %v4604, %v4605
        %v4607 = vsel %vm4254, %v4162, 0.0
        %v4608 = vadd.f32 %v4606, %v4607
        %v4609 = vsel %vm4254, %v4163, 0.0
        %v4610 = vadd.f32 %v4608, %v4609
        %v4611 = vsel %vm4254, %v4164, 0.0
        %v4612 = vadd.f32 %v4610, %v4611
        %v4613 = vsel %vm4254, %v4165, 0.0
        %v4614 = vadd.f32 %v4612, %v4613
        %v4615 = vsel %vm4254, %v4166, 0.0
        %v4616 = vadd.f32 %v4614, %v4615
        %v4617 = vsel %vm4254, %v4167, 0.0
        %v4618 = vadd.f32 %v4616, %v4617
        %v4619 = vsel %vm4254, %v4168, 0.0
        %v4620 = vadd.f32 %v4618, %v4619
        %v4621 = vsel %vm4254, %v4169, 0.0
        %v4622 = vadd.f32 %v4620, %v4621
        %v4623 = vsel %vm4254, %v4170, 0.0
        %v4624 = vadd.f32 %v4622, %v4623
        %v4625 = vsel %vm4254, %v4171, 0.0
        %v4626 = vadd.f32 %v4624, %v4625
        %v4627 = vsel %vm4254, %v4172, 0.0
        %v4628 = vadd.f32 %v4626, %v4627
        %v4629 = vsel %vm4254, %v4173, 0.0
        %v4630 = vadd.f32 %v4628, %v4629
        %v4631 = vsel %vm4254, %v4174, 0.0
        %v4632 = vadd.f32 %v4630, %v4631
        %v4633 = vsel %vm4254, %v4175, 0.0
        %v4634 = vadd.f32 %v4632, %v4633
        %v4635 = vsel %vm4254, %v4176, 0.0
        %v4636 = vadd.f32 %v4634, %v4635
        %v4637 = vsel %vm4254, %v4177, 0.0
        %v4638 = vadd.f32 %v4636, %v4637
        %v4639 = vsel %vm4254, %v4178, 0.0
        %v4640 = vadd.f32 %v4638, %v4639
        %v4641 = vsel %vm4254, %v4179, 0.0
        %v4642 = vadd.f32 %v4640, %v4641
        %v4643 = vsel %vm4254, %v4180, 0.0
        %v4644 = vadd.f32 %v4642, %v4643
        %v4645 = vsel %vm4254, %v4181, 0.0
        %v4646 = vadd.f32 %v4644, %v4645
        %v4647 = vsel %vm4254, %v4182, 0.0
        %v4648 = vadd.f32 %v4646, %v4647
        %v4649 = vsel %vm4254, %v4183, 0.0
        %v4650 = vadd.f32 %v4648, %v4649
        %v4651 = vsel %vm4254, %v4184, 0.0
        %v4652 = vadd.f32 %v4650, %v4651
        %v4653 = vsel %vm4254, %v4185, 0.0
        %v4654 = vadd.f32 %v4652, %v4653
        %v4655 = vsel %vm4254, %v4186, 0.0
        %v4656 = vadd.f32 %v4654, %v4655
        %v4657 = vsel %vm4254, %v4187, 0.0
        %v4658 = vadd.f32 %v4656, %v4657
        %v4659 = vsel %vm4254, %v4188, 0.0
        %v4660 = vadd.f32 %v4658, %v4659
        %v4661 = vsel %vm4254, %v4189, 0.0
        %v4662 = vadd.f32 %v4660, %v4661
        %v4663 = vrot.slane %v4662, 4
        %v4664 = vadd.f32 %v4662, %v4663
        %v4665 = vrot.slane %v4664, 2
        %v4666 = vadd.f32 %v4664, %v4665
        %v4667 = vrot.slane %v4666, 1
        %v4668 = vadd.f32 %v4666, %v4667
        %v4669 = vsel %vm4254, %v4190, 0.0
        %v4670 = vsel %vm4254, %v4191, 0.0
        %v4671 = vadd.f32 %v4669, %v4670
        %v4672 = vsel %vm4254, %v4192, 0.0
        %v4673 = vadd.f32 %v4671, %v4672
        %v4674 = vsel %vm4254, %v4193, 0.0
        %v4675 = vadd.f32 %v4673, %v4674
        %v4676 = vsel %vm4254, %v4194, 0.0
        %v4677 = vadd.f32 %v4675, %v4676
        %v4678 = vsel %vm4254, %v4195, 0.0
        %v4679 = vadd.f32 %v4677, %v4678
        %v4680 = vsel %vm4254, %v4196, 0.0
        %v4681 = vadd.f32 %v4679, %v4680
        %v4682 = vsel %vm4254, %v4197, 0.0
        %v4683 = vadd.f32 %v4681, %v4682
        %v4684 = vsel %vm4254, %v4198, 0.0
        %v4685 = vadd.f32 %v4683, %v4684
        %v4686 = vsel %vm4254, %v4199, 0.0
        %v4687 = vadd.f32 %v4685, %v4686
        %v4688 = vsel %vm4254, %v4200, 0.0
        %v4689 = vadd.f32 %v4687, %v4688
        %v4690 = vsel %vm4254, %v4201, 0.0
        %v4691 = vadd.f32 %v4689, %v4690
        %v4692 = vsel %vm4254, %v4202, 0.0
        %v4693 = vadd.f32 %v4691, %v4692
        %v4694 = vsel %vm4254, %v4203, 0.0
        %v4695 = vadd.f32 %v4693, %v4694
        %v4696 = vsel %vm4254, %v4204, 0.0
        %v4697 = vadd.f32 %v4695, %v4696
        %v4698 = vsel %vm4254, %v4205, 0.0
        %v4699 = vadd.f32 %v4697, %v4698
        %v4700 = vsel %vm4254, %v4206, 0.0
        %v4701 = vadd.f32 %v4699, %v4700
        %v4702 = vsel %vm4254, %v4207, 0.0
        %v4703 = vadd.f32 %v4701, %v4702
        %v4704 = vsel %vm4254, %v4208, 0.0
        %v4705 = vadd.f32 %v4703, %v4704
        %v4706 = vsel %vm4254, %v4209, 0.0
        %v4707 = vadd.f32 %v4705, %v4706
        %v4708 = vsel %vm4254, %v4210, 0.0
        %v4709 = vadd.f32 %v4707, %v4708
        %v4710 = vsel %vm4254, %v4211, 0.0
        %v4711 = vadd.f32 %v4709, %v4710
        %v4712 = vsel %vm4254, %v4212, 0.0
        %v4713 = vadd.f32 %v4711, %v4712
        %v4714 = vsel %vm4254, %v4213, 0.0
        %v4715 = vadd.f32 %v4713, %v4714
        %v4716 = vsel %vm4254, %v4214, 0.0
        %v4717 = vadd.f32 %v4715, %v4716
        %v4718 = vsel %vm4254, %v4215, 0.0
        %v4719 = vadd.f32 %v4717, %v4718
        %v4720 = vsel %vm4254, %v4216, 0.0
        %v4721 = vadd.f32 %v4719, %v4720
        %v4722 = vsel %vm4254, %v4217, 0.0
        %v4723 = vadd.f32 %v4721, %v4722
        %v4724 = vsel %vm4254, %v4218, 0.0
        %v4725 = vadd.f32 %v4723, %v4724
        %v4726 = vsel %vm4254, %v4219, 0.0
        %v4727 = vadd.f32 %v4725, %v4726
        %v4728 = vsel %vm4254, %v4220, 0.0
        %v4729 = vadd.f32 %v4727, %v4728
        %v4730 = vsel %vm4254, %v4221, 0.0
        %v4731 = vadd.f32 %v4729, %v4730
        %v4732 = vrot.slane %v4731, 4
        %v4733 = vadd.f32 %v4731, %v4732
        %v4734 = vrot.slane %v4733, 2
        %v4735 = vadd.f32 %v4733, %v4734
        %v4736 = vrot.slane %v4735, 1
        %v4737 = vadd.f32 %v4735, %v4736
        %v4738 = vsel %vm4254, %v4222, 0.0
        %v4739 = vsel %vm4254, %v4223, 0.0
        %v4740 = vadd.f32 %v4738, %v4739
        %v4741 = vsel %vm4254, %v4224, 0.0
        %v4742 = vadd.f32 %v4740, %v4741
        %v4743 = vsel %vm4254, %v4225, 0.0
        %v4744 = vadd.f32 %v4742, %v4743
        %v4745 = vsel %vm4254, %v4226, 0.0
        %v4746 = vadd.f32 %v4744, %v4745
        %v4747 = vsel %vm4254, %v4227, 0.0
        %v4748 = vadd.f32 %v4746, %v4747
        %v4749 = vsel %vm4254, %v4228, 0.0
        %v4750 = vadd.f32 %v4748, %v4749
        %v4751 = vsel %vm4254, %v4229, 0.0
        %v4752 = vadd.f32 %v4750, %v4751
        %v4753 = vsel %vm4254, %v4230, 0.0
        %v4754 = vadd.f32 %v4752, %v4753
        %v4755 = vsel %vm4254, %v4231, 0.0
        %v4756 = vadd.f32 %v4754, %v4755
        %v4757 = vsel %vm4254, %v4232, 0.0
        %v4758 = vadd.f32 %v4756, %v4757
        %v4759 = vsel %vm4254, %v4233, 0.0
        %v4760 = vadd.f32 %v4758, %v4759
        %v4761 = vsel %vm4254, %v4234, 0.0
        %v4762 = vadd.f32 %v4760, %v4761
        %v4763 = vsel %vm4254, %v4235, 0.0
        %v4764 = vadd.f32 %v4762, %v4763
        %v4765 = vsel %vm4254, %v4236, 0.0
        %v4766 = vadd.f32 %v4764, %v4765
        %v4767 = vsel %vm4254, %v4237, 0.0
        %v4768 = vadd.f32 %v4766, %v4767
        %v4769 = vsel %vm4254, %v4238, 0.0
        %v4770 = vadd.f32 %v4768, %v4769
        %v4771 = vsel %vm4254, %v4239, 0.0
        %v4772 = vadd.f32 %v4770, %v4771
        %v4773 = vsel %vm4254, %v4240, 0.0
        %v4774 = vadd.f32 %v4772, %v4773
        %v4775 = vsel %vm4254, %v4241, 0.0
        %v4776 = vadd.f32 %v4774, %v4775
        %v4777 = vsel %vm4254, %v4242, 0.0
        %v4778 = vadd.f32 %v4776, %v4777
        %v4779 = vsel %vm4254, %v4243, 0.0
        %v4780 = vadd.f32 %v4778, %v4779
        %v4781 = vsel %vm4254, %v4244, 0.0
        %v4782 = vadd.f32 %v4780, %v4781
        %v4783 = vsel %vm4254, %v4245, 0.0
        %v4784 = vadd.f32 %v4782, %v4783
        %v4785 = vsel %vm4254, %v4246, 0.0
        %v4786 = vadd.f32 %v4784, %v4785
        %v4787 = vsel %vm4254, %v4247, 0.0
        %v4788 = vadd.f32 %v4786, %v4787
        %v4789 = vsel %vm4254, %v4248, 0.0
        %v4790 = vadd.f32 %v4788, %v4789
        %v4791 = vsel %vm4254, %v4249, 0.0
        %v4792 = vadd.f32 %v4790, %v4791
        %v4793 = vsel %vm4254, %v4250, 0.0
        %v4794 = vadd.f32 %v4792, %v4793
        %v4795 = vsel %vm4254, %v4251, 0.0
        %v4796 = vadd.f32 %v4794, %v4795
        %v4797 = vsel %vm4254, %v4252, 0.0
        %v4798 = vadd.f32 %v4796, %v4797
        %v4799 = vsel %vm4254, %v4253, 0.0
        %v4800 = vadd.f32 %v4798, %v4799
        %v4801 = vrot.slane %v4800, 4
        %v4802 = vadd.f32 %v4800, %v4801
        %v4803 = vrot.slane %v4802, 2
        %v4804 = vadd.f32 %v4802, %v4803
        %v4805 = vrot.slane %v4804, 1
        %v4806 = vadd.f32 %v4804, %v4805
        %v4807 = vmul.f32 %v374, %v2452
        %v4808 = vmul.f32 %v375, %v2458
        %v4809 = vmul.f32 %v376, %v2464
        %v4810 = vmul.f32 %v377, %v2470
        %v4811 = vmul.f32 %v378, %v2476
        %v4812 = vmul.f32 %v379, %v2482
        %v4813 = vmul.f32 %v380, %v2488
        %v4814 = vmul.f32 %v381, %v2494
        %v4815 = vmul.f32 %v382, %v2500
        %v4816 = vmul.f32 %v383, %v2506
        %v4817 = vmul.f32 %v384, %v2512
        %v4818 = vmul.f32 %v385, %v2518
        %v4819 = vmul.f32 %v386, %v2524
        %v4820 = vmul.f32 %v387, %v2530
        %v4821 = vmul.f32 %v388, %v2536
        %v4822 = vmul.f32 %v389, %v2542
        %v4823 = vmul.f32 %v390, %v2549
        %v4824 = vmul.f32 %v391, %v2555
        %v4825 = vmul.f32 %v392, %v2561
        %v4826 = vmul.f32 %v393, %v2567
        %v4827 = vmul.f32 %v394, %v2573
        %v4828 = vmul.f32 %v395, %v2579
        %v4829 = vmul.f32 %v396, %v2585
        %v4830 = vmul.f32 %v397, %v2591
        %v4831 = vmul.f32 %v398, %v2597
        %v4832 = vmul.f32 %v399, %v2603
        %v4833 = vmul.f32 %v400, %v2609
        %v4834 = vmul.f32 %v401, %v2615
        %v4835 = vmul.f32 %v402, %v2621
        %v4836 = vmul.f32 %v403, %v2627
        %v4837 = vmul.f32 %v404, %v2633
        %v4838 = vmul.f32 %v405, %v2639
        %v4839 = vmul.f32 %v406, %v2646
        %v4840 = vmul.f32 %v407, %v2652
        %v4841 = vmul.f32 %v408, %v2658
        %v4842 = vmul.f32 %v409, %v2664
        %v4843 = vmul.f32 %v410, %v2670
        %v4844 = vmul.f32 %v411, %v2676
        %v4845 = vmul.f32 %v412, %v2682
        %v4846 = vmul.f32 %v413, %v2688
        %v4847 = vmul.f32 %v414, %v2694
        %v4848 = vmul.f32 %v415, %v2700
        %v4849 = vmul.f32 %v416, %v2706
        %v4850 = vmul.f32 %v417, %v2712
        %v4851 = vmul.f32 %v418, %v2718
        %v4852 = vmul.f32 %v419, %v2724
        %v4853 = vmul.f32 %v420, %v2730
        %v4854 = vmul.f32 %v421, %v2736
        %v4855 = vmul.f32 %v422, %v2743
        %v4856 = vmul.f32 %v423, %v2749
        %v4857 = vmul.f32 %v424, %v2755
        %v4858 = vmul.f32 %v425, %v2761
        %v4859 = vmul.f32 %v426, %v2767
        %v4860 = vmul.f32 %v427, %v2773
        %v4861 = vmul.f32 %v428, %v2779
        %v4862 = vmul.f32 %v429, %v2785
        %v4863 = vmul.f32 %v430, %v2791
        %v4864 = vmul.f32 %v431, %v2797
        %v4865 = vmul.f32 %v432, %v2803
        %v4866 = vmul.f32 %v433, %v2809
        %v4867 = vmul.f32 %v434, %v2815
        %v4868 = vmul.f32 %v435, %v2821
        %v4869 = vmul.f32 %v436, %v2827
        %v4870 = vmul.f32 %v437, %v2833
        %v4871 = vmul.f32 %v438, %v2840
        %v4872 = vmul.f32 %v439, %v2846
        %v4873 = vmul.f32 %v440, %v2852
        %v4874 = vmul.f32 %v441, %v2858
        %v4875 = vmul.f32 %v442, %v2864
        %v4876 = vmul.f32 %v443, %v2870
        %v4877 = vmul.f32 %v444, %v2876
        %v4878 = vmul.f32 %v445, %v2882
        %v4879 = vmul.f32 %v446, %v2888
        %v4880 = vmul.f32 %v447, %v2894
        %v4881 = vmul.f32 %v448, %v2900
        %v4882 = vmul.f32 %v449, %v2906
        %v4883 = vmul.f32 %v450, %v2912
        %v4884 = vmul.f32 %v451, %v2918
        %v4885 = vmul.f32 %v452, %v2924
        %v4886 = vmul.f32 %v453, %v2930
        %v4887 = vmul.f32 %v454, %v2937
        %v4888 = vmul.f32 %v455, %v2943
        %v4889 = vmul.f32 %v456, %v2949
        %v4890 = vmul.f32 %v457, %v2955
        %v4891 = vmul.f32 %v458, %v2961
        %v4892 = vmul.f32 %v459, %v2967
        %v4893 = vmul.f32 %v460, %v2973
        %v4894 = vmul.f32 %v461, %v2979
        %v4895 = vmul.f32 %v462, %v2985
        %v4896 = vmul.f32 %v463, %v2991
        %v4897 = vmul.f32 %v464, %v2997
        %v4898 = vmul.f32 %v465, %v3003
        %v4899 = vmul.f32 %v466, %v3009
        %v4900 = vmul.f32 %v467, %v3015
        %v4901 = vmul.f32 %v468, %v3021
        %v4902 = vmul.f32 %v469, %v3027
        %v4903 = vmul.f32 %v470, %v3034
        %v4904 = vmul.f32 %v471, %v3040
        %v4905 = vmul.f32 %v472, %v3046
        %v4906 = vmul.f32 %v473, %v3052
        %v4907 = vmul.f32 %v474, %v3058
        %v4908 = vmul.f32 %v475, %v3064
        %v4909 = vmul.f32 %v476, %v3070
        %v4910 = vmul.f32 %v477, %v3076
        %v4911 = vmul.f32 %v478, %v3082
        %v4912 = vmul.f32 %v479, %v3088
        %v4913 = vmul.f32 %v480, %v3094
        %v4914 = vmul.f32 %v481, %v3100
        %v4915 = vmul.f32 %v482, %v3106
        %v4916 = vmul.f32 %v483, %v3112
        %v4917 = vmul.f32 %v484, %v3118
        %v4918 = vmul.f32 %v485, %v3124
        %v4919 = vmul.f32 %v486, %v3131
        %v4920 = vmul.f32 %v487, %v3137
        %v4921 = vmul.f32 %v488, %v3143
        %v4922 = vmul.f32 %v489, %v3149
        %v4923 = vmul.f32 %v490, %v3155
        %v4924 = vmul.f32 %v491, %v3161
        %v4925 = vmul.f32 %v492, %v3167
        %v4926 = vmul.f32 %v493, %v3173
        %v4927 = vmul.f32 %v494, %v3179
        %v4928 = vmul.f32 %v495, %v3185
        %v4929 = vmul.f32 %v496, %v3191
        %v4930 = vmul.f32 %v497, %v3197
        %v4931 = vmul.f32 %v498, %v3203
        %v4932 = vmul.f32 %v499, %v3209
        %v4933 = vmul.f32 %v500, %v3215
        %v4934 = vmul.f32 %v501, %v3221
        %v4935 = vmul.f32 %v502, %v3228
        %v4936 = vmul.f32 %v503, %v3234
        %v4937 = vmul.f32 %v504, %v3240
        %v4938 = vmul.f32 %v505, %v3246
        %v4939 = vmul.f32 %v506, %v3252
        %v4940 = vmul.f32 %v507, %v3258
        %v4941 = vmul.f32 %v508, %v3264
        %v4942 = vmul.f32 %v509, %v3270
        %v4943 = vmul.f32 %v510, %v3276
        %v4944 = vmul.f32 %v511, %v3282
        %v4945 = vmul.f32 %v512, %v3288
        %v4946 = vmul.f32 %v513, %v3294
        %v4947 = vmul.f32 %v514, %v3300
        %v4948 = vmul.f32 %v515, %v3306
        %v4949 = vmul.f32 %v516, %v3312
        %v4950 = vmul.f32 %v517, %v3318
        %v4951 = vmul.f32 %v518, %v3325
        %v4952 = vmul.f32 %v519, %v3331
        %v4953 = vmul.f32 %v520, %v3337
        %v4954 = vmul.f32 %v521, %v3343
        %v4955 = vmul.f32 %v522, %v3349
        %v4956 = vmul.f32 %v523, %v3355
        %v4957 = vmul.f32 %v524, %v3361
        %v4958 = vmul.f32 %v525, %v3367
        %v4959 = vmul.f32 %v526, %v3373
        %v4960 = vmul.f32 %v527, %v3379
        %v4961 = vmul.f32 %v528, %v3385
        %v4962 = vmul.f32 %v529, %v3391
        %v4963 = vmul.f32 %v530, %v3397
        %v4964 = vmul.f32 %v531, %v3403
        %v4965 = vmul.f32 %v532, %v3409
        %v4966 = vmul.f32 %v533, %v3415
        %v4967 = vmul.f32 %v534, %v3422
        %v4968 = vmul.f32 %v535, %v3428
        %v4969 = vmul.f32 %v536, %v3434
        %v4970 = vmul.f32 %v537, %v3440
        %v4971 = vmul.f32 %v538, %v3446
        %v4972 = vmul.f32 %v539, %v3452
        %v4973 = vmul.f32 %v540, %v3458
        %v4974 = vmul.f32 %v541, %v3464
        %v4975 = vmul.f32 %v542, %v3470
        %v4976 = vmul.f32 %v543, %v3476
        %v4977 = vmul.f32 %v544, %v3482
        %v4978 = vmul.f32 %v545, %v3488
        %v4979 = vmul.f32 %v546, %v3494
        %v4980 = vmul.f32 %v547, %v3500
        %v4981 = vmul.f32 %v548, %v3506
        %v4982 = vmul.f32 %v549, %v3512
        %v4983 = vmul.f32 %v550, %v3519
        %v4984 = vmul.f32 %v551, %v3525
        %v4985 = vmul.f32 %v552, %v3531
        %v4986 = vmul.f32 %v553, %v3537
        %v4987 = vmul.f32 %v554, %v3543
        %v4988 = vmul.f32 %v555, %v3549
        %v4989 = vmul.f32 %v556, %v3555
        %v4990 = vmul.f32 %v557, %v3561
        %v4991 = vmul.f32 %v558, %v3567
        %v4992 = vmul.f32 %v559, %v3573
        %v4993 = vmul.f32 %v560, %v3579
        %v4994 = vmul.f32 %v561, %v3585
        %v4995 = vmul.f32 %v562, %v3591
        %v4996 = vmul.f32 %v563, %v3597
        %v4997 = vmul.f32 %v564, %v3603
        %v4998 = vmul.f32 %v565, %v3609
        %v4999 = vmul.f32 %v566, %v3616
        %v5000 = vmul.f32 %v567, %v3622
        %v5001 = vmul.f32 %v568, %v3628
        %v5002 = vmul.f32 %v569, %v3634
        %v5003 = vmul.f32 %v570, %v3640
        %v5004 = vmul.f32 %v571, %v3646
        %v5005 = vmul.f32 %v572, %v3652
        %v5006 = vmul.f32 %v573, %v3658
        %v5007 = vmul.f32 %v574, %v3664
        %v5008 = vmul.f32 %v575, %v3670
        %v5009 = vmul.f32 %v576, %v3676
        %v5010 = vmul.f32 %v577, %v3682
        %v5011 = vmul.f32 %v578, %v3688
        %v5012 = vmul.f32 %v579, %v3694
        %v5013 = vmul.f32 %v580, %v3700
        %v5014 = vmul.f32 %v581, %v3706
        %v5015 = vmul.f32 %v582, %v3713
        %v5016 = vmul.f32 %v583, %v3719
        %v5017 = vmul.f32 %v584, %v3725
        %v5018 = vmul.f32 %v585, %v3731
        %v5019 = vmul.f32 %v586, %v3737
        %v5020 = vmul.f32 %v587, %v3743
        %v5021 = vmul.f32 %v588, %v3749
        %v5022 = vmul.f32 %v589, %v3755
        %v5023 = vmul.f32 %v590, %v3761
        %v5024 = vmul.f32 %v591, %v3767
        %v5025 = vmul.f32 %v592, %v3773
        %v5026 = vmul.f32 %v593, %v3779
        %v5027 = vmul.f32 %v594, %v3785
        %v5028 = vmul.f32 %v595, %v3791
        %v5029 = vmul.f32 %v596, %v3797
        %v5030 = vmul.f32 %v597, %v3803
        %v5031 = vmul.f32 %v598, %v3810
        %v5032 = vmul.f32 %v599, %v3816
        %v5033 = vmul.f32 %v600, %v3822
        %v5034 = vmul.f32 %v601, %v3828
        %v5035 = vmul.f32 %v602, %v3834
        %v5036 = vmul.f32 %v603, %v3840
        %v5037 = vmul.f32 %v604, %v3846
        %v5038 = vmul.f32 %v605, %v3852
        %v5039 = vmul.f32 %v606, %v3858
        %v5040 = vmul.f32 %v607, %v3864
        %v5041 = vmul.f32 %v608, %v3870
        %v5042 = vmul.f32 %v609, %v3876
        %v5043 = vmul.f32 %v610, %v3882
        %v5044 = vmul.f32 %v611, %v3888
        %v5045 = vmul.f32 %v612, %v3894
        %v5046 = vmul.f32 %v613, %v3900
        %v5047 = vmul.f32 %v614, %v3907
        %v5048 = vmul.f32 %v615, %v3913
        %v5049 = vmul.f32 %v616, %v3919
        %v5050 = vmul.f32 %v617, %v3925
        %v5051 = vmul.f32 %v618, %v3931
        %v5052 = vmul.f32 %v619, %v3937
        %v5053 = vmul.f32 %v620, %v3943
        %v5054 = vmul.f32 %v621, %v3949
        %v5055 = vmul.f32 %v622, %v3955
        %v5056 = vmul.f32 %v623, %v3961
        %v5057 = vmul.f32 %v624, %v3967
        %v5058 = vmul.f32 %v625, %v3973
        %v5059 = vmul.f32 %v626, %v3979
        %v5060 = vmul.f32 %v627, %v3985
        %v5061 = vmul.f32 %v628, %v3991
        %v5062 = vmul.f32 %v629, %v3997
        %v5063 = vsel %vm4254, %v4807, 0.0
        %v5064 = vsel %vm4254, %v4808, 0.0
        %v5065 = vadd.f32 %v5063, %v5064
        %v5066 = vsel %vm4254, %v4809, 0.0
        %v5067 = vadd.f32 %v5065, %v5066
        %v5068 = vsel %vm4254, %v4810, 0.0
        %v5069 = vadd.f32 %v5067, %v5068
        %v5070 = vsel %vm4254, %v4811, 0.0
        %v5071 = vadd.f32 %v5069, %v5070
        %v5072 = vsel %vm4254, %v4812, 0.0
        %v5073 = vadd.f32 %v5071, %v5072
        %v5074 = vsel %vm4254, %v4813, 0.0
        %v5075 = vadd.f32 %v5073, %v5074
        %v5076 = vsel %vm4254, %v4814, 0.0
        %v5077 = vadd.f32 %v5075, %v5076
        %v5078 = vsel %vm4254, %v4815, 0.0
        %v5079 = vadd.f32 %v5077, %v5078
        %v5080 = vsel %vm4254, %v4816, 0.0
        %v5081 = vadd.f32 %v5079, %v5080
        %v5082 = vsel %vm4254, %v4817, 0.0
        %v5083 = vadd.f32 %v5081, %v5082
        %v5084 = vsel %vm4254, %v4818, 0.0
        %v5085 = vadd.f32 %v5083, %v5084
        %v5086 = vsel %vm4254, %v4819, 0.0
        %v5087 = vadd.f32 %v5085, %v5086
        %v5088 = vsel %vm4254, %v4820, 0.0
        %v5089 = vadd.f32 %v5087, %v5088
        %v5090 = vsel %vm4254, %v4821, 0.0
        %v5091 = vadd.f32 %v5089, %v5090
        %v5092 = vsel %vm4254, %v4822, 0.0
        %v5093 = vadd.f32 %v5091, %v5092
        %v5094 = vsel %vm4254, %v4823, 0.0
        %v5095 = vadd.f32 %v5093, %v5094
        %v5096 = vsel %vm4254, %v4824, 0.0
        %v5097 = vadd.f32 %v5095, %v5096
        %v5098 = vsel %vm4254, %v4825, 0.0
        %v5099 = vadd.f32 %v5097, %v5098
        %v5100 = vsel %vm4254, %v4826, 0.0
        %v5101 = vadd.f32 %v5099, %v5100
        %v5102 = vsel %vm4254, %v4827, 0.0
        %v5103 = vadd.f32 %v5101, %v5102
        %v5104 = vsel %vm4254, %v4828, 0.0
        %v5105 = vadd.f32 %v5103, %v5104
        %v5106 = vsel %vm4254, %v4829, 0.0
        %v5107 = vadd.f32 %v5105, %v5106
        %v5108 = vsel %vm4254, %v4830, 0.0
        %v5109 = vadd.f32 %v5107, %v5108
        %v5110 = vsel %vm4254, %v4831, 0.0
        %v5111 = vadd.f32 %v5109, %v5110
        %v5112 = vsel %vm4254, %v4832, 0.0
        %v5113 = vadd.f32 %v5111, %v5112
        %v5114 = vsel %vm4254, %v4833, 0.0
        %v5115 = vadd.f32 %v5113, %v5114
        %v5116 = vsel %vm4254, %v4834, 0.0
        %v5117 = vadd.f32 %v5115, %v5116
        %v5118 = vsel %vm4254, %v4835, 0.0
        %v5119 = vadd.f32 %v5117, %v5118
        %v5120 = vsel %vm4254, %v4836, 0.0
        %v5121 = vadd.f32 %v5119, %v5120
        %v5122 = vsel %vm4254, %v4837, 0.0
        %v5123 = vadd.f32 %v5121, %v5122
        %v5124 = vsel %vm4254, %v4838, 0.0
        %v5125 = vadd.f32 %v5123, %v5124
        %v5126 = vrot.slane %v5125, 4
        %v5127 = vadd.f32 %v5125, %v5126
        %v5128 = vrot.slane %v5127, 2
        %v5129 = vadd.f32 %v5127, %v5128
        %v5130 = vrot.slane %v5129, 1
        %v5131 = vadd.f32 %v5129, %v5130
        %v5132 = vsel %vm4254, %v4839, 0.0
        %v5133 = vsel %vm4254, %v4840, 0.0
        %v5134 = vadd.f32 %v5132, %v5133
        %v5135 = vsel %vm4254, %v4841, 0.0
        %v5136 = vadd.f32 %v5134, %v5135
        %v5137 = vsel %vm4254, %v4842, 0.0
        %v5138 = vadd.f32 %v5136, %v5137
        %v5139 = vsel %vm4254, %v4843, 0.0
        %v5140 = vadd.f32 %v5138, %v5139
        %v5141 = vsel %vm4254, %v4844, 0.0
        %v5142 = vadd.f32 %v5140, %v5141
        %v5143 = vsel %vm4254, %v4845, 0.0
        %v5144 = vadd.f32 %v5142, %v5143
        %v5145 = vsel %vm4254, %v4846, 0.0
        %v5146 = vadd.f32 %v5144, %v5145
        %v5147 = vsel %vm4254, %v4847, 0.0
        %v5148 = vadd.f32 %v5146, %v5147
        %v5149 = vsel %vm4254, %v4848, 0.0
        %v5150 = vadd.f32 %v5148, %v5149
        %v5151 = vsel %vm4254, %v4849, 0.0
        %v5152 = vadd.f32 %v5150, %v5151
        %v5153 = vsel %vm4254, %v4850, 0.0
        %v5154 = vadd.f32 %v5152, %v5153
        %v5155 = vsel %vm4254, %v4851, 0.0
        %v5156 = vadd.f32 %v5154, %v5155
        %v5157 = vsel %vm4254, %v4852, 0.0
        %v5158 = vadd.f32 %v5156, %v5157
        %v5159 = vsel %vm4254, %v4853, 0.0
        %v5160 = vadd.f32 %v5158, %v5159
        %v5161 = vsel %vm4254, %v4854, 0.0
        %v5162 = vadd.f32 %v5160, %v5161
        %v5163 = vsel %vm4254, %v4855, 0.0
        %v5164 = vadd.f32 %v5162, %v5163
        %v5165 = vsel %vm4254, %v4856, 0.0
        %v5166 = vadd.f32 %v5164, %v5165
        %v5167 = vsel %vm4254, %v4857, 0.0
        %v5168 = vadd.f32 %v5166, %v5167
        %v5169 = vsel %vm4254, %v4858, 0.0
        %v5170 = vadd.f32 %v5168, %v5169
        %v5171 = vsel %vm4254, %v4859, 0.0
        %v5172 = vadd.f32 %v5170, %v5171
        %v5173 = vsel %vm4254, %v4860, 0.0
        %v5174 = vadd.f32 %v5172, %v5173
        %v5175 = vsel %vm4254, %v4861, 0.0
        %v5176 = vadd.f32 %v5174, %v5175
        %v5177 = vsel %vm4254, %v4862, 0.0
        %v5178 = vadd.f32 %v5176, %v5177
        %v5179 = vsel %vm4254, %v4863, 0.0
        %v5180 = vadd.f32 %v5178, %v5179
        %v5181 = vsel %vm4254, %v4864, 0.0
        %v5182 = vadd.f32 %v5180, %v5181
        %v5183 = vsel %vm4254, %v4865, 0.0
        %v5184 = vadd.f32 %v5182, %v5183
        %v5185 = vsel %vm4254, %v4866, 0.0
        %v5186 = vadd.f32 %v5184, %v5185
        %v5187 = vsel %vm4254, %v4867, 0.0
        %v5188 = vadd.f32 %v5186, %v5187
        %v5189 = vsel %vm4254, %v4868, 0.0
        %v5190 = vadd.f32 %v5188, %v5189
        %v5191 = vsel %vm4254, %v4869, 0.0
        %v5192 = vadd.f32 %v5190, %v5191
        %v5193 = vsel %vm4254, %v4870, 0.0
        %v5194 = vadd.f32 %v5192, %v5193
        %v5195 = vrot.slane %v5194, 4
        %v5196 = vadd.f32 %v5194, %v5195
        %v5197 = vrot.slane %v5196, 2
        %v5198 = vadd.f32 %v5196, %v5197
        %v5199 = vrot.slane %v5198, 1
        %v5200 = vadd.f32 %v5198, %v5199
        %v5201 = vsel %vm4254, %v4871, 0.0
        %v5202 = vsel %vm4254, %v4872, 0.0
        %v5203 = vadd.f32 %v5201, %v5202
        %v5204 = vsel %vm4254, %v4873, 0.0
        %v5205 = vadd.f32 %v5203, %v5204
        %v5206 = vsel %vm4254, %v4874, 0.0
        %v5207 = vadd.f32 %v5205, %v5206
        %v5208 = vsel %vm4254, %v4875, 0.0
        %v5209 = vadd.f32 %v5207, %v5208
        %v5210 = vsel %vm4254, %v4876, 0.0
        %v5211 = vadd.f32 %v5209, %v5210
        %v5212 = vsel %vm4254, %v4877, 0.0
        %v5213 = vadd.f32 %v5211, %v5212
        %v5214 = vsel %vm4254, %v4878, 0.0
        %v5215 = vadd.f32 %v5213, %v5214
        %v5216 = vsel %vm4254, %v4879, 0.0
        %v5217 = vadd.f32 %v5215, %v5216
        %v5218 = vsel %vm4254, %v4880, 0.0
        %v5219 = vadd.f32 %v5217, %v5218
        %v5220 = vsel %vm4254, %v4881, 0.0
        %v5221 = vadd.f32 %v5219, %v5220
        %v5222 = vsel %vm4254, %v4882, 0.0
        %v5223 = vadd.f32 %v5221, %v5222
        %v5224 = vsel %vm4254, %v4883, 0.0
        %v5225 = vadd.f32 %v5223, %v5224
        %v5226 = vsel %vm4254, %v4884, 0.0
        %v5227 = vadd.f32 %v5225, %v5226
        %v5228 = vsel %vm4254, %v4885, 0.0
        %v5229 = vadd.f32 %v5227, %v5228
        %v5230 = vsel %vm4254, %v4886, 0.0
        %v5231 = vadd.f32 %v5229, %v5230
        %v5232 = vsel %vm4254, %v4887, 0.0
        %v5233 = vadd.f32 %v5231, %v5232
        %v5234 = vsel %vm4254, %v4888, 0.0
        %v5235 = vadd.f32 %v5233, %v5234
        %v5236 = vsel %vm4254, %v4889, 0.0
        %v5237 = vadd.f32 %v5235, %v5236
        %v5238 = vsel %vm4254, %v4890, 0.0
        %v5239 = vadd.f32 %v5237, %v5238
        %v5240 = vsel %vm4254, %v4891, 0.0
        %v5241 = vadd.f32 %v5239, %v5240
        %v5242 = vsel %vm4254, %v4892, 0.0
        %v5243 = vadd.f32 %v5241, %v5242
        %v5244 = vsel %vm4254, %v4893, 0.0
        %v5245 = vadd.f32 %v5243, %v5244
        %v5246 = vsel %vm4254, %v4894, 0.0
        %v5247 = vadd.f32 %v5245, %v5246
        %v5248 = vsel %vm4254, %v4895, 0.0
        %v5249 = vadd.f32 %v5247, %v5248
        %v5250 = vsel %vm4254, %v4896, 0.0
        %v5251 = vadd.f32 %v5249, %v5250
        %v5252 = vsel %vm4254, %v4897, 0.0
        %v5253 = vadd.f32 %v5251, %v5252
        %v5254 = vsel %vm4254, %v4898, 0.0
        %v5255 = vadd.f32 %v5253, %v5254
        %v5256 = vsel %vm4254, %v4899, 0.0
        %v5257 = vadd.f32 %v5255, %v5256
        %v5258 = vsel %vm4254, %v4900, 0.0
        %v5259 = vadd.f32 %v5257, %v5258
        %v5260 = vsel %vm4254, %v4901, 0.0
        %v5261 = vadd.f32 %v5259, %v5260
        %v5262 = vsel %vm4254, %v4902, 0.0
        %v5263 = vadd.f32 %v5261, %v5262
        %v5264 = vrot.slane %v5263, 4
        %v5265 = vadd.f32 %v5263, %v5264
        %v5266 = vrot.slane %v5265, 2
        %v5267 = vadd.f32 %v5265, %v5266
        %v5268 = vrot.slane %v5267, 1
        %v5269 = vadd.f32 %v5267, %v5268
        %v5270 = vsel %vm4254, %v4903, 0.0
        %v5271 = vsel %vm4254, %v4904, 0.0
        %v5272 = vadd.f32 %v5270, %v5271
        %v5273 = vsel %vm4254, %v4905, 0.0
        %v5274 = vadd.f32 %v5272, %v5273
        %v5275 = vsel %vm4254, %v4906, 0.0
        %v5276 = vadd.f32 %v5274, %v5275
        %v5277 = vsel %vm4254, %v4907, 0.0
        %v5278 = vadd.f32 %v5276, %v5277
        %v5279 = vsel %vm4254, %v4908, 0.0
        %v5280 = vadd.f32 %v5278, %v5279
        %v5281 = vsel %vm4254, %v4909, 0.0
        %v5282 = vadd.f32 %v5280, %v5281
        %v5283 = vsel %vm4254, %v4910, 0.0
        %v5284 = vadd.f32 %v5282, %v5283
        %v5285 = vsel %vm4254, %v4911, 0.0
        %v5286 = vadd.f32 %v5284, %v5285
        %v5287 = vsel %vm4254, %v4912, 0.0
        %v5288 = vadd.f32 %v5286, %v5287
        %v5289 = vsel %vm4254, %v4913, 0.0
        %v5290 = vadd.f32 %v5288, %v5289
        %v5291 = vsel %vm4254, %v4914, 0.0
        %v5292 = vadd.f32 %v5290, %v5291
        %v5293 = vsel %vm4254, %v4915, 0.0
        %v5294 = vadd.f32 %v5292, %v5293
        %v5295 = vsel %vm4254, %v4916, 0.0
        %v5296 = vadd.f32 %v5294, %v5295
        %v5297 = vsel %vm4254, %v4917, 0.0
        %v5298 = vadd.f32 %v5296, %v5297
        %v5299 = vsel %vm4254, %v4918, 0.0
        %v5300 = vadd.f32 %v5298, %v5299
        %v5301 = vsel %vm4254, %v4919, 0.0
        %v5302 = vadd.f32 %v5300, %v5301
        %v5303 = vsel %vm4254, %v4920, 0.0
        %v5304 = vadd.f32 %v5302, %v5303
        %v5305 = vsel %vm4254, %v4921, 0.0
        %v5306 = vadd.f32 %v5304, %v5305
        %v5307 = vsel %vm4254, %v4922, 0.0
        %v5308 = vadd.f32 %v5306, %v5307
        %v5309 = vsel %vm4254, %v4923, 0.0
        %v5310 = vadd.f32 %v5308, %v5309
        %v5311 = vsel %vm4254, %v4924, 0.0
        %v5312 = vadd.f32 %v5310, %v5311
        %v5313 = vsel %vm4254, %v4925, 0.0
        %v5314 = vadd.f32 %v5312, %v5313
        %v5315 = vsel %vm4254, %v4926, 0.0
        %v5316 = vadd.f32 %v5314, %v5315
        %v5317 = vsel %vm4254, %v4927, 0.0
        %v5318 = vadd.f32 %v5316, %v5317
        %v5319 = vsel %vm4254, %v4928, 0.0
        %v5320 = vadd.f32 %v5318, %v5319
        %v5321 = vsel %vm4254, %v4929, 0.0
        %v5322 = vadd.f32 %v5320, %v5321
        %v5323 = vsel %vm4254, %v4930, 0.0
        %v5324 = vadd.f32 %v5322, %v5323
        %v5325 = vsel %vm4254, %v4931, 0.0
        %v5326 = vadd.f32 %v5324, %v5325
        %v5327 = vsel %vm4254, %v4932, 0.0
        %v5328 = vadd.f32 %v5326, %v5327
        %v5329 = vsel %vm4254, %v4933, 0.0
        %v5330 = vadd.f32 %v5328, %v5329
        %v5331 = vsel %vm4254, %v4934, 0.0
        %v5332 = vadd.f32 %v5330, %v5331
        %v5333 = vrot.slane %v5332, 4
        %v5334 = vadd.f32 %v5332, %v5333
        %v5335 = vrot.slane %v5334, 2
        %v5336 = vadd.f32 %v5334, %v5335
        %v5337 = vrot.slane %v5336, 1
        %v5338 = vadd.f32 %v5336, %v5337
        %v5339 = vsel %vm4254, %v4935, 0.0
        %v5340 = vsel %vm4254, %v4936, 0.0
        %v5341 = vadd.f32 %v5339, %v5340
        %v5342 = vsel %vm4254, %v4937, 0.0
        %v5343 = vadd.f32 %v5341, %v5342
        %v5344 = vsel %vm4254, %v4938, 0.0
        %v5345 = vadd.f32 %v5343, %v5344
        %v5346 = vsel %vm4254, %v4939, 0.0
        %v5347 = vadd.f32 %v5345, %v5346
        %v5348 = vsel %vm4254, %v4940, 0.0
        %v5349 = vadd.f32 %v5347, %v5348
        %v5350 = vsel %vm4254, %v4941, 0.0
        %v5351 = vadd.f32 %v5349, %v5350
        %v5352 = vsel %vm4254, %v4942, 0.0
        %v5353 = vadd.f32 %v5351, %v5352
        %v5354 = vsel %vm4254, %v4943, 0.0
        %v5355 = vadd.f32 %v5353, %v5354
        %v5356 = vsel %vm4254, %v4944, 0.0
        %v5357 = vadd.f32 %v5355, %v5356
        %v5358 = vsel %vm4254, %v4945, 0.0
        %v5359 = vadd.f32 %v5357, %v5358
        %v5360 = vsel %vm4254, %v4946, 0.0
        %v5361 = vadd.f32 %v5359, %v5360
        %v5362 = vsel %vm4254, %v4947, 0.0
        %v5363 = vadd.f32 %v5361, %v5362
        %v5364 = vsel %vm4254, %v4948, 0.0
        %v5365 = vadd.f32 %v5363, %v5364
        %v5366 = vsel %vm4254, %v4949, 0.0
        %v5367 = vadd.f32 %v5365, %v5366
        %v5368 = vsel %vm4254, %v4950, 0.0
        %v5369 = vadd.f32 %v5367, %v5368
        %v5370 = vsel %vm4254, %v4951, 0.0
        %v5371 = vadd.f32 %v5369, %v5370
        %v5372 = vsel %vm4254, %v4952, 0.0
        %v5373 = vadd.f32 %v5371, %v5372
        %v5374 = vsel %vm4254, %v4953, 0.0
        %v5375 = vadd.f32 %v5373, %v5374
        %v5376 = vsel %vm4254, %v4954, 0.0
        %v5377 = vadd.f32 %v5375, %v5376
        %v5378 = vsel %vm4254, %v4955, 0.0
        %v5379 = vadd.f32 %v5377, %v5378
        %v5380 = vsel %vm4254, %v4956, 0.0
        %v5381 = vadd.f32 %v5379, %v5380
        %v5382 = vsel %vm4254, %v4957, 0.0
        %v5383 = vadd.f32 %v5381, %v5382
        %v5384 = vsel %vm4254, %v4958, 0.0
        %v5385 = vadd.f32 %v5383, %v5384
        %v5386 = vsel %vm4254, %v4959, 0.0
        %v5387 = vadd.f32 %v5385, %v5386
        %v5388 = vsel %vm4254, %v4960, 0.0
        %v5389 = vadd.f32 %v5387, %v5388
        %v5390 = vsel %vm4254, %v4961, 0.0
        %v5391 = vadd.f32 %v5389, %v5390
        %v5392 = vsel %vm4254, %v4962, 0.0
        %v5393 = vadd.f32 %v5391, %v5392
        %v5394 = vsel %vm4254, %v4963, 0.0
        %v5395 = vadd.f32 %v5393, %v5394
        %v5396 = vsel %vm4254, %v4964, 0.0
        %v5397 = vadd.f32 %v5395, %v5396
        %v5398 = vsel %vm4254, %v4965, 0.0
        %v5399 = vadd.f32 %v5397, %v5398
        %v5400 = vsel %vm4254, %v4966, 0.0
        %v5401 = vadd.f32 %v5399, %v5400
        %v5402 = vrot.slane %v5401, 4
        %v5403 = vadd.f32 %v5401, %v5402
        %v5404 = vrot.slane %v5403, 2
        %v5405 = vadd.f32 %v5403, %v5404
        %v5406 = vrot.slane %v5405, 1
        %v5407 = vadd.f32 %v5405, %v5406
        %v5408 = vsel %vm4254, %v4967, 0.0
        %v5409 = vsel %vm4254, %v4968, 0.0
        %v5410 = vadd.f32 %v5408, %v5409
        %v5411 = vsel %vm4254, %v4969, 0.0
        %v5412 = vadd.f32 %v5410, %v5411
        %v5413 = vsel %vm4254, %v4970, 0.0
        %v5414 = vadd.f32 %v5412, %v5413
        %v5415 = vsel %vm4254, %v4971, 0.0
        %v5416 = vadd.f32 %v5414, %v5415
        %v5417 = vsel %vm4254, %v4972, 0.0
        %v5418 = vadd.f32 %v5416, %v5417
        %v5419 = vsel %vm4254, %v4973, 0.0
        %v5420 = vadd.f32 %v5418, %v5419
        %v5421 = vsel %vm4254, %v4974, 0.0
        %v5422 = vadd.f32 %v5420, %v5421
        %v5423 = vsel %vm4254, %v4975, 0.0
        %v5424 = vadd.f32 %v5422, %v5423
        %v5425 = vsel %vm4254, %v4976, 0.0
        %v5426 = vadd.f32 %v5424, %v5425
        %v5427 = vsel %vm4254, %v4977, 0.0
        %v5428 = vadd.f32 %v5426, %v5427
        %v5429 = vsel %vm4254, %v4978, 0.0
        %v5430 = vadd.f32 %v5428, %v5429
        %v5431 = vsel %vm4254, %v4979, 0.0
        %v5432 = vadd.f32 %v5430, %v5431
        %v5433 = vsel %vm4254, %v4980, 0.0
        %v5434 = vadd.f32 %v5432, %v5433
        %v5435 = vsel %vm4254, %v4981, 0.0
        %v5436 = vadd.f32 %v5434, %v5435
        %v5437 = vsel %vm4254, %v4982, 0.0
        %v5438 = vadd.f32 %v5436, %v5437
        %v5439 = vsel %vm4254, %v4983, 0.0
        %v5440 = vadd.f32 %v5438, %v5439
        %v5441 = vsel %vm4254, %v4984, 0.0
        %v5442 = vadd.f32 %v5440, %v5441
        %v5443 = vsel %vm4254, %v4985, 0.0
        %v5444 = vadd.f32 %v5442, %v5443
        %v5445 = vsel %vm4254, %v4986, 0.0
        %v5446 = vadd.f32 %v5444, %v5445
        %v5447 = vsel %vm4254, %v4987, 0.0
        %v5448 = vadd.f32 %v5446, %v5447
        %v5449 = vsel %vm4254, %v4988, 0.0
        %v5450 = vadd.f32 %v5448, %v5449
        %v5451 = vsel %vm4254, %v4989, 0.0
        %v5452 = vadd.f32 %v5450, %v5451
        %v5453 = vsel %vm4254, %v4990, 0.0
        %v5454 = vadd.f32 %v5452, %v5453
        %v5455 = vsel %vm4254, %v4991, 0.0
        %v5456 = vadd.f32 %v5454, %v5455
        %v5457 = vsel %vm4254, %v4992, 0.0
        %v5458 = vadd.f32 %v5456, %v5457
        %v5459 = vsel %vm4254, %v4993, 0.0
        %v5460 = vadd.f32 %v5458, %v5459
        %v5461 = vsel %vm4254, %v4994, 0.0
        %v5462 = vadd.f32 %v5460, %v5461
        %v5463 = vsel %vm4254, %v4995, 0.0
        %v5464 = vadd.f32 %v5462, %v5463
        %v5465 = vsel %vm4254, %v4996, 0.0
        %v5466 = vadd.f32 %v5464, %v5465
        %v5467 = vsel %vm4254, %v4997, 0.0
        %v5468 = vadd.f32 %v5466, %v5467
        %v5469 = vsel %vm4254, %v4998, 0.0
        %v5470 = vadd.f32 %v5468, %v5469
        %v5471 = vrot.slane %v5470, 4
        %v5472 = vadd.f32 %v5470, %v5471
        %v5473 = vrot.slane %v5472, 2
        %v5474 = vadd.f32 %v5472, %v5473
        %v5475 = vrot.slane %v5474, 1
        %v5476 = vadd.f32 %v5474, %v5475
        %v5477 = vsel %vm4254, %v4999, 0.0
        %v5478 = vsel %vm4254, %v5000, 0.0
        %v5479 = vadd.f32 %v5477, %v5478
        %v5480 = vsel %vm4254, %v5001, 0.0
        %v5481 = vadd.f32 %v5479, %v5480
        %v5482 = vsel %vm4254, %v5002, 0.0
        %v5483 = vadd.f32 %v5481, %v5482
        %v5484 = vsel %vm4254, %v5003, 0.0
        %v5485 = vadd.f32 %v5483, %v5484
        %v5486 = vsel %vm4254, %v5004, 0.0
        %v5487 = vadd.f32 %v5485, %v5486
        %v5488 = vsel %vm4254, %v5005, 0.0
        %v5489 = vadd.f32 %v5487, %v5488
        %v5490 = vsel %vm4254, %v5006, 0.0
        %v5491 = vadd.f32 %v5489, %v5490
        %v5492 = vsel %vm4254, %v5007, 0.0
        %v5493 = vadd.f32 %v5491, %v5492
        %v5494 = vsel %vm4254, %v5008, 0.0
        %v5495 = vadd.f32 %v5493, %v5494
        %v5496 = vsel %vm4254, %v5009, 0.0
        %v5497 = vadd.f32 %v5495, %v5496
        %v5498 = vsel %vm4254, %v5010, 0.0
        %v5499 = vadd.f32 %v5497, %v5498
        %v5500 = vsel %vm4254, %v5011, 0.0
        %v5501 = vadd.f32 %v5499, %v5500
        %v5502 = vsel %vm4254, %v5012, 0.0
        %v5503 = vadd.f32 %v5501, %v5502
        %v5504 = vsel %vm4254, %v5013, 0.0
        %v5505 = vadd.f32 %v5503, %v5504
        %v5506 = vsel %vm4254, %v5014, 0.0
        %v5507 = vadd.f32 %v5505, %v5506
        %v5508 = vsel %vm4254, %v5015, 0.0
        %v5509 = vadd.f32 %v5507, %v5508
        %v5510 = vsel %vm4254, %v5016, 0.0
        %v5511 = vadd.f32 %v5509, %v5510
        %v5512 = vsel %vm4254, %v5017, 0.0
        %v5513 = vadd.f32 %v5511, %v5512
        %v5514 = vsel %vm4254, %v5018, 0.0
        %v5515 = vadd.f32 %v5513, %v5514
        %v5516 = vsel %vm4254, %v5019, 0.0
        %v5517 = vadd.f32 %v5515, %v5516
        %v5518 = vsel %vm4254, %v5020, 0.0
        %v5519 = vadd.f32 %v5517, %v5518
        %v5520 = vsel %vm4254, %v5021, 0.0
        %v5521 = vadd.f32 %v5519, %v5520
        %v5522 = vsel %vm4254, %v5022, 0.0
        %v5523 = vadd.f32 %v5521, %v5522
        %v5524 = vsel %vm4254, %v5023, 0.0
        %v5525 = vadd.f32 %v5523, %v5524
        %v5526 = vsel %vm4254, %v5024, 0.0
        %v5527 = vadd.f32 %v5525, %v5526
        %v5528 = vsel %vm4254, %v5025, 0.0
        %v5529 = vadd.f32 %v5527, %v5528
        %v5530 = vsel %vm4254, %v5026, 0.0
        %v5531 = vadd.f32 %v5529, %v5530
        %v5532 = vsel %vm4254, %v5027, 0.0
        %v5533 = vadd.f32 %v5531, %v5532
        %v5534 = vsel %vm4254, %v5028, 0.0
        %v5535 = vadd.f32 %v5533, %v5534
        %v5536 = vsel %vm4254, %v5029, 0.0
        %v5537 = vadd.f32 %v5535, %v5536
        %v5538 = vsel %vm4254, %v5030, 0.0
        %v5539 = vadd.f32 %v5537, %v5538
        %v5540 = vrot.slane %v5539, 4
        %v5541 = vadd.f32 %v5539, %v5540
        %v5542 = vrot.slane %v5541, 2
        %v5543 = vadd.f32 %v5541, %v5542
        %v5544 = vrot.slane %v5543, 1
        %v5545 = vadd.f32 %v5543, %v5544
        %v5546 = vsel %vm4254, %v5031, 0.0
        %v5547 = vsel %vm4254, %v5032, 0.0
        %v5548 = vadd.f32 %v5546, %v5547
        %v5549 = vsel %vm4254, %v5033, 0.0
        %v5550 = vadd.f32 %v5548, %v5549
        %v5551 = vsel %vm4254, %v5034, 0.0
        %v5552 = vadd.f32 %v5550, %v5551
        %v5553 = vsel %vm4254, %v5035, 0.0
        %v5554 = vadd.f32 %v5552, %v5553
        %v5555 = vsel %vm4254, %v5036, 0.0
        %v5556 = vadd.f32 %v5554, %v5555
        %v5557 = vsel %vm4254, %v5037, 0.0
        %v5558 = vadd.f32 %v5556, %v5557
        %v5559 = vsel %vm4254, %v5038, 0.0
        %v5560 = vadd.f32 %v5558, %v5559
        %v5561 = vsel %vm4254, %v5039, 0.0
        %v5562 = vadd.f32 %v5560, %v5561
        %v5563 = vsel %vm4254, %v5040, 0.0
        %v5564 = vadd.f32 %v5562, %v5563
        %v5565 = vsel %vm4254, %v5041, 0.0
        %v5566 = vadd.f32 %v5564, %v5565
        %v5567 = vsel %vm4254, %v5042, 0.0
        %v5568 = vadd.f32 %v5566, %v5567
        %v5569 = vsel %vm4254, %v5043, 0.0
        %v5570 = vadd.f32 %v5568, %v5569
        %v5571 = vsel %vm4254, %v5044, 0.0
        %v5572 = vadd.f32 %v5570, %v5571
        %v5573 = vsel %vm4254, %v5045, 0.0
        %v5574 = vadd.f32 %v5572, %v5573
        %v5575 = vsel %vm4254, %v5046, 0.0
        %v5576 = vadd.f32 %v5574, %v5575
        %v5577 = vsel %vm4254, %v5047, 0.0
        %v5578 = vadd.f32 %v5576, %v5577
        %v5579 = vsel %vm4254, %v5048, 0.0
        %v5580 = vadd.f32 %v5578, %v5579
        %v5581 = vsel %vm4254, %v5049, 0.0
        %v5582 = vadd.f32 %v5580, %v5581
        %v5583 = vsel %vm4254, %v5050, 0.0
        %v5584 = vadd.f32 %v5582, %v5583
        %v5585 = vsel %vm4254, %v5051, 0.0
        %v5586 = vadd.f32 %v5584, %v5585
        %v5587 = vsel %vm4254, %v5052, 0.0
        %v5588 = vadd.f32 %v5586, %v5587
        %v5589 = vsel %vm4254, %v5053, 0.0
        %v5590 = vadd.f32 %v5588, %v5589
        %v5591 = vsel %vm4254, %v5054, 0.0
        %v5592 = vadd.f32 %v5590, %v5591
        %v5593 = vsel %vm4254, %v5055, 0.0
        %v5594 = vadd.f32 %v5592, %v5593
        %v5595 = vsel %vm4254, %v5056, 0.0
        %v5596 = vadd.f32 %v5594, %v5595
        %v5597 = vsel %vm4254, %v5057, 0.0
        %v5598 = vadd.f32 %v5596, %v5597
        %v5599 = vsel %vm4254, %v5058, 0.0
        %v5600 = vadd.f32 %v5598, %v5599
        %v5601 = vsel %vm4254, %v5059, 0.0
        %v5602 = vadd.f32 %v5600, %v5601
        %v5603 = vsel %vm4254, %v5060, 0.0
        %v5604 = vadd.f32 %v5602, %v5603
        %v5605 = vsel %vm4254, %v5061, 0.0
        %v5606 = vadd.f32 %v5604, %v5605
        %v5607 = vsel %vm4254, %v5062, 0.0
        %v5608 = vadd.f32 %v5606, %v5607
        %v5609 = vrot.slane %v5608, 4
        %v5610 = vadd.f32 %v5608, %v5609
        %v5611 = vrot.slane %v5610, 2
        %v5612 = vadd.f32 %v5610, %v5611
        %v5613 = vrot.slane %v5612, 1
        %v5614 = vadd.f32 %v5612, %v5613
        %v5615 = vmul.f32 %v3998, %v374
        %v5616 = vmul.f32 %v3999, %v375
        %v5617 = vmul.f32 %v4000, %v376
        %v5618 = vmul.f32 %v4001, %v377
        %v5619 = vmul.f32 %v4002, %v378
        %v5620 = vmul.f32 %v4003, %v379
        %v5621 = vmul.f32 %v4004, %v380
        %v5622 = vmul.f32 %v4005, %v381
        %v5623 = vmul.f32 %v4006, %v382
        %v5624 = vmul.f32 %v4007, %v383
        %v5625 = vmul.f32 %v4008, %v384
        %v5626 = vmul.f32 %v4009, %v385
        %v5627 = vmul.f32 %v4010, %v386
        %v5628 = vmul.f32 %v4011, %v387
        %v5629 = vmul.f32 %v4012, %v388
        %v5630 = vmul.f32 %v4013, %v389
        %v5631 = vmul.f32 %v4014, %v390
        %v5632 = vmul.f32 %v4015, %v391
        %v5633 = vmul.f32 %v4016, %v392
        %v5634 = vmul.f32 %v4017, %v393
        %v5635 = vmul.f32 %v4018, %v394
        %v5636 = vmul.f32 %v4019, %v395
        %v5637 = vmul.f32 %v4020, %v396
        %v5638 = vmul.f32 %v4021, %v397
        %v5639 = vmul.f32 %v4022, %v398
        %v5640 = vmul.f32 %v4023, %v399
        %v5641 = vmul.f32 %v4024, %v400
        %v5642 = vmul.f32 %v4025, %v401
        %v5643 = vmul.f32 %v4026, %v402
        %v5644 = vmul.f32 %v4027, %v403
        %v5645 = vmul.f32 %v4028, %v404
        %v5646 = vmul.f32 %v4029, %v405
        %v5647 = vmul.f32 %v4030, %v406
        %v5648 = vmul.f32 %v4031, %v407
        %v5649 = vmul.f32 %v4032, %v408
        %v5650 = vmul.f32 %v4033, %v409
        %v5651 = vmul.f32 %v4034, %v410
        %v5652 = vmul.f32 %v4035, %v411
        %v5653 = vmul.f32 %v4036, %v412
        %v5654 = vmul.f32 %v4037, %v413
        %v5655 = vmul.f32 %v4038, %v414
        %v5656 = vmul.f32 %v4039, %v415
        %v5657 = vmul.f32 %v4040, %v416
        %v5658 = vmul.f32 %v4041, %v417
        %v5659 = vmul.f32 %v4042, %v418
        %v5660 = vmul.f32 %v4043, %v419
        %v5661 = vmul.f32 %v4044, %v420
        %v5662 = vmul.f32 %v4045, %v421
        %v5663 = vmul.f32 %v4046, %v422
        %v5664 = vmul.f32 %v4047, %v423
        %v5665 = vmul.f32 %v4048, %v424
        %v5666 = vmul.f32 %v4049, %v425
        %v5667 = vmul.f32 %v4050, %v426
        %v5668 = vmul.f32 %v4051, %v427
        %v5669 = vmul.f32 %v4052, %v428
        %v5670 = vmul.f32 %v4053, %v429
        %v5671 = vmul.f32 %v4054, %v430
        %v5672 = vmul.f32 %v4055, %v431
        %v5673 = vmul.f32 %v4056, %v432
        %v5674 = vmul.f32 %v4057, %v433
        %v5675 = vmul.f32 %v4058, %v434
        %v5676 = vmul.f32 %v4059, %v435
        %v5677 = vmul.f32 %v4060, %v436
        %v5678 = vmul.f32 %v4061, %v437
        %v5679 = vmul.f32 %v4062, %v438
        %v5680 = vmul.f32 %v4063, %v439
        %v5681 = vmul.f32 %v4064, %v440
        %v5682 = vmul.f32 %v4065, %v441
        %v5683 = vmul.f32 %v4066, %v442
        %v5684 = vmul.f32 %v4067, %v443
        %v5685 = vmul.f32 %v4068, %v444
        %v5686 = vmul.f32 %v4069, %v445
        %v5687 = vmul.f32 %v4070, %v446
        %v5688 = vmul.f32 %v4071, %v447
        %v5689 = vmul.f32 %v4072, %v448
        %v5690 = vmul.f32 %v4073, %v449
        %v5691 = vmul.f32 %v4074, %v450
        %v5692 = vmul.f32 %v4075, %v451
        %v5693 = vmul.f32 %v4076, %v452
        %v5694 = vmul.f32 %v4077, %v453
        %v5695 = vmul.f32 %v4078, %v454
        %v5696 = vmul.f32 %v4079, %v455
        %v5697 = vmul.f32 %v4080, %v456
        %v5698 = vmul.f32 %v4081, %v457
        %v5699 = vmul.f32 %v4082, %v458
        %v5700 = vmul.f32 %v4083, %v459
        %v5701 = vmul.f32 %v4084, %v460
        %v5702 = vmul.f32 %v4085, %v461
        %v5703 = vmul.f32 %v4086, %v462
        %v5704 = vmul.f32 %v4087, %v463
        %v5705 = vmul.f32 %v4088, %v464
        %v5706 = vmul.f32 %v4089, %v465
        %v5707 = vmul.f32 %v4090, %v466
        %v5708 = vmul.f32 %v4091, %v467
        %v5709 = vmul.f32 %v4092, %v468
        %v5710 = vmul.f32 %v4093, %v469
        %v5711 = vmul.f32 %v4094, %v470
        %v5712 = vmul.f32 %v4095, %v471
        %v5713 = vmul.f32 %v4096, %v472
        %v5714 = vmul.f32 %v4097, %v473
        %v5715 = vmul.f32 %v4098, %v474
        %v5716 = vmul.f32 %v4099, %v475
        %v5717 = vmul.f32 %v4100, %v476
        %v5718 = vmul.f32 %v4101, %v477
        %v5719 = vmul.f32 %v4102, %v478
        %v5720 = vmul.f32 %v4103, %v479
        %v5721 = vmul.f32 %v4104, %v480
        %v5722 = vmul.f32 %v4105, %v481
        %v5723 = vmul.f32 %v4106, %v482
        %v5724 = vmul.f32 %v4107, %v483
        %v5725 = vmul.f32 %v4108, %v484
        %v5726 = vmul.f32 %v4109, %v485
        %v5727 = vmul.f32 %v4110, %v486
        %v5728 = vmul.f32 %v4111, %v487
        %v5729 = vmul.f32 %v4112, %v488
        %v5730 = vmul.f32 %v4113, %v489
        %v5731 = vmul.f32 %v4114, %v490
        %v5732 = vmul.f32 %v4115, %v491
        %v5733 = vmul.f32 %v4116, %v492
        %v5734 = vmul.f32 %v4117, %v493
        %v5735 = vmul.f32 %v4118, %v494
        %v5736 = vmul.f32 %v4119, %v495
        %v5737 = vmul.f32 %v4120, %v496
        %v5738 = vmul.f32 %v4121, %v497
        %v5739 = vmul.f32 %v4122, %v498
        %v5740 = vmul.f32 %v4123, %v499
        %v5741 = vmul.f32 %v4124, %v500
        %v5742 = vmul.f32 %v4125, %v501
        %v5743 = vmul.f32 %v4126, %v502
        %v5744 = vmul.f32 %v4127, %v503
        %v5745 = vmul.f32 %v4128, %v504
        %v5746 = vmul.f32 %v4129, %v505
        %v5747 = vmul.f32 %v4130, %v506
        %v5748 = vmul.f32 %v4131, %v507
        %v5749 = vmul.f32 %v4132, %v508
        %v5750 = vmul.f32 %v4133, %v509
        %v5751 = vmul.f32 %v4134, %v510
        %v5752 = vmul.f32 %v4135, %v511
        %v5753 = vmul.f32 %v4136, %v512
        %v5754 = vmul.f32 %v4137, %v513
        %v5755 = vmul.f32 %v4138, %v514
        %v5756 = vmul.f32 %v4139, %v515
        %v5757 = vmul.f32 %v4140, %v516
        %v5758 = vmul.f32 %v4141, %v517
        %v5759 = vmul.f32 %v4142, %v518
        %v5760 = vmul.f32 %v4143, %v519
        %v5761 = vmul.f32 %v4144, %v520
        %v5762 = vmul.f32 %v4145, %v521
        %v5763 = vmul.f32 %v4146, %v522
        %v5764 = vmul.f32 %v4147, %v523
        %v5765 = vmul.f32 %v4148, %v524
        %v5766 = vmul.f32 %v4149, %v525
        %v5767 = vmul.f32 %v4150, %v526
        %v5768 = vmul.f32 %v4151, %v527
        %v5769 = vmul.f32 %v4152, %v528
        %v5770 = vmul.f32 %v4153, %v529
        %v5771 = vmul.f32 %v4154, %v530
        %v5772 = vmul.f32 %v4155, %v531
        %v5773 = vmul.f32 %v4156, %v532
        %v5774 = vmul.f32 %v4157, %v533
        %v5775 = vmul.f32 %v4158, %v534
        %v5776 = vmul.f32 %v4159, %v535
        %v5777 = vmul.f32 %v4160, %v536
        %v5778 = vmul.f32 %v4161, %v537
        %v5779 = vmul.f32 %v4162, %v538
        %v5780 = vmul.f32 %v4163, %v539
        %v5781 = vmul.f32 %v4164, %v540
        %v5782 = vmul.f32 %v4165, %v541
        %v5783 = vmul.f32 %v4166, %v542
        %v5784 = vmul.f32 %v4167, %v543
        %v5785 = vmul.f32 %v4168, %v544
        %v5786 = vmul.f32 %v4169, %v545
        %v5787 = vmul.f32 %v4170, %v546
        %v5788 = vmul.f32 %v4171, %v547
        %v5789 = vmul.f32 %v4172, %v548
        %v5790 = vmul.f32 %v4173, %v549
        %v5791 = vmul.f32 %v4174, %v550
        %v5792 = vmul.f32 %v4175, %v551
        %v5793 = vmul.f32 %v4176, %v552
        %v5794 = vmul.f32 %v4177, %v553
        %v5795 = vmul.f32 %v4178, %v554
        %v5796 = vmul.f32 %v4179, %v555
        %v5797 = vmul.f32 %v4180, %v556
        %v5798 = vmul.f32 %v4181, %v557
        %v5799 = vmul.f32 %v4182, %v558
        %v5800 = vmul.f32 %v4183, %v559
        %v5801 = vmul.f32 %v4184, %v560
        %v5802 = vmul.f32 %v4185, %v561
        %v5803 = vmul.f32 %v4186, %v562
        %v5804 = vmul.f32 %v4187, %v563
        %v5805 = vmul.f32 %v4188, %v564
        %v5806 = vmul.f32 %v4189, %v565
        %v5807 = vmul.f32 %v4190, %v566
        %v5808 = vmul.f32 %v4191, %v567
        %v5809 = vmul.f32 %v4192, %v568
        %v5810 = vmul.f32 %v4193, %v569
        %v5811 = vmul.f32 %v4194, %v570
        %v5812 = vmul.f32 %v4195, %v571
        %v5813 = vmul.f32 %v4196, %v572
        %v5814 = vmul.f32 %v4197, %v573
        %v5815 = vmul.f32 %v4198, %v574
        %v5816 = vmul.f32 %v4199, %v575
        %v5817 = vmul.f32 %v4200, %v576
        %v5818 = vmul.f32 %v4201, %v577
        %v5819 = vmul.f32 %v4202, %v578
        %v5820 = vmul.f32 %v4203, %v579
        %v5821 = vmul.f32 %v4204, %v580
        %v5822 = vmul.f32 %v4205, %v581
        %v5823 = vmul.f32 %v4206, %v582
        %v5824 = vmul.f32 %v4207, %v583
        %v5825 = vmul.f32 %v4208, %v584
        %v5826 = vmul.f32 %v4209, %v585
        %v5827 = vmul.f32 %v4210, %v586
        %v5828 = vmul.f32 %v4211, %v587
        %v5829 = vmul.f32 %v4212, %v588
        %v5830 = vmul.f32 %v4213, %v589
        %v5831 = vmul.f32 %v4214, %v590
        %v5832 = vmul.f32 %v4215, %v591
        %v5833 = vmul.f32 %v4216, %v592
        %v5834 = vmul.f32 %v4217, %v593
        %v5835 = vmul.f32 %v4218, %v594
        %v5836 = vmul.f32 %v4219, %v595
        %v5837 = vmul.f32 %v4220, %v596
        %v5838 = vmul.f32 %v4221, %v597
        %v5839 = vmul.f32 %v4222, %v598
        %v5840 = vmul.f32 %v4223, %v599
        %v5841 = vmul.f32 %v4224, %v600
        %v5842 = vmul.f32 %v4225, %v601
        %v5843 = vmul.f32 %v4226, %v602
        %v5844 = vmul.f32 %v4227, %v603
        %v5845 = vmul.f32 %v4228, %v604
        %v5846 = vmul.f32 %v4229, %v605
        %v5847 = vmul.f32 %v4230, %v606
        %v5848 = vmul.f32 %v4231, %v607
        %v5849 = vmul.f32 %v4232, %v608
        %v5850 = vmul.f32 %v4233, %v609
        %v5851 = vmul.f32 %v4234, %v610
        %v5852 = vmul.f32 %v4235, %v611
        %v5853 = vmul.f32 %v4236, %v612
        %v5854 = vmul.f32 %v4237, %v613
        %v5855 = vmul.f32 %v4238, %v614
        %v5856 = vmul.f32 %v4239, %v615
        %v5857 = vmul.f32 %v4240, %v616
        %v5858 = vmul.f32 %v4241, %v617
        %v5859 = vmul.f32 %v4242, %v618
        %v5860 = vmul.f32 %v4243, %v619
        %v5861 = vmul.f32 %v4244, %v620
        %v5862 = vmul.f32 %v4245, %v621
        %v5863 = vmul.f32 %v4246, %v622
        %v5864 = vmul.f32 %v4247, %v623
        %v5865 = vmul.f32 %v4248, %v624
        %v5866 = vmul.f32 %v4249, %v625
        %v5867 = vmul.f32 %v4250, %v626
        %v5868 = vmul.f32 %v4251, %v627
        %v5869 = vmul.f32 %v4252, %v628
        %v5870 = vmul.f32 %v4253, %v629
        %v5871 = vsel %vm4254, %v5615, 0.0
        %5872 = vadd.xlane.f32.xlu0 %v5871
        %v5873 = vpop.xlane.xlu0 %5872
        %v5874 = vsel %vm4254, %v5616, 0.0
        %5875 = vadd.xlane.f32.xlu0 %v5874
        %v5876 = vpop.xlane.xlu0 %5875
        %v5877 = vsel %vm4254, %v5617, 0.0
        %5878 = vadd.xlane.f32.xlu0 %v5877
        %v5879 = vpop.xlane.xlu0 %5878
        %v5880 = vsel %vm4254, %v5618, 0.0
        %5881 = vadd.xlane.f32.xlu0 %v5880
        %v5882 = vpop.xlane.xlu0 %5881
        %v5883 = vsel %vm4254, %v5619, 0.0
        %5884 = vadd.xlane.f32.xlu0 %v5883
        %v5885 = vpop.xlane.xlu0 %5884
        %v5886 = vsel %vm4254, %v5620, 0.0
        %5887 = vadd.xlane.f32.xlu0 %v5886
        %v5888 = vpop.xlane.xlu0 %5887
        %v5889 = vsel %vm4254, %v5621, 0.0
        %5890 = vadd.xlane.f32.xlu0 %v5889
        %v5891 = vpop.xlane.xlu0 %5890
        %v5892 = vsel %vm4254, %v5622, 0.0
        %5893 = vadd.xlane.f32.xlu0 %v5892
        %v5894 = vpop.xlane.xlu0 %5893
        %v5895 = vsel %vm4254, %v5623, 0.0
        %5896 = vadd.xlane.f32.xlu0 %v5895
        %v5897 = vpop.xlane.xlu0 %5896
        %v5898 = vsel %vm4254, %v5624, 0.0
        %5899 = vadd.xlane.f32.xlu0 %v5898
        %v5900 = vpop.xlane.xlu0 %5899
        %v5901 = vsel %vm4254, %v5625, 0.0
        %5902 = vadd.xlane.f32.xlu0 %v5901
        %v5903 = vpop.xlane.xlu0 %5902
        %v5904 = vsel %vm4254, %v5626, 0.0
        %5905 = vadd.xlane.f32.xlu0 %v5904
        %v5906 = vpop.xlane.xlu0 %5905
        %v5907 = vsel %vm4254, %v5627, 0.0
        %5908 = vadd.xlane.f32.xlu0 %v5907
        %v5909 = vpop.xlane.xlu0 %5908
        %v5910 = vsel %vm4254, %v5628, 0.0
        %5911 = vadd.xlane.f32.xlu0 %v5910
        %v5912 = vpop.xlane.xlu0 %5911
        %v5913 = vsel %vm4254, %v5629, 0.0
        %5914 = vadd.xlane.f32.xlu0 %v5913
        %v5915 = vpop.xlane.xlu0 %5914
        %v5916 = vsel %vm4254, %v5630, 0.0
        %5917 = vadd.xlane.f32.xlu0 %v5916
        %v5918 = vpop.xlane.xlu0 %5917
        %v5919 = vsel %vm4254, %v5631, 0.0
        %5920 = vadd.xlane.f32.xlu0 %v5919
        %v5921 = vpop.xlane.xlu0 %5920
        %v5922 = vsel %vm4254, %v5632, 0.0
        %5923 = vadd.xlane.f32.xlu0 %v5922
        %v5924 = vpop.xlane.xlu0 %5923
        %v5925 = vsel %vm4254, %v5633, 0.0
        %5926 = vadd.xlane.f32.xlu0 %v5925
        %v5927 = vpop.xlane.xlu0 %5926
        %v5928 = vsel %vm4254, %v5634, 0.0
        %5929 = vadd.xlane.f32.xlu0 %v5928
        %v5930 = vpop.xlane.xlu0 %5929
        %v5931 = vsel %vm4254, %v5635, 0.0
        %5932 = vadd.xlane.f32.xlu0 %v5931
        %v5933 = vpop.xlane.xlu0 %5932
        %v5934 = vsel %vm4254, %v5636, 0.0
        %5935 = vadd.xlane.f32.xlu0 %v5934
        %v5936 = vpop.xlane.xlu0 %5935
        %v5937 = vsel %vm4254, %v5637, 0.0
        %5938 = vadd.xlane.f32.xlu0 %v5937
        %v5939 = vpop.xlane.xlu0 %5938
        %v5940 = vsel %vm4254, %v5638, 0.0
        %5941 = vadd.xlane.f32.xlu0 %v5940
        %v5942 = vpop.xlane.xlu0 %5941
        %v5943 = vsel %vm4254, %v5639, 0.0
        %5944 = vadd.xlane.f32.xlu0 %v5943
        %v5945 = vpop.xlane.xlu0 %5944
        %v5946 = vsel %vm4254, %v5640, 0.0
        %5947 = vadd.xlane.f32.xlu0 %v5946
        %v5948 = vpop.xlane.xlu0 %5947
        %v5949 = vsel %vm4254, %v5641, 0.0
        %5950 = vadd.xlane.f32.xlu0 %v5949
        %v5951 = vpop.xlane.xlu0 %5950
        %v5952 = vsel %vm4254, %v5642, 0.0
        %5953 = vadd.xlane.f32.xlu0 %v5952
        %v5954 = vpop.xlane.xlu0 %5953
        %v5955 = vsel %vm4254, %v5643, 0.0
        %5956 = vadd.xlane.f32.xlu0 %v5955
        %v5957 = vpop.xlane.xlu0 %5956
        %v5958 = vsel %vm4254, %v5644, 0.0
        %5959 = vadd.xlane.f32.xlu0 %v5958
        %v5960 = vpop.xlane.xlu0 %5959
        %v5961 = vsel %vm4254, %v5645, 0.0
        %5962 = vadd.xlane.f32.xlu0 %v5961
        %v5963 = vpop.xlane.xlu0 %5962
        %v5964 = vsel %vm4254, %v5646, 0.0
        %5965 = vadd.xlane.f32.xlu0 %v5964
        %v5966 = vpop.xlane.xlu0 %5965
        %v5967 = vsel %vm4254, %v5647, 0.0
        %5968 = vadd.xlane.f32.xlu0 %v5967
        %v5969 = vpop.xlane.xlu0 %5968
        %v5970 = vsel %vm4254, %v5648, 0.0
        %5971 = vadd.xlane.f32.xlu0 %v5970
        %v5972 = vpop.xlane.xlu0 %5971
        %v5973 = vsel %vm4254, %v5649, 0.0
        %5974 = vadd.xlane.f32.xlu0 %v5973
        %v5975 = vpop.xlane.xlu0 %5974
        %v5976 = vsel %vm4254, %v5650, 0.0
        %5977 = vadd.xlane.f32.xlu0 %v5976
        %v5978 = vpop.xlane.xlu0 %5977
        %v5979 = vsel %vm4254, %v5651, 0.0
        %5980 = vadd.xlane.f32.xlu0 %v5979
        %v5981 = vpop.xlane.xlu0 %5980
        %v5982 = vsel %vm4254, %v5652, 0.0
        %5983 = vadd.xlane.f32.xlu0 %v5982
        %v5984 = vpop.xlane.xlu0 %5983
        %v5985 = vsel %vm4254, %v5653, 0.0
        %5986 = vadd.xlane.f32.xlu0 %v5985
        %v5987 = vpop.xlane.xlu0 %5986
        %v5988 = vsel %vm4254, %v5654, 0.0
        %5989 = vadd.xlane.f32.xlu0 %v5988
        %v5990 = vpop.xlane.xlu0 %5989
        %v5991 = vsel %vm4254, %v5655, 0.0
        %5992 = vadd.xlane.f32.xlu0 %v5991
        %v5993 = vpop.xlane.xlu0 %5992
        %v5994 = vsel %vm4254, %v5656, 0.0
        %5995 = vadd.xlane.f32.xlu0 %v5994
        %v5996 = vpop.xlane.xlu0 %5995
        %v5997 = vsel %vm4254, %v5657, 0.0
        %5998 = vadd.xlane.f32.xlu0 %v5997
        %v5999 = vpop.xlane.xlu0 %5998
        %v6000 = vsel %vm4254, %v5658, 0.0
        %6001 = vadd.xlane.f32.xlu0 %v6000
        %v6002 = vpop.xlane.xlu0 %6001
        %v6003 = vsel %vm4254, %v5659, 0.0
        %6004 = vadd.xlane.f32.xlu0 %v6003
        %v6005 = vpop.xlane.xlu0 %6004
        %v6006 = vsel %vm4254, %v5660, 0.0
        %6007 = vadd.xlane.f32.xlu0 %v6006
        %v6008 = vpop.xlane.xlu0 %6007
        %v6009 = vsel %vm4254, %v5661, 0.0
        %6010 = vadd.xlane.f32.xlu0 %v6009
        %v6011 = vpop.xlane.xlu0 %6010
        %v6012 = vsel %vm4254, %v5662, 0.0
        %6013 = vadd.xlane.f32.xlu0 %v6012
        %v6014 = vpop.xlane.xlu0 %6013
        %v6015 = vsel %vm4254, %v5663, 0.0
        %6016 = vadd.xlane.f32.xlu0 %v6015
        %v6017 = vpop.xlane.xlu0 %6016
        %v6018 = vsel %vm4254, %v5664, 0.0
        %6019 = vadd.xlane.f32.xlu0 %v6018
        %v6020 = vpop.xlane.xlu0 %6019
        %v6021 = vsel %vm4254, %v5665, 0.0
        %6022 = vadd.xlane.f32.xlu0 %v6021
        %v6023 = vpop.xlane.xlu0 %6022
        %v6024 = vsel %vm4254, %v5666, 0.0
        %6025 = vadd.xlane.f32.xlu0 %v6024
        %v6026 = vpop.xlane.xlu0 %6025
        %v6027 = vsel %vm4254, %v5667, 0.0
        %6028 = vadd.xlane.f32.xlu0 %v6027
        %v6029 = vpop.xlane.xlu0 %6028
        %v6030 = vsel %vm4254, %v5668, 0.0
        %6031 = vadd.xlane.f32.xlu0 %v6030
        %v6032 = vpop.xlane.xlu0 %6031
        %v6033 = vsel %vm4254, %v5669, 0.0
        %6034 = vadd.xlane.f32.xlu0 %v6033
        %v6035 = vpop.xlane.xlu0 %6034
        %v6036 = vsel %vm4254, %v5670, 0.0
        %6037 = vadd.xlane.f32.xlu0 %v6036
        %v6038 = vpop.xlane.xlu0 %6037
        %v6039 = vsel %vm4254, %v5671, 0.0
        %6040 = vadd.xlane.f32.xlu0 %v6039
        %v6041 = vpop.xlane.xlu0 %6040
        %v6042 = vsel %vm4254, %v5672, 0.0
        %6043 = vadd.xlane.f32.xlu0 %v6042
        %v6044 = vpop.xlane.xlu0 %6043
        %v6045 = vsel %vm4254, %v5673, 0.0
        %6046 = vadd.xlane.f32.xlu0 %v6045
        %v6047 = vpop.xlane.xlu0 %6046
        %v6048 = vsel %vm4254, %v5674, 0.0
        %6049 = vadd.xlane.f32.xlu0 %v6048
        %v6050 = vpop.xlane.xlu0 %6049
        %v6051 = vsel %vm4254, %v5675, 0.0
        %6052 = vadd.xlane.f32.xlu0 %v6051
        %v6053 = vpop.xlane.xlu0 %6052
        %v6054 = vsel %vm4254, %v5676, 0.0
        %6055 = vadd.xlane.f32.xlu0 %v6054
        %v6056 = vpop.xlane.xlu0 %6055
        %v6057 = vsel %vm4254, %v5677, 0.0
        %6058 = vadd.xlane.f32.xlu0 %v6057
        %v6059 = vpop.xlane.xlu0 %6058
        %v6060 = vsel %vm4254, %v5678, 0.0
        %6061 = vadd.xlane.f32.xlu0 %v6060
        %v6062 = vpop.xlane.xlu0 %6061
        %v6063 = vsel %vm4254, %v5679, 0.0
        %6064 = vadd.xlane.f32.xlu0 %v6063
        %v6065 = vpop.xlane.xlu0 %6064
        %v6066 = vsel %vm4254, %v5680, 0.0
        %6067 = vadd.xlane.f32.xlu0 %v6066
        %v6068 = vpop.xlane.xlu0 %6067
        %v6069 = vsel %vm4254, %v5681, 0.0
        %6070 = vadd.xlane.f32.xlu0 %v6069
        %v6071 = vpop.xlane.xlu0 %6070
        %v6072 = vsel %vm4254, %v5682, 0.0
        %6073 = vadd.xlane.f32.xlu0 %v6072
        %v6074 = vpop.xlane.xlu0 %6073
        %v6075 = vsel %vm4254, %v5683, 0.0
        %6076 = vadd.xlane.f32.xlu0 %v6075
        %v6077 = vpop.xlane.xlu0 %6076
        %v6078 = vsel %vm4254, %v5684, 0.0
        %6079 = vadd.xlane.f32.xlu0 %v6078
        %v6080 = vpop.xlane.xlu0 %6079
        %v6081 = vsel %vm4254, %v5685, 0.0
        %6082 = vadd.xlane.f32.xlu0 %v6081
        %v6083 = vpop.xlane.xlu0 %6082
        %v6084 = vsel %vm4254, %v5686, 0.0
        %6085 = vadd.xlane.f32.xlu0 %v6084
        %v6086 = vpop.xlane.xlu0 %6085
        %v6087 = vsel %vm4254, %v5687, 0.0
        %6088 = vadd.xlane.f32.xlu0 %v6087
        %v6089 = vpop.xlane.xlu0 %6088
        %v6090 = vsel %vm4254, %v5688, 0.0
        %6091 = vadd.xlane.f32.xlu0 %v6090
        %v6092 = vpop.xlane.xlu0 %6091
        %v6093 = vsel %vm4254, %v5689, 0.0
        %6094 = vadd.xlane.f32.xlu0 %v6093
        %v6095 = vpop.xlane.xlu0 %6094
        %v6096 = vsel %vm4254, %v5690, 0.0
        %6097 = vadd.xlane.f32.xlu0 %v6096
        %v6098 = vpop.xlane.xlu0 %6097
        %v6099 = vsel %vm4254, %v5691, 0.0
        %6100 = vadd.xlane.f32.xlu0 %v6099
        %v6101 = vpop.xlane.xlu0 %6100
        %v6102 = vsel %vm4254, %v5692, 0.0
        %6103 = vadd.xlane.f32.xlu0 %v6102
        %v6104 = vpop.xlane.xlu0 %6103
        %v6105 = vsel %vm4254, %v5693, 0.0
        %6106 = vadd.xlane.f32.xlu0 %v6105
        %v6107 = vpop.xlane.xlu0 %6106
        %v6108 = vsel %vm4254, %v5694, 0.0
        %6109 = vadd.xlane.f32.xlu0 %v6108
        %v6110 = vpop.xlane.xlu0 %6109
        %v6111 = vsel %vm4254, %v5695, 0.0
        %6112 = vadd.xlane.f32.xlu0 %v6111
        %v6113 = vpop.xlane.xlu0 %6112
        %v6114 = vsel %vm4254, %v5696, 0.0
        %6115 = vadd.xlane.f32.xlu0 %v6114
        %v6116 = vpop.xlane.xlu0 %6115
        %v6117 = vsel %vm4254, %v5697, 0.0
        %6118 = vadd.xlane.f32.xlu0 %v6117
        %v6119 = vpop.xlane.xlu0 %6118
        %v6120 = vsel %vm4254, %v5698, 0.0
        %6121 = vadd.xlane.f32.xlu0 %v6120
        %v6122 = vpop.xlane.xlu0 %6121
        %v6123 = vsel %vm4254, %v5699, 0.0
        %6124 = vadd.xlane.f32.xlu0 %v6123
        %v6125 = vpop.xlane.xlu0 %6124
        %v6126 = vsel %vm4254, %v5700, 0.0
        %6127 = vadd.xlane.f32.xlu0 %v6126
        %v6128 = vpop.xlane.xlu0 %6127
        %v6129 = vsel %vm4254, %v5701, 0.0
        %6130 = vadd.xlane.f32.xlu0 %v6129
        %v6131 = vpop.xlane.xlu0 %6130
        %v6132 = vsel %vm4254, %v5702, 0.0
        %6133 = vadd.xlane.f32.xlu0 %v6132
        %v6134 = vpop.xlane.xlu0 %6133
        %v6135 = vsel %vm4254, %v5703, 0.0
        %6136 = vadd.xlane.f32.xlu0 %v6135
        %v6137 = vpop.xlane.xlu0 %6136
        %v6138 = vsel %vm4254, %v5704, 0.0
        %6139 = vadd.xlane.f32.xlu0 %v6138
        %v6140 = vpop.xlane.xlu0 %6139
        %v6141 = vsel %vm4254, %v5705, 0.0
        %6142 = vadd.xlane.f32.xlu0 %v6141
        %v6143 = vpop.xlane.xlu0 %6142
        %v6144 = vsel %vm4254, %v5706, 0.0
        %6145 = vadd.xlane.f32.xlu0 %v6144
        %v6146 = vpop.xlane.xlu0 %6145
        %v6147 = vsel %vm4254, %v5707, 0.0
        %6148 = vadd.xlane.f32.xlu0 %v6147
        %v6149 = vpop.xlane.xlu0 %6148
        %v6150 = vsel %vm4254, %v5708, 0.0
        %6151 = vadd.xlane.f32.xlu0 %v6150
        %v6152 = vpop.xlane.xlu0 %6151
        %v6153 = vsel %vm4254, %v5709, 0.0
        %6154 = vadd.xlane.f32.xlu0 %v6153
        %v6155 = vpop.xlane.xlu0 %6154
        %v6156 = vsel %vm4254, %v5710, 0.0
        %6157 = vadd.xlane.f32.xlu0 %v6156
        %v6158 = vpop.xlane.xlu0 %6157
        %v6159 = vsel %vm4254, %v5711, 0.0
        %6160 = vadd.xlane.f32.xlu0 %v6159
        %v6161 = vpop.xlane.xlu0 %6160
        %v6162 = vsel %vm4254, %v5712, 0.0
        %6163 = vadd.xlane.f32.xlu0 %v6162
        %v6164 = vpop.xlane.xlu0 %6163
        %v6165 = vsel %vm4254, %v5713, 0.0
        %6166 = vadd.xlane.f32.xlu0 %v6165
        %v6167 = vpop.xlane.xlu0 %6166
        %v6168 = vsel %vm4254, %v5714, 0.0
        %6169 = vadd.xlane.f32.xlu0 %v6168
        %v6170 = vpop.xlane.xlu0 %6169
        %v6171 = vsel %vm4254, %v5715, 0.0
        %6172 = vadd.xlane.f32.xlu0 %v6171
        %v6173 = vpop.xlane.xlu0 %6172
        %v6174 = vsel %vm4254, %v5716, 0.0
        %6175 = vadd.xlane.f32.xlu0 %v6174
        %v6176 = vpop.xlane.xlu0 %6175
        %v6177 = vsel %vm4254, %v5717, 0.0
        %6178 = vadd.xlane.f32.xlu0 %v6177
        %v6179 = vpop.xlane.xlu0 %6178
        %v6180 = vsel %vm4254, %v5718, 0.0
        %6181 = vadd.xlane.f32.xlu0 %v6180
        %v6182 = vpop.xlane.xlu0 %6181
        %v6183 = vsel %vm4254, %v5719, 0.0
        %6184 = vadd.xlane.f32.xlu0 %v6183
        %v6185 = vpop.xlane.xlu0 %6184
        %v6186 = vsel %vm4254, %v5720, 0.0
        %6187 = vadd.xlane.f32.xlu0 %v6186
        %v6188 = vpop.xlane.xlu0 %6187
        %v6189 = vsel %vm4254, %v5721, 0.0
        %6190 = vadd.xlane.f32.xlu0 %v6189
        %v6191 = vpop.xlane.xlu0 %6190
        %v6192 = vsel %vm4254, %v5722, 0.0
        %6193 = vadd.xlane.f32.xlu0 %v6192
        %v6194 = vpop.xlane.xlu0 %6193
        %v6195 = vsel %vm4254, %v5723, 0.0
        %6196 = vadd.xlane.f32.xlu0 %v6195
        %v6197 = vpop.xlane.xlu0 %6196
        %v6198 = vsel %vm4254, %v5724, 0.0
        %6199 = vadd.xlane.f32.xlu0 %v6198
        %v6200 = vpop.xlane.xlu0 %6199
        %v6201 = vsel %vm4254, %v5725, 0.0
        %6202 = vadd.xlane.f32.xlu0 %v6201
        %v6203 = vpop.xlane.xlu0 %6202
        %v6204 = vsel %vm4254, %v5726, 0.0
        %6205 = vadd.xlane.f32.xlu0 %v6204
        %v6206 = vpop.xlane.xlu0 %6205
        %v6207 = vsel %vm4254, %v5727, 0.0
        %6208 = vadd.xlane.f32.xlu0 %v6207
        %v6209 = vpop.xlane.xlu0 %6208
        %v6210 = vsel %vm4254, %v5728, 0.0
        %6211 = vadd.xlane.f32.xlu0 %v6210
        %v6212 = vpop.xlane.xlu0 %6211
        %v6213 = vsel %vm4254, %v5729, 0.0
        %6214 = vadd.xlane.f32.xlu0 %v6213
        %v6215 = vpop.xlane.xlu0 %6214
        %v6216 = vsel %vm4254, %v5730, 0.0
        %6217 = vadd.xlane.f32.xlu0 %v6216
        %v6218 = vpop.xlane.xlu0 %6217
        %v6219 = vsel %vm4254, %v5731, 0.0
        %6220 = vadd.xlane.f32.xlu0 %v6219
        %v6221 = vpop.xlane.xlu0 %6220
        %v6222 = vsel %vm4254, %v5732, 0.0
        %6223 = vadd.xlane.f32.xlu0 %v6222
        %v6224 = vpop.xlane.xlu0 %6223
        %v6225 = vsel %vm4254, %v5733, 0.0
        %6226 = vadd.xlane.f32.xlu0 %v6225
        %v6227 = vpop.xlane.xlu0 %6226
        %v6228 = vsel %vm4254, %v5734, 0.0
        %6229 = vadd.xlane.f32.xlu0 %v6228
        %v6230 = vpop.xlane.xlu0 %6229
        %v6231 = vsel %vm4254, %v5735, 0.0
        %6232 = vadd.xlane.f32.xlu0 %v6231
        %v6233 = vpop.xlane.xlu0 %6232
        %v6234 = vsel %vm4254, %v5736, 0.0
        %6235 = vadd.xlane.f32.xlu0 %v6234
        %v6236 = vpop.xlane.xlu0 %6235
        %v6237 = vsel %vm4254, %v5737, 0.0
        %6238 = vadd.xlane.f32.xlu0 %v6237
        %v6239 = vpop.xlane.xlu0 %6238
        %v6240 = vsel %vm4254, %v5738, 0.0
        %6241 = vadd.xlane.f32.xlu0 %v6240
        %v6242 = vpop.xlane.xlu0 %6241
        %v6243 = vsel %vm4254, %v5739, 0.0
        %6244 = vadd.xlane.f32.xlu0 %v6243
        %v6245 = vpop.xlane.xlu0 %6244
        %v6246 = vsel %vm4254, %v5740, 0.0
        %6247 = vadd.xlane.f32.xlu0 %v6246
        %v6248 = vpop.xlane.xlu0 %6247
        %v6249 = vsel %vm4254, %v5741, 0.0
        %6250 = vadd.xlane.f32.xlu0 %v6249
        %v6251 = vpop.xlane.xlu0 %6250
        %v6252 = vsel %vm4254, %v5742, 0.0
        %6253 = vadd.xlane.f32.xlu0 %v6252
        %v6254 = vpop.xlane.xlu0 %6253
        %v6255 = vsel %vm4254, %v5743, 0.0
        %6256 = vadd.xlane.f32.xlu0 %v6255
        %v6257 = vpop.xlane.xlu0 %6256
        %v6258 = vsel %vm4254, %v5744, 0.0
        %6259 = vadd.xlane.f32.xlu0 %v6258
        %v6260 = vpop.xlane.xlu0 %6259
        %v6261 = vsel %vm4254, %v5745, 0.0
        %6262 = vadd.xlane.f32.xlu0 %v6261
        %v6263 = vpop.xlane.xlu0 %6262
        %v6264 = vsel %vm4254, %v5746, 0.0
        %6265 = vadd.xlane.f32.xlu0 %v6264
        %v6266 = vpop.xlane.xlu0 %6265
        %v6267 = vsel %vm4254, %v5747, 0.0
        %6268 = vadd.xlane.f32.xlu0 %v6267
        %v6269 = vpop.xlane.xlu0 %6268
        %v6270 = vsel %vm4254, %v5748, 0.0
        %6271 = vadd.xlane.f32.xlu0 %v6270
        %v6272 = vpop.xlane.xlu0 %6271
        %v6273 = vsel %vm4254, %v5749, 0.0
        %6274 = vadd.xlane.f32.xlu0 %v6273
        %v6275 = vpop.xlane.xlu0 %6274
        %v6276 = vsel %vm4254, %v5750, 0.0
        %6277 = vadd.xlane.f32.xlu0 %v6276
        %v6278 = vpop.xlane.xlu0 %6277
        %v6279 = vsel %vm4254, %v5751, 0.0
        %6280 = vadd.xlane.f32.xlu0 %v6279
        %v6281 = vpop.xlane.xlu0 %6280
        %v6282 = vsel %vm4254, %v5752, 0.0
        %6283 = vadd.xlane.f32.xlu0 %v6282
        %v6284 = vpop.xlane.xlu0 %6283
        %v6285 = vsel %vm4254, %v5753, 0.0
        %6286 = vadd.xlane.f32.xlu0 %v6285
        %v6287 = vpop.xlane.xlu0 %6286
        %v6288 = vsel %vm4254, %v5754, 0.0
        %6289 = vadd.xlane.f32.xlu0 %v6288
        %v6290 = vpop.xlane.xlu0 %6289
        %v6291 = vsel %vm4254, %v5755, 0.0
        %6292 = vadd.xlane.f32.xlu0 %v6291
        %v6293 = vpop.xlane.xlu0 %6292
        %v6294 = vsel %vm4254, %v5756, 0.0
        %6295 = vadd.xlane.f32.xlu0 %v6294
        %v6296 = vpop.xlane.xlu0 %6295
        %v6297 = vsel %vm4254, %v5757, 0.0
        %6298 = vadd.xlane.f32.xlu0 %v6297
        %v6299 = vpop.xlane.xlu0 %6298
        %v6300 = vsel %vm4254, %v5758, 0.0
        %6301 = vadd.xlane.f32.xlu0 %v6300
        %v6302 = vpop.xlane.xlu0 %6301
        %v6303 = vsel %vm4254, %v5759, 0.0
        %6304 = vadd.xlane.f32.xlu0 %v6303
        %v6305 = vpop.xlane.xlu0 %6304
        %v6306 = vsel %vm4254, %v5760, 0.0
        %6307 = vadd.xlane.f32.xlu0 %v6306
        %v6308 = vpop.xlane.xlu0 %6307
        %v6309 = vsel %vm4254, %v5761, 0.0
        %6310 = vadd.xlane.f32.xlu0 %v6309
        %v6311 = vpop.xlane.xlu0 %6310
        %v6312 = vsel %vm4254, %v5762, 0.0
        %6313 = vadd.xlane.f32.xlu0 %v6312
        %v6314 = vpop.xlane.xlu0 %6313
        %v6315 = vsel %vm4254, %v5763, 0.0
        %6316 = vadd.xlane.f32.xlu0 %v6315
        %v6317 = vpop.xlane.xlu0 %6316
        %v6318 = vsel %vm4254, %v5764, 0.0
        %6319 = vadd.xlane.f32.xlu0 %v6318
        %v6320 = vpop.xlane.xlu0 %6319
        %v6321 = vsel %vm4254, %v5765, 0.0
        %6322 = vadd.xlane.f32.xlu0 %v6321
        %v6323 = vpop.xlane.xlu0 %6322
        %v6324 = vsel %vm4254, %v5766, 0.0
        %6325 = vadd.xlane.f32.xlu0 %v6324
        %v6326 = vpop.xlane.xlu0 %6325
        %v6327 = vsel %vm4254, %v5767, 0.0
        %6328 = vadd.xlane.f32.xlu0 %v6327
        %v6329 = vpop.xlane.xlu0 %6328
        %v6330 = vsel %vm4254, %v5768, 0.0
        %6331 = vadd.xlane.f32.xlu0 %v6330
        %v6332 = vpop.xlane.xlu0 %6331
        %v6333 = vsel %vm4254, %v5769, 0.0
        %6334 = vadd.xlane.f32.xlu0 %v6333
        %v6335 = vpop.xlane.xlu0 %6334
        %v6336 = vsel %vm4254, %v5770, 0.0
        %6337 = vadd.xlane.f32.xlu0 %v6336
        %v6338 = vpop.xlane.xlu0 %6337
        %v6339 = vsel %vm4254, %v5771, 0.0
        %6340 = vadd.xlane.f32.xlu0 %v6339
        %v6341 = vpop.xlane.xlu0 %6340
        %v6342 = vsel %vm4254, %v5772, 0.0
        %6343 = vadd.xlane.f32.xlu0 %v6342
        %v6344 = vpop.xlane.xlu0 %6343
        %v6345 = vsel %vm4254, %v5773, 0.0
        %6346 = vadd.xlane.f32.xlu0 %v6345
        %v6347 = vpop.xlane.xlu0 %6346
        %v6348 = vsel %vm4254, %v5774, 0.0
        %6349 = vadd.xlane.f32.xlu0 %v6348
        %v6350 = vpop.xlane.xlu0 %6349
        %v6351 = vsel %vm4254, %v5775, 0.0
        %6352 = vadd.xlane.f32.xlu0 %v6351
        %v6353 = vpop.xlane.xlu0 %6352
        %v6354 = vsel %vm4254, %v5776, 0.0
        %6355 = vadd.xlane.f32.xlu0 %v6354
        %v6356 = vpop.xlane.xlu0 %6355
        %v6357 = vsel %vm4254, %v5777, 0.0
        %6358 = vadd.xlane.f32.xlu0 %v6357
        %v6359 = vpop.xlane.xlu0 %6358
        %v6360 = vsel %vm4254, %v5778, 0.0
        %6361 = vadd.xlane.f32.xlu0 %v6360
        %v6362 = vpop.xlane.xlu0 %6361
        %v6363 = vsel %vm4254, %v5779, 0.0
        %6364 = vadd.xlane.f32.xlu0 %v6363
        %v6365 = vpop.xlane.xlu0 %6364
        %v6366 = vsel %vm4254, %v5780, 0.0
        %6367 = vadd.xlane.f32.xlu0 %v6366
        %v6368 = vpop.xlane.xlu0 %6367
        %v6369 = vsel %vm4254, %v5781, 0.0
        %6370 = vadd.xlane.f32.xlu0 %v6369
        %v6371 = vpop.xlane.xlu0 %6370
        %v6372 = vsel %vm4254, %v5782, 0.0
        %6373 = vadd.xlane.f32.xlu0 %v6372
        %v6374 = vpop.xlane.xlu0 %6373
        %v6375 = vsel %vm4254, %v5783, 0.0
        %6376 = vadd.xlane.f32.xlu0 %v6375
        %v6377 = vpop.xlane.xlu0 %6376
        %v6378 = vsel %vm4254, %v5784, 0.0
        %6379 = vadd.xlane.f32.xlu0 %v6378
        %v6380 = vpop.xlane.xlu0 %6379
        %v6381 = vsel %vm4254, %v5785, 0.0
        %6382 = vadd.xlane.f32.xlu0 %v6381
        %v6383 = vpop.xlane.xlu0 %6382
        %v6384 = vsel %vm4254, %v5786, 0.0
        %6385 = vadd.xlane.f32.xlu0 %v6384
        %v6386 = vpop.xlane.xlu0 %6385
        %v6387 = vsel %vm4254, %v5787, 0.0
        %6388 = vadd.xlane.f32.xlu0 %v6387
        %v6389 = vpop.xlane.xlu0 %6388
        %v6390 = vsel %vm4254, %v5788, 0.0
        %6391 = vadd.xlane.f32.xlu0 %v6390
        %v6392 = vpop.xlane.xlu0 %6391
        %v6393 = vsel %vm4254, %v5789, 0.0
        %6394 = vadd.xlane.f32.xlu0 %v6393
        %v6395 = vpop.xlane.xlu0 %6394
        %v6396 = vsel %vm4254, %v5790, 0.0
        %6397 = vadd.xlane.f32.xlu0 %v6396
        %v6398 = vpop.xlane.xlu0 %6397
        %v6399 = vsel %vm4254, %v5791, 0.0
        %6400 = vadd.xlane.f32.xlu0 %v6399
        %v6401 = vpop.xlane.xlu0 %6400
        %v6402 = vsel %vm4254, %v5792, 0.0
        %6403 = vadd.xlane.f32.xlu0 %v6402
        %v6404 = vpop.xlane.xlu0 %6403
        %v6405 = vsel %vm4254, %v5793, 0.0
        %6406 = vadd.xlane.f32.xlu0 %v6405
        %v6407 = vpop.xlane.xlu0 %6406
        %v6408 = vsel %vm4254, %v5794, 0.0
        %6409 = vadd.xlane.f32.xlu0 %v6408
        %v6410 = vpop.xlane.xlu0 %6409
        %v6411 = vsel %vm4254, %v5795, 0.0
        %6412 = vadd.xlane.f32.xlu0 %v6411
        %v6413 = vpop.xlane.xlu0 %6412
        %v6414 = vsel %vm4254, %v5796, 0.0
        %6415 = vadd.xlane.f32.xlu0 %v6414
        %v6416 = vpop.xlane.xlu0 %6415
        %v6417 = vsel %vm4254, %v5797, 0.0
        %6418 = vadd.xlane.f32.xlu0 %v6417
        %v6419 = vpop.xlane.xlu0 %6418
        %v6420 = vsel %vm4254, %v5798, 0.0
        %6421 = vadd.xlane.f32.xlu0 %v6420
        %v6422 = vpop.xlane.xlu0 %6421
        %v6423 = vsel %vm4254, %v5799, 0.0
        %6424 = vadd.xlane.f32.xlu0 %v6423
        %v6425 = vpop.xlane.xlu0 %6424
        %v6426 = vsel %vm4254, %v5800, 0.0
        %6427 = vadd.xlane.f32.xlu0 %v6426
        %v6428 = vpop.xlane.xlu0 %6427
        %v6429 = vsel %vm4254, %v5801, 0.0
        %6430 = vadd.xlane.f32.xlu0 %v6429
        %v6431 = vpop.xlane.xlu0 %6430
        %v6432 = vsel %vm4254, %v5802, 0.0
        %6433 = vadd.xlane.f32.xlu0 %v6432
        %v6434 = vpop.xlane.xlu0 %6433
        %v6435 = vsel %vm4254, %v5803, 0.0
        %6436 = vadd.xlane.f32.xlu0 %v6435
        %v6437 = vpop.xlane.xlu0 %6436
        %v6438 = vsel %vm4254, %v5804, 0.0
        %6439 = vadd.xlane.f32.xlu0 %v6438
        %v6440 = vpop.xlane.xlu0 %6439
        %v6441 = vsel %vm4254, %v5805, 0.0
        %6442 = vadd.xlane.f32.xlu0 %v6441
        %v6443 = vpop.xlane.xlu0 %6442
        %v6444 = vsel %vm4254, %v5806, 0.0
        %6445 = vadd.xlane.f32.xlu0 %v6444
        %v6446 = vpop.xlane.xlu0 %6445
        %v6447 = vsel %vm4254, %v5807, 0.0
        %6448 = vadd.xlane.f32.xlu0 %v6447
        %v6449 = vpop.xlane.xlu0 %6448
        %v6450 = vsel %vm4254, %v5808, 0.0
        %6451 = vadd.xlane.f32.xlu0 %v6450
        %v6452 = vpop.xlane.xlu0 %6451
        %v6453 = vsel %vm4254, %v5809, 0.0
        %6454 = vadd.xlane.f32.xlu0 %v6453
        %v6455 = vpop.xlane.xlu0 %6454
        %v6456 = vsel %vm4254, %v5810, 0.0
        %6457 = vadd.xlane.f32.xlu0 %v6456
        %v6458 = vpop.xlane.xlu0 %6457
        %v6459 = vsel %vm4254, %v5811, 0.0
        %6460 = vadd.xlane.f32.xlu0 %v6459
        %v6461 = vpop.xlane.xlu0 %6460
        %v6462 = vsel %vm4254, %v5812, 0.0
        %6463 = vadd.xlane.f32.xlu0 %v6462
        %v6464 = vpop.xlane.xlu0 %6463
        %v6465 = vsel %vm4254, %v5813, 0.0
        %6466 = vadd.xlane.f32.xlu0 %v6465
        %v6467 = vpop.xlane.xlu0 %6466
        %v6468 = vsel %vm4254, %v5814, 0.0
        %6469 = vadd.xlane.f32.xlu0 %v6468
        %v6470 = vpop.xlane.xlu0 %6469
        %v6471 = vsel %vm4254, %v5815, 0.0
        %6472 = vadd.xlane.f32.xlu0 %v6471
        %v6473 = vpop.xlane.xlu0 %6472
        %v6474 = vsel %vm4254, %v5816, 0.0
        %6475 = vadd.xlane.f32.xlu0 %v6474
        %v6476 = vpop.xlane.xlu0 %6475
        %v6477 = vsel %vm4254, %v5817, 0.0
        %6478 = vadd.xlane.f32.xlu0 %v6477
        %v6479 = vpop.xlane.xlu0 %6478
        %v6480 = vsel %vm4254, %v5818, 0.0
        %6481 = vadd.xlane.f32.xlu0 %v6480
        %v6482 = vpop.xlane.xlu0 %6481
        %v6483 = vsel %vm4254, %v5819, 0.0
        %6484 = vadd.xlane.f32.xlu0 %v6483
        %v6485 = vpop.xlane.xlu0 %6484
        %v6486 = vsel %vm4254, %v5820, 0.0
        %6487 = vadd.xlane.f32.xlu0 %v6486
        %v6488 = vpop.xlane.xlu0 %6487
        %v6489 = vsel %vm4254, %v5821, 0.0
        %6490 = vadd.xlane.f32.xlu0 %v6489
        %v6491 = vpop.xlane.xlu0 %6490
        %v6492 = vsel %vm4254, %v5822, 0.0
        %6493 = vadd.xlane.f32.xlu0 %v6492
        %v6494 = vpop.xlane.xlu0 %6493
        %v6495 = vsel %vm4254, %v5823, 0.0
        %6496 = vadd.xlane.f32.xlu0 %v6495
        %v6497 = vpop.xlane.xlu0 %6496
        %v6498 = vsel %vm4254, %v5824, 0.0
        %6499 = vadd.xlane.f32.xlu0 %v6498
        %v6500 = vpop.xlane.xlu0 %6499
        %v6501 = vsel %vm4254, %v5825, 0.0
        %6502 = vadd.xlane.f32.xlu0 %v6501
        %v6503 = vpop.xlane.xlu0 %6502
        %v6504 = vsel %vm4254, %v5826, 0.0
        %6505 = vadd.xlane.f32.xlu0 %v6504
        %v6506 = vpop.xlane.xlu0 %6505
        %v6507 = vsel %vm4254, %v5827, 0.0
        %6508 = vadd.xlane.f32.xlu0 %v6507
        %v6509 = vpop.xlane.xlu0 %6508
        %v6510 = vsel %vm4254, %v5828, 0.0
        %6511 = vadd.xlane.f32.xlu0 %v6510
        %v6512 = vpop.xlane.xlu0 %6511
        %v6513 = vsel %vm4254, %v5829, 0.0
        %6514 = vadd.xlane.f32.xlu0 %v6513
        %v6515 = vpop.xlane.xlu0 %6514
        %v6516 = vsel %vm4254, %v5830, 0.0
        %6517 = vadd.xlane.f32.xlu0 %v6516
        %v6518 = vpop.xlane.xlu0 %6517
        %v6519 = vsel %vm4254, %v5831, 0.0
        %6520 = vadd.xlane.f32.xlu0 %v6519
        %v6521 = vpop.xlane.xlu0 %6520
        %v6522 = vsel %vm4254, %v5832, 0.0
        %6523 = vadd.xlane.f32.xlu0 %v6522
        %v6524 = vpop.xlane.xlu0 %6523
        %v6525 = vsel %vm4254, %v5833, 0.0
        %6526 = vadd.xlane.f32.xlu0 %v6525
        %v6527 = vpop.xlane.xlu0 %6526
        %v6528 = vsel %vm4254, %v5834, 0.0
        %6529 = vadd.xlane.f32.xlu0 %v6528
        %v6530 = vpop.xlane.xlu0 %6529
        %v6531 = vsel %vm4254, %v5835, 0.0
        %6532 = vadd.xlane.f32.xlu0 %v6531
        %v6533 = vpop.xlane.xlu0 %6532
        %v6534 = vsel %vm4254, %v5836, 0.0
        %6535 = vadd.xlane.f32.xlu0 %v6534
        %v6536 = vpop.xlane.xlu0 %6535
        %v6537 = vsel %vm4254, %v5837, 0.0
        %6538 = vadd.xlane.f32.xlu0 %v6537
        %v6539 = vpop.xlane.xlu0 %6538
        %v6540 = vsel %vm4254, %v5838, 0.0
        %6541 = vadd.xlane.f32.xlu0 %v6540
        %v6542 = vpop.xlane.xlu0 %6541
        %v6543 = vsel %vm4254, %v5839, 0.0
        %6544 = vadd.xlane.f32.xlu0 %v6543
        %v6545 = vpop.xlane.xlu0 %6544
        %v6546 = vsel %vm4254, %v5840, 0.0
        %6547 = vadd.xlane.f32.xlu0 %v6546
        %v6548 = vpop.xlane.xlu0 %6547
        %v6549 = vsel %vm4254, %v5841, 0.0
        %6550 = vadd.xlane.f32.xlu0 %v6549
        %v6551 = vpop.xlane.xlu0 %6550
        %v6552 = vsel %vm4254, %v5842, 0.0
        %6553 = vadd.xlane.f32.xlu0 %v6552
        %v6554 = vpop.xlane.xlu0 %6553
        %v6555 = vsel %vm4254, %v5843, 0.0
        %6556 = vadd.xlane.f32.xlu0 %v6555
        %v6557 = vpop.xlane.xlu0 %6556
        %v6558 = vsel %vm4254, %v5844, 0.0
        %6559 = vadd.xlane.f32.xlu0 %v6558
        %v6560 = vpop.xlane.xlu0 %6559
        %v6561 = vsel %vm4254, %v5845, 0.0
        %6562 = vadd.xlane.f32.xlu0 %v6561
        %v6563 = vpop.xlane.xlu0 %6562
        %v6564 = vsel %vm4254, %v5846, 0.0
        %6565 = vadd.xlane.f32.xlu0 %v6564
        %v6566 = vpop.xlane.xlu0 %6565
        %v6567 = vsel %vm4254, %v5847, 0.0
        %6568 = vadd.xlane.f32.xlu0 %v6567
        %v6569 = vpop.xlane.xlu0 %6568
        %v6570 = vsel %vm4254, %v5848, 0.0
        %6571 = vadd.xlane.f32.xlu0 %v6570
        %v6572 = vpop.xlane.xlu0 %6571
        %v6573 = vsel %vm4254, %v5849, 0.0
        %6574 = vadd.xlane.f32.xlu0 %v6573
        %v6575 = vpop.xlane.xlu0 %6574
        %v6576 = vsel %vm4254, %v5850, 0.0
        %6577 = vadd.xlane.f32.xlu0 %v6576
        %v6578 = vpop.xlane.xlu0 %6577
        %v6579 = vsel %vm4254, %v5851, 0.0
        %6580 = vadd.xlane.f32.xlu0 %v6579
        %v6581 = vpop.xlane.xlu0 %6580
        %v6582 = vsel %vm4254, %v5852, 0.0
        %6583 = vadd.xlane.f32.xlu0 %v6582
        %v6584 = vpop.xlane.xlu0 %6583
        %v6585 = vsel %vm4254, %v5853, 0.0
        %6586 = vadd.xlane.f32.xlu0 %v6585
        %v6587 = vpop.xlane.xlu0 %6586
        %v6588 = vsel %vm4254, %v5854, 0.0
        %6589 = vadd.xlane.f32.xlu0 %v6588
        %v6590 = vpop.xlane.xlu0 %6589
        %v6591 = vsel %vm4254, %v5855, 0.0
        %6592 = vadd.xlane.f32.xlu0 %v6591
        %v6593 = vpop.xlane.xlu0 %6592
        %v6594 = vsel %vm4254, %v5856, 0.0
        %6595 = vadd.xlane.f32.xlu0 %v6594
        %v6596 = vpop.xlane.xlu0 %6595
        %v6597 = vsel %vm4254, %v5857, 0.0
        %6598 = vadd.xlane.f32.xlu0 %v6597
        %v6599 = vpop.xlane.xlu0 %6598
        %v6600 = vsel %vm4254, %v5858, 0.0
        %6601 = vadd.xlane.f32.xlu0 %v6600
        %v6602 = vpop.xlane.xlu0 %6601
        %v6603 = vsel %vm4254, %v5859, 0.0
        %6604 = vadd.xlane.f32.xlu0 %v6603
        %v6605 = vpop.xlane.xlu0 %6604
        %v6606 = vsel %vm4254, %v5860, 0.0
        %6607 = vadd.xlane.f32.xlu0 %v6606
        %v6608 = vpop.xlane.xlu0 %6607
        %v6609 = vsel %vm4254, %v5861, 0.0
        %6610 = vadd.xlane.f32.xlu0 %v6609
        %v6611 = vpop.xlane.xlu0 %6610
        %v6612 = vsel %vm4254, %v5862, 0.0
        %6613 = vadd.xlane.f32.xlu0 %v6612
        %v6614 = vpop.xlane.xlu0 %6613
        %v6615 = vsel %vm4254, %v5863, 0.0
        %6616 = vadd.xlane.f32.xlu0 %v6615
        %v6617 = vpop.xlane.xlu0 %6616
        %v6618 = vsel %vm4254, %v5864, 0.0
        %6619 = vadd.xlane.f32.xlu0 %v6618
        %v6620 = vpop.xlane.xlu0 %6619
        %v6621 = vsel %vm4254, %v5865, 0.0
        %6622 = vadd.xlane.f32.xlu0 %v6621
        %v6623 = vpop.xlane.xlu0 %6622
        %v6624 = vsel %vm4254, %v5866, 0.0
        %6625 = vadd.xlane.f32.xlu0 %v6624
        %v6626 = vpop.xlane.xlu0 %6625
        %v6627 = vsel %vm4254, %v5867, 0.0
        %6628 = vadd.xlane.f32.xlu0 %v6627
        %v6629 = vpop.xlane.xlu0 %6628
        %v6630 = vsel %vm4254, %v5868, 0.0
        %6631 = vadd.xlane.f32.xlu0 %v6630
        %v6632 = vpop.xlane.xlu0 %6631
        %v6633 = vsel %vm4254, %v5869, 0.0
        %6634 = vadd.xlane.f32.xlu0 %v6633
        %v6635 = vpop.xlane.xlu0 %6634
        %v6636 = vsel %vm4254, %v5870, 0.0
        %6637 = vadd.xlane.f32.xlu0 %v6636
        %v6638 = vpop.xlane.xlu0 %6637
        %v6895 = vperm.slane %v5873, %v637
        %v6896 = vadd.s32 %v637, 4294967288
        %v6897 = vperm.slane %v5876, %v6896
        %vm6898 = vcmask 130112
        %v6899 = vsel %vm6898, %v6897, %v6895
        %v6900 = vadd.s32 %v637, 4294967280
        %v6901 = vperm.slane %v5879, %v6900
        %vm6902 = vcmask 195712
        %v6903 = vsel %vm6902, %v6901, %v6899
        %v6904 = vadd.s32 %v637, 4294967272
        %v6905 = vperm.slane %v5882, %v6904
        %vm6906 = vcmask 261312
        %v6907 = vsel %vm6906, %v6905, %v6903
        %v6908 = vadd.s32 %v637, 4294967264
        %v6909 = vperm.slane %v5885, %v6908
        %vm6910 = vcmask 326912
        %v6911 = vsel %vm6910, %v6909, %v6907
        %v6912 = vadd.s32 %v637, 4294967256
        %v6913 = vperm.slane %v5888, %v6912
        %vm6914 = vcmask 392512
        %v6915 = vsel %vm6914, %v6913, %v6911
        %v6916 = vadd.s32 %v637, 4294967248
        %v6917 = vperm.slane %v5891, %v6916
        %vm6918 = vcmask 458112
        %v6919 = vsel %vm6918, %v6917, %v6915
        %v6920 = vadd.s32 %v637, 4294967240
        %v6921 = vperm.slane %v5894, %v6920
        %vm6922 = vcmask 523712
        %v6923 = vsel %vm6922, %v6921, %v6919
        %v6924 = vadd.s32 %v637, 4294967232
        %v6925 = vperm.slane %v5897, %v6924
        %vm6926 = vcmask 589312
        %v6927 = vsel %vm6926, %v6925, %v6923
        %v6928 = vadd.s32 %v637, 4294967224
        %v6929 = vperm.slane %v5900, %v6928
        %vm6930 = vcmask 654912
        %v6931 = vsel %vm6930, %v6929, %v6927
        %v6932 = vadd.s32 %v637, 4294967216
        %v6933 = vperm.slane %v5903, %v6932
        %vm6934 = vcmask 720512
        %v6935 = vsel %vm6934, %v6933, %v6931
        %v6936 = vadd.s32 %v637, 4294967208
        %v6937 = vperm.slane %v5906, %v6936
        %vm6938 = vcmask 786112
        %v6939 = vsel %vm6938, %v6937, %v6935
        %v6940 = vadd.s32 %v637, 4294967200
        %v6941 = vperm.slane %v5909, %v6940
        %vm6942 = vcmask 851712
        %v6943 = vsel %vm6942, %v6941, %v6939
        %v6944 = vadd.s32 %v637, 4294967192
        %v6945 = vperm.slane %v5912, %v6944
        %vm6946 = vcmask 917312
        %v6947 = vsel %vm6946, %v6945, %v6943
        %v6948 = vadd.s32 %v637, 4294967184
        %v6949 = vperm.slane %v5915, %v6948
        %vm6950 = vcmask 982912
        %v6951 = vsel %vm6950, %v6949, %v6947
        %v6952 = vadd.s32 %v637, 4294967176
        %v6953 = vperm.slane %v5918, %v6952
        %vm6954 = vcmask 1048512
        %v6955 = vsel %vm6954, %v6953, %v6951
        %v6956 = vperm.slane %v5921, %v637
        %v6957 = vperm.slane %v5924, %v6896
        %v6958 = vsel %vm6898, %v6957, %v6956
        %v6959 = vperm.slane %v5927, %v6900
        %v6960 = vsel %vm6902, %v6959, %v6958
        %v6961 = vperm.slane %v5930, %v6904
        %v6962 = vsel %vm6906, %v6961, %v6960
        %v6963 = vperm.slane %v5933, %v6908
        %v6964 = vsel %vm6910, %v6963, %v6962
        %v6965 = vperm.slane %v5936, %v6912
        %v6966 = vsel %vm6914, %v6965, %v6964
        %v6967 = vperm.slane %v5939, %v6916
        %v6968 = vsel %vm6918, %v6967, %v6966
        %v6969 = vperm.slane %v5942, %v6920
        %v6970 = vsel %vm6922, %v6969, %v6968
        %v6971 = vperm.slane %v5945, %v6924
        %v6972 = vsel %vm6926, %v6971, %v6970
        %v6973 = vperm.slane %v5948, %v6928
        %v6974 = vsel %vm6930, %v6973, %v6972
        %v6975 = vperm.slane %v5951, %v6932
        %v6976 = vsel %vm6934, %v6975, %v6974
        %v6977 = vperm.slane %v5954, %v6936
        %v6978 = vsel %vm6938, %v6977, %v6976
        %v6979 = vperm.slane %v5957, %v6940
        %v6980 = vsel %vm6942, %v6979, %v6978
        %v6981 = vperm.slane %v5960, %v6944
        %v6982 = vsel %vm6946, %v6981, %v6980
        %v6983 = vperm.slane %v5963, %v6948
        %v6984 = vsel %vm6950, %v6983, %v6982
        %v6985 = vperm.slane %v5966, %v6952
        %v6986 = vsel %vm6954, %v6985, %v6984
        %v6987 = vperm.slane %v5969, %v637
        %v6988 = vperm.slane %v5972, %v6896
        %v6989 = vsel %vm6898, %v6988, %v6987
        %v6990 = vperm.slane %v5975, %v6900
        %v6991 = vsel %vm6902, %v6990, %v6989
        %v6992 = vperm.slane %v5978, %v6904
        %v6993 = vsel %vm6906, %v6992, %v6991
        %v6994 = vperm.slane %v5981, %v6908
        %v6995 = vsel %vm6910, %v6994, %v6993
        %v6996 = vperm.slane %v5984, %v6912
        %v6997 = vsel %vm6914, %v6996, %v6995
        %v6998 = vperm.slane %v5987, %v6916
        %v6999 = vsel %vm6918, %v6998, %v6997
        %v7000 = vperm.slane %v5990, %v6920
        %v7001 = vsel %vm6922, %v7000, %v6999
        %v7002 = vperm.slane %v5993, %v6924
        %v7003 = vsel %vm6926, %v7002, %v7001
        %v7004 = vperm.slane %v5996, %v6928
        %v7005 = vsel %vm6930, %v7004, %v7003
        %v7006 = vperm.slane %v5999, %v6932
        %v7007 = vsel %vm6934, %v7006, %v7005
        %v7008 = vperm.slane %v6002, %v6936
        %v7009 = vsel %vm6938, %v7008, %v7007
        %v7010 = vperm.slane %v6005, %v6940
        %v7011 = vsel %vm6942, %v7010, %v7009
        %v7012 = vperm.slane %v6008, %v6944
        %v7013 = vsel %vm6946, %v7012, %v7011
        %v7014 = vperm.slane %v6011, %v6948
        %v7015 = vsel %vm6950, %v7014, %v7013
        %v7016 = vperm.slane %v6014, %v6952
        %v7017 = vsel %vm6954, %v7016, %v7015
        %v7018 = vperm.slane %v6017, %v637
        %v7019 = vperm.slane %v6020, %v6896
        %v7020 = vsel %vm6898, %v7019, %v7018
        %v7021 = vperm.slane %v6023, %v6900
        %v7022 = vsel %vm6902, %v7021, %v7020
        %v7023 = vperm.slane %v6026, %v6904
        %v7024 = vsel %vm6906, %v7023, %v7022
        %v7025 = vperm.slane %v6029, %v6908
        %v7026 = vsel %vm6910, %v7025, %v7024
        %v7027 = vperm.slane %v6032, %v6912
        %v7028 = vsel %vm6914, %v7027, %v7026
        %v7029 = vperm.slane %v6035, %v6916
        %v7030 = vsel %vm6918, %v7029, %v7028
        %v7031 = vperm.slane %v6038, %v6920
        %v7032 = vsel %vm6922, %v7031, %v7030
        %v7033 = vperm.slane %v6041, %v6924
        %v7034 = vsel %vm6926, %v7033, %v7032
        %v7035 = vperm.slane %v6044, %v6928
        %v7036 = vsel %vm6930, %v7035, %v7034
        %v7037 = vperm.slane %v6047, %v6932
        %v7038 = vsel %vm6934, %v7037, %v7036
        %v7039 = vperm.slane %v6050, %v6936
        %v7040 = vsel %vm6938, %v7039, %v7038
        %v7041 = vperm.slane %v6053, %v6940
        %v7042 = vsel %vm6942, %v7041, %v7040
        %v7043 = vperm.slane %v6056, %v6944
        %v7044 = vsel %vm6946, %v7043, %v7042
        %v7045 = vperm.slane %v6059, %v6948
        %v7046 = vsel %vm6950, %v7045, %v7044
        %v7047 = vperm.slane %v6062, %v6952
        %v7048 = vsel %vm6954, %v7047, %v7046
        %v7049 = vperm.slane %v6065, %v637
        %v7050 = vperm.slane %v6068, %v6896
        %v7051 = vsel %vm6898, %v7050, %v7049
        %v7052 = vperm.slane %v6071, %v6900
        %v7053 = vsel %vm6902, %v7052, %v7051
        %v7054 = vperm.slane %v6074, %v6904
        %v7055 = vsel %vm6906, %v7054, %v7053
        %v7056 = vperm.slane %v6077, %v6908
        %v7057 = vsel %vm6910, %v7056, %v7055
        %v7058 = vperm.slane %v6080, %v6912
        %v7059 = vsel %vm6914, %v7058, %v7057
        %v7060 = vperm.slane %v6083, %v6916
        %v7061 = vsel %vm6918, %v7060, %v7059
        %v7062 = vperm.slane %v6086, %v6920
        %v7063 = vsel %vm6922, %v7062, %v7061
        %v7064 = vperm.slane %v6089, %v6924
        %v7065 = vsel %vm6926, %v7064, %v7063
        %v7066 = vperm.slane %v6092, %v6928
        %v7067 = vsel %vm6930, %v7066, %v7065
        %v7068 = vperm.slane %v6095, %v6932
        %v7069 = vsel %vm6934, %v7068, %v7067
        %v7070 = vperm.slane %v6098, %v6936
        %v7071 = vsel %vm6938, %v7070, %v7069
        %v7072 = vperm.slane %v6101, %v6940
        %v7073 = vsel %vm6942, %v7072, %v7071
        %v7074 = vperm.slane %v6104, %v6944
        %v7075 = vsel %vm6946, %v7074, %v7073
        %v7076 = vperm.slane %v6107, %v6948
        %v7077 = vsel %vm6950, %v7076, %v7075
        %v7078 = vperm.slane %v6110, %v6952
        %v7079 = vsel %vm6954, %v7078, %v7077
        %v7080 = vperm.slane %v6113, %v637
        %v7081 = vperm.slane %v6116, %v6896
        %v7082 = vsel %vm6898, %v7081, %v7080
        %v7083 = vperm.slane %v6119, %v6900
        %v7084 = vsel %vm6902, %v7083, %v7082
        %v7085 = vperm.slane %v6122, %v6904
        %v7086 = vsel %vm6906, %v7085, %v7084
        %v7087 = vperm.slane %v6125, %v6908
        %v7088 = vsel %vm6910, %v7087, %v7086
        %v7089 = vperm.slane %v6128, %v6912
        %v7090 = vsel %vm6914, %v7089, %v7088
        %v7091 = vperm.slane %v6131, %v6916
        %v7092 = vsel %vm6918, %v7091, %v7090
        %v7093 = vperm.slane %v6134, %v6920
        %v7094 = vsel %vm6922, %v7093, %v7092
        %v7095 = vperm.slane %v6137, %v6924
        %v7096 = vsel %vm6926, %v7095, %v7094
        %v7097 = vperm.slane %v6140, %v6928
        %v7098 = vsel %vm6930, %v7097, %v7096
        %v7099 = vperm.slane %v6143, %v6932
        %v7100 = vsel %vm6934, %v7099, %v7098
        %v7101 = vperm.slane %v6146, %v6936
        %v7102 = vsel %vm6938, %v7101, %v7100
        %v7103 = vperm.slane %v6149, %v6940
        %v7104 = vsel %vm6942, %v7103, %v7102
        %v7105 = vperm.slane %v6152, %v6944
        %v7106 = vsel %vm6946, %v7105, %v7104
        %v7107 = vperm.slane %v6155, %v6948
        %v7108 = vsel %vm6950, %v7107, %v7106
        %v7109 = vperm.slane %v6158, %v6952
        %v7110 = vsel %vm6954, %v7109, %v7108
        %v7111 = vperm.slane %v6161, %v637
        %v7112 = vperm.slane %v6164, %v6896
        %v7113 = vsel %vm6898, %v7112, %v7111
        %v7114 = vperm.slane %v6167, %v6900
        %v7115 = vsel %vm6902, %v7114, %v7113
        %v7116 = vperm.slane %v6170, %v6904
        %v7117 = vsel %vm6906, %v7116, %v7115
        %v7118 = vperm.slane %v6173, %v6908
        %v7119 = vsel %vm6910, %v7118, %v7117
        %v7120 = vperm.slane %v6176, %v6912
        %v7121 = vsel %vm6914, %v7120, %v7119
        %v7122 = vperm.slane %v6179, %v6916
        %v7123 = vsel %vm6918, %v7122, %v7121
        %v7124 = vperm.slane %v6182, %v6920
        %v7125 = vsel %vm6922, %v7124, %v7123
        %v7126 = vperm.slane %v6185, %v6924
        %v7127 = vsel %vm6926, %v7126, %v7125
        %v7128 = vperm.slane %v6188, %v6928
        %v7129 = vsel %vm6930, %v7128, %v7127
        %v7130 = vperm.slane %v6191, %v6932
        %v7131 = vsel %vm6934, %v7130, %v7129
        %v7132 = vperm.slane %v6194, %v6936
        %v7133 = vsel %vm6938, %v7132, %v7131
        %v7134 = vperm.slane %v6197, %v6940
        %v7135 = vsel %vm6942, %v7134, %v7133
        %v7136 = vperm.slane %v6200, %v6944
        %v7137 = vsel %vm6946, %v7136, %v7135
        %v7138 = vperm.slane %v6203, %v6948
        %v7139 = vsel %vm6950, %v7138, %v7137
        %v7140 = vperm.slane %v6206, %v6952
        %v7141 = vsel %vm6954, %v7140, %v7139
        %v7142 = vperm.slane %v6209, %v637
        %v7143 = vperm.slane %v6212, %v6896
        %v7144 = vsel %vm6898, %v7143, %v7142
        %v7145 = vperm.slane %v6215, %v6900
        %v7146 = vsel %vm6902, %v7145, %v7144
        %v7147 = vperm.slane %v6218, %v6904
        %v7148 = vsel %vm6906, %v7147, %v7146
        %v7149 = vperm.slane %v6221, %v6908
        %v7150 = vsel %vm6910, %v7149, %v7148
        %v7151 = vperm.slane %v6224, %v6912
        %v7152 = vsel %vm6914, %v7151, %v7150
        %v7153 = vperm.slane %v6227, %v6916
        %v7154 = vsel %vm6918, %v7153, %v7152
        %v7155 = vperm.slane %v6230, %v6920
        %v7156 = vsel %vm6922, %v7155, %v7154
        %v7157 = vperm.slane %v6233, %v6924
        %v7158 = vsel %vm6926, %v7157, %v7156
        %v7159 = vperm.slane %v6236, %v6928
        %v7160 = vsel %vm6930, %v7159, %v7158
        %v7161 = vperm.slane %v6239, %v6932
        %v7162 = vsel %vm6934, %v7161, %v7160
        %v7163 = vperm.slane %v6242, %v6936
        %v7164 = vsel %vm6938, %v7163, %v7162
        %v7165 = vperm.slane %v6245, %v6940
        %v7166 = vsel %vm6942, %v7165, %v7164
        %v7167 = vperm.slane %v6248, %v6944
        %v7168 = vsel %vm6946, %v7167, %v7166
        %v7169 = vperm.slane %v6251, %v6948
        %v7170 = vsel %vm6950, %v7169, %v7168
        %v7171 = vperm.slane %v6254, %v6952
        %v7172 = vsel %vm6954, %v7171, %v7170
        %v7173 = vperm.slane %v6257, %v637
        %v7174 = vperm.slane %v6260, %v6896
        %v7175 = vsel %vm6898, %v7174, %v7173
        %v7176 = vperm.slane %v6263, %v6900
        %v7177 = vsel %vm6902, %v7176, %v7175
        %v7178 = vperm.slane %v6266, %v6904
        %v7179 = vsel %vm6906, %v7178, %v7177
        %v7180 = vperm.slane %v6269, %v6908
        %v7181 = vsel %vm6910, %v7180, %v7179
        %v7182 = vperm.slane %v6272, %v6912
        %v7183 = vsel %vm6914, %v7182, %v7181
        %v7184 = vperm.slane %v6275, %v6916
        %v7185 = vsel %vm6918, %v7184, %v7183
        %v7186 = vperm.slane %v6278, %v6920
        %v7187 = vsel %vm6922, %v7186, %v7185
        %v7188 = vperm.slane %v6281, %v6924
        %v7189 = vsel %vm6926, %v7188, %v7187
        %v7190 = vperm.slane %v6284, %v6928
        %v7191 = vsel %vm6930, %v7190, %v7189
        %v7192 = vperm.slane %v6287, %v6932
        %v7193 = vsel %vm6934, %v7192, %v7191
        %v7194 = vperm.slane %v6290, %v6936
        %v7195 = vsel %vm6938, %v7194, %v7193
        %v7196 = vperm.slane %v6293, %v6940
        %v7197 = vsel %vm6942, %v7196, %v7195
        %v7198 = vperm.slane %v6296, %v6944
        %v7199 = vsel %vm6946, %v7198, %v7197
        %v7200 = vperm.slane %v6299, %v6948
        %v7201 = vsel %vm6950, %v7200, %v7199
        %v7202 = vperm.slane %v6302, %v6952
        %v7203 = vsel %vm6954, %v7202, %v7201
        %v7204 = vperm.slane %v6305, %v637
        %v7205 = vperm.slane %v6308, %v6896
        %v7206 = vsel %vm6898, %v7205, %v7204
        %v7207 = vperm.slane %v6311, %v6900
        %v7208 = vsel %vm6902, %v7207, %v7206
        %v7209 = vperm.slane %v6314, %v6904
        %v7210 = vsel %vm6906, %v7209, %v7208
        %v7211 = vperm.slane %v6317, %v6908
        %v7212 = vsel %vm6910, %v7211, %v7210
        %v7213 = vperm.slane %v6320, %v6912
        %v7214 = vsel %vm6914, %v7213, %v7212
        %v7215 = vperm.slane %v6323, %v6916
        %v7216 = vsel %vm6918, %v7215, %v7214
        %v7217 = vperm.slane %v6326, %v6920
        %v7218 = vsel %vm6922, %v7217, %v7216
        %v7219 = vperm.slane %v6329, %v6924
        %v7220 = vsel %vm6926, %v7219, %v7218
        %v7221 = vperm.slane %v6332, %v6928
        %v7222 = vsel %vm6930, %v7221, %v7220
        %v7223 = vperm.slane %v6335, %v6932
        %v7224 = vsel %vm6934, %v7223, %v7222
        %v7225 = vperm.slane %v6338, %v6936
        %v7226 = vsel %vm6938, %v7225, %v7224
        %v7227 = vperm.slane %v6341, %v6940
        %v7228 = vsel %vm6942, %v7227, %v7226
        %v7229 = vperm.slane %v6344, %v6944
        %v7230 = vsel %vm6946, %v7229, %v7228
        %v7231 = vperm.slane %v6347, %v6948
        %v7232 = vsel %vm6950, %v7231, %v7230
        %v7233 = vperm.slane %v6350, %v6952
        %v7234 = vsel %vm6954, %v7233, %v7232
        %v7235 = vperm.slane %v6353, %v637
        %v7236 = vperm.slane %v6356, %v6896
        %v7237 = vsel %vm6898, %v7236, %v7235
        %v7238 = vperm.slane %v6359, %v6900
        %v7239 = vsel %vm6902, %v7238, %v7237
        %v7240 = vperm.slane %v6362, %v6904
        %v7241 = vsel %vm6906, %v7240, %v7239
        %v7242 = vperm.slane %v6365, %v6908
        %v7243 = vsel %vm6910, %v7242, %v7241
        %v7244 = vperm.slane %v6368, %v6912
        %v7245 = vsel %vm6914, %v7244, %v7243
        %v7246 = vperm.slane %v6371, %v6916
        %v7247 = vsel %vm6918, %v7246, %v7245
        %v7248 = vperm.slane %v6374, %v6920
        %v7249 = vsel %vm6922, %v7248, %v7247
        %v7250 = vperm.slane %v6377, %v6924
        %v7251 = vsel %vm6926, %v7250, %v7249
        %v7252 = vperm.slane %v6380, %v6928
        %v7253 = vsel %vm6930, %v7252, %v7251
        %v7254 = vperm.slane %v6383, %v6932
        %v7255 = vsel %vm6934, %v7254, %v7253
        %v7256 = vperm.slane %v6386, %v6936
        %v7257 = vsel %vm6938, %v7256, %v7255
        %v7258 = vperm.slane %v6389, %v6940
        %v7259 = vsel %vm6942, %v7258, %v7257
        %v7260 = vperm.slane %v6392, %v6944
        %v7261 = vsel %vm6946, %v7260, %v7259
        %v7262 = vperm.slane %v6395, %v6948
        %v7263 = vsel %vm6950, %v7262, %v7261
        %v7264 = vperm.slane %v6398, %v6952
        %v7265 = vsel %vm6954, %v7264, %v7263
        %v7266 = vperm.slane %v6401, %v637
        %v7267 = vperm.slane %v6404, %v6896
        %v7268 = vsel %vm6898, %v7267, %v7266
        %v7269 = vperm.slane %v6407, %v6900
        %v7270 = vsel %vm6902, %v7269, %v7268
        %v7271 = vperm.slane %v6410, %v6904
        %v7272 = vsel %vm6906, %v7271, %v7270
        %v7273 = vperm.slane %v6413, %v6908
        %v7274 = vsel %vm6910, %v7273, %v7272
        %v7275 = vperm.slane %v6416, %v6912
        %v7276 = vsel %vm6914, %v7275, %v7274
        %v7277 = vperm.slane %v6419, %v6916
        %v7278 = vsel %vm6918, %v7277, %v7276
        %v7279 = vperm.slane %v6422, %v6920
        %v7280 = vsel %vm6922, %v7279, %v7278
        %v7281 = vperm.slane %v6425, %v6924
        %v7282 = vsel %vm6926, %v7281, %v7280
        %v7283 = vperm.slane %v6428, %v6928
        %v7284 = vsel %vm6930, %v7283, %v7282
        %v7285 = vperm.slane %v6431, %v6932
        %v7286 = vsel %vm6934, %v7285, %v7284
        %v7287 = vperm.slane %v6434, %v6936
        %v7288 = vsel %vm6938, %v7287, %v7286
        %v7289 = vperm.slane %v6437, %v6940
        %v7290 = vsel %vm6942, %v7289, %v7288
        %v7291 = vperm.slane %v6440, %v6944
        %v7292 = vsel %vm6946, %v7291, %v7290
        %v7293 = vperm.slane %v6443, %v6948
        %v7294 = vsel %vm6950, %v7293, %v7292
        %v7295 = vperm.slane %v6446, %v6952
        %v7296 = vsel %vm6954, %v7295, %v7294
        %v7297 = vperm.slane %v6449, %v637
        %v7298 = vperm.slane %v6452, %v6896
        %v7299 = vsel %vm6898, %v7298, %v7297
        %v7300 = vperm.slane %v6455, %v6900
        %v7301 = vsel %vm6902, %v7300, %v7299
        %v7302 = vperm.slane %v6458, %v6904
        %v7303 = vsel %vm6906, %v7302, %v7301
        %v7304 = vperm.slane %v6461, %v6908
        %v7305 = vsel %vm6910, %v7304, %v7303
        %v7306 = vperm.slane %v6464, %v6912
        %v7307 = vsel %vm6914, %v7306, %v7305
        %v7308 = vperm.slane %v6467, %v6916
        %v7309 = vsel %vm6918, %v7308, %v7307
        %v7310 = vperm.slane %v6470, %v6920
        %v7311 = vsel %vm6922, %v7310, %v7309
        %v7312 = vperm.slane %v6473, %v6924
        %v7313 = vsel %vm6926, %v7312, %v7311
        %v7314 = vperm.slane %v6476, %v6928
        %v7315 = vsel %vm6930, %v7314, %v7313
        %v7316 = vperm.slane %v6479, %v6932
        %v7317 = vsel %vm6934, %v7316, %v7315
        %v7318 = vperm.slane %v6482, %v6936
        %v7319 = vsel %vm6938, %v7318, %v7317
        %v7320 = vperm.slane %v6485, %v6940
        %v7321 = vsel %vm6942, %v7320, %v7319
        %v7322 = vperm.slane %v6488, %v6944
        %v7323 = vsel %vm6946, %v7322, %v7321
        %v7324 = vperm.slane %v6491, %v6948
        %v7325 = vsel %vm6950, %v7324, %v7323
        %v7326 = vperm.slane %v6494, %v6952
        %v7327 = vsel %vm6954, %v7326, %v7325
        %v7328 = vperm.slane %v6497, %v637
        %v7329 = vperm.slane %v6500, %v6896
        %v7330 = vsel %vm6898, %v7329, %v7328
        %v7331 = vperm.slane %v6503, %v6900
        %v7332 = vsel %vm6902, %v7331, %v7330
        %v7333 = vperm.slane %v6506, %v6904
        %v7334 = vsel %vm6906, %v7333, %v7332
        %v7335 = vperm.slane %v6509, %v6908
        %v7336 = vsel %vm6910, %v7335, %v7334
        %v7337 = vperm.slane %v6512, %v6912
        %v7338 = vsel %vm6914, %v7337, %v7336
        %v7339 = vperm.slane %v6515, %v6916
        %v7340 = vsel %vm6918, %v7339, %v7338
        %v7341 = vperm.slane %v6518, %v6920
        %v7342 = vsel %vm6922, %v7341, %v7340
        %v7343 = vperm.slane %v6521, %v6924
        %v7344 = vsel %vm6926, %v7343, %v7342
        %v7345 = vperm.slane %v6524, %v6928
        %v7346 = vsel %vm6930, %v7345, %v7344
        %v7347 = vperm.slane %v6527, %v6932
        %v7348 = vsel %vm6934, %v7347, %v7346
        %v7349 = vperm.slane %v6530, %v6936
        %v7350 = vsel %vm6938, %v7349, %v7348
        %v7351 = vperm.slane %v6533, %v6940
        %v7352 = vsel %vm6942, %v7351, %v7350
        %v7353 = vperm.slane %v6536, %v6944
        %v7354 = vsel %vm6946, %v7353, %v7352
        %v7355 = vperm.slane %v6539, %v6948
        %v7356 = vsel %vm6950, %v7355, %v7354
        %v7357 = vperm.slane %v6542, %v6952
        %v7358 = vsel %vm6954, %v7357, %v7356
        %v7359 = vperm.slane %v6545, %v637
        %v7360 = vperm.slane %v6548, %v6896
        %v7361 = vsel %vm6898, %v7360, %v7359
        %v7362 = vperm.slane %v6551, %v6900
        %v7363 = vsel %vm6902, %v7362, %v7361
        %v7364 = vperm.slane %v6554, %v6904
        %v7365 = vsel %vm6906, %v7364, %v7363
        %v7366 = vperm.slane %v6557, %v6908
        %v7367 = vsel %vm6910, %v7366, %v7365
        %v7368 = vperm.slane %v6560, %v6912
        %v7369 = vsel %vm6914, %v7368, %v7367
        %v7370 = vperm.slane %v6563, %v6916
        %v7371 = vsel %vm6918, %v7370, %v7369
        %v7372 = vperm.slane %v6566, %v6920
        %v7373 = vsel %vm6922, %v7372, %v7371
        %v7374 = vperm.slane %v6569, %v6924
        %v7375 = vsel %vm6926, %v7374, %v7373
        %v7376 = vperm.slane %v6572, %v6928
        %v7377 = vsel %vm6930, %v7376, %v7375
        %v7378 = vperm.slane %v6575, %v6932
        %v7379 = vsel %vm6934, %v7378, %v7377
        %v7380 = vperm.slane %v6578, %v6936
        %v7381 = vsel %vm6938, %v7380, %v7379
        %v7382 = vperm.slane %v6581, %v6940
        %v7383 = vsel %vm6942, %v7382, %v7381
        %v7384 = vperm.slane %v6584, %v6944
        %v7385 = vsel %vm6946, %v7384, %v7383
        %v7386 = vperm.slane %v6587, %v6948
        %v7387 = vsel %vm6950, %v7386, %v7385
        %v7388 = vperm.slane %v6590, %v6952
        %v7389 = vsel %vm6954, %v7388, %v7387
        %v7390 = vperm.slane %v6593, %v637
        %v7391 = vperm.slane %v6596, %v6896
        %v7392 = vsel %vm6898, %v7391, %v7390
        %v7393 = vperm.slane %v6599, %v6900
        %v7394 = vsel %vm6902, %v7393, %v7392
        %v7395 = vperm.slane %v6602, %v6904
        %v7396 = vsel %vm6906, %v7395, %v7394
        %v7397 = vperm.slane %v6605, %v6908
        %v7398 = vsel %vm6910, %v7397, %v7396
        %v7399 = vperm.slane %v6608, %v6912
        %v7400 = vsel %vm6914, %v7399, %v7398
        %v7401 = vperm.slane %v6611, %v6916
        %v7402 = vsel %vm6918, %v7401, %v7400
        %v7403 = vperm.slane %v6614, %v6920
        %v7404 = vsel %vm6922, %v7403, %v7402
        %v7405 = vperm.slane %v6617, %v6924
        %v7406 = vsel %vm6926, %v7405, %v7404
        %v7407 = vperm.slane %v6620, %v6928
        %v7408 = vsel %vm6930, %v7407, %v7406
        %v7409 = vperm.slane %v6623, %v6932
        %v7410 = vsel %vm6934, %v7409, %v7408
        %v7411 = vperm.slane %v6626, %v6936
        %v7412 = vsel %vm6938, %v7411, %v7410
        %v7413 = vperm.slane %v6629, %v6940
        %v7414 = vsel %vm6942, %v7413, %v7412
        %v7415 = vperm.slane %v6632, %v6944
        %v7416 = vsel %vm6946, %v7415, %v7414
        %v7417 = vperm.slane %v6635, %v6948
        %v7418 = vsel %vm6950, %v7417, %v7416
        %v7419 = vperm.slane %v6638, %v6952
        %v7420 = vsel %vm6954, %v7419, %v7418
        %vm7421 = vcmask 1041409
        %v7422 = vsel %vm7421, %v7017, %v6955
        %vm7423 = vcmask 1042434
        %v7424 = vsel %vm7423, %v7079, %v7422
        %vm7425 = vcmask 1043459
        %v7426 = vsel %vm7425, %v7141, %v7424
        %vm7427 = vcmask 1044484
        %v7428 = vsel %vm7427, %v7203, %v7426
        %vm7429 = vcmask 1045509
        %v7430 = vsel %vm7429, %v7265, %v7428
        %vm7431 = vcmask 1046534
        %v7432 = vsel %vm7431, %v7327, %v7430
        %vm7433 = vcmask 1047559
        %v7434 = vsel %vm7433, %v7389, %v7432
        %v7435 = vsel %vm7421, %v7048, %v6986
        %v7436 = vsel %vm7423, %v7110, %v7435
        %v7437 = vsel %vm7425, %v7172, %v7436
        %v7438 = vsel %vm7427, %v7234, %v7437
        %v7439 = vsel %vm7429, %v7296, %v7438
        %v7440 = vsel %vm7431, %v7358, %v7439
        %v7441 = vsel %vm7433, %v7420, %v7440
        %v7444 = vadd.f32 %v7434, %v7441
        %7445 = vadd.xlane.f32.xlu0 %v7444
        %v7446 = vpop.xlane.xlu0 %7445
        %v7447 = vld [vmem:[%s3] sm:$0xff]
        %v7448 = vld [vmem:[%s3 + $0x8] sm:$0xff]
        %v7457 = vsel %vm7421, %v4392, %v4323
        %v7458 = vsel %vm7423, %v4461, %v7457
        %v7459 = vsel %vm7425, %v4530, %v7458
        %v7460 = vsel %vm7427, %v4599, %v7459
        %v7461 = vsel %vm7429, %v4668, %v7460
        %v7462 = vsel %vm7431, %v4737, %v7461
        %v7463 = vsel %vm7433, %v4806, %v7462
        %v7464 = vsel %vm4254, %v7463, 0
        %7466 = vmatpush.msra.mxu0 0.0
        %7467 = vmatpush.msra.mxu0 0.0
        %7468 = vmatpush.msra.mxu0 0.0
        %7469 = vmatpush.msra.mxu0 0.0
        %7470 = vmatpush.msra.mxu0 0.0
        %7471 = vmatpush.msra.mxu0 0.0
        %7472 = vmatpush.msra.mxu0 0.0
        %7473 = vmatpush.msra.mxu0 0.0
        %7474 = vmatpush.msra.mxu0 0.0
        %7475 = vmatpush.msra.mxu0 0.0
        %7476 = vmatpush.msra.mxu0 0.0
        %7477 = vmatpush.msra.mxu0 0.0
        %7478 = vmatpush.msra.mxu0 0.0
        %7479 = vmatpush.msra.mxu0 0.0
        %7480 = vmatpush.msra.mxu0 %v7448
        %7481 = vmatpush.msra.mxu0 %v7447
        %7482 = vmatmul.f32.gmra.mxu0 %v7464
        %v7483 = vpop.f32.mrf.mxu0
        %v7484 = vadd.f32 0.0, %v7483
        %7485 = vdwg.mxu0
        %v7486 = vld [vmem:[%s4] sm:$0x1]
        %v7488 = vperm.slane %v7486, 0
        %v7490 = vmul.f32 %v4323, %v7488
        %v7491 = vmul.f32 %v4392, %v7488
        %v7492 = vmul.f32 %v4461, %v7488
        %v7493 = vmul.f32 %v4530, %v7488
        %v7494 = vmul.f32 %v4599, %v7488
        %v7495 = vmul.f32 %v4668, %v7488
        %v7496 = vmul.f32 %v4737, %v7488
        %v7497 = vmul.f32 %v4806, %v7488
        %v7506 = vrot.slane %v7491, 7
        %v7507 = vsel %vm7421, %v7506, %v7490
        %v7508 = vrot.slane %v7492, 6
        %v7509 = vsel %vm7423, %v7508, %v7507
        %v7510 = vrot.slane %v7493, 5
        %v7511 = vsel %vm7425, %v7510, %v7509
        %v7512 = vrot.slane %v7494, 4
        %v7513 = vsel %vm7427, %v7512, %v7511
        %v7514 = vrot.slane %v7495, 3
        %v7515 = vsel %vm7429, %v7514, %v7513
        %v7516 = vrot.slane %v7496, 2
        %v7517 = vsel %vm7431, %v7516, %v7515
        %v7518 = vrot.slane %v7497, 1
        %v7519 = vsel %vm7433, %v7518, %v7517
        %v7521 = vsel %vm4254, %v7519, 0.0
        %7522 = vadd.xlane.f32.xlu0 %v7521
        %v7523 = vpop.xlane.xlu0 %7522
        %v7524 = vld [vmem:[%s323] sm:$0xff]
        %v7526 = vrot.slane %v7484, 1
        %v7527 = vrot.slane %v7484, 2
        %v7528 = vrot.slane %v7484, 3
        %v7529 = vrot.slane %v7484, 4
        %v7530 = vrot.slane %v7484, 5
        %v7531 = vrot.slane %v7484, 6
        %v7532 = vrot.slane %v7484, 7
        %v7541 = vadd.f32 %v5131, %v7484
        %v7542 = vadd.f32 %v5200, %v7526
        %v7543 = vadd.f32 %v5269, %v7527
        %v7544 = vadd.f32 %v5338, %v7528
        %v7545 = vadd.f32 %v5407, %v7529
        %v7546 = vadd.f32 %v5476, %v7530
        %v7547 = vadd.f32 %v5545, %v7531
        %v7548 = vadd.f32 %v5614, %v7532
        %v7557 = vrot.slane %v7542, 7
        %v7558 = vsel %vm7421, %v7557, %v7541
        %v7559 = vrot.slane %v7543, 6
        %v7560 = vsel %vm7423, %v7559, %v7558
        %v7561 = vrot.slane %v7544, 5
        %v7562 = vsel %vm7425, %v7561, %v7560
        %v7563 = vrot.slane %v7545, 4
        %v7564 = vsel %vm7427, %v7563, %v7562
        %v7565 = vrot.slane %v7546, 3
        %v7566 = vsel %vm7429, %v7565, %v7564
        %v7567 = vrot.slane %v7547, 2
        %v7568 = vsel %vm7431, %v7567, %v7566
        %v7569 = vrot.slane %v7548, 1
        %v7570 = vsel %vm7433, %v7569, %v7568
        %v7572 = vadd.f32 %v7524, %v7570
        %7573 = vst.msk [vmem:[%s323] sm:$0xff] %vm4254, %v7572
        %v7574 = vld [vmem:[%s365] sm:$0xff]
        %v7575 = vadd.f32 %v7446, %v7523
        %v7576 = vadd.f32 %v7574, %v7575
        %vm7577 = vcmask 7168
        %7578 = vst.msk [vmem:[%s365] sm:$0xff] %vm7577, %v7576
        %s7579 = sand.u32 %s167, 1
        %s7580 = scalar_lea.sflag [#allocation3], %s7579
        %s7581 = sand.u32 %s167, 1
        %s7582 = smul.addr %s7581, 8
        %s7583 = scalar_lea.vmem [#allocation2], %s7582
        %p7584 = scmp.lt.s32.totalorder %s25, 1
        %s7585 = scalar_select %p7584, %s25, 1
        %s7586 = smul.addr %s7585, 8
        %s7587 = scalar_lea.vmem %s6, %s7586
        // Predicated region
        $region45: #{tpu_custom_call.1} parent=39 // pred_check
          %p7588 = pneg %p177
        $region46: #{tpu_custom_call.1} parent=39 // pred_check_branch
          %7590 = sbr.rel (%p7588) target = $region48
        $region47: #{tpu_custom_call.1} parent=39 // pred_region
          %7592 = vsyncadd %s7580, 0
          %s7593 = smul.addr %s25, 8
          %s7594 = scalar_lea.hbm %s5, %s7593
          %s7596 = sshll.u32 %s7583, 4
          %s7597 = int_to_ptr.vmem [resolvable:$true] %s7596
          %s7598 = sshll.u32 %s7594, 4
          %s7599 = int_to_ptr.hbm [resolvable:$true] %s7598
          %7601 = dma.vmem_to_hbm [thread:$0]  %s7597, 128, %s7599, %s7580
        $region48: #{tpu_custom_call.1} parent=39 // pred_fallthru
          _
        // Predicated region
        $region49: #{tpu_custom_call.1} parent=39 // pred_check
          %p7602 = pneg %p203
        $region50: #{tpu_custom_call.1} parent=39 // pred_check_branch
          %7604 = sbr.rel (%p7602) target = $region52
        $region51: #{tpu_custom_call.1} parent=39 // pred_region
          _
        $region52: #{tpu_custom_call.1} parent=39 // pred_fallthru
          _
      $region40: #{tpu_custom_call.1} parent=5 // pred_fallthru
        _
      %p7605 = scmp.le.s32.totalorder 2, %s16
      // Predicated region
      $region53: #{tpu_custom_call.1} parent=5 // pred_check
        %p7606 = pneg %p7605
      $region54: #{tpu_custom_call.1} parent=5 // pred_check_branch
        %7608 = sbr.rel (%p7606) target = $region56
      $region55: #{tpu_custom_call.1} parent=5 // pred_region
        %s7609 = ssub.s32 %s16, 2
        // Predicated region
        $region57: #{tpu_custom_call.1} parent=55 // pred_check
          %p7610 = pneg %p183
        $region58: #{tpu_custom_call.1} parent=55 // pred_check_branch
          %7612 = sbr.rel (%p7610) target = $region60
        $region59: #{tpu_custom_call.1} parent=55 // pred_region
          %s7613 = sand.u32 %s168, 1
          %s7614 = scalar_lea.sflag [#allocation3], %s7613
          %s7615 = sand.u32 %s168, 1
          %s7616 = smul.addr %s7615, 8
          %s7617 = scalar_lea.vmem [#allocation2], %s7616
          %7619 = dma.done %s7614, 128
        $region60: #{tpu_custom_call.1} parent=55 // pred_fallthru
          _
        // Predicated region
        $region61: #{tpu_custom_call.1} parent=55 // pred_check
          %p7620 = pneg %p209
        $region62: #{tpu_custom_call.1} parent=55 // pred_check_branch
          %7622 = sbr.rel (%p7620) target = $region64
        $region63: #{tpu_custom_call.1} parent=55 // pred_region
          %p7623 = scmp.lt.s32.totalorder %s27, 1
          %s7624 = scalar_select %p7623, %s27, 1
          %s7625 = smul.addr %s7624, 8
          %s7626 = scalar_lea.vmem %s6, %s7625
        $region64: #{tpu_custom_call.1} parent=55 // pred_fallthru
          _
      $region56: #{tpu_custom_call.1} parent=5 // pred_fallthru
        _
    $region6: #{tpu_custom_call.1} parent=1 // loop_footer
      %s20 = sadd.s32 1, %s16
    $region7: #{tpu_custom_call.1} parent=1 // loop_footer_branch
      %15 = sbr.rel target = $region3
    $region8: #{tpu_custom_call.1} parent=1 // loop_exit
      _
    %7627 = vsyncpa [#allocation3], 1
    %s7628 = scalar_lea.sflag [#allocation3], 1
    %7629 = vsyncpa %s7628, 1

</llo_original>
